<compile_context>
chip_gen: v7x
topology: tpu7x:2x2x1
jax: 0.10.0
libtpu: 0.0.40
codegen_flags: <defaults>
</compile_context>

<pallas_src>
import functools
import math

import jax
import jax.numpy as jnp
from jax.experimental import pallas as pl
from jax.experimental.pallas import tpu as pltpu


# ------------------------------ fused kernel --------------------------------

def _model_kernel(feats_ref, prefix_ref, tq_ref, enc_bias_ref, dec_bias_ref,
                  in_w_ref,
                  e_wqkv_ref, e_bqkv_ref, e_wo_ref, e_bo_ref,
                  e_w1_ref, e_b1_ref, e_w2_ref, e_b2_ref, e_ln_ref,
                  d_sa_wqkv_ref, d_sa_bqkv_ref, d_sa_wo_ref, d_sa_bo_ref,
                  d_ca_w_ref, d_ca_b_ref,
                  d_w1_ref, d_b1_ref, d_w2_ref, d_b2_ref, d_ln_ref,
                  out_w_ref, out_b_ref,
                  o_ref, *, num_heads, n_enc, n_dec, bblk, s_ep, t_len, mm_dtype):
    f32 = jnp.float32
    D = in_w_ref.shape[1]
    hd = D // num_heads
    scale = 1.0 / math.sqrt(hd)

    def mm(a, b):
        return jnp.dot(a.astype(mm_dtype), b.astype(mm_dtype),
                       preferred_element_type=f32)

    def mm_nt(a, b):   # a @ b.T via dot_general (no transpose materialization)
        return jax.lax.dot_general(
            a.astype(mm_dtype), b.astype(mm_dtype),
            dimension_numbers=(((1,), (1,)), ((), ())),
            preferred_element_type=f32)

    def layer_norm(x, g, b):                    # LayerNorm over last dim, eps=1e-5
        mu = jnp.mean(x, axis=-1, keepdims=True)
        c = x - mu
        var = jnp.mean(c * c, axis=-1, keepdims=True)
        return c * jax.lax.rsqrt(var + 1e-5) * g + b

    def self_attention(x, wqkv, bqkv, wo, bo, bias_full, seq):
        # x: (bblk*seq, D).  bias_full: list of bblk (seq, H*seq) additive
        # key-padding biases (pre-broadcast, pre-lane-tiled).
        qkv = mm(x, wqkv) + bqkv                            # packed QKV (bblk*seq, 3D)
        q = qkv[:, :D] * scale                              # fold 1/sqrt(hd) once
        k = qkv[:, D:2 * D]
        v = qkv[:, 2 * D:]
        ctx = []
        for b in range(bblk):                               # tiny per-row attention
            rs = slice(b * seq, (b + 1) * seq)              # sublane-aligned slice
            qb, kb, vb = q[rs], k[rs], v[rs]
            # Lane-packed per-head scores: (seq, H*seq) — one lane-tile.
            s = jnp.concatenate(
                [mm_nt(qb[:, h * hd:(h + 1) * hd], kb[:, h * hd:(h + 1) * hd])
                 for h in range(num_heads)], axis=1) + bias_full[b]
            # Row-global max is constant per query row => per-head softmax exact.
            s = s - jnp.max(s, axis=-1, keepdims=True)
            p = jnp.exp(s)
            heads = []
            for h in range(num_heads):
                ph = p[:, h * seq:(h + 1) * seq]
                r = pl.reciprocal(jnp.sum(ph, axis=-1, keepdims=True), approx=True)
                heads.append(mm(ph, vb[:, h * hd:(h + 1) * hd]) * r)
            ctx.append(jnp.concatenate(heads, axis=1))      # lane concat -> (seq, D)
        ctx = jnp.concatenate(ctx, axis=0)                   # (bblk*seq, D)
        return mm(ctx, wo) + bo                              # single K=D output proj

    def ffn(x, w1, b1, w2, b2):
        h = jnp.maximum(mm(x, w1) + b1, 0.0)                 # relu
        return mm(h, w2) + b2

    # ---------------- encoder ----------------
    # `prefix` already holds: eos tokens (+PE) on rows 0/1 and
    # (input-linear bias + 2*PE) on the motion/pad rows -> one fused add.
    x = mm(feats_ref[...], in_w_ref[...]) + prefix_ref[...]  # (bblk*S_ep, D)
    # Hoisted bias broadcasts (once, not per layer).
    enc_bias = [jnp.broadcast_to(enc_bias_ref[b], (s_ep, num_heads * s_ep))
                for b in range(bblk)]

    for l in range(n_enc):
        ln = e_ln_ref[l]                                     # rows: g1,b1,g2,b2
        a = self_attention(x, e_wqkv_ref[l], e_bqkv_ref[l],
                           e_wo_ref[l], e_bo_ref[l], enc_bias, s_ep)
        x = layer_norm(x + a, ln[0:1], ln[1:2])
        f = ffn(x, e_w1_ref[l], e_b1_ref[l], e_w2_ref[l], e_b2_ref[l])
        x = layer_norm(x + f, ln[2:3], ln[3:4])

    # m_vector: row 0 of each batch block -> (bblk, D)
    mem = jnp.concatenate([x[b * s_ep:b * s_ep + 1, :] for b in range(bblk)], axis=0)

    # ---------------- decoder ----------------
    y = tq_ref[...]                                          # timequeries = 0 + PE
    dec_bias = [jnp.broadcast_to(dec_bias_ref[b], (t_len, num_heads * t_len))
                for b in range(bblk)]

    for l in range(n_dec):
        ln = d_ln_ref[l]                                     # rows: g1,b1,g2,b2,g3,b3
        a = self_attention(y, d_sa_wqkv_ref[l], d_sa_bqkv_ref[l],
                           d_sa_wo_ref[l], d_sa_bo_ref[l], dec_bias, t_len)
        y = layer_norm(y + a, ln[0:1], ln[1:2])
        # Cross-attention over a single memory token: softmax == 1 identically,
        # so it reduces to mem @ (Wv@Wo) + (bv@Wo + bo) (folded in the wrapper).
        ca = mm(mem, d_ca_w_ref[l]) + d_ca_b_ref[l]          # (bblk, D)
        c = jnp.concatenate([jnp.broadcast_to(ca[b:b + 1, :], (t_len, D))
                             for b in range(bblk)], axis=0)
        y = layer_norm(y + c, ln[2:3], ln[3:4])
        f = ffn(y, d_w1_ref[l], d_b1_ref[l], d_w2_ref[l], d_b2_ref[l])
        y = layer_norm(y + f, ln[4:5], ln[5:6])

    # Lane-dense output: weights zero-padded to 128 lanes -> one unmasked store.
    o_ref[...] = mm(y, out_w_ref[...]) + out_b_ref[...]


# ------------------------------- forward ------------------------------------

def forward(params, motion_feats, motion_masks, cfg):
    B, T, F = motion_feats.shape
    D, H = cfg['d_model'], cfg['heads']
    S_e = T + 2
    S_ep = ((S_e + 7) // 8) * 8            # sublane-aligned encoder seq (pad keys masked)
    F_pad = 128                            # lane-dense output width
    bblk = cfg.get('batch_block') or B     # batch rows folded into matmul M per grid step
    assert B % bblk == 0, "batch_block must divide batch"
    mm_dtype = jnp.bfloat16 if cfg.get('use_bf16') else jnp.float32

    # Reference PE quirk: encoding indexed by the *batch* position, broadcast
    # over the sequence axis.
    pe = params['pos_enc'][:B][:, None, :].astype(jnp.float32)          # (B,1,D)
    feats = motion_feats.astype(jnp.float32)

    # Pure data plumbing (no compute): zero-pad 2 leading eos slots + trailing
    # alignment rows so those slots pass through the input matmul contributing 0.
    feats_pad = jnp.zeros((B, S_ep, F), jnp.float32).at[:, 2:2 + T, :].set(feats)
    feats_flat = feats_pad.reshape(B * S_ep, F)

    # Additive prefix: eos tokens (+PE) on rows 0/1, (input bias + 2*PE) elsewhere.
    prefix = jnp.concatenate(
        [params['eos1'][None, :, :] + pe,
         params['eos2'][None, :, :] + pe,
         jnp.broadcast_to(params['enc_in_b'][None, :, :] + 2.0 * pe, (B, S_ep - 2, D))],
        axis=1)                                                          # (B,S_ep,D)
    prefix_flat = prefix.reshape(B * S_ep, D)

    # timequeries = 0 + PE (per batch row, broadcast over the T query rows).
    tq_flat = jnp.broadcast_to(pe, (B, T, D)).reshape(B * T, D)

    masks = motion_masks.astype(bool)
    newmask = jnp.concatenate([jnp.ones((B, 2), bool), masks,
                               jnp.zeros((B, S_ep - S_e), bool)], axis=1)
    # Key-padding biases pre-tiled H times along lanes (lane-packed score layout).
    enc_bias = jnp.where(newmask, 0.0, -1e30).astype(jnp.float32)        # (B,S_ep)
    enc_bias_lanes = jnp.tile(enc_bias, (1, H)).reshape(B, 1, H * S_ep)
    dec_bias = jnp.where(masks, 0.0, -1e30).astype(jnp.float32)          # (B,T)
    dec_bias_lanes = jnp.tile(dec_bias, (1, H)).reshape(B, 1, H * T)

    # Degenerate single-token cross-attention: fold Wv @ Wo (and biases) once.
    d_ca_w = jnp.einsum('lde,lef->ldf', params['d_ca_wkv'][:, :, D:], params['d_ca_wo'])
    d_ca_b = (jnp.einsum('lxe,lef->lxf', params['d_ca_bkv'][:, :, D:], params['d_ca_wo'])
              + params['d_ca_bo'])

    # Lane-dense output projection (pad F -> 128 with zeros; slice after the call).
    out_w_pad = jnp.zeros((D, F_pad), jnp.float32).at[:, :F].set(params['dec_out_w'])
    out_b_pad = jnp.zeros((1, F_pad), jnp.float32).at[:, :F].set(params['dec_out_b'])

    wargs = [params['enc_in_w'],
             params['e_wqkv'], params['e_bqkv'], params['e_wo'], params['e_bo'],
             params['e_w1'], params['e_b1'], params['e_w2'], params['e_b2'],
             params['e_ln'],
             params['d_sa_wqkv'], params['d_sa_bqkv'], params['d_sa_wo'], params['d_sa_bo'],
             d_ca_w, d_ca_b,
             params['d_w1'], params['d_b1'], params['d_w2'], params['d_b2'],
             params['d_ln'],
             out_w_pad, out_b_pad]

    def batched(*shape):
        zero_tail = (0,) * (len(shape) - 1)
        return pl.BlockSpec(shape, lambda i: (i,) + zero_tail)

    def replicated(shape):
        zero = (0,) * len(shape)
        return pl.BlockSpec(shape, lambda i: zero)     # constant block -> VMEM resident

    FF, Le, Ld = cfg['ff'], cfg['n_enc'], cfg['n_dec']
    flops = 2 * (B * S_ep * F * D
                 + Le * (B * S_ep * (4 * D * D + 2 * D * FF) + 2 * B * S_ep * S_ep * D)
                 + Ld * (B * T * (4 * D * D + 2 * D * FF) + 2 * B * T * T * D + B * D * D)
                 + B * T * D * F_pad)
    transcendentals = B * (Le * S_ep * H * S_ep + Ld * T * H * T)
    bytes_accessed = int(sum(int(a.size) * 4 for a in
                             ([feats_flat, prefix_flat, tq_flat,
                               enc_bias_lanes, dec_bias_lanes] + wargs))
                         + B * T * F_pad * 4)

    kernel = functools.partial(_model_kernel, num_heads=H, n_enc=Le, n_dec=Ld,
                               bblk=bblk, s_ep=S_ep, t_len=T, mm_dtype=mm_dtype)

    out_flat = pl.pallas_call(
        kernel,
        out_shape=jax.ShapeDtypeStruct((B * T, F_pad), jnp.float32),
        grid=(B // bblk,),
        in_specs=([batched(bblk * S_ep, F), batched(bblk * S_ep, D),
                   batched(bblk * T, D),
                   batched(bblk, 1, H * S_ep), batched(bblk, 1, H * T)]
                  + [replicated(a.shape) for a in wargs]),
        out_specs=pl.BlockSpec((bblk * T, F_pad), lambda i: (i, 0)),
        compiler_params=pltpu.CompilerParams(dimension_semantics=("parallel",)),
        cost_estimate=pl.CostEstimate(flops=int(flops),
                                      transcendentals=int(transcendentals),
                                      bytes_accessed=bytes_accessed),
    )(feats_flat, prefix_flat, tq_flat, enc_bias_lanes, dec_bias_lanes, *wargs)

    dec_out = out_flat.reshape(B, T, F_pad)[:, :, :F]
    return motion_feats, dec_out


# ------------------------------ parameters ----------------------------------

def make_pos_encoding(max_len, d_model):
    pos = jnp.arange(max_len, dtype=jnp.float32)[:, None]
    _2i = jnp.arange(0, d_model, 2, dtype=jnp.float32)
    angle = pos / (10000.0 ** (_2i / d_model))
    enc = jnp.zeros((max_len, d_model), jnp.float32)
    enc = enc.at[:, 0::2].set(jnp.sin(angle))
    enc = enc.at[:, 1::2].set(jnp.cos(angle))
    return enc


def init_params(key, cfg):
    F, D, FF = cfg['nfeats'], cfg['d_model'], cfg['ff']
    Le, Ld = cfg['n_enc'], cfg['n_dec']
    keys = iter(jax.random.split(key, 64))
    nk = lambda: next(keys)
    w = lambda *s: 0.02 * jax.random.normal(nk(), s, jnp.float32)
    zeros = lambda *s: jnp.zeros(s, jnp.float32)

    def ln_pack(n_ln, L):
        rows = [jnp.ones((D,), jnp.float32) if i % 2 == 0 else jnp.zeros((D,), jnp.float32)
                for i in range(n_ln)]
        return jnp.tile(jnp.stack(rows)[None], (L, 1, 1))              # (L, n_ln, D)

    return dict(
        pos_enc=make_pos_encoding(cfg['max_len'], D),
        enc_in_w=w(F, D), enc_in_b=zeros(1, D),
        dec_out_w=w(D, F), dec_out_b=zeros(1, F),
        eos1=jax.random.normal(nk(), (1, D), jnp.float32),
        eos2=jax.random.normal(nk(), (1, D), jnp.float32),
        # encoder layer stacks (leading axis = layer)
        e_wqkv=w(Le, D, 3 * D), e_bqkv=zeros(Le, 1, 3 * D),
        e_wo=w(Le, D, D), e_bo=zeros(Le, 1, D),
        e_w1=w(Le, D, FF), e_b1=zeros(Le, 1, FF),
        e_w2=w(Le, FF, D), e_b2=zeros(Le, 1, D),
        e_ln=ln_pack(4, Le),
        # decoder layer stacks
        d_sa_wqkv=w(Ld, D, 3 * D), d_sa_bqkv=zeros(Ld, 1, 3 * D),
        d_sa_wo=w(Ld, D, D), d_sa_bo=zeros(Ld, 1, D),
        d_ca_wq=w(Ld, D, D), d_ca_bq=zeros(Ld, 1, D),
        d_ca_wkv=w(Ld, D, 2 * D), d_ca_bkv=zeros(Ld, 1, 2 * D),
        d_ca_wo=w(Ld, D, D), d_ca_bo=zeros(Ld, 1, D),
        d_w1=w(Ld, D, FF), d_b1=zeros(Ld, 1, FF),
        d_w2=w(Ld, FF, D), d_b2=zeros(Ld, 1, D),
        d_ln=ln_pack(6, Ld),
    )


# --------------------- plain-JAX numerical reference -------------------------

def reference_forward(params, motion_feats, motion_masks, cfg):
    B, T, F = motion_feats.shape
    D, H = cfg['d_model'], cfg['heads']
    hd = D // H
    pe = params['pos_enc'][:B][:, None, :]

    def layer_norm(x, g, b):
        mu = jnp.mean(x, -1, keepdims=True)
        c = x - mu
        var = jnp.mean(c * c, -1, keepdims=True)
        return c * jax.lax.rsqrt(var + 1e-5) * g + b

    def mha(xq, xkv, bias, wq, bq, wk, bk, wv, bv, wo, bo):
        q = xq @ wq + bq
        k = xkv @ wk + bk
        v = xkv @ wv + bv
        qh = q.reshape(B, -1, H, hd).transpose(0, 2, 1, 3)
        kh = k.reshape(B, -1, H, hd).transpose(0, 2, 1, 3)
        vh = v.reshape(B, -1, H, hd).transpose(0, 2, 1, 3)
        s = jnp.einsum('bhqd,bhkd->bhqk', qh, kh) / math.sqrt(hd) + bias[:, None, :, :]
        p = jax.nn.softmax(s, axis=-1)
        o = jnp.einsum('bhqk,bhkd->bhqd', p, vh).transpose(0, 2, 1, 3).reshape(B, -1, D)
        return o @ wo + bo

    m = motion_feats @ params['enc_in_w'] + params['enc_in_b'] + pe
    eos1 = jnp.broadcast_to(params['eos1'][None], (B, 1, D))
    eos2 = jnp.broadcast_to(params['eos2'][None], (B, 1, D))
    x = jnp.concatenate([eos1, eos2, m], axis=1) + pe
    masks = motion_masks.astype(bool)
    newmask = jnp.concatenate([jnp.ones((B, 2), bool), masks], axis=1)
    enc_bias = jnp.where(newmask, 0.0, -1e30)[:, None, :].astype(jnp.float32)
    for l in range(cfg['n_enc']):
        wqkv, bqkv = params['e_wqkv'][l], params['e_bqkv'][l][0]
        ln = params['e_ln'][l]
        a = mha(x, x, enc_bias, wqkv[:, :D], bqkv[:D], wqkv[:, D:2 * D], bqkv[D:2 * D],
                wqkv[:, 2 * D:], bqkv[2 * D:], params['e_wo'][l], params['e_bo'][l][0])
        x = layer_norm(x + a, ln[0], ln[1])
        f = jnp.maximum(x @ params['e_w1'][l] + params['e_b1'][l][0], 0.0)
        f = f @ params['e_w2'][l] + params['e_b2'][l][0]
        x = layer_norm(x + f, ln[2], ln[3])
    mem = x[:, 0:1, :]
    y = jnp.broadcast_to(pe, (B, T, D))
    dec_bias = jnp.where(masks, 0.0, -1e30)[:, None, :].astype(jnp.float32)
    zero_bias = jnp.zeros((B, 1, 1), jnp.float32)
    for l in range(cfg['n_dec']):
        ln = params['d_ln'][l]
        wqkv, bqkv = params['d_sa_wqkv'][l], params['d_sa_bqkv'][l][0]
        a = mha(y, y, dec_bias, wqkv[:, :D], bqkv[:D], wqkv[:, D:2 * D], bqkv[D:2 * D],
                wqkv[:, 2 * D:], bqkv[2 * D:], params['d_sa_wo'][l], params['d_sa_bo'][l][0])
        y = layer_norm(y + a, ln[0], ln[1])
        wkv, bkv = params['d_ca_wkv'][l], params['d_ca_bkv'][l][0]
        c = mha(y, mem, zero_bias, params['d_ca_wq'][l], params['d_ca_bq'][l][0],
                wkv[:, :D], bkv[:D], wkv[:, D:], bkv[D:],
                params['d_ca_wo'][l], params['d_ca_bo'][l][0])
        y = layer_norm(y + c, ln[2], ln[3])
        f = jnp.maximum(y @ params['d_w1'][l] + params['d_b1'][l][0], 0.0)
        f = f @ params['d_w2'][l] + params['d_b2'][l][0]
        y = layer_norm(y + f, ln[4], ln[5])
    return y @ params['dec_out_w'] + params['dec_out_b']


# ---------------------------------- main -------------------------------------

if __name__ == "__main__":
    cfg = dict(nfeats=4, d_model=32, ff=64, heads=4, n_enc=2, n_dec=2, max_len=64)
    key = jax.random.PRNGKey(0)
    pkey, xkey = jax.random.split(key)
    params = init_params(pkey, cfg)

    B, T = 2, 8
    motion_feats = jax.random.normal(xkey, (B, T, cfg['nfeats']), jnp.float32)
    motion_masks = jnp.array([[1, 1, 1, 1, 1, 1, 1, 1],
                              [1, 1, 1, 1, 1, 0, 0, 0]], dtype=bool)

    feats_out, dec_out = forward(params, motion_feats, motion_masks, cfg)
    jax.block_until_ready((feats_out, dec_out))

    assert feats_out.shape == (B, T, cfg['nfeats'])
    assert dec_out.shape == (B, T, cfg['nfeats'])
    assert bool(jnp.all(jnp.isfinite(dec_out)))

    ref = reference_forward(params, motion_feats, motion_masks, cfg)
    err = float(jnp.max(jnp.abs(dec_out - ref)))
    assert err < 2e-2, f"kernel vs reference mismatch: max abs err = {err}"

    print("KERNEL_OK")
</pallas_src>

<mosaic_0001>
module attributes {stable_mosaic.version = 11 : i64} {
  func.func @_model_kernel(%arg0: i32, %arg1: memref<32x4xf32, #tpu.memory_space<vmem>>, %arg2: memref<32x32xf32, #tpu.memory_space<vmem>>, %arg3: memref<16x32xf32, #tpu.memory_space<vmem>>, %arg4: memref<2x1x64xf32, #tpu.memory_space<vmem>>, %arg5: memref<2x1x32xf32, #tpu.memory_space<vmem>>, %arg6: memref<4x32xf32, #tpu.memory_space<vmem>>, %arg7: memref<2x32x96xf32, #tpu.memory_space<vmem>>, %arg8: memref<2x1x96xf32, #tpu.memory_space<vmem>>, %arg9: memref<2x32x32xf32, #tpu.memory_space<vmem>>, %arg10: memref<2x1x32xf32, #tpu.memory_space<vmem>>, %arg11: memref<2x32x64xf32, #tpu.memory_space<vmem>>, %arg12: memref<2x1x64xf32, #tpu.memory_space<vmem>>, %arg13: memref<2x64x32xf32, #tpu.memory_space<vmem>>, %arg14: memref<2x1x32xf32, #tpu.memory_space<vmem>>, %arg15: memref<2x4x32xf32, #tpu.memory_space<vmem>>, %arg16: memref<2x32x96xf32, #tpu.memory_space<vmem>>, %arg17: memref<2x1x96xf32, #tpu.memory_space<vmem>>, %arg18: memref<2x32x32xf32, #tpu.memory_space<vmem>>, %arg19: memref<2x1x32xf32, #tpu.memory_space<vmem>>, %arg20: memref<2x32x32xf32, #tpu.memory_space<vmem>>, %arg21: memref<2x1x32xf32, #tpu.memory_space<vmem>>, %arg22: memref<2x32x64xf32, #tpu.memory_space<vmem>>, %arg23: memref<2x1x64xf32, #tpu.memory_space<vmem>>, %arg24: memref<2x64x32xf32, #tpu.memory_space<vmem>>, %arg25: memref<2x1x32xf32, #tpu.memory_space<vmem>>, %arg26: memref<2x6x32xf32, #tpu.memory_space<vmem>>, %arg27: memref<32x128xf32, #tpu.memory_space<vmem>>, %arg28: memref<1x128xf32, #tpu.memory_space<vmem>>, %arg29: memref<16x128xf32, #tpu.memory_space<vmem>>) attributes {dimension_semantics = [#tpu.dimension_semantics<parallel>], iteration_bounds = array<i64: 1>, scalar_prefetch = 0 : i64, scratch_operands = 0 : i64, tpu.core_type = #tpu.core_type<tc>, window_params = [{transform_indices = @transform_0, window_bounds = array<i64: 32, 4>}, {transform_indices = @transform_1, window_bounds = array<i64: 32, 32>}, {transform_indices = @transform_2, window_bounds = array<i64: 16, 32>}, {transform_indices = @transform_3, window_bounds = array<i64: 2, 1, 64>}, {transform_indices = @transform_4, window_bounds = array<i64: 2, 1, 32>}, {pipeline_mode = #tpu.pipeline_mode<synchronous>, transform_indices = @transform_5, window_bounds = array<i64: 4, 32>}, {pipeline_mode = #tpu.pipeline_mode<synchronous>, transform_indices = @transform_6, window_bounds = array<i64: 2, 32, 96>}, {pipeline_mode = #tpu.pipeline_mode<synchronous>, transform_indices = @transform_7, window_bounds = array<i64: 2, 1, 96>}, {pipeline_mode = #tpu.pipeline_mode<synchronous>, transform_indices = @transform_8, window_bounds = array<i64: 2, 32, 32>}, {pipeline_mode = #tpu.pipeline_mode<synchronous>, transform_indices = @transform_9, window_bounds = array<i64: 2, 1, 32>}, {pipeline_mode = #tpu.pipeline_mode<synchronous>, transform_indices = @transform_10, window_bounds = array<i64: 2, 32, 64>}, {pipeline_mode = #tpu.pipeline_mode<synchronous>, transform_indices = @transform_11, window_bounds = array<i64: 2, 1, 64>}, {pipeline_mode = #tpu.pipeline_mode<synchronous>, transform_indices = @transform_12, window_bounds = array<i64: 2, 64, 32>}, {pipeline_mode = #tpu.pipeline_mode<synchronous>, transform_indices = @transform_13, window_bounds = array<i64: 2, 1, 32>}, {pipeline_mode = #tpu.pipeline_mode<synchronous>, transform_indices = @transform_14, window_bounds = array<i64: 2, 4, 32>}, {pipeline_mode = #tpu.pipeline_mode<synchronous>, transform_indices = @transform_15, window_bounds = array<i64: 2, 32, 96>}, {pipeline_mode = #tpu.pipeline_mode<synchronous>, transform_indices = @transform_16, window_bounds = array<i64: 2, 1, 96>}, {pipeline_mode = #tpu.pipeline_mode<synchronous>, transform_indices = @transform_17, window_bounds = array<i64: 2, 32, 32>}, {pipeline_mode = #tpu.pipeline_mode<synchronous>, transform_indices = @transform_18, window_bounds = array<i64: 2, 1, 32>}, {pipeline_mode = #tpu.pipeline_mode<synchronous>, transform_indices = @transform_19, window_bounds = array<i64: 2, 32, 32>}, {pipeline_mode = #tpu.pipeline_mode<synchronous>, transform_indices = @transform_20, window_bounds = array<i64: 2, 1, 32>}, {pipeline_mode = #tpu.pipeline_mode<synchronous>, transform_indices = @transform_21, window_bounds = array<i64: 2, 32, 64>}, {pipeline_mode = #tpu.pipeline_mode<synchronous>, transform_indices = @transform_22, window_bounds = array<i64: 2, 1, 64>}, {pipeline_mode = #tpu.pipeline_mode<synchronous>, transform_indices = @transform_23, window_bounds = array<i64: 2, 64, 32>}, {pipeline_mode = #tpu.pipeline_mode<synchronous>, transform_indices = @transform_24, window_bounds = array<i64: 2, 1, 32>}, {pipeline_mode = #tpu.pipeline_mode<synchronous>, transform_indices = @transform_25, window_bounds = array<i64: 2, 6, 32>}, {pipeline_mode = #tpu.pipeline_mode<synchronous>, transform_indices = @transform_26, window_bounds = array<i64: 32, 128>}, {pipeline_mode = #tpu.pipeline_mode<synchronous>, transform_indices = @transform_27, window_bounds = array<i64: 1, 128>}, {transform_indices = @transform_28, window_bounds = array<i64: 16, 128>}]} {
    %c0 = arith.constant 0 : index
    %c0_0 = arith.constant 0 : index
    %0 = vector.load %arg1[%c0, %c0_0] : memref<32x4xf32, #tpu.memory_space<vmem>>, vector<32x4xf32>
    %c0_1 = arith.constant 0 : index
    %c0_2 = arith.constant 0 : index
    %1 = vector.load %arg6[%c0_1, %c0_2] : memref<4x32xf32, #tpu.memory_space<vmem>>, vector<4x32xf32>
    %cst = arith.constant dense<0.000000e+00> : vector<32x32xf32>
    %2 = tpu.matmul %0, %1, %cst {dimension_numbers = #tpu.dot_dimension_numbers<[1], [0], [0], [1], [0, 0, 1, 1], [], []>} : vector<32x4xf32>, vector<4x32xf32>, vector<32x32xf32> -> vector<32x32xf32>
    %c0_3 = arith.constant 0 : index
    %c0_4 = arith.constant 0 : index
    %3 = vector.load %arg2[%c0_3, %c0_4] : memref<32x32xf32, #tpu.memory_space<vmem>>, vector<32x32xf32>
    %4 = arith.addf %2, %3 : vector<32x32xf32>
    %c0_5 = arith.constant 0 : index
    %c0_6 = arith.constant 0 : index
    %c0_7 = arith.constant 0 : index
    %5 = vector.load %arg4[%c0_5, %c0_6, %c0_7] : memref<2x1x64xf32, #tpu.memory_space<vmem>>, vector<1x1x64xf32>
    %6 = vector.shape_cast %5 : vector<1x1x64xf32> to vector<1x64xf32>
    %7 = vector.shape_cast %6 : vector<1x64xf32> to vector<1x64xf32>
    %8 = vector.broadcast %7 : vector<1x64xf32> to vector<16x64xf32>
    %c1 = arith.constant 1 : index
    %c0_8 = arith.constant 0 : index
    %c0_9 = arith.constant 0 : index
    %9 = vector.load %arg4[%c1, %c0_8, %c0_9] : memref<2x1x64xf32, #tpu.memory_space<vmem>>, vector<1x1x64xf32>
    %10 = vector.shape_cast %9 : vector<1x1x64xf32> to vector<1x64xf32>
    %11 = vector.shape_cast %10 : vector<1x64xf32> to vector<1x64xf32>
    %12 = vector.broadcast %11 : vector<1x64xf32> to vector<16x64xf32>
    %c0_10 = arith.constant 0 : index
    %c0_11 = arith.constant 0 : index
    %c0_12 = arith.constant 0 : index
    %13 = vector.load %arg15[%c0_10, %c0_11, %c0_12] : memref<2x4x32xf32, #tpu.memory_space<vmem>>, vector<1x4x32xf32>
    %14 = vector.shape_cast %13 : vector<1x4x32xf32> to vector<4x32xf32>
    %c0_13 = arith.constant 0 : index
    %c0_14 = arith.constant 0 : index
    %c0_15 = arith.constant 0 : index
    %15 = vector.load %arg7[%c0_13, %c0_14, %c0_15] : memref<2x32x96xf32, #tpu.memory_space<vmem>>, vector<1x32x96xf32>
    %16 = vector.shape_cast %15 : vector<1x32x96xf32> to vector<32x96xf32>
    %c0_16 = arith.constant 0 : index
    %c0_17 = arith.constant 0 : index
    %c0_18 = arith.constant 0 : index
    %17 = vector.load %arg8[%c0_16, %c0_17, %c0_18] : memref<2x1x96xf32, #tpu.memory_space<vmem>>, vector<1x1x96xf32>
    %18 = vector.shape_cast %17 : vector<1x1x96xf32> to vector<1x96xf32>
    %c0_19 = arith.constant 0 : index
    %c0_20 = arith.constant 0 : index
    %c0_21 = arith.constant 0 : index
    %19 = vector.load %arg9[%c0_19, %c0_20, %c0_21] : memref<2x32x32xf32, #tpu.memory_space<vmem>>, vector<1x32x32xf32>
    %20 = vector.shape_cast %19 : vector<1x32x32xf32> to vector<32x32xf32>
    %c0_22 = arith.constant 0 : index
    %c0_23 = arith.constant 0 : index
    %c0_24 = arith.constant 0 : index
    %21 = vector.load %arg10[%c0_22, %c0_23, %c0_24] : memref<2x1x32xf32, #tpu.memory_space<vmem>>, vector<1x1x32xf32>
    %22 = vector.shape_cast %21 : vector<1x1x32xf32> to vector<1x32xf32>
    %cst_25 = arith.constant dense<0.000000e+00> : vector<32x96xf32>
    %23 = tpu.matmul %4, %16, %cst_25 {dimension_numbers = #tpu.dot_dimension_numbers<[1], [0], [0], [1], [0, 0, 1, 1], [], []>} : vector<32x32xf32>, vector<32x96xf32>, vector<32x96xf32> -> vector<32x96xf32>
    %24 = vector.broadcast %18 : vector<1x96xf32> to vector<32x96xf32>
    %25 = arith.addf %23, %24 : vector<32x96xf32>
    %26 = vector.extract_strided_slice %25 {offsets = [0, 0], sizes = [32, 32], strides = [1, 1]} : vector<32x96xf32> to vector<32x32xf32>
    %cst_26 = arith.constant 0.353553385 : f32
    %27 = vector.broadcast %cst_26 : f32 to vector<32x32xf32>
    %28 = arith.mulf %26, %27 : vector<32x32xf32>
    %29 = vector.extract_strided_slice %25 {offsets = [0, 32], sizes = [32, 32], strides = [1, 1]} : vector<32x96xf32> to vector<32x32xf32>
    %30 = vector.extract_strided_slice %25 {offsets = [0, 64], sizes = [32, 32], strides = [1, 1]} : vector<32x96xf32> to vector<32x32xf32>
    %31 = vector.extract_strided_slice %28 {offsets = [0, 0], sizes = [16, 32], strides = [1, 1]} : vector<32x32xf32> to vector<16x32xf32>
    %32 = vector.extract_strided_slice %29 {offsets = [0, 0], sizes = [16, 32], strides = [1, 1]} : vector<32x32xf32> to vector<16x32xf32>
    %33 = vector.extract_strided_slice %30 {offsets = [0, 0], sizes = [16, 32], strides = [1, 1]} : vector<32x32xf32> to vector<16x32xf32>
    %34 = vector.extract_strided_slice %31 {offsets = [0, 0], sizes = [16, 8], strides = [1, 1]} : vector<16x32xf32> to vector<16x8xf32>
    %35 = vector.extract_strided_slice %32 {offsets = [0, 0], sizes = [16, 8], strides = [1, 1]} : vector<16x32xf32> to vector<16x8xf32>
    %cst_27 = arith.constant dense<0.000000e+00> : vector<16x16xf32>
    %36 = tpu.matmul %34, %35, %cst_27 {dimension_numbers = #tpu.dot_dimension_numbers<[1], [1], [0], [0], [0, 0, 1, 0], [], []>} : vector<16x8xf32>, vector<16x8xf32>, vector<16x16xf32> -> vector<16x16xf32>
    %37 = vector.extract_strided_slice %31 {offsets = [0, 8], sizes = [16, 8], strides = [1, 1]} : vector<16x32xf32> to vector<16x8xf32>
    %38 = vector.extract_strided_slice %32 {offsets = [0, 8], sizes = [16, 8], strides = [1, 1]} : vector<16x32xf32> to vector<16x8xf32>
    %cst_28 = arith.constant dense<0.000000e+00> : vector<16x16xf32>
    %39 = tpu.matmul %37, %38, %cst_28 {dimension_numbers = #tpu.dot_dimension_numbers<[1], [1], [0], [0], [0, 0, 1, 0], [], []>} : vector<16x8xf32>, vector<16x8xf32>, vector<16x16xf32> -> vector<16x16xf32>
    %40 = vector.extract_strided_slice %31 {offsets = [0, 16], sizes = [16, 8], strides = [1, 1]} : vector<16x32xf32> to vector<16x8xf32>
    %41 = vector.extract_strided_slice %32 {offsets = [0, 16], sizes = [16, 8], strides = [1, 1]} : vector<16x32xf32> to vector<16x8xf32>
    %cst_29 = arith.constant dense<0.000000e+00> : vector<16x16xf32>
    %42 = tpu.matmul %40, %41, %cst_29 {dimension_numbers = #tpu.dot_dimension_numbers<[1], [1], [0], [0], [0, 0, 1, 0], [], []>} : vector<16x8xf32>, vector<16x8xf32>, vector<16x16xf32> -> vector<16x16xf32>
    %43 = vector.extract_strided_slice %31 {offsets = [0, 24], sizes = [16, 8], strides = [1, 1]} : vector<16x32xf32> to vector<16x8xf32>
    %44 = vector.extract_strided_slice %32 {offsets = [0, 24], sizes = [16, 8], strides = [1, 1]} : vector<16x32xf32> to vector<16x8xf32>
    %cst_30 = arith.constant dense<0.000000e+00> : vector<16x16xf32>
    %45 = tpu.matmul %43, %44, %cst_30 {dimension_numbers = #tpu.dot_dimension_numbers<[1], [1], [0], [0], [0, 0, 1, 0], [], []>} : vector<16x8xf32>, vector<16x8xf32>, vector<16x16xf32> -> vector<16x16xf32>
    %46 = tpu.concatenate %36, %39, %42, %45 in 1 : vector<16x16xf32>, vector<16x16xf32>, vector<16x16xf32>, vector<16x16xf32> -> vector<16x64xf32>
    %47 = arith.addf %46, %8 : vector<16x64xf32>
    %cst_31 = arith.constant dense<0xFF800000> : vector<16xf32>
    %48 = vector.multi_reduction <maximumf>, %47, %cst_31 [1] : vector<16x64xf32> to vector<16xf32>
    %49 = vector.shape_cast %48 : vector<16xf32> to vector<16x1xf32>
    %50 = vector.broadcast %49 : vector<16x1xf32> to vector<16x64xf32>
    %51 = arith.subf %47, %50 : vector<16x64xf32>
    %52 = math.exp %51 : vector<16x64xf32>
    %53 = vector.extract_strided_slice %52 {offsets = [0, 0], sizes = [16, 16], strides = [1, 1]} : vector<16x64xf32> to vector<16x16xf32>
    %cst_32 = arith.constant dense<0.000000e+00> : vector<16xf32>
    %54 = vector.multi_reduction <add>, %53, %cst_32 [1] : vector<16x16xf32> to vector<16xf32>
    %55 = vector.shape_cast %54 : vector<16xf32> to vector<16x1xf32>
    %56 = tpu.reciprocal %55 {approx = true} : vector<16x1xf32> -> vector<16x1xf32>
    %57 = vector.extract_strided_slice %33 {offsets = [0, 0], sizes = [16, 8], strides = [1, 1]} : vector<16x32xf32> to vector<16x8xf32>
    %cst_33 = arith.constant dense<0.000000e+00> : vector<16x8xf32>
    %58 = tpu.matmul %53, %57, %cst_33 {dimension_numbers = #tpu.dot_dimension_numbers<[1], [0], [0], [1], [0, 0, 1, 1], [], []>} : vector<16x16xf32>, vector<16x8xf32>, vector<16x8xf32> -> vector<16x8xf32>
    %59 = vector.broadcast %56 : vector<16x1xf32> to vector<16x8xf32>
    %60 = arith.mulf %58, %59 : vector<16x8xf32>
    %61 = vector.extract_strided_slice %52 {offsets = [0, 16], sizes = [16, 16], strides = [1, 1]} : vector<16x64xf32> to vector<16x16xf32>
    %cst_34 = arith.constant dense<0.000000e+00> : vector<16xf32>
    %62 = vector.multi_reduction <add>, %61, %cst_34 [1] : vector<16x16xf32> to vector<16xf32>
    %63 = vector.shape_cast %62 : vector<16xf32> to vector<16x1xf32>
    %64 = tpu.reciprocal %63 {approx = true} : vector<16x1xf32> -> vector<16x1xf32>
    %65 = vector.extract_strided_slice %33 {offsets = [0, 8], sizes = [16, 8], strides = [1, 1]} : vector<16x32xf32> to vector<16x8xf32>
    %cst_35 = arith.constant dense<0.000000e+00> : vector<16x8xf32>
    %66 = tpu.matmul %61, %65, %cst_35 {dimension_numbers = #tpu.dot_dimension_numbers<[1], [0], [0], [1], [0, 0, 1, 1], [], []>} : vector<16x16xf32>, vector<16x8xf32>, vector<16x8xf32> -> vector<16x8xf32>
    %67 = vector.broadcast %64 : vector<16x1xf32> to vector<16x8xf32>
    %68 = arith.mulf %66, %67 : vector<16x8xf32>
    %69 = vector.extract_strided_slice %52 {offsets = [0, 32], sizes = [16, 16], strides = [1, 1]} : vector<16x64xf32> to vector<16x16xf32>
    %cst_36 = arith.constant dense<0.000000e+00> : vector<16xf32>
    %70 = vector.multi_reduction <add>, %69, %cst_36 [1] : vector<16x16xf32> to vector<16xf32>
    %71 = vector.shape_cast %70 : vector<16xf32> to vector<16x1xf32>
    %72 = tpu.reciprocal %71 {approx = true} : vector<16x1xf32> -> vector<16x1xf32>
    %73 = vector.extract_strided_slice %33 {offsets = [0, 16], sizes = [16, 8], strides = [1, 1]} : vector<16x32xf32> to vector<16x8xf32>
    %cst_37 = arith.constant dense<0.000000e+00> : vector<16x8xf32>
    %74 = tpu.matmul %69, %73, %cst_37 {dimension_numbers = #tpu.dot_dimension_numbers<[1], [0], [0], [1], [0, 0, 1, 1], [], []>} : vector<16x16xf32>, vector<16x8xf32>, vector<16x8xf32> -> vector<16x8xf32>
    %75 = vector.broadcast %72 : vector<16x1xf32> to vector<16x8xf32>
    %76 = arith.mulf %74, %75 : vector<16x8xf32>
    %77 = vector.extract_strided_slice %52 {offsets = [0, 48], sizes = [16, 16], strides = [1, 1]} : vector<16x64xf32> to vector<16x16xf32>
    %cst_38 = arith.constant dense<0.000000e+00> : vector<16xf32>
    %78 = vector.multi_reduction <add>, %77, %cst_38 [1] : vector<16x16xf32> to vector<16xf32>
    %79 = vector.shape_cast %78 : vector<16xf32> to vector<16x1xf32>
    %80 = tpu.reciprocal %79 {approx = true} : vector<16x1xf32> -> vector<16x1xf32>
    %81 = vector.extract_strided_slice %33 {offsets = [0, 24], sizes = [16, 8], strides = [1, 1]} : vector<16x32xf32> to vector<16x8xf32>
    %cst_39 = arith.constant dense<0.000000e+00> : vector<16x8xf32>
    %82 = tpu.matmul %77, %81, %cst_39 {dimension_numbers = #tpu.dot_dimension_numbers<[1], [0], [0], [1], [0, 0, 1, 1], [], []>} : vector<16x16xf32>, vector<16x8xf32>, vector<16x8xf32> -> vector<16x8xf32>
    %83 = vector.broadcast %80 : vector<16x1xf32> to vector<16x8xf32>
    %84 = arith.mulf %82, %83 : vector<16x8xf32>
    %85 = tpu.concatenate %60, %68, %76, %84 in 1 : vector<16x8xf32>, vector<16x8xf32>, vector<16x8xf32>, vector<16x8xf32> -> vector<16x32xf32>
    %86 = vector.extract_strided_slice %28 {offsets = [16, 0], sizes = [16, 32], strides = [1, 1]} : vector<32x32xf32> to vector<16x32xf32>
    %87 = vector.extract_strided_slice %29 {offsets = [16, 0], sizes = [16, 32], strides = [1, 1]} : vector<32x32xf32> to vector<16x32xf32>
    %88 = vector.extract_strided_slice %30 {offsets = [16, 0], sizes = [16, 32], strides = [1, 1]} : vector<32x32xf32> to vector<16x32xf32>
    %89 = vector.extract_strided_slice %86 {offsets = [0, 0], sizes = [16, 8], strides = [1, 1]} : vector<16x32xf32> to vector<16x8xf32>
    %90 = vector.extract_strided_slice %87 {offsets = [0, 0], sizes = [16, 8], strides = [1, 1]} : vector<16x32xf32> to vector<16x8xf32>
    %cst_40 = arith.constant dense<0.000000e+00> : vector<16x16xf32>
    %91 = tpu.matmul %89, %90, %cst_40 {dimension_numbers = #tpu.dot_dimension_numbers<[1], [1], [0], [0], [0, 0, 1, 0], [], []>} : vector<16x8xf32>, vector<16x8xf32>, vector<16x16xf32> -> vector<16x16xf32>
    %92 = vector.extract_strided_slice %86 {offsets = [0, 8], sizes = [16, 8], strides = [1, 1]} : vector<16x32xf32> to vector<16x8xf32>
    %93 = vector.extract_strided_slice %87 {offsets = [0, 8], sizes = [16, 8], strides = [1, 1]} : vector<16x32xf32> to vector<16x8xf32>
    %cst_41 = arith.constant dense<0.000000e+00> : vector<16x16xf32>
    %94 = tpu.matmul %92, %93, %cst_41 {dimension_numbers = #tpu.dot_dimension_numbers<[1], [1], [0], [0], [0, 0, 1, 0], [], []>} : vector<16x8xf32>, vector<16x8xf32>, vector<16x16xf32> -> vector<16x16xf32>
    %95 = vector.extract_strided_slice %86 {offsets = [0, 16], sizes = [16, 8], strides = [1, 1]} : vector<16x32xf32> to vector<16x8xf32>
    %96 = vector.extract_strided_slice %87 {offsets = [0, 16], sizes = [16, 8], strides = [1, 1]} : vector<16x32xf32> to vector<16x8xf32>
    %cst_42 = arith.constant dense<0.000000e+00> : vector<16x16xf32>
    %97 = tpu.matmul %95, %96, %cst_42 {dimension_numbers = #tpu.dot_dimension_numbers<[1], [1], [0], [0], [0, 0, 1, 0], [], []>} : vector<16x8xf32>, vector<16x8xf32>, vector<16x16xf32> -> vector<16x16xf32>
    %98 = vector.extract_strided_slice %86 {offsets = [0, 24], sizes = [16, 8], strides = [1, 1]} : vector<16x32xf32> to vector<16x8xf32>
    %99 = vector.extract_strided_slice %87 {offsets = [0, 24], sizes = [16, 8], strides = [1, 1]} : vector<16x32xf32> to vector<16x8xf32>
    %cst_43 = arith.constant dense<0.000000e+00> : vector<16x16xf32>
    %100 = tpu.matmul %98, %99, %cst_43 {dimension_numbers = #tpu.dot_dimension_numbers<[1], [1], [0], [0], [0, 0, 1, 0], [], []>} : vector<16x8xf32>, vector<16x8xf32>, vector<16x16xf32> -> vector<16x16xf32>
    %101 = tpu.concatenate %91, %94, %97, %100 in 1 : vector<16x16xf32>, vector<16x16xf32>, vector<16x16xf32>, vector<16x16xf32> -> vector<16x64xf32>
    %102 = arith.addf %101, %12 : vector<16x64xf32>
    %cst_44 = arith.constant dense<0xFF800000> : vector<16xf32>
    %103 = vector.multi_reduction <maximumf>, %102, %cst_44 [1] : vector<16x64xf32> to vector<16xf32>
    %104 = vector.shape_cast %103 : vector<16xf32> to vector<16x1xf32>
    %105 = vector.broadcast %104 : vector<16x1xf32> to vector<16x64xf32>
    %106 = arith.subf %102, %105 : vector<16x64xf32>
    %107 = math.exp %106 : vector<16x64xf32>
    %108 = vector.extract_strided_slice %107 {offsets = [0, 0], sizes = [16, 16], strides = [1, 1]} : vector<16x64xf32> to vector<16x16xf32>
    %cst_45 = arith.constant dense<0.000000e+00> : vector<16xf32>
    %109 = vector.multi_reduction <add>, %108, %cst_45 [1] : vector<16x16xf32> to vector<16xf32>
    %110 = vector.shape_cast %109 : vector<16xf32> to vector<16x1xf32>
    %111 = tpu.reciprocal %110 {approx = true} : vector<16x1xf32> -> vector<16x1xf32>
    %112 = vector.extract_strided_slice %88 {offsets = [0, 0], sizes = [16, 8], strides = [1, 1]} : vector<16x32xf32> to vector<16x8xf32>
    %cst_46 = arith.constant dense<0.000000e+00> : vector<16x8xf32>
    %113 = tpu.matmul %108, %112, %cst_46 {dimension_numbers = #tpu.dot_dimension_numbers<[1], [0], [0], [1], [0, 0, 1, 1], [], []>} : vector<16x16xf32>, vector<16x8xf32>, vector<16x8xf32> -> vector<16x8xf32>
    %114 = vector.broadcast %111 : vector<16x1xf32> to vector<16x8xf32>
    %115 = arith.mulf %113, %114 : vector<16x8xf32>
    %116 = vector.extract_strided_slice %107 {offsets = [0, 16], sizes = [16, 16], strides = [1, 1]} : vector<16x64xf32> to vector<16x16xf32>
    %cst_47 = arith.constant dense<0.000000e+00> : vector<16xf32>
    %117 = vector.multi_reduction <add>, %116, %cst_47 [1] : vector<16x16xf32> to vector<16xf32>
    %118 = vector.shape_cast %117 : vector<16xf32> to vector<16x1xf32>
    %119 = tpu.reciprocal %118 {approx = true} : vector<16x1xf32> -> vector<16x1xf32>
    %120 = vector.extract_strided_slice %88 {offsets = [0, 8], sizes = [16, 8], strides = [1, 1]} : vector<16x32xf32> to vector<16x8xf32>
    %cst_48 = arith.constant dense<0.000000e+00> : vector<16x8xf32>
    %121 = tpu.matmul %116, %120, %cst_48 {dimension_numbers = #tpu.dot_dimension_numbers<[1], [0], [0], [1], [0, 0, 1, 1], [], []>} : vector<16x16xf32>, vector<16x8xf32>, vector<16x8xf32> -> vector<16x8xf32>
    %122 = vector.broadcast %119 : vector<16x1xf32> to vector<16x8xf32>
    %123 = arith.mulf %121, %122 : vector<16x8xf32>
    %124 = vector.extract_strided_slice %107 {offsets = [0, 32], sizes = [16, 16], strides = [1, 1]} : vector<16x64xf32> to vector<16x16xf32>
    %cst_49 = arith.constant dense<0.000000e+00> : vector<16xf32>
    %125 = vector.multi_reduction <add>, %124, %cst_49 [1] : vector<16x16xf32> to vector<16xf32>
    %126 = vector.shape_cast %125 : vector<16xf32> to vector<16x1xf32>
    %127 = tpu.reciprocal %126 {approx = true} : vector<16x1xf32> -> vector<16x1xf32>
    %128 = vector.extract_strided_slice %88 {offsets = [0, 16], sizes = [16, 8], strides = [1, 1]} : vector<16x32xf32> to vector<16x8xf32>
    %cst_50 = arith.constant dense<0.000000e+00> : vector<16x8xf32>
    %129 = tpu.matmul %124, %128, %cst_50 {dimension_numbers = #tpu.dot_dimension_numbers<[1], [0], [0], [1], [0, 0, 1, 1], [], []>} : vector<16x16xf32>, vector<16x8xf32>, vector<16x8xf32> -> vector<16x8xf32>
    %130 = vector.broadcast %127 : vector<16x1xf32> to vector<16x8xf32>
    %131 = arith.mulf %129, %130 : vector<16x8xf32>
    %132 = vector.extract_strided_slice %107 {offsets = [0, 48], sizes = [16, 16], strides = [1, 1]} : vector<16x64xf32> to vector<16x16xf32>
    %cst_51 = arith.constant dense<0.000000e+00> : vector<16xf32>
    %133 = vector.multi_reduction <add>, %132, %cst_51 [1] : vector<16x16xf32> to vector<16xf32>
    %134 = vector.shape_cast %133 : vector<16xf32> to vector<16x1xf32>
    %135 = tpu.reciprocal %134 {approx = true} : vector<16x1xf32> -> vector<16x1xf32>
    %136 = vector.extract_strided_slice %88 {offsets = [0, 24], sizes = [16, 8], strides = [1, 1]} : vector<16x32xf32> to vector<16x8xf32>
    %cst_52 = arith.constant dense<0.000000e+00> : vector<16x8xf32>
    %137 = tpu.matmul %132, %136, %cst_52 {dimension_numbers = #tpu.dot_dimension_numbers<[1], [0], [0], [1], [0, 0, 1, 1], [], []>} : vector<16x16xf32>, vector<16x8xf32>, vector<16x8xf32> -> vector<16x8xf32>
    %138 = vector.broadcast %135 : vector<16x1xf32> to vector<16x8xf32>
    %139 = arith.mulf %137, %138 : vector<16x8xf32>
    %140 = tpu.concatenate %115, %123, %131, %139 in 1 : vector<16x8xf32>, vector<16x8xf32>, vector<16x8xf32>, vector<16x8xf32> -> vector<16x32xf32>
    %141 = tpu.concatenate %85, %140 in 0 : vector<16x32xf32>, vector<16x32xf32> -> vector<32x32xf32>
    %cst_53 = arith.constant dense<0.000000e+00> : vector<32x32xf32>
    %142 = tpu.matmul %141, %20, %cst_53 {dimension_numbers = #tpu.dot_dimension_numbers<[1], [0], [0], [1], [0, 0, 1, 1], [], []>} : vector<32x32xf32>, vector<32x32xf32>, vector<32x32xf32> -> vector<32x32xf32>
    %143 = vector.broadcast %22 : vector<1x32xf32> to vector<32x32xf32>
    %144 = arith.addf %142, %143 : vector<32x32xf32>
    %145 = arith.addf %4, %144 : vector<32x32xf32>
    %146 = vector.extract_strided_slice %14 {offsets = [0, 0], sizes = [1, 32], strides = [1, 1]} : vector<4x32xf32> to vector<1x32xf32>
    %147 = vector.extract_strided_slice %14 {offsets = [1, 0], sizes = [1, 32], strides = [1, 1]} : vector<4x32xf32> to vector<1x32xf32>
    %cst_54 = arith.constant dense<0.000000e+00> : vector<32xf32>
    %148 = vector.multi_reduction <add>, %145, %cst_54 [1] : vector<32x32xf32> to vector<32xf32>
    %149 = vector.shape_cast %148 : vector<32xf32> to vector<32x1xf32>
    %cst_55 = arith.constant 3.200000e+01 : f32
    %150 = vector.broadcast %cst_55 : f32 to vector<32x1xf32>
    %151 = arith.divf %149, %150 : vector<32x1xf32>
    %152 = vector.broadcast %151 : vector<32x1xf32> to vector<32x32xf32>
    %153 = arith.subf %145, %152 : vector<32x32xf32>
    %154 = arith.mulf %153, %153 : vector<32x32xf32>
    %cst_56 = arith.constant dense<0.000000e+00> : vector<32xf32>
    %155 = vector.multi_reduction <add>, %154, %cst_56 [1] : vector<32x32xf32> to vector<32xf32>
    %156 = vector.shape_cast %155 : vector<32xf32> to vector<32x1xf32>
    %cst_57 = arith.constant 3.200000e+01 : f32
    %157 = vector.broadcast %cst_57 : f32 to vector<32x1xf32>
    %158 = arith.divf %156, %157 : vector<32x1xf32>
    %cst_58 = arith.constant 9.99999974E-6 : f32
    %159 = vector.broadcast %cst_58 : f32 to vector<32x1xf32>
    %160 = arith.addf %158, %159 : vector<32x1xf32>
    %161 = math.rsqrt %160 : vector<32x1xf32>
    %162 = vector.broadcast %161 : vector<32x1xf32> to vector<32x32xf32>
    %163 = arith.mulf %153, %162 : vector<32x32xf32>
    %164 = vector.broadcast %146 : vector<1x32xf32> to vector<32x32xf32>
    %165 = arith.mulf %163, %164 : vector<32x32xf32>
    %166 = vector.broadcast %147 : vector<1x32xf32> to vector<32x32xf32>
    %167 = arith.addf %165, %166 : vector<32x32xf32>
    %c0_59 = arith.constant 0 : index
    %c0_60 = arith.constant 0 : index
    %c0_61 = arith.constant 0 : index
    %168 = vector.load %arg11[%c0_59, %c0_60, %c0_61] : memref<2x32x64xf32, #tpu.memory_space<vmem>>, vector<1x32x64xf32>
    %169 = vector.shape_cast %168 : vector<1x32x64xf32> to vector<32x64xf32>
    %c0_62 = arith.constant 0 : index
    %c0_63 = arith.constant 0 : index
    %c0_64 = arith.constant 0 : index
    %170 = vector.load %arg12[%c0_62, %c0_63, %c0_64] : memref<2x1x64xf32, #tpu.memory_space<vmem>>, vector<1x1x64xf32>
    %171 = vector.shape_cast %170 : vector<1x1x64xf32> to vector<1x64xf32>
    %c0_65 = arith.constant 0 : index
    %c0_66 = arith.constant 0 : index
    %c0_67 = arith.constant 0 : index
    %172 = vector.load %arg13[%c0_65, %c0_66, %c0_67] : memref<2x64x32xf32, #tpu.memory_space<vmem>>, vector<1x64x32xf32>
    %173 = vector.shape_cast %172 : vector<1x64x32xf32> to vector<64x32xf32>
    %c0_68 = arith.constant 0 : index
    %c0_69 = arith.constant 0 : index
    %c0_70 = arith.constant 0 : index
    %174 = vector.load %arg14[%c0_68, %c0_69, %c0_70] : memref<2x1x32xf32, #tpu.memory_space<vmem>>, vector<1x1x32xf32>
    %175 = vector.shape_cast %174 : vector<1x1x32xf32> to vector<1x32xf32>
    %cst_71 = arith.constant dense<0.000000e+00> : vector<32x64xf32>
    %176 = tpu.matmul %167, %169, %cst_71 {dimension_numbers = #tpu.dot_dimension_numbers<[1], [0], [0], [1], [0, 0, 1, 1], [], []>} : vector<32x32xf32>, vector<32x64xf32>, vector<32x64xf32> -> vector<32x64xf32>
    %177 = vector.broadcast %171 : vector<1x64xf32> to vector<32x64xf32>
    %178 = arith.addf %176, %177 : vector<32x64xf32>
    %cst_72 = arith.constant 0.000000e+00 : f32
    %179 = vector.broadcast %cst_72 : f32 to vector<32x64xf32>
    %180 = arith.maximumf %178, %179 : vector<32x64xf32>
    %cst_73 = arith.constant dense<0.000000e+00> : vector<32x32xf32>
    %181 = tpu.matmul %180, %173, %cst_73 {dimension_numbers = #tpu.dot_dimension_numbers<[1], [0], [0], [1], [0, 0, 1, 1], [], []>} : vector<32x64xf32>, vector<64x32xf32>, vector<32x32xf32> -> vector<32x32xf32>
    %182 = vector.broadcast %175 : vector<1x32xf32> to vector<32x32xf32>
    %183 = arith.addf %181, %182 : vector<32x32xf32>
    %184 = arith.addf %167, %183 : vector<32x32xf32>
    %185 = vector.extract_strided_slice %14 {offsets = [2, 0], sizes = [1, 32], strides = [1, 1]} : vector<4x32xf32> to vector<1x32xf32>
    %186 = vector.extract_strided_slice %14 {offsets = [3, 0], sizes = [1, 32], strides = [1, 1]} : vector<4x32xf32> to vector<1x32xf32>
    %cst_74 = arith.constant dense<0.000000e+00> : vector<32xf32>
    %187 = vector.multi_reduction <add>, %184, %cst_74 [1] : vector<32x32xf32> to vector<32xf32>
    %188 = vector.shape_cast %187 : vector<32xf32> to vector<32x1xf32>
    %cst_75 = arith.constant 3.200000e+01 : f32
    %189 = vector.broadcast %cst_75 : f32 to vector<32x1xf32>
    %190 = arith.divf %188, %189 : vector<32x1xf32>
    %191 = vector.broadcast %190 : vector<32x1xf32> to vector<32x32xf32>
    %192 = arith.subf %184, %191 : vector<32x32xf32>
    %193 = arith.mulf %192, %192 : vector<32x32xf32>
    %cst_76 = arith.constant dense<0.000000e+00> : vector<32xf32>
    %194 = vector.multi_reduction <add>, %193, %cst_76 [1] : vector<32x32xf32> to vector<32xf32>
    %195 = vector.shape_cast %194 : vector<32xf32> to vector<32x1xf32>
    %cst_77 = arith.constant 3.200000e+01 : f32
    %196 = vector.broadcast %cst_77 : f32 to vector<32x1xf32>
    %197 = arith.divf %195, %196 : vector<32x1xf32>
    %cst_78 = arith.constant 9.99999974E-6 : f32
    %198 = vector.broadcast %cst_78 : f32 to vector<32x1xf32>
    %199 = arith.addf %197, %198 : vector<32x1xf32>
    %200 = math.rsqrt %199 : vector<32x1xf32>
    %201 = vector.broadcast %200 : vector<32x1xf32> to vector<32x32xf32>
    %202 = arith.mulf %192, %201 : vector<32x32xf32>
    %203 = vector.broadcast %185 : vector<1x32xf32> to vector<32x32xf32>
    %204 = arith.mulf %202, %203 : vector<32x32xf32>
    %205 = vector.broadcast %186 : vector<1x32xf32> to vector<32x32xf32>
    %206 = arith.addf %204, %205 : vector<32x32xf32>
    %c1_79 = arith.constant 1 : index
    %c0_80 = arith.constant 0 : index
    %c0_81 = arith.constant 0 : index
    %207 = vector.load %arg15[%c1_79, %c0_80, %c0_81] : memref<2x4x32xf32, #tpu.memory_space<vmem>>, vector<1x4x32xf32>
    %208 = vector.shape_cast %207 : vector<1x4x32xf32> to vector<4x32xf32>
    %c1_82 = arith.constant 1 : index
    %c0_83 = arith.constant 0 : index
    %c0_84 = arith.constant 0 : index
    %209 = vector.load %arg7[%c1_82, %c0_83, %c0_84] : memref<2x32x96xf32, #tpu.memory_space<vmem>>, vector<1x32x96xf32>
    %210 = vector.shape_cast %209 : vector<1x32x96xf32> to vector<32x96xf32>
    %c1_85 = arith.constant 1 : index
    %c0_86 = arith.constant 0 : index
    %c0_87 = arith.constant 0 : index
    %211 = vector.load %arg8[%c1_85, %c0_86, %c0_87] : memref<2x1x96xf32, #tpu.memory_space<vmem>>, vector<1x1x96xf32>
    %212 = vector.shape_cast %211 : vector<1x1x96xf32> to vector<1x96xf32>
    %c1_88 = arith.constant 1 : index
    %c0_89 = arith.constant 0 : index
    %c0_90 = arith.constant 0 : index
    %213 = vector.load %arg9[%c1_88, %c0_89, %c0_90] : memref<2x32x32xf32, #tpu.memory_space<vmem>>, vector<1x32x32xf32>
    %214 = vector.shape_cast %213 : vector<1x32x32xf32> to vector<32x32xf32>
    %c1_91 = arith.constant 1 : index
    %c0_92 = arith.constant 0 : index
    %c0_93 = arith.constant 0 : index
    %215 = vector.load %arg10[%c1_91, %c0_92, %c0_93] : memref<2x1x32xf32, #tpu.memory_space<vmem>>, vector<1x1x32xf32>
    %216 = vector.shape_cast %215 : vector<1x1x32xf32> to vector<1x32xf32>
    %cst_94 = arith.constant dense<0.000000e+00> : vector<32x96xf32>
    %217 = tpu.matmul %206, %210, %cst_94 {dimension_numbers = #tpu.dot_dimension_numbers<[1], [0], [0], [1], [0, 0, 1, 1], [], []>} : vector<32x32xf32>, vector<32x96xf32>, vector<32x96xf32> -> vector<32x96xf32>
    %218 = vector.broadcast %212 : vector<1x96xf32> to vector<32x96xf32>
    %219 = arith.addf %217, %218 : vector<32x96xf32>
    %220 = vector.extract_strided_slice %219 {offsets = [0, 0], sizes = [32, 32], strides = [1, 1]} : vector<32x96xf32> to vector<32x32xf32>
    %cst_95 = arith.constant 0.353553385 : f32
    %221 = vector.broadcast %cst_95 : f32 to vector<32x32xf32>
    %222 = arith.mulf %220, %221 : vector<32x32xf32>
    %223 = vector.extract_strided_slice %219 {offsets = [0, 32], sizes = [32, 32], strides = [1, 1]} : vector<32x96xf32> to vector<32x32xf32>
    %224 = vector.extract_strided_slice %219 {offsets = [0, 64], sizes = [32, 32], strides = [1, 1]} : vector<32x96xf32> to vector<32x32xf32>
    %225 = vector.extract_strided_slice %222 {offsets = [0, 0], sizes = [16, 32], strides = [1, 1]} : vector<32x32xf32> to vector<16x32xf32>
    %226 = vector.extract_strided_slice %223 {offsets = [0, 0], sizes = [16, 32], strides = [1, 1]} : vector<32x32xf32> to vector<16x32xf32>
    %227 = vector.extract_strided_slice %224 {offsets = [0, 0], sizes = [16, 32], strides = [1, 1]} : vector<32x32xf32> to vector<16x32xf32>
    %228 = vector.extract_strided_slice %225 {offsets = [0, 0], sizes = [16, 8], strides = [1, 1]} : vector<16x32xf32> to vector<16x8xf32>
    %229 = vector.extract_strided_slice %226 {offsets = [0, 0], sizes = [16, 8], strides = [1, 1]} : vector<16x32xf32> to vector<16x8xf32>
    %cst_96 = arith.constant dense<0.000000e+00> : vector<16x16xf32>
    %230 = tpu.matmul %228, %229, %cst_96 {dimension_numbers = #tpu.dot_dimension_numbers<[1], [1], [0], [0], [0, 0, 1, 0], [], []>} : vector<16x8xf32>, vector<16x8xf32>, vector<16x16xf32> -> vector<16x16xf32>
    %231 = vector.extract_strided_slice %225 {offsets = [0, 8], sizes = [16, 8], strides = [1, 1]} : vector<16x32xf32> to vector<16x8xf32>
    %232 = vector.extract_strided_slice %226 {offsets = [0, 8], sizes = [16, 8], strides = [1, 1]} : vector<16x32xf32> to vector<16x8xf32>
    %cst_97 = arith.constant dense<0.000000e+00> : vector<16x16xf32>
    %233 = tpu.matmul %231, %232, %cst_97 {dimension_numbers = #tpu.dot_dimension_numbers<[1], [1], [0], [0], [0, 0, 1, 0], [], []>} : vector<16x8xf32>, vector<16x8xf32>, vector<16x16xf32> -> vector<16x16xf32>
    %234 = vector.extract_strided_slice %225 {offsets = [0, 16], sizes = [16, 8], strides = [1, 1]} : vector<16x32xf32> to vector<16x8xf32>
    %235 = vector.extract_strided_slice %226 {offsets = [0, 16], sizes = [16, 8], strides = [1, 1]} : vector<16x32xf32> to vector<16x8xf32>
    %cst_98 = arith.constant dense<0.000000e+00> : vector<16x16xf32>
    %236 = tpu.matmul %234, %235, %cst_98 {dimension_numbers = #tpu.dot_dimension_numbers<[1], [1], [0], [0], [0, 0, 1, 0], [], []>} : vector<16x8xf32>, vector<16x8xf32>, vector<16x16xf32> -> vector<16x16xf32>
    %237 = vector.extract_strided_slice %225 {offsets = [0, 24], sizes = [16, 8], strides = [1, 1]} : vector<16x32xf32> to vector<16x8xf32>
    %238 = vector.extract_strided_slice %226 {offsets = [0, 24], sizes = [16, 8], strides = [1, 1]} : vector<16x32xf32> to vector<16x8xf32>
    %cst_99 = arith.constant dense<0.000000e+00> : vector<16x16xf32>
    %239 = tpu.matmul %237, %238, %cst_99 {dimension_numbers = #tpu.dot_dimension_numbers<[1], [1], [0], [0], [0, 0, 1, 0], [], []>} : vector<16x8xf32>, vector<16x8xf32>, vector<16x16xf32> -> vector<16x16xf32>
    %240 = tpu.concatenate %230, %233, %236, %239 in 1 : vector<16x16xf32>, vector<16x16xf32>, vector<16x16xf32>, vector<16x16xf32> -> vector<16x64xf32>
    %241 = arith.addf %240, %8 : vector<16x64xf32>
    %cst_100 = arith.constant dense<0xFF800000> : vector<16xf32>
    %242 = vector.multi_reduction <maximumf>, %241, %cst_100 [1] : vector<16x64xf32> to vector<16xf32>
    %243 = vector.shape_cast %242 : vector<16xf32> to vector<16x1xf32>
    %244 = vector.broadcast %243 : vector<16x1xf32> to vector<16x64xf32>
    %245 = arith.subf %241, %244 : vector<16x64xf32>
    %246 = math.exp %245 : vector<16x64xf32>
    %247 = vector.extract_strided_slice %246 {offsets = [0, 0], sizes = [16, 16], strides = [1, 1]} : vector<16x64xf32> to vector<16x16xf32>
    %cst_101 = arith.constant dense<0.000000e+00> : vector<16xf32>
    %248 = vector.multi_reduction <add>, %247, %cst_101 [1] : vector<16x16xf32> to vector<16xf32>
    %249 = vector.shape_cast %248 : vector<16xf32> to vector<16x1xf32>
    %250 = tpu.reciprocal %249 {approx = true} : vector<16x1xf32> -> vector<16x1xf32>
    %251 = vector.extract_strided_slice %227 {offsets = [0, 0], sizes = [16, 8], strides = [1, 1]} : vector<16x32xf32> to vector<16x8xf32>
    %cst_102 = arith.constant dense<0.000000e+00> : vector<16x8xf32>
    %252 = tpu.matmul %247, %251, %cst_102 {dimension_numbers = #tpu.dot_dimension_numbers<[1], [0], [0], [1], [0, 0, 1, 1], [], []>} : vector<16x16xf32>, vector<16x8xf32>, vector<16x8xf32> -> vector<16x8xf32>
    %253 = vector.broadcast %250 : vector<16x1xf32> to vector<16x8xf32>
    %254 = arith.mulf %252, %253 : vector<16x8xf32>
    %255 = vector.extract_strided_slice %246 {offsets = [0, 16], sizes = [16, 16], strides = [1, 1]} : vector<16x64xf32> to vector<16x16xf32>
    %cst_103 = arith.constant dense<0.000000e+00> : vector<16xf32>
    %256 = vector.multi_reduction <add>, %255, %cst_103 [1] : vector<16x16xf32> to vector<16xf32>
    %257 = vector.shape_cast %256 : vector<16xf32> to vector<16x1xf32>
    %258 = tpu.reciprocal %257 {approx = true} : vector<16x1xf32> -> vector<16x1xf32>
    %259 = vector.extract_strided_slice %227 {offsets = [0, 8], sizes = [16, 8], strides = [1, 1]} : vector<16x32xf32> to vector<16x8xf32>
    %cst_104 = arith.constant dense<0.000000e+00> : vector<16x8xf32>
    %260 = tpu.matmul %255, %259, %cst_104 {dimension_numbers = #tpu.dot_dimension_numbers<[1], [0], [0], [1], [0, 0, 1, 1], [], []>} : vector<16x16xf32>, vector<16x8xf32>, vector<16x8xf32> -> vector<16x8xf32>
    %261 = vector.broadcast %258 : vector<16x1xf32> to vector<16x8xf32>
    %262 = arith.mulf %260, %261 : vector<16x8xf32>
    %263 = vector.extract_strided_slice %246 {offsets = [0, 32], sizes = [16, 16], strides = [1, 1]} : vector<16x64xf32> to vector<16x16xf32>
    %cst_105 = arith.constant dense<0.000000e+00> : vector<16xf32>
    %264 = vector.multi_reduction <add>, %263, %cst_105 [1] : vector<16x16xf32> to vector<16xf32>
    %265 = vector.shape_cast %264 : vector<16xf32> to vector<16x1xf32>
    %266 = tpu.reciprocal %265 {approx = true} : vector<16x1xf32> -> vector<16x1xf32>
    %267 = vector.extract_strided_slice %227 {offsets = [0, 16], sizes = [16, 8], strides = [1, 1]} : vector<16x32xf32> to vector<16x8xf32>
    %cst_106 = arith.constant dense<0.000000e+00> : vector<16x8xf32>
    %268 = tpu.matmul %263, %267, %cst_106 {dimension_numbers = #tpu.dot_dimension_numbers<[1], [0], [0], [1], [0, 0, 1, 1], [], []>} : vector<16x16xf32>, vector<16x8xf32>, vector<16x8xf32> -> vector<16x8xf32>
    %269 = vector.broadcast %266 : vector<16x1xf32> to vector<16x8xf32>
    %270 = arith.mulf %268, %269 : vector<16x8xf32>
    %271 = vector.extract_strided_slice %246 {offsets = [0, 48], sizes = [16, 16], strides = [1, 1]} : vector<16x64xf32> to vector<16x16xf32>
    %cst_107 = arith.constant dense<0.000000e+00> : vector<16xf32>
    %272 = vector.multi_reduction <add>, %271, %cst_107 [1] : vector<16x16xf32> to vector<16xf32>
    %273 = vector.shape_cast %272 : vector<16xf32> to vector<16x1xf32>
    %274 = tpu.reciprocal %273 {approx = true} : vector<16x1xf32> -> vector<16x1xf32>
    %275 = vector.extract_strided_slice %227 {offsets = [0, 24], sizes = [16, 8], strides = [1, 1]} : vector<16x32xf32> to vector<16x8xf32>
    %cst_108 = arith.constant dense<0.000000e+00> : vector<16x8xf32>
    %276 = tpu.matmul %271, %275, %cst_108 {dimension_numbers = #tpu.dot_dimension_numbers<[1], [0], [0], [1], [0, 0, 1, 1], [], []>} : vector<16x16xf32>, vector<16x8xf32>, vector<16x8xf32> -> vector<16x8xf32>
    %277 = vector.broadcast %274 : vector<16x1xf32> to vector<16x8xf32>
    %278 = arith.mulf %276, %277 : vector<16x8xf32>
    %279 = tpu.concatenate %254, %262, %270, %278 in 1 : vector<16x8xf32>, vector<16x8xf32>, vector<16x8xf32>, vector<16x8xf32> -> vector<16x32xf32>
    %280 = vector.extract_strided_slice %222 {offsets = [16, 0], sizes = [16, 32], strides = [1, 1]} : vector<32x32xf32> to vector<16x32xf32>
    %281 = vector.extract_strided_slice %223 {offsets = [16, 0], sizes = [16, 32], strides = [1, 1]} : vector<32x32xf32> to vector<16x32xf32>
    %282 = vector.extract_strided_slice %224 {offsets = [16, 0], sizes = [16, 32], strides = [1, 1]} : vector<32x32xf32> to vector<16x32xf32>
    %283 = vector.extract_strided_slice %280 {offsets = [0, 0], sizes = [16, 8], strides = [1, 1]} : vector<16x32xf32> to vector<16x8xf32>
    %284 = vector.extract_strided_slice %281 {offsets = [0, 0], sizes = [16, 8], strides = [1, 1]} : vector<16x32xf32> to vector<16x8xf32>
    %cst_109 = arith.constant dense<0.000000e+00> : vector<16x16xf32>
    %285 = tpu.matmul %283, %284, %cst_109 {dimension_numbers = #tpu.dot_dimension_numbers<[1], [1], [0], [0], [0, 0, 1, 0], [], []>} : vector<16x8xf32>, vector<16x8xf32>, vector<16x16xf32> -> vector<16x16xf32>
    %286 = vector.extract_strided_slice %280 {offsets = [0, 8], sizes = [16, 8], strides = [1, 1]} : vector<16x32xf32> to vector<16x8xf32>
    %287 = vector.extract_strided_slice %281 {offsets = [0, 8], sizes = [16, 8], strides = [1, 1]} : vector<16x32xf32> to vector<16x8xf32>
    %cst_110 = arith.constant dense<0.000000e+00> : vector<16x16xf32>
    %288 = tpu.matmul %286, %287, %cst_110 {dimension_numbers = #tpu.dot_dimension_numbers<[1], [1], [0], [0], [0, 0, 1, 0], [], []>} : vector<16x8xf32>, vector<16x8xf32>, vector<16x16xf32> -> vector<16x16xf32>
    %289 = vector.extract_strided_slice %280 {offsets = [0, 16], sizes = [16, 8], strides = [1, 1]} : vector<16x32xf32> to vector<16x8xf32>
    %290 = vector.extract_strided_slice %281 {offsets = [0, 16], sizes = [16, 8], strides = [1, 1]} : vector<16x32xf32> to vector<16x8xf32>
    %cst_111 = arith.constant dense<0.000000e+00> : vector<16x16xf32>
    %291 = tpu.matmul %289, %290, %cst_111 {dimension_numbers = #tpu.dot_dimension_numbers<[1], [1], [0], [0], [0, 0, 1, 0], [], []>} : vector<16x8xf32>, vector<16x8xf32>, vector<16x16xf32> -> vector<16x16xf32>
    %292 = vector.extract_strided_slice %280 {offsets = [0, 24], sizes = [16, 8], strides = [1, 1]} : vector<16x32xf32> to vector<16x8xf32>
    %293 = vector.extract_strided_slice %281 {offsets = [0, 24], sizes = [16, 8], strides = [1, 1]} : vector<16x32xf32> to vector<16x8xf32>
    %cst_112 = arith.constant dense<0.000000e+00> : vector<16x16xf32>
    %294 = tpu.matmul %292, %293, %cst_112 {dimension_numbers = #tpu.dot_dimension_numbers<[1], [1], [0], [0], [0, 0, 1, 0], [], []>} : vector<16x8xf32>, vector<16x8xf32>, vector<16x16xf32> -> vector<16x16xf32>
    %295 = tpu.concatenate %285, %288, %291, %294 in 1 : vector<16x16xf32>, vector<16x16xf32>, vector<16x16xf32>, vector<16x16xf32> -> vector<16x64xf32>
    %296 = arith.addf %295, %12 : vector<16x64xf32>
    %cst_113 = arith.constant dense<0xFF800000> : vector<16xf32>
    %297 = vector.multi_reduction <maximumf>, %296, %cst_113 [1] : vector<16x64xf32> to vector<16xf32>
    %298 = vector.shape_cast %297 : vector<16xf32> to vector<16x1xf32>
    %299 = vector.broadcast %298 : vector<16x1xf32> to vector<16x64xf32>
    %300 = arith.subf %296, %299 : vector<16x64xf32>
    %301 = math.exp %300 : vector<16x64xf32>
    %302 = vector.extract_strided_slice %301 {offsets = [0, 0], sizes = [16, 16], strides = [1, 1]} : vector<16x64xf32> to vector<16x16xf32>
    %cst_114 = arith.constant dense<0.000000e+00> : vector<16xf32>
    %303 = vector.multi_reduction <add>, %302, %cst_114 [1] : vector<16x16xf32> to vector<16xf32>
    %304 = vector.shape_cast %303 : vector<16xf32> to vector<16x1xf32>
    %305 = tpu.reciprocal %304 {approx = true} : vector<16x1xf32> -> vector<16x1xf32>
    %306 = vector.extract_strided_slice %282 {offsets = [0, 0], sizes = [16, 8], strides = [1, 1]} : vector<16x32xf32> to vector<16x8xf32>
    %cst_115 = arith.constant dense<0.000000e+00> : vector<16x8xf32>
    %307 = tpu.matmul %302, %306, %cst_115 {dimension_numbers = #tpu.dot_dimension_numbers<[1], [0], [0], [1], [0, 0, 1, 1], [], []>} : vector<16x16xf32>, vector<16x8xf32>, vector<16x8xf32> -> vector<16x8xf32>
    %308 = vector.broadcast %305 : vector<16x1xf32> to vector<16x8xf32>
    %309 = arith.mulf %307, %308 : vector<16x8xf32>
    %310 = vector.extract_strided_slice %301 {offsets = [0, 16], sizes = [16, 16], strides = [1, 1]} : vector<16x64xf32> to vector<16x16xf32>
    %cst_116 = arith.constant dense<0.000000e+00> : vector<16xf32>
    %311 = vector.multi_reduction <add>, %310, %cst_116 [1] : vector<16x16xf32> to vector<16xf32>
    %312 = vector.shape_cast %311 : vector<16xf32> to vector<16x1xf32>
    %313 = tpu.reciprocal %312 {approx = true} : vector<16x1xf32> -> vector<16x1xf32>
    %314 = vector.extract_strided_slice %282 {offsets = [0, 8], sizes = [16, 8], strides = [1, 1]} : vector<16x32xf32> to vector<16x8xf32>
    %cst_117 = arith.constant dense<0.000000e+00> : vector<16x8xf32>
    %315 = tpu.matmul %310, %314, %cst_117 {dimension_numbers = #tpu.dot_dimension_numbers<[1], [0], [0], [1], [0, 0, 1, 1], [], []>} : vector<16x16xf32>, vector<16x8xf32>, vector<16x8xf32> -> vector<16x8xf32>
    %316 = vector.broadcast %313 : vector<16x1xf32> to vector<16x8xf32>
    %317 = arith.mulf %315, %316 : vector<16x8xf32>
    %318 = vector.extract_strided_slice %301 {offsets = [0, 32], sizes = [16, 16], strides = [1, 1]} : vector<16x64xf32> to vector<16x16xf32>
    %cst_118 = arith.constant dense<0.000000e+00> : vector<16xf32>
    %319 = vector.multi_reduction <add>, %318, %cst_118 [1] : vector<16x16xf32> to vector<16xf32>
    %320 = vector.shape_cast %319 : vector<16xf32> to vector<16x1xf32>
    %321 = tpu.reciprocal %320 {approx = true} : vector<16x1xf32> -> vector<16x1xf32>
    %322 = vector.extract_strided_slice %282 {offsets = [0, 16], sizes = [16, 8], strides = [1, 1]} : vector<16x32xf32> to vector<16x8xf32>
    %cst_119 = arith.constant dense<0.000000e+00> : vector<16x8xf32>
    %323 = tpu.matmul %318, %322, %cst_119 {dimension_numbers = #tpu.dot_dimension_numbers<[1], [0], [0], [1], [0, 0, 1, 1], [], []>} : vector<16x16xf32>, vector<16x8xf32>, vector<16x8xf32> -> vector<16x8xf32>
    %324 = vector.broadcast %321 : vector<16x1xf32> to vector<16x8xf32>
    %325 = arith.mulf %323, %324 : vector<16x8xf32>
    %326 = vector.extract_strided_slice %301 {offsets = [0, 48], sizes = [16, 16], strides = [1, 1]} : vector<16x64xf32> to vector<16x16xf32>
    %cst_120 = arith.constant dense<0.000000e+00> : vector<16xf32>
    %327 = vector.multi_reduction <add>, %326, %cst_120 [1] : vector<16x16xf32> to vector<16xf32>
    %328 = vector.shape_cast %327 : vector<16xf32> to vector<16x1xf32>
    %329 = tpu.reciprocal %328 {approx = true} : vector<16x1xf32> -> vector<16x1xf32>
    %330 = vector.extract_strided_slice %282 {offsets = [0, 24], sizes = [16, 8], strides = [1, 1]} : vector<16x32xf32> to vector<16x8xf32>
    %cst_121 = arith.constant dense<0.000000e+00> : vector<16x8xf32>
    %331 = tpu.matmul %326, %330, %cst_121 {dimension_numbers = #tpu.dot_dimension_numbers<[1], [0], [0], [1], [0, 0, 1, 1], [], []>} : vector<16x16xf32>, vector<16x8xf32>, vector<16x8xf32> -> vector<16x8xf32>
    %332 = vector.broadcast %329 : vector<16x1xf32> to vector<16x8xf32>
    %333 = arith.mulf %331, %332 : vector<16x8xf32>
    %334 = tpu.concatenate %309, %317, %325, %333 in 1 : vector<16x8xf32>, vector<16x8xf32>, vector<16x8xf32>, vector<16x8xf32> -> vector<16x32xf32>
    %335 = tpu.concatenate %279, %334 in 0 : vector<16x32xf32>, vector<16x32xf32> -> vector<32x32xf32>
    %cst_122 = arith.constant dense<0.000000e+00> : vector<32x32xf32>
    %336 = tpu.matmul %335, %214, %cst_122 {dimension_numbers = #tpu.dot_dimension_numbers<[1], [0], [0], [1], [0, 0, 1, 1], [], []>} : vector<32x32xf32>, vector<32x32xf32>, vector<32x32xf32> -> vector<32x32xf32>
    %337 = vector.broadcast %216 : vector<1x32xf32> to vector<32x32xf32>
    %338 = arith.addf %336, %337 : vector<32x32xf32>
    %339 = arith.addf %206, %338 : vector<32x32xf32>
    %340 = vector.extract_strided_slice %208 {offsets = [0, 0], sizes = [1, 32], strides = [1, 1]} : vector<4x32xf32> to vector<1x32xf32>
    %341 = vector.extract_strided_slice %208 {offsets = [1, 0], sizes = [1, 32], strides = [1, 1]} : vector<4x32xf32> to vector<1x32xf32>
    %cst_123 = arith.constant dense<0.000000e+00> : vector<32xf32>
    %342 = vector.multi_reduction <add>, %339, %cst_123 [1] : vector<32x32xf32> to vector<32xf32>
    %343 = vector.shape_cast %342 : vector<32xf32> to vector<32x1xf32>
    %cst_124 = arith.constant 3.200000e+01 : f32
    %344 = vector.broadcast %cst_124 : f32 to vector<32x1xf32>
    %345 = arith.divf %343, %344 : vector<32x1xf32>
    %346 = vector.broadcast %345 : vector<32x1xf32> to vector<32x32xf32>
    %347 = arith.subf %339, %346 : vector<32x32xf32>
    %348 = arith.mulf %347, %347 : vector<32x32xf32>
    %cst_125 = arith.constant dense<0.000000e+00> : vector<32xf32>
    %349 = vector.multi_reduction <add>, %348, %cst_125 [1] : vector<32x32xf32> to vector<32xf32>
    %350 = vector.shape_cast %349 : vector<32xf32> to vector<32x1xf32>
    %cst_126 = arith.constant 3.200000e+01 : f32
    %351 = vector.broadcast %cst_126 : f32 to vector<32x1xf32>
    %352 = arith.divf %350, %351 : vector<32x1xf32>
    %cst_127 = arith.constant 9.99999974E-6 : f32
    %353 = vector.broadcast %cst_127 : f32 to vector<32x1xf32>
    %354 = arith.addf %352, %353 : vector<32x1xf32>
    %355 = math.rsqrt %354 : vector<32x1xf32>
    %356 = vector.broadcast %355 : vector<32x1xf32> to vector<32x32xf32>
    %357 = arith.mulf %347, %356 : vector<32x32xf32>
    %358 = vector.broadcast %340 : vector<1x32xf32> to vector<32x32xf32>
    %359 = arith.mulf %357, %358 : vector<32x32xf32>
    %360 = vector.broadcast %341 : vector<1x32xf32> to vector<32x32xf32>
    %361 = arith.addf %359, %360 : vector<32x32xf32>
    %c1_128 = arith.constant 1 : index
    %c0_129 = arith.constant 0 : index
    %c0_130 = arith.constant 0 : index
    %362 = vector.load %arg11[%c1_128, %c0_129, %c0_130] : memref<2x32x64xf32, #tpu.memory_space<vmem>>, vector<1x32x64xf32>
    %363 = vector.shape_cast %362 : vector<1x32x64xf32> to vector<32x64xf32>
    %c1_131 = arith.constant 1 : index
    %c0_132 = arith.constant 0 : index
    %c0_133 = arith.constant 0 : index
    %364 = vector.load %arg12[%c1_131, %c0_132, %c0_133] : memref<2x1x64xf32, #tpu.memory_space<vmem>>, vector<1x1x64xf32>
    %365 = vector.shape_cast %364 : vector<1x1x64xf32> to vector<1x64xf32>
    %c1_134 = arith.constant 1 : index
    %c0_135 = arith.constant 0 : index
    %c0_136 = arith.constant 0 : index
    %366 = vector.load %arg13[%c1_134, %c0_135, %c0_136] : memref<2x64x32xf32, #tpu.memory_space<vmem>>, vector<1x64x32xf32>
    %367 = vector.shape_cast %366 : vector<1x64x32xf32> to vector<64x32xf32>
    %c1_137 = arith.constant 1 : index
    %c0_138 = arith.constant 0 : index
    %c0_139 = arith.constant 0 : index
    %368 = vector.load %arg14[%c1_137, %c0_138, %c0_139] : memref<2x1x32xf32, #tpu.memory_space<vmem>>, vector<1x1x32xf32>
    %369 = vector.shape_cast %368 : vector<1x1x32xf32> to vector<1x32xf32>
    %cst_140 = arith.constant dense<0.000000e+00> : vector<32x64xf32>
    %370 = tpu.matmul %361, %363, %cst_140 {dimension_numbers = #tpu.dot_dimension_numbers<[1], [0], [0], [1], [0, 0, 1, 1], [], []>} : vector<32x32xf32>, vector<32x64xf32>, vector<32x64xf32> -> vector<32x64xf32>
    %371 = vector.broadcast %365 : vector<1x64xf32> to vector<32x64xf32>
    %372 = arith.addf %370, %371 : vector<32x64xf32>
    %cst_141 = arith.constant 0.000000e+00 : f32
    %373 = vector.broadcast %cst_141 : f32 to vector<32x64xf32>
    %374 = arith.maximumf %372, %373 : vector<32x64xf32>
    %cst_142 = arith.constant dense<0.000000e+00> : vector<32x32xf32>
    %375 = tpu.matmul %374, %367, %cst_142 {dimension_numbers = #tpu.dot_dimension_numbers<[1], [0], [0], [1], [0, 0, 1, 1], [], []>} : vector<32x64xf32>, vector<64x32xf32>, vector<32x32xf32> -> vector<32x32xf32>
    %376 = vector.broadcast %369 : vector<1x32xf32> to vector<32x32xf32>
    %377 = arith.addf %375, %376 : vector<32x32xf32>
    %378 = arith.addf %361, %377 : vector<32x32xf32>
    %379 = vector.extract_strided_slice %208 {offsets = [2, 0], sizes = [1, 32], strides = [1, 1]} : vector<4x32xf32> to vector<1x32xf32>
    %380 = vector.extract_strided_slice %208 {offsets = [3, 0], sizes = [1, 32], strides = [1, 1]} : vector<4x32xf32> to vector<1x32xf32>
    %cst_143 = arith.constant dense<0.000000e+00> : vector<32xf32>
    %381 = vector.multi_reduction <add>, %378, %cst_143 [1] : vector<32x32xf32> to vector<32xf32>
    %382 = vector.shape_cast %381 : vector<32xf32> to vector<32x1xf32>
    %cst_144 = arith.constant 3.200000e+01 : f32
    %383 = vector.broadcast %cst_144 : f32 to vector<32x1xf32>
    %384 = arith.divf %382, %383 : vector<32x1xf32>
    %385 = vector.broadcast %384 : vector<32x1xf32> to vector<32x32xf32>
    %386 = arith.subf %378, %385 : vector<32x32xf32>
    %387 = arith.mulf %386, %386 : vector<32x32xf32>
    %cst_145 = arith.constant dense<0.000000e+00> : vector<32xf32>
    %388 = vector.multi_reduction <add>, %387, %cst_145 [1] : vector<32x32xf32> to vector<32xf32>
    %389 = vector.shape_cast %388 : vector<32xf32> to vector<32x1xf32>
    %cst_146 = arith.constant 3.200000e+01 : f32
    %390 = vector.broadcast %cst_146 : f32 to vector<32x1xf32>
    %391 = arith.divf %389, %390 : vector<32x1xf32>
    %cst_147 = arith.constant 9.99999974E-6 : f32
    %392 = vector.broadcast %cst_147 : f32 to vector<32x1xf32>
    %393 = arith.addf %391, %392 : vector<32x1xf32>
    %394 = math.rsqrt %393 : vector<32x1xf32>
    %395 = vector.broadcast %394 : vector<32x1xf32> to vector<32x32xf32>
    %396 = arith.mulf %386, %395 : vector<32x32xf32>
    %397 = vector.broadcast %379 : vector<1x32xf32> to vector<32x32xf32>
    %398 = arith.mulf %396, %397 : vector<32x32xf32>
    %399 = vector.broadcast %380 : vector<1x32xf32> to vector<32x32xf32>
    %400 = arith.addf %398, %399 : vector<32x32xf32>
    %401 = vector.extract_strided_slice %400 {offsets = [0, 0], sizes = [1, 32], strides = [1, 1]} : vector<32x32xf32> to vector<1x32xf32>
    %402 = vector.extract_strided_slice %400 {offsets = [16, 0], sizes = [1, 32], strides = [1, 1]} : vector<32x32xf32> to vector<1x32xf32>
    %403 = tpu.concatenate %401, %402 in 0 : vector<1x32xf32>, vector<1x32xf32> -> vector<2x32xf32>
    %c0_148 = arith.constant 0 : index
    %c0_149 = arith.constant 0 : index
    %404 = vector.load %arg3[%c0_148, %c0_149] : memref<16x32xf32, #tpu.memory_space<vmem>>, vector<16x32xf32>
    %c0_150 = arith.constant 0 : index
    %c0_151 = arith.constant 0 : index
    %c0_152 = arith.constant 0 : index
    %405 = vector.load %arg5[%c0_150, %c0_151, %c0_152] : memref<2x1x32xf32, #tpu.memory_space<vmem>>, vector<1x1x32xf32>
    %406 = vector.shape_cast %405 : vector<1x1x32xf32> to vector<1x32xf32>
    %407 = vector.shape_cast %406 : vector<1x32xf32> to vector<1x32xf32>
    %408 = vector.broadcast %407 : vector<1x32xf32> to vector<8x32xf32>
    %c1_153 = arith.constant 1 : index
    %c0_154 = arith.constant 0 : index
    %c0_155 = arith.constant 0 : index
    %409 = vector.load %arg5[%c1_153, %c0_154, %c0_155] : memref<2x1x32xf32, #tpu.memory_space<vmem>>, vector<1x1x32xf32>
    %410 = vector.shape_cast %409 : vector<1x1x32xf32> to vector<1x32xf32>
    %411 = vector.shape_cast %410 : vector<1x32xf32> to vector<1x32xf32>
    %412 = vector.broadcast %411 : vector<1x32xf32> to vector<8x32xf32>
    %c0_156 = arith.constant 0 : index
    %c0_157 = arith.constant 0 : index
    %c0_158 = arith.constant 0 : index
    %413 = vector.load %arg26[%c0_156, %c0_157, %c0_158] : memref<2x6x32xf32, #tpu.memory_space<vmem>>, vector<1x6x32xf32>
    %414 = vector.shape_cast %413 : vector<1x6x32xf32> to vector<6x32xf32>
    %c0_159 = arith.constant 0 : index
    %c0_160 = arith.constant 0 : index
    %c0_161 = arith.constant 0 : index
    %415 = vector.load %arg16[%c0_159, %c0_160, %c0_161] : memref<2x32x96xf32, #tpu.memory_space<vmem>>, vector<1x32x96xf32>
    %416 = vector.shape_cast %415 : vector<1x32x96xf32> to vector<32x96xf32>
    %c0_162 = arith.constant 0 : index
    %c0_163 = arith.constant 0 : index
    %c0_164 = arith.constant 0 : index
    %417 = vector.load %arg17[%c0_162, %c0_163, %c0_164] : memref<2x1x96xf32, #tpu.memory_space<vmem>>, vector<1x1x96xf32>
    %418 = vector.shape_cast %417 : vector<1x1x96xf32> to vector<1x96xf32>
    %c0_165 = arith.constant 0 : index
    %c0_166 = arith.constant 0 : index
    %c0_167 = arith.constant 0 : index
    %419 = vector.load %arg18[%c0_165, %c0_166, %c0_167] : memref<2x32x32xf32, #tpu.memory_space<vmem>>, vector<1x32x32xf32>
    %420 = vector.shape_cast %419 : vector<1x32x32xf32> to vector<32x32xf32>
    %c0_168 = arith.constant 0 : index
    %c0_169 = arith.constant 0 : index
    %c0_170 = arith.constant 0 : index
    %421 = vector.load %arg19[%c0_168, %c0_169, %c0_170] : memref<2x1x32xf32, #tpu.memory_space<vmem>>, vector<1x1x32xf32>
    %422 = vector.shape_cast %421 : vector<1x1x32xf32> to vector<1x32xf32>
    %cst_171 = arith.constant dense<0.000000e+00> : vector<16x96xf32>
    %423 = tpu.matmul %404, %416, %cst_171 {dimension_numbers = #tpu.dot_dimension_numbers<[1], [0], [0], [1], [0, 0, 1, 1], [], []>} : vector<16x32xf32>, vector<32x96xf32>, vector<16x96xf32> -> vector<16x96xf32>
    %424 = vector.broadcast %418 : vector<1x96xf32> to vector<16x96xf32>
    %425 = arith.addf %423, %424 : vector<16x96xf32>
    %426 = vector.extract_strided_slice %425 {offsets = [0, 0], sizes = [16, 32], strides = [1, 1]} : vector<16x96xf32> to vector<16x32xf32>
    %cst_172 = arith.constant 0.353553385 : f32
    %427 = vector.broadcast %cst_172 : f32 to vector<16x32xf32>
    %428 = arith.mulf %426, %427 : vector<16x32xf32>
    %429 = vector.extract_strided_slice %425 {offsets = [0, 32], sizes = [16, 32], strides = [1, 1]} : vector<16x96xf32> to vector<16x32xf32>
    %430 = vector.extract_strided_slice %425 {offsets = [0, 64], sizes = [16, 32], strides = [1, 1]} : vector<16x96xf32> to vector<16x32xf32>
    %431 = vector.extract_strided_slice %428 {offsets = [0, 0], sizes = [8, 32], strides = [1, 1]} : vector<16x32xf32> to vector<8x32xf32>
    %432 = vector.extract_strided_slice %429 {offsets = [0, 0], sizes = [8, 32], strides = [1, 1]} : vector<16x32xf32> to vector<8x32xf32>
    %433 = vector.extract_strided_slice %430 {offsets = [0, 0], sizes = [8, 32], strides = [1, 1]} : vector<16x32xf32> to vector<8x32xf32>
    %434 = vector.extract_strided_slice %431 {offsets = [0, 0], sizes = [8, 8], strides = [1, 1]} : vector<8x32xf32> to vector<8x8xf32>
    %435 = vector.extract_strided_slice %432 {offsets = [0, 0], sizes = [8, 8], strides = [1, 1]} : vector<8x32xf32> to vector<8x8xf32>
    %cst_173 = arith.constant dense<0.000000e+00> : vector<8x8xf32>
    %436 = tpu.matmul %434, %435, %cst_173 {dimension_numbers = #tpu.dot_dimension_numbers<[1], [1], [0], [0], [0, 0, 1, 0], [], []>} : vector<8x8xf32>, vector<8x8xf32>, vector<8x8xf32> -> vector<8x8xf32>
    %437 = vector.extract_strided_slice %431 {offsets = [0, 8], sizes = [8, 8], strides = [1, 1]} : vector<8x32xf32> to vector<8x8xf32>
    %438 = vector.extract_strided_slice %432 {offsets = [0, 8], sizes = [8, 8], strides = [1, 1]} : vector<8x32xf32> to vector<8x8xf32>
    %cst_174 = arith.constant dense<0.000000e+00> : vector<8x8xf32>
    %439 = tpu.matmul %437, %438, %cst_174 {dimension_numbers = #tpu.dot_dimension_numbers<[1], [1], [0], [0], [0, 0, 1, 0], [], []>} : vector<8x8xf32>, vector<8x8xf32>, vector<8x8xf32> -> vector<8x8xf32>
    %440 = vector.extract_strided_slice %431 {offsets = [0, 16], sizes = [8, 8], strides = [1, 1]} : vector<8x32xf32> to vector<8x8xf32>
    %441 = vector.extract_strided_slice %432 {offsets = [0, 16], sizes = [8, 8], strides = [1, 1]} : vector<8x32xf32> to vector<8x8xf32>
    %cst_175 = arith.constant dense<0.000000e+00> : vector<8x8xf32>
    %442 = tpu.matmul %440, %441, %cst_175 {dimension_numbers = #tpu.dot_dimension_numbers<[1], [1], [0], [0], [0, 0, 1, 0], [], []>} : vector<8x8xf32>, vector<8x8xf32>, vector<8x8xf32> -> vector<8x8xf32>
    %443 = vector.extract_strided_slice %431 {offsets = [0, 24], sizes = [8, 8], strides = [1, 1]} : vector<8x32xf32> to vector<8x8xf32>
    %444 = vector.extract_strided_slice %432 {offsets = [0, 24], sizes = [8, 8], strides = [1, 1]} : vector<8x32xf32> to vector<8x8xf32>
    %cst_176 = arith.constant dense<0.000000e+00> : vector<8x8xf32>
    %445 = tpu.matmul %443, %444, %cst_176 {dimension_numbers = #tpu.dot_dimension_numbers<[1], [1], [0], [0], [0, 0, 1, 0], [], []>} : vector<8x8xf32>, vector<8x8xf32>, vector<8x8xf32> -> vector<8x8xf32>
    %446 = tpu.concatenate %436, %439, %442, %445 in 1 : vector<8x8xf32>, vector<8x8xf32>, vector<8x8xf32>, vector<8x8xf32> -> vector<8x32xf32>
    %447 = arith.addf %446, %408 : vector<8x32xf32>
    %cst_177 = arith.constant dense<0xFF800000> : vector<8xf32>
    %448 = vector.multi_reduction <maximumf>, %447, %cst_177 [1] : vector<8x32xf32> to vector<8xf32>
    %449 = vector.shape_cast %448 : vector<8xf32> to vector<8x1xf32>
    %450 = vector.broadcast %449 : vector<8x1xf32> to vector<8x32xf32>
    %451 = arith.subf %447, %450 : vector<8x32xf32>
    %452 = math.exp %451 : vector<8x32xf32>
    %453 = vector.extract_strided_slice %452 {offsets = [0, 0], sizes = [8, 8], strides = [1, 1]} : vector<8x32xf32> to vector<8x8xf32>
    %cst_178 = arith.constant dense<0.000000e+00> : vector<8xf32>
    %454 = vector.multi_reduction <add>, %453, %cst_178 [1] : vector<8x8xf32> to vector<8xf32>
    %455 = vector.shape_cast %454 : vector<8xf32> to vector<8x1xf32>
    %456 = tpu.reciprocal %455 {approx = true} : vector<8x1xf32> -> vector<8x1xf32>
    %457 = vector.extract_strided_slice %433 {offsets = [0, 0], sizes = [8, 8], strides = [1, 1]} : vector<8x32xf32> to vector<8x8xf32>
    %cst_179 = arith.constant dense<0.000000e+00> : vector<8x8xf32>
    %458 = tpu.matmul %453, %457, %cst_179 {dimension_numbers = #tpu.dot_dimension_numbers<[1], [0], [0], [1], [0, 0, 1, 1], [], []>} : vector<8x8xf32>, vector<8x8xf32>, vector<8x8xf32> -> vector<8x8xf32>
    %459 = vector.broadcast %456 : vector<8x1xf32> to vector<8x8xf32>
    %460 = arith.mulf %458, %459 : vector<8x8xf32>
    %461 = vector.extract_strided_slice %452 {offsets = [0, 8], sizes = [8, 8], strides = [1, 1]} : vector<8x32xf32> to vector<8x8xf32>
    %cst_180 = arith.constant dense<0.000000e+00> : vector<8xf32>
    %462 = vector.multi_reduction <add>, %461, %cst_180 [1] : vector<8x8xf32> to vector<8xf32>
    %463 = vector.shape_cast %462 : vector<8xf32> to vector<8x1xf32>
    %464 = tpu.reciprocal %463 {approx = true} : vector<8x1xf32> -> vector<8x1xf32>
    %465 = vector.extract_strided_slice %433 {offsets = [0, 8], sizes = [8, 8], strides = [1, 1]} : vector<8x32xf32> to vector<8x8xf32>
    %cst_181 = arith.constant dense<0.000000e+00> : vector<8x8xf32>
    %466 = tpu.matmul %461, %465, %cst_181 {dimension_numbers = #tpu.dot_dimension_numbers<[1], [0], [0], [1], [0, 0, 1, 1], [], []>} : vector<8x8xf32>, vector<8x8xf32>, vector<8x8xf32> -> vector<8x8xf32>
    %467 = vector.broadcast %464 : vector<8x1xf32> to vector<8x8xf32>
    %468 = arith.mulf %466, %467 : vector<8x8xf32>
    %469 = vector.extract_strided_slice %452 {offsets = [0, 16], sizes = [8, 8], strides = [1, 1]} : vector<8x32xf32> to vector<8x8xf32>
    %cst_182 = arith.constant dense<0.000000e+00> : vector<8xf32>
    %470 = vector.multi_reduction <add>, %469, %cst_182 [1] : vector<8x8xf32> to vector<8xf32>
    %471 = vector.shape_cast %470 : vector<8xf32> to vector<8x1xf32>
    %472 = tpu.reciprocal %471 {approx = true} : vector<8x1xf32> -> vector<8x1xf32>
    %473 = vector.extract_strided_slice %433 {offsets = [0, 16], sizes = [8, 8], strides = [1, 1]} : vector<8x32xf32> to vector<8x8xf32>
    %cst_183 = arith.constant dense<0.000000e+00> : vector<8x8xf32>
    %474 = tpu.matmul %469, %473, %cst_183 {dimension_numbers = #tpu.dot_dimension_numbers<[1], [0], [0], [1], [0, 0, 1, 1], [], []>} : vector<8x8xf32>, vector<8x8xf32>, vector<8x8xf32> -> vector<8x8xf32>
    %475 = vector.broadcast %472 : vector<8x1xf32> to vector<8x8xf32>
    %476 = arith.mulf %474, %475 : vector<8x8xf32>
    %477 = vector.extract_strided_slice %452 {offsets = [0, 24], sizes = [8, 8], strides = [1, 1]} : vector<8x32xf32> to vector<8x8xf32>
    %cst_184 = arith.constant dense<0.000000e+00> : vector<8xf32>
    %478 = vector.multi_reduction <add>, %477, %cst_184 [1] : vector<8x8xf32> to vector<8xf32>
    %479 = vector.shape_cast %478 : vector<8xf32> to vector<8x1xf32>
    %480 = tpu.reciprocal %479 {approx = true} : vector<8x1xf32> -> vector<8x1xf32>
    %481 = vector.extract_strided_slice %433 {offsets = [0, 24], sizes = [8, 8], strides = [1, 1]} : vector<8x32xf32> to vector<8x8xf32>
    %cst_185 = arith.constant dense<0.000000e+00> : vector<8x8xf32>
    %482 = tpu.matmul %477, %481, %cst_185 {dimension_numbers = #tpu.dot_dimension_numbers<[1], [0], [0], [1], [0, 0, 1, 1], [], []>} : vector<8x8xf32>, vector<8x8xf32>, vector<8x8xf32> -> vector<8x8xf32>
    %483 = vector.broadcast %480 : vector<8x1xf32> to vector<8x8xf32>
    %484 = arith.mulf %482, %483 : vector<8x8xf32>
    %485 = tpu.concatenate %460, %468, %476, %484 in 1 : vector<8x8xf32>, vector<8x8xf32>, vector<8x8xf32>, vector<8x8xf32> -> vector<8x32xf32>
    %486 = vector.extract_strided_slice %428 {offsets = [8, 0], sizes = [8, 32], strides = [1, 1]} : vector<16x32xf32> to vector<8x32xf32>
    %487 = vector.extract_strided_slice %429 {offsets = [8, 0], sizes = [8, 32], strides = [1, 1]} : vector<16x32xf32> to vector<8x32xf32>
    %488 = vector.extract_strided_slice %430 {offsets = [8, 0], sizes = [8, 32], strides = [1, 1]} : vector<16x32xf32> to vector<8x32xf32>
    %489 = vector.extract_strided_slice %486 {offsets = [0, 0], sizes = [8, 8], strides = [1, 1]} : vector<8x32xf32> to vector<8x8xf32>
    %490 = vector.extract_strided_slice %487 {offsets = [0, 0], sizes = [8, 8], strides = [1, 1]} : vector<8x32xf32> to vector<8x8xf32>
    %cst_186 = arith.constant dense<0.000000e+00> : vector<8x8xf32>
    %491 = tpu.matmul %489, %490, %cst_186 {dimension_numbers = #tpu.dot_dimension_numbers<[1], [1], [0], [0], [0, 0, 1, 0], [], []>} : vector<8x8xf32>, vector<8x8xf32>, vector<8x8xf32> -> vector<8x8xf32>
    %492 = vector.extract_strided_slice %486 {offsets = [0, 8], sizes = [8, 8], strides = [1, 1]} : vector<8x32xf32> to vector<8x8xf32>
    %493 = vector.extract_strided_slice %487 {offsets = [0, 8], sizes = [8, 8], strides = [1, 1]} : vector<8x32xf32> to vector<8x8xf32>
    %cst_187 = arith.constant dense<0.000000e+00> : vector<8x8xf32>
    %494 = tpu.matmul %492, %493, %cst_187 {dimension_numbers = #tpu.dot_dimension_numbers<[1], [1], [0], [0], [0, 0, 1, 0], [], []>} : vector<8x8xf32>, vector<8x8xf32>, vector<8x8xf32> -> vector<8x8xf32>
    %495 = vector.extract_strided_slice %486 {offsets = [0, 16], sizes = [8, 8], strides = [1, 1]} : vector<8x32xf32> to vector<8x8xf32>
    %496 = vector.extract_strided_slice %487 {offsets = [0, 16], sizes = [8, 8], strides = [1, 1]} : vector<8x32xf32> to vector<8x8xf32>
    %cst_188 = arith.constant dense<0.000000e+00> : vector<8x8xf32>
    %497 = tpu.matmul %495, %496, %cst_188 {dimension_numbers = #tpu.dot_dimension_numbers<[1], [1], [0], [0], [0, 0, 1, 0], [], []>} : vector<8x8xf32>, vector<8x8xf32>, vector<8x8xf32> -> vector<8x8xf32>
    %498 = vector.extract_strided_slice %486 {offsets = [0, 24], sizes = [8, 8], strides = [1, 1]} : vector<8x32xf32> to vector<8x8xf32>
    %499 = vector.extract_strided_slice %487 {offsets = [0, 24], sizes = [8, 8], strides = [1, 1]} : vector<8x32xf32> to vector<8x8xf32>
    %cst_189 = arith.constant dense<0.000000e+00> : vector<8x8xf32>
    %500 = tpu.matmul %498, %499, %cst_189 {dimension_numbers = #tpu.dot_dimension_numbers<[1], [1], [0], [0], [0, 0, 1, 0], [], []>} : vector<8x8xf32>, vector<8x8xf32>, vector<8x8xf32> -> vector<8x8xf32>
    %501 = tpu.concatenate %491, %494, %497, %500 in 1 : vector<8x8xf32>, vector<8x8xf32>, vector<8x8xf32>, vector<8x8xf32> -> vector<8x32xf32>
    %502 = arith.addf %501, %412 : vector<8x32xf32>
    %cst_190 = arith.constant dense<0xFF800000> : vector<8xf32>
    %503 = vector.multi_reduction <maximumf>, %502, %cst_190 [1] : vector<8x32xf32> to vector<8xf32>
    %504 = vector.shape_cast %503 : vector<8xf32> to vector<8x1xf32>
    %505 = vector.broadcast %504 : vector<8x1xf32> to vector<8x32xf32>
    %506 = arith.subf %502, %505 : vector<8x32xf32>
    %507 = math.exp %506 : vector<8x32xf32>
    %508 = vector.extract_strided_slice %507 {offsets = [0, 0], sizes = [8, 8], strides = [1, 1]} : vector<8x32xf32> to vector<8x8xf32>
    %cst_191 = arith.constant dense<0.000000e+00> : vector<8xf32>
    %509 = vector.multi_reduction <add>, %508, %cst_191 [1] : vector<8x8xf32> to vector<8xf32>
    %510 = vector.shape_cast %509 : vector<8xf32> to vector<8x1xf32>
    %511 = tpu.reciprocal %510 {approx = true} : vector<8x1xf32> -> vector<8x1xf32>
    %512 = vector.extract_strided_slice %488 {offsets = [0, 0], sizes = [8, 8], strides = [1, 1]} : vector<8x32xf32> to vector<8x8xf32>
    %cst_192 = arith.constant dense<0.000000e+00> : vector<8x8xf32>
    %513 = tpu.matmul %508, %512, %cst_192 {dimension_numbers = #tpu.dot_dimension_numbers<[1], [0], [0], [1], [0, 0, 1, 1], [], []>} : vector<8x8xf32>, vector<8x8xf32>, vector<8x8xf32> -> vector<8x8xf32>
    %514 = vector.broadcast %511 : vector<8x1xf32> to vector<8x8xf32>
    %515 = arith.mulf %513, %514 : vector<8x8xf32>
    %516 = vector.extract_strided_slice %507 {offsets = [0, 8], sizes = [8, 8], strides = [1, 1]} : vector<8x32xf32> to vector<8x8xf32>
    %cst_193 = arith.constant dense<0.000000e+00> : vector<8xf32>
    %517 = vector.multi_reduction <add>, %516, %cst_193 [1] : vector<8x8xf32> to vector<8xf32>
    %518 = vector.shape_cast %517 : vector<8xf32> to vector<8x1xf32>
    %519 = tpu.reciprocal %518 {approx = true} : vector<8x1xf32> -> vector<8x1xf32>
    %520 = vector.extract_strided_slice %488 {offsets = [0, 8], sizes = [8, 8], strides = [1, 1]} : vector<8x32xf32> to vector<8x8xf32>
    %cst_194 = arith.constant dense<0.000000e+00> : vector<8x8xf32>
    %521 = tpu.matmul %516, %520, %cst_194 {dimension_numbers = #tpu.dot_dimension_numbers<[1], [0], [0], [1], [0, 0, 1, 1], [], []>} : vector<8x8xf32>, vector<8x8xf32>, vector<8x8xf32> -> vector<8x8xf32>
    %522 = vector.broadcast %519 : vector<8x1xf32> to vector<8x8xf32>
    %523 = arith.mulf %521, %522 : vector<8x8xf32>
    %524 = vector.extract_strided_slice %507 {offsets = [0, 16], sizes = [8, 8], strides = [1, 1]} : vector<8x32xf32> to vector<8x8xf32>
    %cst_195 = arith.constant dense<0.000000e+00> : vector<8xf32>
    %525 = vector.multi_reduction <add>, %524, %cst_195 [1] : vector<8x8xf32> to vector<8xf32>
    %526 = vector.shape_cast %525 : vector<8xf32> to vector<8x1xf32>
    %527 = tpu.reciprocal %526 {approx = true} : vector<8x1xf32> -> vector<8x1xf32>
    %528 = vector.extract_strided_slice %488 {offsets = [0, 16], sizes = [8, 8], strides = [1, 1]} : vector<8x32xf32> to vector<8x8xf32>
    %cst_196 = arith.constant dense<0.000000e+00> : vector<8x8xf32>
    %529 = tpu.matmul %524, %528, %cst_196 {dimension_numbers = #tpu.dot_dimension_numbers<[1], [0], [0], [1], [0, 0, 1, 1], [], []>} : vector<8x8xf32>, vector<8x8xf32>, vector<8x8xf32> -> vector<8x8xf32>
    %530 = vector.broadcast %527 : vector<8x1xf32> to vector<8x8xf32>
    %531 = arith.mulf %529, %530 : vector<8x8xf32>
    %532 = vector.extract_strided_slice %507 {offsets = [0, 24], sizes = [8, 8], strides = [1, 1]} : vector<8x32xf32> to vector<8x8xf32>
    %cst_197 = arith.constant dense<0.000000e+00> : vector<8xf32>
    %533 = vector.multi_reduction <add>, %532, %cst_197 [1] : vector<8x8xf32> to vector<8xf32>
    %534 = vector.shape_cast %533 : vector<8xf32> to vector<8x1xf32>
    %535 = tpu.reciprocal %534 {approx = true} : vector<8x1xf32> -> vector<8x1xf32>
    %536 = vector.extract_strided_slice %488 {offsets = [0, 24], sizes = [8, 8], strides = [1, 1]} : vector<8x32xf32> to vector<8x8xf32>
    %cst_198 = arith.constant dense<0.000000e+00> : vector<8x8xf32>
    %537 = tpu.matmul %532, %536, %cst_198 {dimension_numbers = #tpu.dot_dimension_numbers<[1], [0], [0], [1], [0, 0, 1, 1], [], []>} : vector<8x8xf32>, vector<8x8xf32>, vector<8x8xf32> -> vector<8x8xf32>
    %538 = vector.broadcast %535 : vector<8x1xf32> to vector<8x8xf32>
    %539 = arith.mulf %537, %538 : vector<8x8xf32>
    %540 = tpu.concatenate %515, %523, %531, %539 in 1 : vector<8x8xf32>, vector<8x8xf32>, vector<8x8xf32>, vector<8x8xf32> -> vector<8x32xf32>
    %541 = tpu.concatenate %485, %540 in 0 : vector<8x32xf32>, vector<8x32xf32> -> vector<16x32xf32>
    %cst_199 = arith.constant dense<0.000000e+00> : vector<16x32xf32>
    %542 = tpu.matmul %541, %420, %cst_199 {dimension_numbers = #tpu.dot_dimension_numbers<[1], [0], [0], [1], [0, 0, 1, 1], [], []>} : vector<16x32xf32>, vector<32x32xf32>, vector<16x32xf32> -> vector<16x32xf32>
    %543 = vector.broadcast %422 : vector<1x32xf32> to vector<16x32xf32>
    %544 = arith.addf %542, %543 : vector<16x32xf32>
    %545 = arith.addf %404, %544 : vector<16x32xf32>
    %546 = vector.extract_strided_slice %414 {offsets = [0, 0], sizes = [1, 32], strides = [1, 1]} : vector<6x32xf32> to vector<1x32xf32>
    %547 = vector.extract_strided_slice %414 {offsets = [1, 0], sizes = [1, 32], strides = [1, 1]} : vector<6x32xf32> to vector<1x32xf32>
    %cst_200 = arith.constant dense<0.000000e+00> : vector<16xf32>
    %548 = vector.multi_reduction <add>, %545, %cst_200 [1] : vector<16x32xf32> to vector<16xf32>
    %549 = vector.shape_cast %548 : vector<16xf32> to vector<16x1xf32>
    %cst_201 = arith.constant 3.200000e+01 : f32
    %550 = vector.broadcast %cst_201 : f32 to vector<16x1xf32>
    %551 = arith.divf %549, %550 : vector<16x1xf32>
    %552 = vector.broadcast %551 : vector<16x1xf32> to vector<16x32xf32>
    %553 = arith.subf %545, %552 : vector<16x32xf32>
    %554 = arith.mulf %553, %553 : vector<16x32xf32>
    %cst_202 = arith.constant dense<0.000000e+00> : vector<16xf32>
    %555 = vector.multi_reduction <add>, %554, %cst_202 [1] : vector<16x32xf32> to vector<16xf32>
    %556 = vector.shape_cast %555 : vector<16xf32> to vector<16x1xf32>
    %cst_203 = arith.constant 3.200000e+01 : f32
    %557 = vector.broadcast %cst_203 : f32 to vector<16x1xf32>
    %558 = arith.divf %556, %557 : vector<16x1xf32>
    %cst_204 = arith.constant 9.99999974E-6 : f32
    %559 = vector.broadcast %cst_204 : f32 to vector<16x1xf32>
    %560 = arith.addf %558, %559 : vector<16x1xf32>
    %561 = math.rsqrt %560 : vector<16x1xf32>
    %562 = vector.broadcast %561 : vector<16x1xf32> to vector<16x32xf32>
    %563 = arith.mulf %553, %562 : vector<16x32xf32>
    %564 = vector.broadcast %546 : vector<1x32xf32> to vector<16x32xf32>
    %565 = arith.mulf %563, %564 : vector<16x32xf32>
    %566 = vector.broadcast %547 : vector<1x32xf32> to vector<16x32xf32>
    %567 = arith.addf %565, %566 : vector<16x32xf32>
    %c0_205 = arith.constant 0 : index
    %c0_206 = arith.constant 0 : index
    %c0_207 = arith.constant 0 : index
    %568 = vector.load %arg20[%c0_205, %c0_206, %c0_207] : memref<2x32x32xf32, #tpu.memory_space<vmem>>, vector<1x32x32xf32>
    %569 = vector.shape_cast %568 : vector<1x32x32xf32> to vector<32x32xf32>
    %cst_208 = arith.constant dense<0.000000e+00> : vector<2x32xf32>
    %570 = tpu.matmul %403, %569, %cst_208 {dimension_numbers = #tpu.dot_dimension_numbers<[1], [0], [0], [1], [0, 0, 1, 1], [], []>} : vector<2x32xf32>, vector<32x32xf32>, vector<2x32xf32> -> vector<2x32xf32>
    %c0_209 = arith.constant 0 : index
    %c0_210 = arith.constant 0 : index
    %c0_211 = arith.constant 0 : index
    %571 = vector.load %arg21[%c0_209, %c0_210, %c0_211] : memref<2x1x32xf32, #tpu.memory_space<vmem>>, vector<1x1x32xf32>
    %572 = vector.shape_cast %571 : vector<1x1x32xf32> to vector<1x32xf32>
    %573 = vector.broadcast %572 : vector<1x32xf32> to vector<2x32xf32>
    %574 = arith.addf %570, %573 : vector<2x32xf32>
    %575 = vector.extract_strided_slice %574 {offsets = [0, 0], sizes = [1, 32], strides = [1, 1]} : vector<2x32xf32> to vector<1x32xf32>
    %576 = vector.shape_cast %575 : vector<1x32xf32> to vector<1x32xf32>
    %577 = vector.broadcast %576 : vector<1x32xf32> to vector<8x32xf32>
    %578 = vector.extract_strided_slice %574 {offsets = [1, 0], sizes = [1, 32], strides = [1, 1]} : vector<2x32xf32> to vector<1x32xf32>
    %579 = vector.shape_cast %578 : vector<1x32xf32> to vector<1x32xf32>
    %580 = vector.broadcast %579 : vector<1x32xf32> to vector<8x32xf32>
    %581 = tpu.concatenate %577, %580 in 0 : vector<8x32xf32>, vector<8x32xf32> -> vector<16x32xf32>
    %582 = arith.addf %567, %581 : vector<16x32xf32>
    %583 = vector.extract_strided_slice %414 {offsets = [2, 0], sizes = [1, 32], strides = [1, 1]} : vector<6x32xf32> to vector<1x32xf32>
    %584 = vector.extract_strided_slice %414 {offsets = [3, 0], sizes = [1, 32], strides = [1, 1]} : vector<6x32xf32> to vector<1x32xf32>
    %cst_212 = arith.constant dense<0.000000e+00> : vector<16xf32>
    %585 = vector.multi_reduction <add>, %582, %cst_212 [1] : vector<16x32xf32> to vector<16xf32>
    %586 = vector.shape_cast %585 : vector<16xf32> to vector<16x1xf32>
    %cst_213 = arith.constant 3.200000e+01 : f32
    %587 = vector.broadcast %cst_213 : f32 to vector<16x1xf32>
    %588 = arith.divf %586, %587 : vector<16x1xf32>
    %589 = vector.broadcast %588 : vector<16x1xf32> to vector<16x32xf32>
    %590 = arith.subf %582, %589 : vector<16x32xf32>
    %591 = arith.mulf %590, %590 : vector<16x32xf32>
    %cst_214 = arith.constant dense<0.000000e+00> : vector<16xf32>
    %592 = vector.multi_reduction <add>, %591, %cst_214 [1] : vector<16x32xf32> to vector<16xf32>
    %593 = vector.shape_cast %592 : vector<16xf32> to vector<16x1xf32>
    %cst_215 = arith.constant 3.200000e+01 : f32
    %594 = vector.broadcast %cst_215 : f32 to vector<16x1xf32>
    %595 = arith.divf %593, %594 : vector<16x1xf32>
    %cst_216 = arith.constant 9.99999974E-6 : f32
    %596 = vector.broadcast %cst_216 : f32 to vector<16x1xf32>
    %597 = arith.addf %595, %596 : vector<16x1xf32>
    %598 = math.rsqrt %597 : vector<16x1xf32>
    %599 = vector.broadcast %598 : vector<16x1xf32> to vector<16x32xf32>
    %600 = arith.mulf %590, %599 : vector<16x32xf32>
    %601 = vector.broadcast %583 : vector<1x32xf32> to vector<16x32xf32>
    %602 = arith.mulf %600, %601 : vector<16x32xf32>
    %603 = vector.broadcast %584 : vector<1x32xf32> to vector<16x32xf32>
    %604 = arith.addf %602, %603 : vector<16x32xf32>
    %c0_217 = arith.constant 0 : index
    %c0_218 = arith.constant 0 : index
    %c0_219 = arith.constant 0 : index
    %605 = vector.load %arg22[%c0_217, %c0_218, %c0_219] : memref<2x32x64xf32, #tpu.memory_space<vmem>>, vector<1x32x64xf32>
    %606 = vector.shape_cast %605 : vector<1x32x64xf32> to vector<32x64xf32>
    %c0_220 = arith.constant 0 : index
    %c0_221 = arith.constant 0 : index
    %c0_222 = arith.constant 0 : index
    %607 = vector.load %arg23[%c0_220, %c0_221, %c0_222] : memref<2x1x64xf32, #tpu.memory_space<vmem>>, vector<1x1x64xf32>
    %608 = vector.shape_cast %607 : vector<1x1x64xf32> to vector<1x64xf32>
    %c0_223 = arith.constant 0 : index
    %c0_224 = arith.constant 0 : index
    %c0_225 = arith.constant 0 : index
    %609 = vector.load %arg24[%c0_223, %c0_224, %c0_225] : memref<2x64x32xf32, #tpu.memory_space<vmem>>, vector<1x64x32xf32>
    %610 = vector.shape_cast %609 : vector<1x64x32xf32> to vector<64x32xf32>
    %c0_226 = arith.constant 0 : index
    %c0_227 = arith.constant 0 : index
    %c0_228 = arith.constant 0 : index
    %611 = vector.load %arg25[%c0_226, %c0_227, %c0_228] : memref<2x1x32xf32, #tpu.memory_space<vmem>>, vector<1x1x32xf32>
    %612 = vector.shape_cast %611 : vector<1x1x32xf32> to vector<1x32xf32>
    %cst_229 = arith.constant dense<0.000000e+00> : vector<16x64xf32>
    %613 = tpu.matmul %604, %606, %cst_229 {dimension_numbers = #tpu.dot_dimension_numbers<[1], [0], [0], [1], [0, 0, 1, 1], [], []>} : vector<16x32xf32>, vector<32x64xf32>, vector<16x64xf32> -> vector<16x64xf32>
    %614 = vector.broadcast %608 : vector<1x64xf32> to vector<16x64xf32>
    %615 = arith.addf %613, %614 : vector<16x64xf32>
    %cst_230 = arith.constant 0.000000e+00 : f32
    %616 = vector.broadcast %cst_230 : f32 to vector<16x64xf32>
    %617 = arith.maximumf %615, %616 : vector<16x64xf32>
    %cst_231 = arith.constant dense<0.000000e+00> : vector<16x32xf32>
    %618 = tpu.matmul %617, %610, %cst_231 {dimension_numbers = #tpu.dot_dimension_numbers<[1], [0], [0], [1], [0, 0, 1, 1], [], []>} : vector<16x64xf32>, vector<64x32xf32>, vector<16x32xf32> -> vector<16x32xf32>
    %619 = vector.broadcast %612 : vector<1x32xf32> to vector<16x32xf32>
    %620 = arith.addf %618, %619 : vector<16x32xf32>
    %621 = arith.addf %604, %620 : vector<16x32xf32>
    %622 = vector.extract_strided_slice %414 {offsets = [4, 0], sizes = [1, 32], strides = [1, 1]} : vector<6x32xf32> to vector<1x32xf32>
    %623 = vector.extract_strided_slice %414 {offsets = [5, 0], sizes = [1, 32], strides = [1, 1]} : vector<6x32xf32> to vector<1x32xf32>
    %cst_232 = arith.constant dense<0.000000e+00> : vector<16xf32>
    %624 = vector.multi_reduction <add>, %621, %cst_232 [1] : vector<16x32xf32> to vector<16xf32>
    %625 = vector.shape_cast %624 : vector<16xf32> to vector<16x1xf32>
    %cst_233 = arith.constant 3.200000e+01 : f32
    %626 = vector.broadcast %cst_233 : f32 to vector<16x1xf32>
    %627 = arith.divf %625, %626 : vector<16x1xf32>
    %628 = vector.broadcast %627 : vector<16x1xf32> to vector<16x32xf32>
    %629 = arith.subf %621, %628 : vector<16x32xf32>
    %630 = arith.mulf %629, %629 : vector<16x32xf32>
    %cst_234 = arith.constant dense<0.000000e+00> : vector<16xf32>
    %631 = vector.multi_reduction <add>, %630, %cst_234 [1] : vector<16x32xf32> to vector<16xf32>
    %632 = vector.shape_cast %631 : vector<16xf32> to vector<16x1xf32>
    %cst_235 = arith.constant 3.200000e+01 : f32
    %633 = vector.broadcast %cst_235 : f32 to vector<16x1xf32>
    %634 = arith.divf %632, %633 : vector<16x1xf32>
    %cst_236 = arith.constant 9.99999974E-6 : f32
    %635 = vector.broadcast %cst_236 : f32 to vector<16x1xf32>
    %636 = arith.addf %634, %635 : vector<16x1xf32>
    %637 = math.rsqrt %636 : vector<16x1xf32>
    %638 = vector.broadcast %637 : vector<16x1xf32> to vector<16x32xf32>
    %639 = arith.mulf %629, %638 : vector<16x32xf32>
    %640 = vector.broadcast %622 : vector<1x32xf32> to vector<16x32xf32>
    %641 = arith.mulf %639, %640 : vector<16x32xf32>
    %642 = vector.broadcast %623 : vector<1x32xf32> to vector<16x32xf32>
    %643 = arith.addf %641, %642 : vector<16x32xf32>
    %c1_237 = arith.constant 1 : index
    %c0_238 = arith.constant 0 : index
    %c0_239 = arith.constant 0 : index
    %644 = vector.load %arg26[%c1_237, %c0_238, %c0_239] : memref<2x6x32xf32, #tpu.memory_space<vmem>>, vector<1x6x32xf32>
    %645 = vector.shape_cast %644 : vector<1x6x32xf32> to vector<6x32xf32>
    %c1_240 = arith.constant 1 : index
    %c0_241 = arith.constant 0 : index
    %c0_242 = arith.constant 0 : index
    %646 = vector.load %arg16[%c1_240, %c0_241, %c0_242] : memref<2x32x96xf32, #tpu.memory_space<vmem>>, vector<1x32x96xf32>
    %647 = vector.shape_cast %646 : vector<1x32x96xf32> to vector<32x96xf32>
    %c1_243 = arith.constant 1 : index
    %c0_244 = arith.constant 0 : index
    %c0_245 = arith.constant 0 : index
    %648 = vector.load %arg17[%c1_243, %c0_244, %c0_245] : memref<2x1x96xf32, #tpu.memory_space<vmem>>, vector<1x1x96xf32>
    %649 = vector.shape_cast %648 : vector<1x1x96xf32> to vector<1x96xf32>
    %c1_246 = arith.constant 1 : index
    %c0_247 = arith.constant 0 : index
    %c0_248 = arith.constant 0 : index
    %650 = vector.load %arg18[%c1_246, %c0_247, %c0_248] : memref<2x32x32xf32, #tpu.memory_space<vmem>>, vector<1x32x32xf32>
    %651 = vector.shape_cast %650 : vector<1x32x32xf32> to vector<32x32xf32>
    %c1_249 = arith.constant 1 : index
    %c0_250 = arith.constant 0 : index
    %c0_251 = arith.constant 0 : index
    %652 = vector.load %arg19[%c1_249, %c0_250, %c0_251] : memref<2x1x32xf32, #tpu.memory_space<vmem>>, vector<1x1x32xf32>
    %653 = vector.shape_cast %652 : vector<1x1x32xf32> to vector<1x32xf32>
    %cst_252 = arith.constant dense<0.000000e+00> : vector<16x96xf32>
    %654 = tpu.matmul %643, %647, %cst_252 {dimension_numbers = #tpu.dot_dimension_numbers<[1], [0], [0], [1], [0, 0, 1, 1], [], []>} : vector<16x32xf32>, vector<32x96xf32>, vector<16x96xf32> -> vector<16x96xf32>
    %655 = vector.broadcast %649 : vector<1x96xf32> to vector<16x96xf32>
    %656 = arith.addf %654, %655 : vector<16x96xf32>
    %657 = vector.extract_strided_slice %656 {offsets = [0, 0], sizes = [16, 32], strides = [1, 1]} : vector<16x96xf32> to vector<16x32xf32>
    %cst_253 = arith.constant 0.353553385 : f32
    %658 = vector.broadcast %cst_253 : f32 to vector<16x32xf32>
    %659 = arith.mulf %657, %658 : vector<16x32xf32>
    %660 = vector.extract_strided_slice %656 {offsets = [0, 32], sizes = [16, 32], strides = [1, 1]} : vector<16x96xf32> to vector<16x32xf32>
    %661 = vector.extract_strided_slice %656 {offsets = [0, 64], sizes = [16, 32], strides = [1, 1]} : vector<16x96xf32> to vector<16x32xf32>
    %662 = vector.extract_strided_slice %659 {offsets = [0, 0], sizes = [8, 32], strides = [1, 1]} : vector<16x32xf32> to vector<8x32xf32>
    %663 = vector.extract_strided_slice %660 {offsets = [0, 0], sizes = [8, 32], strides = [1, 1]} : vector<16x32xf32> to vector<8x32xf32>
    %664 = vector.extract_strided_slice %661 {offsets = [0, 0], sizes = [8, 32], strides = [1, 1]} : vector<16x32xf32> to vector<8x32xf32>
    %665 = vector.extract_strided_slice %662 {offsets = [0, 0], sizes = [8, 8], strides = [1, 1]} : vector<8x32xf32> to vector<8x8xf32>
    %666 = vector.extract_strided_slice %663 {offsets = [0, 0], sizes = [8, 8], strides = [1, 1]} : vector<8x32xf32> to vector<8x8xf32>
    %cst_254 = arith.constant dense<0.000000e+00> : vector<8x8xf32>
    %667 = tpu.matmul %665, %666, %cst_254 {dimension_numbers = #tpu.dot_dimension_numbers<[1], [1], [0], [0], [0, 0, 1, 0], [], []>} : vector<8x8xf32>, vector<8x8xf32>, vector<8x8xf32> -> vector<8x8xf32>
    %668 = vector.extract_strided_slice %662 {offsets = [0, 8], sizes = [8, 8], strides = [1, 1]} : vector<8x32xf32> to vector<8x8xf32>
    %669 = vector.extract_strided_slice %663 {offsets = [0, 8], sizes = [8, 8], strides = [1, 1]} : vector<8x32xf32> to vector<8x8xf32>
    %cst_255 = arith.constant dense<0.000000e+00> : vector<8x8xf32>
    %670 = tpu.matmul %668, %669, %cst_255 {dimension_numbers = #tpu.dot_dimension_numbers<[1], [1], [0], [0], [0, 0, 1, 0], [], []>} : vector<8x8xf32>, vector<8x8xf32>, vector<8x8xf32> -> vector<8x8xf32>
    %671 = vector.extract_strided_slice %662 {offsets = [0, 16], sizes = [8, 8], strides = [1, 1]} : vector<8x32xf32> to vector<8x8xf32>
    %672 = vector.extract_strided_slice %663 {offsets = [0, 16], sizes = [8, 8], strides = [1, 1]} : vector<8x32xf32> to vector<8x8xf32>
    %cst_256 = arith.constant dense<0.000000e+00> : vector<8x8xf32>
    %673 = tpu.matmul %671, %672, %cst_256 {dimension_numbers = #tpu.dot_dimension_numbers<[1], [1], [0], [0], [0, 0, 1, 0], [], []>} : vector<8x8xf32>, vector<8x8xf32>, vector<8x8xf32> -> vector<8x8xf32>
    %674 = vector.extract_strided_slice %662 {offsets = [0, 24], sizes = [8, 8], strides = [1, 1]} : vector<8x32xf32> to vector<8x8xf32>
    %675 = vector.extract_strided_slice %663 {offsets = [0, 24], sizes = [8, 8], strides = [1, 1]} : vector<8x32xf32> to vector<8x8xf32>
    %cst_257 = arith.constant dense<0.000000e+00> : vector<8x8xf32>
    %676 = tpu.matmul %674, %675, %cst_257 {dimension_numbers = #tpu.dot_dimension_numbers<[1], [1], [0], [0], [0, 0, 1, 0], [], []>} : vector<8x8xf32>, vector<8x8xf32>, vector<8x8xf32> -> vector<8x8xf32>
    %677 = tpu.concatenate %667, %670, %673, %676 in 1 : vector<8x8xf32>, vector<8x8xf32>, vector<8x8xf32>, vector<8x8xf32> -> vector<8x32xf32>
    %678 = arith.addf %677, %408 : vector<8x32xf32>
    %cst_258 = arith.constant dense<0xFF800000> : vector<8xf32>
    %679 = vector.multi_reduction <maximumf>, %678, %cst_258 [1] : vector<8x32xf32> to vector<8xf32>
    %680 = vector.shape_cast %679 : vector<8xf32> to vector<8x1xf32>
    %681 = vector.broadcast %680 : vector<8x1xf32> to vector<8x32xf32>
    %682 = arith.subf %678, %681 : vector<8x32xf32>
    %683 = math.exp %682 : vector<8x32xf32>
    %684 = vector.extract_strided_slice %683 {offsets = [0, 0], sizes = [8, 8], strides = [1, 1]} : vector<8x32xf32> to vector<8x8xf32>
    %cst_259 = arith.constant dense<0.000000e+00> : vector<8xf32>
    %685 = vector.multi_reduction <add>, %684, %cst_259 [1] : vector<8x8xf32> to vector<8xf32>
    %686 = vector.shape_cast %685 : vector<8xf32> to vector<8x1xf32>
    %687 = tpu.reciprocal %686 {approx = true} : vector<8x1xf32> -> vector<8x1xf32>
    %688 = vector.extract_strided_slice %664 {offsets = [0, 0], sizes = [8, 8], strides = [1, 1]} : vector<8x32xf32> to vector<8x8xf32>
    %cst_260 = arith.constant dense<0.000000e+00> : vector<8x8xf32>
    %689 = tpu.matmul %684, %688, %cst_260 {dimension_numbers = #tpu.dot_dimension_numbers<[1], [0], [0], [1], [0, 0, 1, 1], [], []>} : vector<8x8xf32>, vector<8x8xf32>, vector<8x8xf32> -> vector<8x8xf32>
    %690 = vector.broadcast %687 : vector<8x1xf32> to vector<8x8xf32>
    %691 = arith.mulf %689, %690 : vector<8x8xf32>
    %692 = vector.extract_strided_slice %683 {offsets = [0, 8], sizes = [8, 8], strides = [1, 1]} : vector<8x32xf32> to vector<8x8xf32>
    %cst_261 = arith.constant dense<0.000000e+00> : vector<8xf32>
    %693 = vector.multi_reduction <add>, %692, %cst_261 [1] : vector<8x8xf32> to vector<8xf32>
    %694 = vector.shape_cast %693 : vector<8xf32> to vector<8x1xf32>
    %695 = tpu.reciprocal %694 {approx = true} : vector<8x1xf32> -> vector<8x1xf32>
    %696 = vector.extract_strided_slice %664 {offsets = [0, 8], sizes = [8, 8], strides = [1, 1]} : vector<8x32xf32> to vector<8x8xf32>
    %cst_262 = arith.constant dense<0.000000e+00> : vector<8x8xf32>
    %697 = tpu.matmul %692, %696, %cst_262 {dimension_numbers = #tpu.dot_dimension_numbers<[1], [0], [0], [1], [0, 0, 1, 1], [], []>} : vector<8x8xf32>, vector<8x8xf32>, vector<8x8xf32> -> vector<8x8xf32>
    %698 = vector.broadcast %695 : vector<8x1xf32> to vector<8x8xf32>
    %699 = arith.mulf %697, %698 : vector<8x8xf32>
    %700 = vector.extract_strided_slice %683 {offsets = [0, 16], sizes = [8, 8], strides = [1, 1]} : vector<8x32xf32> to vector<8x8xf32>
    %cst_263 = arith.constant dense<0.000000e+00> : vector<8xf32>
    %701 = vector.multi_reduction <add>, %700, %cst_263 [1] : vector<8x8xf32> to vector<8xf32>
    %702 = vector.shape_cast %701 : vector<8xf32> to vector<8x1xf32>
    %703 = tpu.reciprocal %702 {approx = true} : vector<8x1xf32> -> vector<8x1xf32>
    %704 = vector.extract_strided_slice %664 {offsets = [0, 16], sizes = [8, 8], strides = [1, 1]} : vector<8x32xf32> to vector<8x8xf32>
    %cst_264 = arith.constant dense<0.000000e+00> : vector<8x8xf32>
    %705 = tpu.matmul %700, %704, %cst_264 {dimension_numbers = #tpu.dot_dimension_numbers<[1], [0], [0], [1], [0, 0, 1, 1], [], []>} : vector<8x8xf32>, vector<8x8xf32>, vector<8x8xf32> -> vector<8x8xf32>
    %706 = vector.broadcast %703 : vector<8x1xf32> to vector<8x8xf32>
    %707 = arith.mulf %705, %706 : vector<8x8xf32>
    %708 = vector.extract_strided_slice %683 {offsets = [0, 24], sizes = [8, 8], strides = [1, 1]} : vector<8x32xf32> to vector<8x8xf32>
    %cst_265 = arith.constant dense<0.000000e+00> : vector<8xf32>
    %709 = vector.multi_reduction <add>, %708, %cst_265 [1] : vector<8x8xf32> to vector<8xf32>
    %710 = vector.shape_cast %709 : vector<8xf32> to vector<8x1xf32>
    %711 = tpu.reciprocal %710 {approx = true} : vector<8x1xf32> -> vector<8x1xf32>
    %712 = vector.extract_strided_slice %664 {offsets = [0, 24], sizes = [8, 8], strides = [1, 1]} : vector<8x32xf32> to vector<8x8xf32>
    %cst_266 = arith.constant dense<0.000000e+00> : vector<8x8xf32>
    %713 = tpu.matmul %708, %712, %cst_266 {dimension_numbers = #tpu.dot_dimension_numbers<[1], [0], [0], [1], [0, 0, 1, 1], [], []>} : vector<8x8xf32>, vector<8x8xf32>, vector<8x8xf32> -> vector<8x8xf32>
    %714 = vector.broadcast %711 : vector<8x1xf32> to vector<8x8xf32>
    %715 = arith.mulf %713, %714 : vector<8x8xf32>
    %716 = tpu.concatenate %691, %699, %707, %715 in 1 : vector<8x8xf32>, vector<8x8xf32>, vector<8x8xf32>, vector<8x8xf32> -> vector<8x32xf32>
    %717 = vector.extract_strided_slice %659 {offsets = [8, 0], sizes = [8, 32], strides = [1, 1]} : vector<16x32xf32> to vector<8x32xf32>
    %718 = vector.extract_strided_slice %660 {offsets = [8, 0], sizes = [8, 32], strides = [1, 1]} : vector<16x32xf32> to vector<8x32xf32>
    %719 = vector.extract_strided_slice %661 {offsets = [8, 0], sizes = [8, 32], strides = [1, 1]} : vector<16x32xf32> to vector<8x32xf32>
    %720 = vector.extract_strided_slice %717 {offsets = [0, 0], sizes = [8, 8], strides = [1, 1]} : vector<8x32xf32> to vector<8x8xf32>
    %721 = vector.extract_strided_slice %718 {offsets = [0, 0], sizes = [8, 8], strides = [1, 1]} : vector<8x32xf32> to vector<8x8xf32>
    %cst_267 = arith.constant dense<0.000000e+00> : vector<8x8xf32>
    %722 = tpu.matmul %720, %721, %cst_267 {dimension_numbers = #tpu.dot_dimension_numbers<[1], [1], [0], [0], [0, 0, 1, 0], [], []>} : vector<8x8xf32>, vector<8x8xf32>, vector<8x8xf32> -> vector<8x8xf32>
    %723 = vector.extract_strided_slice %717 {offsets = [0, 8], sizes = [8, 8], strides = [1, 1]} : vector<8x32xf32> to vector<8x8xf32>
    %724 = vector.extract_strided_slice %718 {offsets = [0, 8], sizes = [8, 8], strides = [1, 1]} : vector<8x32xf32> to vector<8x8xf32>
    %cst_268 = arith.constant dense<0.000000e+00> : vector<8x8xf32>
    %725 = tpu.matmul %723, %724, %cst_268 {dimension_numbers = #tpu.dot_dimension_numbers<[1], [1], [0], [0], [0, 0, 1, 0], [], []>} : vector<8x8xf32>, vector<8x8xf32>, vector<8x8xf32> -> vector<8x8xf32>
    %726 = vector.extract_strided_slice %717 {offsets = [0, 16], sizes = [8, 8], strides = [1, 1]} : vector<8x32xf32> to vector<8x8xf32>
    %727 = vector.extract_strided_slice %718 {offsets = [0, 16], sizes = [8, 8], strides = [1, 1]} : vector<8x32xf32> to vector<8x8xf32>
    %cst_269 = arith.constant dense<0.000000e+00> : vector<8x8xf32>
    %728 = tpu.matmul %726, %727, %cst_269 {dimension_numbers = #tpu.dot_dimension_numbers<[1], [1], [0], [0], [0, 0, 1, 0], [], []>} : vector<8x8xf32>, vector<8x8xf32>, vector<8x8xf32> -> vector<8x8xf32>
    %729 = vector.extract_strided_slice %717 {offsets = [0, 24], sizes = [8, 8], strides = [1, 1]} : vector<8x32xf32> to vector<8x8xf32>
    %730 = vector.extract_strided_slice %718 {offsets = [0, 24], sizes = [8, 8], strides = [1, 1]} : vector<8x32xf32> to vector<8x8xf32>
    %cst_270 = arith.constant dense<0.000000e+00> : vector<8x8xf32>
    %731 = tpu.matmul %729, %730, %cst_270 {dimension_numbers = #tpu.dot_dimension_numbers<[1], [1], [0], [0], [0, 0, 1, 0], [], []>} : vector<8x8xf32>, vector<8x8xf32>, vector<8x8xf32> -> vector<8x8xf32>
    %732 = tpu.concatenate %722, %725, %728, %731 in 1 : vector<8x8xf32>, vector<8x8xf32>, vector<8x8xf32>, vector<8x8xf32> -> vector<8x32xf32>
    %733 = arith.addf %732, %412 : vector<8x32xf32>
    %cst_271 = arith.constant dense<0xFF800000> : vector<8xf32>
    %734 = vector.multi_reduction <maximumf>, %733, %cst_271 [1] : vector<8x32xf32> to vector<8xf32>
    %735 = vector.shape_cast %734 : vector<8xf32> to vector<8x1xf32>
    %736 = vector.broadcast %735 : vector<8x1xf32> to vector<8x32xf32>
    %737 = arith.subf %733, %736 : vector<8x32xf32>
    %738 = math.exp %737 : vector<8x32xf32>
    %739 = vector.extract_strided_slice %738 {offsets = [0, 0], sizes = [8, 8], strides = [1, 1]} : vector<8x32xf32> to vector<8x8xf32>
    %cst_272 = arith.constant dense<0.000000e+00> : vector<8xf32>
    %740 = vector.multi_reduction <add>, %739, %cst_272 [1] : vector<8x8xf32> to vector<8xf32>
    %741 = vector.shape_cast %740 : vector<8xf32> to vector<8x1xf32>
    %742 = tpu.reciprocal %741 {approx = true} : vector<8x1xf32> -> vector<8x1xf32>
    %743 = vector.extract_strided_slice %719 {offsets = [0, 0], sizes = [8, 8], strides = [1, 1]} : vector<8x32xf32> to vector<8x8xf32>
    %cst_273 = arith.constant dense<0.000000e+00> : vector<8x8xf32>
    %744 = tpu.matmul %739, %743, %cst_273 {dimension_numbers = #tpu.dot_dimension_numbers<[1], [0], [0], [1], [0, 0, 1, 1], [], []>} : vector<8x8xf32>, vector<8x8xf32>, vector<8x8xf32> -> vector<8x8xf32>
    %745 = vector.broadcast %742 : vector<8x1xf32> to vector<8x8xf32>
    %746 = arith.mulf %744, %745 : vector<8x8xf32>
    %747 = vector.extract_strided_slice %738 {offsets = [0, 8], sizes = [8, 8], strides = [1, 1]} : vector<8x32xf32> to vector<8x8xf32>
    %cst_274 = arith.constant dense<0.000000e+00> : vector<8xf32>
    %748 = vector.multi_reduction <add>, %747, %cst_274 [1] : vector<8x8xf32> to vector<8xf32>
    %749 = vector.shape_cast %748 : vector<8xf32> to vector<8x1xf32>
    %750 = tpu.reciprocal %749 {approx = true} : vector<8x1xf32> -> vector<8x1xf32>
    %751 = vector.extract_strided_slice %719 {offsets = [0, 8], sizes = [8, 8], strides = [1, 1]} : vector<8x32xf32> to vector<8x8xf32>
    %cst_275 = arith.constant dense<0.000000e+00> : vector<8x8xf32>
    %752 = tpu.matmul %747, %751, %cst_275 {dimension_numbers = #tpu.dot_dimension_numbers<[1], [0], [0], [1], [0, 0, 1, 1], [], []>} : vector<8x8xf32>, vector<8x8xf32>, vector<8x8xf32> -> vector<8x8xf32>
    %753 = vector.broadcast %750 : vector<8x1xf32> to vector<8x8xf32>
    %754 = arith.mulf %752, %753 : vector<8x8xf32>
    %755 = vector.extract_strided_slice %738 {offsets = [0, 16], sizes = [8, 8], strides = [1, 1]} : vector<8x32xf32> to vector<8x8xf32>
    %cst_276 = arith.constant dense<0.000000e+00> : vector<8xf32>
    %756 = vector.multi_reduction <add>, %755, %cst_276 [1] : vector<8x8xf32> to vector<8xf32>
    %757 = vector.shape_cast %756 : vector<8xf32> to vector<8x1xf32>
    %758 = tpu.reciprocal %757 {approx = true} : vector<8x1xf32> -> vector<8x1xf32>
    %759 = vector.extract_strided_slice %719 {offsets = [0, 16], sizes = [8, 8], strides = [1, 1]} : vector<8x32xf32> to vector<8x8xf32>
    %cst_277 = arith.constant dense<0.000000e+00> : vector<8x8xf32>
    %760 = tpu.matmul %755, %759, %cst_277 {dimension_numbers = #tpu.dot_dimension_numbers<[1], [0], [0], [1], [0, 0, 1, 1], [], []>} : vector<8x8xf32>, vector<8x8xf32>, vector<8x8xf32> -> vector<8x8xf32>
    %761 = vector.broadcast %758 : vector<8x1xf32> to vector<8x8xf32>
    %762 = arith.mulf %760, %761 : vector<8x8xf32>
    %763 = vector.extract_strided_slice %738 {offsets = [0, 24], sizes = [8, 8], strides = [1, 1]} : vector<8x32xf32> to vector<8x8xf32>
    %cst_278 = arith.constant dense<0.000000e+00> : vector<8xf32>
    %764 = vector.multi_reduction <add>, %763, %cst_278 [1] : vector<8x8xf32> to vector<8xf32>
    %765 = vector.shape_cast %764 : vector<8xf32> to vector<8x1xf32>
    %766 = tpu.reciprocal %765 {approx = true} : vector<8x1xf32> -> vector<8x1xf32>
    %767 = vector.extract_strided_slice %719 {offsets = [0, 24], sizes = [8, 8], strides = [1, 1]} : vector<8x32xf32> to vector<8x8xf32>
    %cst_279 = arith.constant dense<0.000000e+00> : vector<8x8xf32>
    %768 = tpu.matmul %763, %767, %cst_279 {dimension_numbers = #tpu.dot_dimension_numbers<[1], [0], [0], [1], [0, 0, 1, 1], [], []>} : vector<8x8xf32>, vector<8x8xf32>, vector<8x8xf32> -> vector<8x8xf32>
    %769 = vector.broadcast %766 : vector<8x1xf32> to vector<8x8xf32>
    %770 = arith.mulf %768, %769 : vector<8x8xf32>
    %771 = tpu.concatenate %746, %754, %762, %770 in 1 : vector<8x8xf32>, vector<8x8xf32>, vector<8x8xf32>, vector<8x8xf32> -> vector<8x32xf32>
    %772 = tpu.concatenate %716, %771 in 0 : vector<8x32xf32>, vector<8x32xf32> -> vector<16x32xf32>
    %cst_280 = arith.constant dense<0.000000e+00> : vector<16x32xf32>
    %773 = tpu.matmul %772, %651, %cst_280 {dimension_numbers = #tpu.dot_dimension_numbers<[1], [0], [0], [1], [0, 0, 1, 1], [], []>} : vector<16x32xf32>, vector<32x32xf32>, vector<16x32xf32> -> vector<16x32xf32>
    %774 = vector.broadcast %653 : vector<1x32xf32> to vector<16x32xf32>
    %775 = arith.addf %773, %774 : vector<16x32xf32>
    %776 = arith.addf %643, %775 : vector<16x32xf32>
    %777 = vector.extract_strided_slice %645 {offsets = [0, 0], sizes = [1, 32], strides = [1, 1]} : vector<6x32xf32> to vector<1x32xf32>
    %778 = vector.extract_strided_slice %645 {offsets = [1, 0], sizes = [1, 32], strides = [1, 1]} : vector<6x32xf32> to vector<1x32xf32>
    %cst_281 = arith.constant dense<0.000000e+00> : vector<16xf32>
    %779 = vector.multi_reduction <add>, %776, %cst_281 [1] : vector<16x32xf32> to vector<16xf32>
    %780 = vector.shape_cast %779 : vector<16xf32> to vector<16x1xf32>
    %cst_282 = arith.constant 3.200000e+01 : f32
    %781 = vector.broadcast %cst_282 : f32 to vector<16x1xf32>
    %782 = arith.divf %780, %781 : vector<16x1xf32>
    %783 = vector.broadcast %782 : vector<16x1xf32> to vector<16x32xf32>
    %784 = arith.subf %776, %783 : vector<16x32xf32>
    %785 = arith.mulf %784, %784 : vector<16x32xf32>
    %cst_283 = arith.constant dense<0.000000e+00> : vector<16xf32>
    %786 = vector.multi_reduction <add>, %785, %cst_283 [1] : vector<16x32xf32> to vector<16xf32>
    %787 = vector.shape_cast %786 : vector<16xf32> to vector<16x1xf32>
    %cst_284 = arith.constant 3.200000e+01 : f32
    %788 = vector.broadcast %cst_284 : f32 to vector<16x1xf32>
    %789 = arith.divf %787, %788 : vector<16x1xf32>
    %cst_285 = arith.constant 9.99999974E-6 : f32
    %790 = vector.broadcast %cst_285 : f32 to vector<16x1xf32>
    %791 = arith.addf %789, %790 : vector<16x1xf32>
    %792 = math.rsqrt %791 : vector<16x1xf32>
    %793 = vector.broadcast %792 : vector<16x1xf32> to vector<16x32xf32>
    %794 = arith.mulf %784, %793 : vector<16x32xf32>
    %795 = vector.broadcast %777 : vector<1x32xf32> to vector<16x32xf32>
    %796 = arith.mulf %794, %795 : vector<16x32xf32>
    %797 = vector.broadcast %778 : vector<1x32xf32> to vector<16x32xf32>
    %798 = arith.addf %796, %797 : vector<16x32xf32>
    %c1_286 = arith.constant 1 : index
    %c0_287 = arith.constant 0 : index
    %c0_288 = arith.constant 0 : index
    %799 = vector.load %arg20[%c1_286, %c0_287, %c0_288] : memref<2x32x32xf32, #tpu.memory_space<vmem>>, vector<1x32x32xf32>
    %800 = vector.shape_cast %799 : vector<1x32x32xf32> to vector<32x32xf32>
    %cst_289 = arith.constant dense<0.000000e+00> : vector<2x32xf32>
    %801 = tpu.matmul %403, %800, %cst_289 {dimension_numbers = #tpu.dot_dimension_numbers<[1], [0], [0], [1], [0, 0, 1, 1], [], []>} : vector<2x32xf32>, vector<32x32xf32>, vector<2x32xf32> -> vector<2x32xf32>
    %c1_290 = arith.constant 1 : index
    %c0_291 = arith.constant 0 : index
    %c0_292 = arith.constant 0 : index
    %802 = vector.load %arg21[%c1_290, %c0_291, %c0_292] : memref<2x1x32xf32, #tpu.memory_space<vmem>>, vector<1x1x32xf32>
    %803 = vector.shape_cast %802 : vector<1x1x32xf32> to vector<1x32xf32>
    %804 = vector.broadcast %803 : vector<1x32xf32> to vector<2x32xf32>
    %805 = arith.addf %801, %804 : vector<2x32xf32>
    %806 = vector.extract_strided_slice %805 {offsets = [0, 0], sizes = [1, 32], strides = [1, 1]} : vector<2x32xf32> to vector<1x32xf32>
    %807 = vector.shape_cast %806 : vector<1x32xf32> to vector<1x32xf32>
    %808 = vector.broadcast %807 : vector<1x32xf32> to vector<8x32xf32>
    %809 = vector.extract_strided_slice %805 {offsets = [1, 0], sizes = [1, 32], strides = [1, 1]} : vector<2x32xf32> to vector<1x32xf32>
    %810 = vector.shape_cast %809 : vector<1x32xf32> to vector<1x32xf32>
    %811 = vector.broadcast %810 : vector<1x32xf32> to vector<8x32xf32>
    %812 = tpu.concatenate %808, %811 in 0 : vector<8x32xf32>, vector<8x32xf32> -> vector<16x32xf32>
    %813 = arith.addf %798, %812 : vector<16x32xf32>
    %814 = vector.extract_strided_slice %645 {offsets = [2, 0], sizes = [1, 32], strides = [1, 1]} : vector<6x32xf32> to vector<1x32xf32>
    %815 = vector.extract_strided_slice %645 {offsets = [3, 0], sizes = [1, 32], strides = [1, 1]} : vector<6x32xf32> to vector<1x32xf32>
    %cst_293 = arith.constant dense<0.000000e+00> : vector<16xf32>
    %816 = vector.multi_reduction <add>, %813, %cst_293 [1] : vector<16x32xf32> to vector<16xf32>
    %817 = vector.shape_cast %816 : vector<16xf32> to vector<16x1xf32>
    %cst_294 = arith.constant 3.200000e+01 : f32
    %818 = vector.broadcast %cst_294 : f32 to vector<16x1xf32>
    %819 = arith.divf %817, %818 : vector<16x1xf32>
    %820 = vector.broadcast %819 : vector<16x1xf32> to vector<16x32xf32>
    %821 = arith.subf %813, %820 : vector<16x32xf32>
    %822 = arith.mulf %821, %821 : vector<16x32xf32>
    %cst_295 = arith.constant dense<0.000000e+00> : vector<16xf32>
    %823 = vector.multi_reduction <add>, %822, %cst_295 [1] : vector<16x32xf32> to vector<16xf32>
    %824 = vector.shape_cast %823 : vector<16xf32> to vector<16x1xf32>
    %cst_296 = arith.constant 3.200000e+01 : f32
    %825 = vector.broadcast %cst_296 : f32 to vector<16x1xf32>
    %826 = arith.divf %824, %825 : vector<16x1xf32>
    %cst_297 = arith.constant 9.99999974E-6 : f32
    %827 = vector.broadcast %cst_297 : f32 to vector<16x1xf32>
    %828 = arith.addf %826, %827 : vector<16x1xf32>
    %829 = math.rsqrt %828 : vector<16x1xf32>
    %830 = vector.broadcast %829 : vector<16x1xf32> to vector<16x32xf32>
    %831 = arith.mulf %821, %830 : vector<16x32xf32>
    %832 = vector.broadcast %814 : vector<1x32xf32> to vector<16x32xf32>
    %833 = arith.mulf %831, %832 : vector<16x32xf32>
    %834 = vector.broadcast %815 : vector<1x32xf32> to vector<16x32xf32>
    %835 = arith.addf %833, %834 : vector<16x32xf32>
    %c1_298 = arith.constant 1 : index
    %c0_299 = arith.constant 0 : index
    %c0_300 = arith.constant 0 : index
    %836 = vector.load %arg22[%c1_298, %c0_299, %c0_300] : memref<2x32x64xf32, #tpu.memory_space<vmem>>, vector<1x32x64xf32>
    %837 = vector.shape_cast %836 : vector<1x32x64xf32> to vector<32x64xf32>
    %c1_301 = arith.constant 1 : index
    %c0_302 = arith.constant 0 : index
    %c0_303 = arith.constant 0 : index
    %838 = vector.load %arg23[%c1_301, %c0_302, %c0_303] : memref<2x1x64xf32, #tpu.memory_space<vmem>>, vector<1x1x64xf32>
    %839 = vector.shape_cast %838 : vector<1x1x64xf32> to vector<1x64xf32>
    %c1_304 = arith.constant 1 : index
    %c0_305 = arith.constant 0 : index
    %c0_306 = arith.constant 0 : index
    %840 = vector.load %arg24[%c1_304, %c0_305, %c0_306] : memref<2x64x32xf32, #tpu.memory_space<vmem>>, vector<1x64x32xf32>
    %841 = vector.shape_cast %840 : vector<1x64x32xf32> to vector<64x32xf32>
    %c1_307 = arith.constant 1 : index
    %c0_308 = arith.constant 0 : index
    %c0_309 = arith.constant 0 : index
    %842 = vector.load %arg25[%c1_307, %c0_308, %c0_309] : memref<2x1x32xf32, #tpu.memory_space<vmem>>, vector<1x1x32xf32>
    %843 = vector.shape_cast %842 : vector<1x1x32xf32> to vector<1x32xf32>
    %cst_310 = arith.constant dense<0.000000e+00> : vector<16x64xf32>
    %844 = tpu.matmul %835, %837, %cst_310 {dimension_numbers = #tpu.dot_dimension_numbers<[1], [0], [0], [1], [0, 0, 1, 1], [], []>} : vector<16x32xf32>, vector<32x64xf32>, vector<16x64xf32> -> vector<16x64xf32>
    %845 = vector.broadcast %839 : vector<1x64xf32> to vector<16x64xf32>
    %846 = arith.addf %844, %845 : vector<16x64xf32>
    %cst_311 = arith.constant 0.000000e+00 : f32
    %847 = vector.broadcast %cst_311 : f32 to vector<16x64xf32>
    %848 = arith.maximumf %846, %847 : vector<16x64xf32>
    %cst_312 = arith.constant dense<0.000000e+00> : vector<16x32xf32>
    %849 = tpu.matmul %848, %841, %cst_312 {dimension_numbers = #tpu.dot_dimension_numbers<[1], [0], [0], [1], [0, 0, 1, 1], [], []>} : vector<16x64xf32>, vector<64x32xf32>, vector<16x32xf32> -> vector<16x32xf32>
    %850 = vector.broadcast %843 : vector<1x32xf32> to vector<16x32xf32>
    %851 = arith.addf %849, %850 : vector<16x32xf32>
    %852 = arith.addf %835, %851 : vector<16x32xf32>
    %853 = vector.extract_strided_slice %645 {offsets = [4, 0], sizes = [1, 32], strides = [1, 1]} : vector<6x32xf32> to vector<1x32xf32>
    %854 = vector.extract_strided_slice %645 {offsets = [5, 0], sizes = [1, 32], strides = [1, 1]} : vector<6x32xf32> to vector<1x32xf32>
    %cst_313 = arith.constant dense<0.000000e+00> : vector<16xf32>
    %855 = vector.multi_reduction <add>, %852, %cst_313 [1] : vector<16x32xf32> to vector<16xf32>
    %856 = vector.shape_cast %855 : vector<16xf32> to vector<16x1xf32>
    %cst_314 = arith.constant 3.200000e+01 : f32
    %857 = vector.broadcast %cst_314 : f32 to vector<16x1xf32>
    %858 = arith.divf %856, %857 : vector<16x1xf32>
    %859 = vector.broadcast %858 : vector<16x1xf32> to vector<16x32xf32>
    %860 = arith.subf %852, %859 : vector<16x32xf32>
    %861 = arith.mulf %860, %860 : vector<16x32xf32>
    %cst_315 = arith.constant dense<0.000000e+00> : vector<16xf32>
    %862 = vector.multi_reduction <add>, %861, %cst_315 [1] : vector<16x32xf32> to vector<16xf32>
    %863 = vector.shape_cast %862 : vector<16xf32> to vector<16x1xf32>
    %cst_316 = arith.constant 3.200000e+01 : f32
    %864 = vector.broadcast %cst_316 : f32 to vector<16x1xf32>
    %865 = arith.divf %863, %864 : vector<16x1xf32>
    %cst_317 = arith.constant 9.99999974E-6 : f32
    %866 = vector.broadcast %cst_317 : f32 to vector<16x1xf32>
    %867 = arith.addf %865, %866 : vector<16x1xf32>
    %868 = math.rsqrt %867 : vector<16x1xf32>
    %869 = vector.broadcast %868 : vector<16x1xf32> to vector<16x32xf32>
    %870 = arith.mulf %860, %869 : vector<16x32xf32>
    %871 = vector.broadcast %853 : vector<1x32xf32> to vector<16x32xf32>
    %872 = arith.mulf %870, %871 : vector<16x32xf32>
    %873 = vector.broadcast %854 : vector<1x32xf32> to vector<16x32xf32>
    %874 = arith.addf %872, %873 : vector<16x32xf32>
    %c0_318 = arith.constant 0 : index
    %c0_319 = arith.constant 0 : index
    %875 = vector.load %arg27[%c0_318, %c0_319] : memref<32x128xf32, #tpu.memory_space<vmem>>, vector<32x128xf32>
    %cst_320 = arith.constant dense<0.000000e+00> : vector<16x128xf32>
    %876 = tpu.matmul %874, %875, %cst_320 {dimension_numbers = #tpu.dot_dimension_numbers<[1], [0], [0], [1], [0, 0, 1, 1], [], []>} : vector<16x32xf32>, vector<32x128xf32>, vector<16x128xf32> -> vector<16x128xf32>
    %c0_321 = arith.constant 0 : index
    %c0_322 = arith.constant 0 : index
    %877 = vector.load %arg28[%c0_321, %c0_322] : memref<1x128xf32, #tpu.memory_space<vmem>>, vector<1x128xf32>
    %878 = vector.broadcast %877 : vector<1x128xf32> to vector<16x128xf32>
    %879 = arith.addf %876, %878 : vector<16x128xf32>
    %c0_323 = arith.constant 0 : index
    %c0_324 = arith.constant 0 : index
    %880 = vector.load %arg29[%c0_323, %c0_324] : memref<16x128xf32, #tpu.memory_space<vmem>>, vector<16x128xf32>
    tpu.vector_store %arg29[%c0_323, %c0_324], %879 {strides = array<i32>} : memref<16x128xf32, #tpu.memory_space<vmem>>, vector<16x128xf32>,
    return
  }
  func.func @transform_0(%arg0: i32) -> (i32, i32) {
    %c0_i32 = arith.constant 0 : i32
    %c0_i32_0 = arith.constant 0 : i32
    return %arg0, %c0_i32 : i32, i32
  }
  func.func @transform_1(%arg0: i32) -> (i32, i32) {
    %c0_i32 = arith.constant 0 : i32
    %c0_i32_0 = arith.constant 0 : i32
    return %arg0, %c0_i32 : i32, i32
  }
  func.func @transform_2(%arg0: i32) -> (i32, i32) {
    %c0_i32 = arith.constant 0 : i32
    %c0_i32_0 = arith.constant 0 : i32
    return %arg0, %c0_i32 : i32, i32
  }
  func.func @transform_3(%arg0: i32) -> (i32, i32, i32) {
    %c0_i32 = arith.constant 0 : i32
    %c0_i32_0 = arith.constant 0 : i32
    %c0_i32_1 = arith.constant 0 : i32
    return %arg0, %c0_i32, %c0_i32_0 : i32, i32, i32
  }
  func.func @transform_4(%arg0: i32) -> (i32, i32, i32) {
    %c0_i32 = arith.constant 0 : i32
    %c0_i32_0 = arith.constant 0 : i32
    %c0_i32_1 = arith.constant 0 : i32
    return %arg0, %c0_i32, %c0_i32_0 : i32, i32, i32
  }
  func.func @transform_5(%arg0: i32) -> (i32, i32) {
    %c0_i32 = arith.constant 0 : i32
    %c0_i32_0 = arith.constant 0 : i32
    %c0_i32_1 = arith.constant 0 : i32
    return %c0_i32, %c0_i32_0 : i32, i32
  }
  func.func @transform_6(%arg0: i32) -> (i32, i32, i32) {
    %c0_i32 = arith.constant 0 : i32
    %c0_i32_0 = arith.constant 0 : i32
    %c0_i32_1 = arith.constant 0 : i32
    %c0_i32_2 = arith.constant 0 : i32
    return %c0_i32, %c0_i32_0, %c0_i32_1 : i32, i32, i32
  }
  func.func @transform_7(%arg0: i32) -> (i32, i32, i32) {
    %c0_i32 = arith.constant 0 : i32
    %c0_i32_0 = arith.constant 0 : i32
    %c0_i32_1 = arith.constant 0 : i32
    %c0_i32_2 = arith.constant 0 : i32
    return %c0_i32, %c0_i32_0, %c0_i32_1 : i32, i32, i32
  }
  func.func @transform_8(%arg0: i32) -> (i32, i32, i32) {
    %c0_i32 = arith.constant 0 : i32
    %c0_i32_0 = arith.constant 0 : i32
    %c0_i32_1 = arith.constant 0 : i32
    %c0_i32_2 = arith.constant 0 : i32
    return %c0_i32, %c0_i32_0, %c0_i32_1 : i32, i32, i32
  }
  func.func @transform_9(%arg0: i32) -> (i32, i32, i32) {
    %c0_i32 = arith.constant 0 : i32
    %c0_i32_0 = arith.constant 0 : i32
    %c0_i32_1 = arith.constant 0 : i32
    %c0_i32_2 = arith.constant 0 : i32
    return %c0_i32, %c0_i32_0, %c0_i32_1 : i32, i32, i32
  }
  func.func @transform_10(%arg0: i32) -> (i32, i32, i32) {
    %c0_i32 = arith.constant 0 : i32
    %c0_i32_0 = arith.constant 0 : i32
    %c0_i32_1 = arith.constant 0 : i32
    %c0_i32_2 = arith.constant 0 : i32
    return %c0_i32, %c0_i32_0, %c0_i32_1 : i32, i32, i32
  }
  func.func @transform_11(%arg0: i32) -> (i32, i32, i32) {
    %c0_i32 = arith.constant 0 : i32
    %c0_i32_0 = arith.constant 0 : i32
    %c0_i32_1 = arith.constant 0 : i32
    %c0_i32_2 = arith.constant 0 : i32
    return %c0_i32, %c0_i32_0, %c0_i32_1 : i32, i32, i32
  }
  func.func @transform_12(%arg0: i32) -> (i32, i32, i32) {
    %c0_i32 = arith.constant 0 : i32
    %c0_i32_0 = arith.constant 0 : i32
    %c0_i32_1 = arith.constant 0 : i32
    %c0_i32_2 = arith.constant 0 : i32
    return %c0_i32, %c0_i32_0, %c0_i32_1 : i32, i32, i32
  }
  func.func @transform_13(%arg0: i32) -> (i32, i32, i32) {
    %c0_i32 = arith.constant 0 : i32
    %c0_i32_0 = arith.constant 0 : i32
    %c0_i32_1 = arith.constant 0 : i32
    %c0_i32_2 = arith.constant 0 : i32
    return %c0_i32, %c0_i32_0, %c0_i32_1 : i32, i32, i32
  }
  func.func @transform_14(%arg0: i32) -> (i32, i32, i32) {
    %c0_i32 = arith.constant 0 : i32
    %c0_i32_0 = arith.constant 0 : i32
    %c0_i32_1 = arith.constant 0 : i32
    %c0_i32_2 = arith.constant 0 : i32
    return %c0_i32, %c0_i32_0, %c0_i32_1 : i32, i32, i32
  }
  func.func @transform_15(%arg0: i32) -> (i32, i32, i32) {
    %c0_i32 = arith.constant 0 : i32
    %c0_i32_0 = arith.constant 0 : i32
    %c0_i32_1 = arith.constant 0 : i32
    %c0_i32_2 = arith.constant 0 : i32
    return %c0_i32, %c0_i32_0, %c0_i32_1 : i32, i32, i32
  }
  func.func @transform_16(%arg0: i32) -> (i32, i32, i32) {
    %c0_i32 = arith.constant 0 : i32
    %c0_i32_0 = arith.constant 0 : i32
    %c0_i32_1 = arith.constant 0 : i32
    %c0_i32_2 = arith.constant 0 : i32
    return %c0_i32, %c0_i32_0, %c0_i32_1 : i32, i32, i32
  }
  func.func @transform_17(%arg0: i32) -> (i32, i32, i32) {
    %c0_i32 = arith.constant 0 : i32
    %c0_i32_0 = arith.constant 0 : i32
    %c0_i32_1 = arith.constant 0 : i32
    %c0_i32_2 = arith.constant 0 : i32
    return %c0_i32, %c0_i32_0, %c0_i32_1 : i32, i32, i32
  }
  func.func @transform_18(%arg0: i32) -> (i32, i32, i32) {
    %c0_i32 = arith.constant 0 : i32
    %c0_i32_0 = arith.constant 0 : i32
    %c0_i32_1 = arith.constant 0 : i32
    %c0_i32_2 = arith.constant 0 : i32
    return %c0_i32, %c0_i32_0, %c0_i32_1 : i32, i32, i32
  }
  func.func @transform_19(%arg0: i32) -> (i32, i32, i32) {
    %c0_i32 = arith.constant 0 : i32
    %c0_i32_0 = arith.constant 0 : i32
    %c0_i32_1 = arith.constant 0 : i32
    %c0_i32_2 = arith.constant 0 : i32
    return %c0_i32, %c0_i32_0, %c0_i32_1 : i32, i32, i32
  }
  func.func @transform_20(%arg0: i32) -> (i32, i32, i32) {
    %c0_i32 = arith.constant 0 : i32
    %c0_i32_0 = arith.constant 0 : i32
    %c0_i32_1 = arith.constant 0 : i32
    %c0_i32_2 = arith.constant 0 : i32
    return %c0_i32, %c0_i32_0, %c0_i32_1 : i32, i32, i32
  }
  func.func @transform_21(%arg0: i32) -> (i32, i32, i32) {
    %c0_i32 = arith.constant 0 : i32
    %c0_i32_0 = arith.constant 0 : i32
    %c0_i32_1 = arith.constant 0 : i32
    %c0_i32_2 = arith.constant 0 : i32
    return %c0_i32, %c0_i32_0, %c0_i32_1 : i32, i32, i32
  }
  func.func @transform_22(%arg0: i32) -> (i32, i32, i32) {
    %c0_i32 = arith.constant 0 : i32
    %c0_i32_0 = arith.constant 0 : i32
    %c0_i32_1 = arith.constant 0 : i32
    %c0_i32_2 = arith.constant 0 : i32
    return %c0_i32, %c0_i32_0, %c0_i32_1 : i32, i32, i32
  }
  func.func @transform_23(%arg0: i32) -> (i32, i32, i32) {
    %c0_i32 = arith.constant 0 : i32
    %c0_i32_0 = arith.constant 0 : i32
    %c0_i32_1 = arith.constant 0 : i32
    %c0_i32_2 = arith.constant 0 : i32
    return %c0_i32, %c0_i32_0, %c0_i32_1 : i32, i32, i32
  }
  func.func @transform_24(%arg0: i32) -> (i32, i32, i32) {
    %c0_i32 = arith.constant 0 : i32
    %c0_i32_0 = arith.constant 0 : i32
    %c0_i32_1 = arith.constant 0 : i32
    %c0_i32_2 = arith.constant 0 : i32
    return %c0_i32, %c0_i32_0, %c0_i32_1 : i32, i32, i32
  }
  func.func @transform_25(%arg0: i32) -> (i32, i32, i32) {
    %c0_i32 = arith.constant 0 : i32
    %c0_i32_0 = arith.constant 0 : i32
    %c0_i32_1 = arith.constant 0 : i32
    %c0_i32_2 = arith.constant 0 : i32
    return %c0_i32, %c0_i32_0, %c0_i32_1 : i32, i32, i32
  }
  func.func @transform_26(%arg0: i32) -> (i32, i32) {
    %c0_i32 = arith.constant 0 : i32
    %c0_i32_0 = arith.constant 0 : i32
    %c0_i32_1 = arith.constant 0 : i32
    return %c0_i32, %c0_i32_0 : i32, i32
  }
  func.func @transform_27(%arg0: i32) -> (i32, i32) {
    %c0_i32 = arith.constant 0 : i32
    %c0_i32_0 = arith.constant 0 : i32
    %c0_i32_1 = arith.constant 0 : i32
    return %c0_i32, %c0_i32_0 : i32, i32
  }
  func.func @transform_28(%arg0: i32) -> (i32, i32) {
    %c0_i32 = arith.constant 0 : i32
    %c0_i32_0 = arith.constant 0 : i32
    return %arg0, %c0_i32 : i32, i32
  }
}

</mosaic_0001>

<llo_original>
// kernel: tpu_custom_call.1
$region0: #{tpu_custom_call.1}
  #allocation0 [shape = 'u32[]', space=smem, size = 0x4, offset = 0x4, fixed_abs, tag = 'smem constant byte address 0x4 - core index']
  #allocation1 [shape = 'u32[144,128]{1,0:T(1,128)}', space=vmem, size = 0x12000, scoped, tag = 'internal scratch']
  %s0 = inlined_call_operand.vmem [shape: f32[32,4], index: 0, kind: input, shape index: {}]
  %s1 = inlined_call_operand.hbm [shape: f32[32,32], index: 1, kind: input, shape index: {}]
  %s2 = inlined_call_operand.hbm [shape: f32[16,32], index: 2, kind: input, shape index: {}]
  %s3 = inlined_call_operand.vmem [shape: f32[2,1,64], index: 3, kind: input, shape index: {}]
  %s4 = inlined_call_operand.hbm [shape: f32[2,1,32], index: 4, kind: input, shape index: {}]
  %s5 = inlined_call_operand.hbm [shape: f32[4,32], index: 5, kind: input, shape index: {}]
  %s6 = inlined_call_operand.vmem [shape: f32[2,32,96], index: 6, kind: input, shape index: {}]
  %s7 = inlined_call_operand.hbm [shape: f32[2,1,96], index: 7, kind: input, shape index: {}]
  %s8 = inlined_call_operand.vmem [shape: f32[2,32,32], index: 8, kind: input, shape index: {}]
  %s9 = inlined_call_operand.hbm [shape: f32[2,1,32], index: 9, kind: input, shape index: {}]
  %s10 = inlined_call_operand.vmem [shape: f32[2,32,64], index: 10, kind: input, shape index: {}]
  %s11 = inlined_call_operand.hbm [shape: f32[2,1,64], index: 11, kind: input, shape index: {}]
  %s12 = inlined_call_operand.vmem [shape: f32[2,64,32], index: 12, kind: input, shape index: {}]
  %s13 = inlined_call_operand.hbm [shape: f32[2,1,32], index: 13, kind: input, shape index: {}]
  %s14 = inlined_call_operand.hbm [shape: f32[2,4,32], index: 14, kind: input, shape index: {}]
  %s15 = inlined_call_operand.vmem [shape: f32[2,32,96], index: 15, kind: input, shape index: {}]
  %s16 = inlined_call_operand.hbm [shape: f32[2,1,96], index: 16, kind: input, shape index: {}]
  %s17 = inlined_call_operand.vmem [shape: f32[2,32,32], index: 17, kind: input, shape index: {}]
  %s18 = inlined_call_operand.hbm [shape: f32[2,1,32], index: 18, kind: input, shape index: {}]
  %s19 = inlined_call_operand.vmem [shape: f32[2,32,32], index: 19, kind: input, shape index: {}]
  %s20 = inlined_call_operand.hbm [shape: f32[2,1,32], index: 20, kind: input, shape index: {}]
  %s21 = inlined_call_operand.hbm [shape: f32[2,32,64], index: 21, kind: input, shape index: {}]
  %s22 = inlined_call_operand.hbm [shape: f32[2,1,64], index: 22, kind: input, shape index: {}]
  %s23 = inlined_call_operand.vmem [shape: f32[2,64,32], index: 23, kind: input, shape index: {}]
  %s24 = inlined_call_operand.hbm [shape: f32[2,1,32], index: 24, kind: input, shape index: {}]
  %s25 = inlined_call_operand.vmem [shape: f32[2,6,32], index: 25, kind: input, shape index: {}]
  %s26 = inlined_call_operand.vmem [shape: f32[32,128], index: 26, kind: input, shape index: {}]
  %s27 = inlined_call_operand.hbm [shape: f32[1,128], index: 27, kind: input, shape index: {}]
  %s28 = inlined_call_operand.hbm [shape: f32[16,128], index: 28, kind: output, shape index: {}]
  %s29 = sld [smem:[#allocation0]]
  $region186: #{tpu_custom_call.1} parent=0
    _
  %s31 = ssub.s32 1, %s29
  %s32 = scalar_select 0, %s31, %s29
  $region1: #{tpu_custom_call.1} parent=0
    #allocation2 [shape = 'u8[16384]{0}', space=vmem, size = 0x4000, scoped, tag = 'input window, operand 1, single buffered']
    #allocation3 [shape = 's32[1]{0}', space=sflag, size = 0x4, scoped, tag = 'scoped memory for tpu_custom_call.1']
    #allocation4 [shape = 's32[1]{0}', space=sflag, size = 0x4, scoped, tag = 'scoped memory for tpu_custom_call.1']
    #allocation5 [shape = 'u8[8192]{0}', space=vmem, size = 0x2000, scoped, tag = 'input window, operand 2, single buffered']
    #allocation6 [shape = 's32[1]{0}', space=sflag, size = 0x4, scoped, tag = 'scoped memory for tpu_custom_call.1']
    #allocation7 [shape = 'u8[1024]{0}', space=vmem, size = 0x400, scoped, tag = 'input window, operand 4, single buffered']
    #allocation8 [shape = 'u8[2048]{0}', space=vmem, size = 0x800, scoped, tag = 'input window, operand 5, single buffered']
    #allocation9 [shape = 's32[1]{0}', space=sflag, size = 0x4, scoped, tag = 'scoped memory for tpu_custom_call.1']
    #allocation10 [shape = 'u8[1024]{0}', space=vmem, size = 0x400, scoped, tag = 'input window, operand 7, single buffered']
    #allocation11 [shape = 'u8[1024]{0}', space=vmem, size = 0x400, scoped, tag = 'input window, operand 9, single buffered']
    #allocation12 [shape = 's32[1]{0}', space=sflag, size = 0x4, scoped, tag = 'scoped memory for tpu_custom_call.1']
    #allocation13 [shape = 'u8[1024]{0}', space=vmem, size = 0x400, scoped, tag = 'input window, operand 11, single buffered']
    #allocation14 [shape = 'u8[1024]{0}', space=vmem, size = 0x400, scoped, tag = 'input window, operand 13, single buffered']
    #allocation15 [shape = 's32[1]{0}', space=sflag, size = 0x4, scoped, tag = 'scoped memory for tpu_custom_call.1']
    #allocation16 [shape = 'u8[4096]{0}', space=vmem, size = 0x1000, scoped, tag = 'input window, operand 14, single buffered']
    #allocation17 [shape = 'u8[1024]{0}', space=vmem, size = 0x400, scoped, tag = 'input window, operand 16, single buffered']
    #allocation18 [shape = 's32[1]{0}', space=sflag, size = 0x4, scoped, tag = 'scoped memory for tpu_custom_call.1']
    #allocation19 [shape = 'u8[1024]{0}', space=vmem, size = 0x400, scoped, tag = 'input window, operand 18, single buffered']
    #allocation20 [shape = 'u8[1024]{0}', space=vmem, size = 0x400, scoped, tag = 'input window, operand 20, single buffered']
    #allocation21 [shape = 's32[1]{0}', space=sflag, size = 0x4, scoped, tag = 'scoped memory for tpu_custom_call.1']
    #allocation22 [shape = 'u8[32768]{0}', space=vmem, size = 0x8000, scoped, tag = 'input window, operand 21, single buffered']
    #allocation23 [shape = 'u8[1024]{0}', space=vmem, size = 0x400, scoped, tag = 'input window, operand 22, single buffered']
    #allocation24 [shape = 's32[1]{0}', space=sflag, size = 0x4, scoped, tag = 'scoped memory for tpu_custom_call.1']
    #allocation25 [shape = 'u8[1024]{0}', space=vmem, size = 0x400, scoped, tag = 'input window, operand 24, single buffered']
    #allocation26 [shape = 'u8[512]{0}', space=vmem, size = 0x400, scoped, tag = 'input window, operand 27, single buffered']
    #allocation27 [shape = 's32[1]{0}', space=sflag, size = 0x4, scoped, tag = 'scoped memory for tpu_custom_call.1']
    #allocation28 [shape = 'u8[8192]{0}', space=vmem, size = 0x2000, scoped, tag = 'output window, operand 0, single buffered']
    %33 = vsyncpa [#allocation3], 0
    %34 = vsyncpa [#allocation6], 0
    %35 = vsyncpa [#allocation9], 0
    %36 = vsyncpa [#allocation12], 0
    %37 = vsyncpa [#allocation15], 0
    %38 = vsyncpa [#allocation18], 0
    %39 = vsyncpa [#allocation21], 0
    %40 = vsyncpa [#allocation24], 0
    %41 = vsyncpa [#allocation27], 0
    %42 = vsyncpa [#allocation4], 0
    // Predicated region
    $region2: #{tpu_custom_call.1} parent=1 // pred_check
      _
    $region3: #{tpu_custom_call.1} parent=1 // pred_check_branch
      %44 = sbr.rel (0) target = $region5
    $region4: #{tpu_custom_call.1} parent=1 // pred_region
      _
    $region5: #{tpu_custom_call.1} parent=1 // pred_fallthru
      _
    // Predicated region
    $region6: #{tpu_custom_call.1} parent=1 // pred_check
      _
    $region7: #{tpu_custom_call.1} parent=1 // pred_check_branch
      %46 = sbr.rel (0) target = $region9
    $region8: #{tpu_custom_call.1} parent=1 // pred_region
      %s48 = ssub.s32 512, 512
      %49 = vsyncadd [#allocation3], %s48
      %s50 = sshll.u32 [#allocation2], 4
      %s51 = int_to_ptr.vmem [resolvable:$true] %s50
      %56 = dma.hbm_to_vmem [thread:$0]  %s1, 512, %s51, [#allocation3], 128, 128, 8
    $region9: #{tpu_custom_call.1} parent=1 // pred_fallthru
      _
    // Predicated region
    $region10: #{tpu_custom_call.1} parent=1 // pred_check
      _
    $region11: #{tpu_custom_call.1} parent=1 // pred_check_branch
      %58 = sbr.rel (0) target = $region13
    $region12: #{tpu_custom_call.1} parent=1 // pred_region
      %s60 = ssub.s32 256, 256
      %61 = vsyncadd [#allocation6], %s60
      %s62 = sshll.u32 [#allocation5], 4
      %s63 = int_to_ptr.vmem [resolvable:$true] %s62
      %68 = dma.hbm_to_vmem [thread:$0]  %s2, 256, %s63, [#allocation6], 128, 128, 8
    $region13: #{tpu_custom_call.1} parent=1 // pred_fallthru
      _
    // Predicated region
    $region14: #{tpu_custom_call.1} parent=1 // pred_check
      _
    $region15: #{tpu_custom_call.1} parent=1 // pred_check_branch
      %70 = sbr.rel (0) target = $region17
    $region16: #{tpu_custom_call.1} parent=1 // pred_region
      _
    $region17: #{tpu_custom_call.1} parent=1 // pred_fallthru
      _
    // Predicated region
    $region18: #{tpu_custom_call.1} parent=1 // pred_check
      _
    $region19: #{tpu_custom_call.1} parent=1 // pred_check_branch
      %72 = sbr.rel (0) target = $region21
    $region20: #{tpu_custom_call.1} parent=1 // pred_region
      %s74 = ssub.s32 32, 32
      %75 = vsyncadd [#allocation6], %s74
      %s76 = sshll.u32 [#allocation7], 4
      %s77 = int_to_ptr.vmem [resolvable:$true] %s76
      %82 = dma.hbm_to_vmem [thread:$0]  %s4, 32, %s77, [#allocation6], 16, 16, 1
    $region21: #{tpu_custom_call.1} parent=1 // pred_fallthru
      _
    // Predicated region
    $region22: #{tpu_custom_call.1} parent=1 // pred_check
      _
    $region23: #{tpu_custom_call.1} parent=1 // pred_check_branch
      %84 = sbr.rel (0) target = $region25
    $region24: #{tpu_custom_call.1} parent=1 // pred_region
      %s86 = ssub.s32 64, 64
      %87 = vsyncadd [#allocation9], %s86
      %s89 = sshll.u32 [#allocation8], 4
      %s90 = int_to_ptr.vmem [resolvable:$true] %s89
      %92 = dma.hbm_to_vmem [thread:$0]  %s5, 64, %s90, [#allocation9]
    $region25: #{tpu_custom_call.1} parent=1 // pred_fallthru
      _
    // Predicated region
    $region26: #{tpu_custom_call.1} parent=1 // pred_check
      _
    $region27: #{tpu_custom_call.1} parent=1 // pred_check_branch
      %94 = sbr.rel (0) target = $region29
    $region28: #{tpu_custom_call.1} parent=1 // pred_region
      _
    $region29: #{tpu_custom_call.1} parent=1 // pred_fallthru
      _
    // Predicated region
    $region30: #{tpu_custom_call.1} parent=1 // pred_check
      _
    $region31: #{tpu_custom_call.1} parent=1 // pred_check_branch
      %96 = sbr.rel (0) target = $region33
    $region32: #{tpu_custom_call.1} parent=1 // pred_region
      %s98 = ssub.s32 32, 32
      %99 = vsyncadd [#allocation9], %s98
      %s100 = sshll.u32 [#allocation10], 4
      %s101 = int_to_ptr.vmem [resolvable:$true] %s100
      %106 = dma.hbm_to_vmem [thread:$0]  %s7, 32, %s101, [#allocation9], 16, 16, 1
    $region33: #{tpu_custom_call.1} parent=1 // pred_fallthru
      _
    // Predicated region
    $region34: #{tpu_custom_call.1} parent=1 // pred_check
      _
    $region35: #{tpu_custom_call.1} parent=1 // pred_check_branch
      %108 = sbr.rel (0) target = $region37
    $region36: #{tpu_custom_call.1} parent=1 // pred_region
      _
    $region37: #{tpu_custom_call.1} parent=1 // pred_fallthru
      _
    // Predicated region
    $region38: #{tpu_custom_call.1} parent=1 // pred_check
      _
    $region39: #{tpu_custom_call.1} parent=1 // pred_check_branch
      %110 = sbr.rel (0) target = $region41
    $region40: #{tpu_custom_call.1} parent=1 // pred_region
      %s112 = ssub.s32 32, 32
      %113 = vsyncadd [#allocation12], %s112
      %s114 = sshll.u32 [#allocation11], 4
      %s115 = int_to_ptr.vmem [resolvable:$true] %s114
      %120 = dma.hbm_to_vmem [thread:$0]  %s9, 32, %s115, [#allocation12], 16, 16, 1
    $region41: #{tpu_custom_call.1} parent=1 // pred_fallthru
      _
    // Predicated region
    $region42: #{tpu_custom_call.1} parent=1 // pred_check
      _
    $region43: #{tpu_custom_call.1} parent=1 // pred_check_branch
      %122 = sbr.rel (0) target = $region45
    $region44: #{tpu_custom_call.1} parent=1 // pred_region
      _
    $region45: #{tpu_custom_call.1} parent=1 // pred_fallthru
      _
    // Predicated region
    $region46: #{tpu_custom_call.1} parent=1 // pred_check
      _
    $region47: #{tpu_custom_call.1} parent=1 // pred_check_branch
      %124 = sbr.rel (0) target = $region49
    $region48: #{tpu_custom_call.1} parent=1 // pred_region
      %s126 = ssub.s32 32, 32
      %127 = vsyncadd [#allocation12], %s126
      %s128 = sshll.u32 [#allocation13], 4
      %s129 = int_to_ptr.vmem [resolvable:$true] %s128
      %134 = dma.hbm_to_vmem [thread:$0]  %s11, 32, %s129, [#allocation12], 16, 16, 1
    $region49: #{tpu_custom_call.1} parent=1 // pred_fallthru
      _
    // Predicated region
    $region50: #{tpu_custom_call.1} parent=1 // pred_check
      _
    $region51: #{tpu_custom_call.1} parent=1 // pred_check_branch
      %136 = sbr.rel (0) target = $region53
    $region52: #{tpu_custom_call.1} parent=1 // pred_region
      _
    $region53: #{tpu_custom_call.1} parent=1 // pred_fallthru
      _
    // Predicated region
    $region54: #{tpu_custom_call.1} parent=1 // pred_check
      _
    $region55: #{tpu_custom_call.1} parent=1 // pred_check_branch
      %138 = sbr.rel (0) target = $region57
    $region56: #{tpu_custom_call.1} parent=1 // pred_region
      %s140 = ssub.s32 32, 32
      %141 = vsyncadd [#allocation15], %s140
      %s142 = sshll.u32 [#allocation14], 4
      %s143 = int_to_ptr.vmem [resolvable:$true] %s142
      %148 = dma.hbm_to_vmem [thread:$0]  %s13, 32, %s143, [#allocation15], 16, 16, 1
    $region57: #{tpu_custom_call.1} parent=1 // pred_fallthru
      _
    // Predicated region
    $region58: #{tpu_custom_call.1} parent=1 // pred_check
      _
    $region59: #{tpu_custom_call.1} parent=1 // pred_check_branch
      %150 = sbr.rel (0) target = $region61
    $region60: #{tpu_custom_call.1} parent=1 // pred_region
      %s152 = ssub.s32 128, 128
      %153 = vsyncadd [#allocation15], %s152
      %s154 = sshll.u32 [#allocation16], 4
      %s155 = int_to_ptr.vmem [resolvable:$true] %s154
      %160 = dma.hbm_to_vmem [thread:$0]  %s14, 128, %s155, [#allocation15], 64, 64, 4
    $region61: #{tpu_custom_call.1} parent=1 // pred_fallthru
      _
    // Predicated region
    $region62: #{tpu_custom_call.1} parent=1 // pred_check
      _
    $region63: #{tpu_custom_call.1} parent=1 // pred_check_branch
      %162 = sbr.rel (0) target = $region65
    $region64: #{tpu_custom_call.1} parent=1 // pred_region
      _
    $region65: #{tpu_custom_call.1} parent=1 // pred_fallthru
      _
    // Predicated region
    $region66: #{tpu_custom_call.1} parent=1 // pred_check
      _
    $region67: #{tpu_custom_call.1} parent=1 // pred_check_branch
      %164 = sbr.rel (0) target = $region69
    $region68: #{tpu_custom_call.1} parent=1 // pred_region
      %s166 = ssub.s32 32, 32
      %167 = vsyncadd [#allocation18], %s166
      %s168 = sshll.u32 [#allocation17], 4
      %s169 = int_to_ptr.vmem [resolvable:$true] %s168
      %174 = dma.hbm_to_vmem [thread:$0]  %s16, 32, %s169, [#allocation18], 16, 16, 1
    $region69: #{tpu_custom_call.1} parent=1 // pred_fallthru
      _
    // Predicated region
    $region70: #{tpu_custom_call.1} parent=1 // pred_check
      _
    $region71: #{tpu_custom_call.1} parent=1 // pred_check_branch
      %176 = sbr.rel (0) target = $region73
    $region72: #{tpu_custom_call.1} parent=1 // pred_region
      _
    $region73: #{tpu_custom_call.1} parent=1 // pred_fallthru
      _
    // Predicated region
    $region74: #{tpu_custom_call.1} parent=1 // pred_check
      _
    $region75: #{tpu_custom_call.1} parent=1 // pred_check_branch
      %178 = sbr.rel (0) target = $region77
    $region76: #{tpu_custom_call.1} parent=1 // pred_region
      %s180 = ssub.s32 32, 32
      %181 = vsyncadd [#allocation18], %s180
      %s182 = sshll.u32 [#allocation19], 4
      %s183 = int_to_ptr.vmem [resolvable:$true] %s182
      %188 = dma.hbm_to_vmem [thread:$0]  %s18, 32, %s183, [#allocation18], 16, 16, 1
    $region77: #{tpu_custom_call.1} parent=1 // pred_fallthru
      _
    // Predicated region
    $region78: #{tpu_custom_call.1} parent=1 // pred_check
      _
    $region79: #{tpu_custom_call.1} parent=1 // pred_check_branch
      %190 = sbr.rel (0) target = $region81
    $region80: #{tpu_custom_call.1} parent=1 // pred_region
      _
    $region81: #{tpu_custom_call.1} parent=1 // pred_fallthru
      _
    // Predicated region
    $region82: #{tpu_custom_call.1} parent=1 // pred_check
      _
    $region83: #{tpu_custom_call.1} parent=1 // pred_check_branch
      %192 = sbr.rel (0) target = $region85
    $region84: #{tpu_custom_call.1} parent=1 // pred_region
      %s194 = ssub.s32 32, 32
      %195 = vsyncadd [#allocation21], %s194
      %s196 = sshll.u32 [#allocation20], 4
      %s197 = int_to_ptr.vmem [resolvable:$true] %s196
      %202 = dma.hbm_to_vmem [thread:$0]  %s20, 32, %s197, [#allocation21], 16, 16, 1
    $region85: #{tpu_custom_call.1} parent=1 // pred_fallthru
      _
    // Predicated region
    $region86: #{tpu_custom_call.1} parent=1 // pred_check
      _
    $region87: #{tpu_custom_call.1} parent=1 // pred_check_branch
      %204 = sbr.rel (0) target = $region89
    $region88: #{tpu_custom_call.1} parent=1 // pred_region
      %s206 = ssub.s32 1024, 1024
      %207 = vsyncadd [#allocation21], %s206
      %s208 = sshll.u32 [#allocation22], 4
      %s209 = int_to_ptr.vmem [resolvable:$true] %s208
      %214 = dma.hbm_to_vmem [thread:$0]  %s21, 1024, %s209, [#allocation21], 128, 128, 8
    $region89: #{tpu_custom_call.1} parent=1 // pred_fallthru
      _
    // Predicated region
    $region90: #{tpu_custom_call.1} parent=1 // pred_check
      _
    $region91: #{tpu_custom_call.1} parent=1 // pred_check_branch
      %216 = sbr.rel (0) target = $region93
    $region92: #{tpu_custom_call.1} parent=1 // pred_region
      %s218 = ssub.s32 32, 32
      %219 = vsyncadd [#allocation24], %s218
      %s220 = sshll.u32 [#allocation23], 4
      %s221 = int_to_ptr.vmem [resolvable:$true] %s220
      %226 = dma.hbm_to_vmem [thread:$0]  %s22, 32, %s221, [#allocation24], 16, 16, 1
    $region93: #{tpu_custom_call.1} parent=1 // pred_fallthru
      _
    // Predicated region
    $region94: #{tpu_custom_call.1} parent=1 // pred_check
      _
    $region95: #{tpu_custom_call.1} parent=1 // pred_check_branch
      %228 = sbr.rel (0) target = $region97
    $region96: #{tpu_custom_call.1} parent=1 // pred_region
      _
    $region97: #{tpu_custom_call.1} parent=1 // pred_fallthru
      _
    // Predicated region
    $region98: #{tpu_custom_call.1} parent=1 // pred_check
      _
    $region99: #{tpu_custom_call.1} parent=1 // pred_check_branch
      %230 = sbr.rel (0) target = $region101
    $region100: #{tpu_custom_call.1} parent=1 // pred_region
      %s232 = ssub.s32 32, 32
      %233 = vsyncadd [#allocation24], %s232
      %s234 = sshll.u32 [#allocation25], 4
      %s235 = int_to_ptr.vmem [resolvable:$true] %s234
      %240 = dma.hbm_to_vmem [thread:$0]  %s24, 32, %s235, [#allocation24], 16, 16, 1
    $region101: #{tpu_custom_call.1} parent=1 // pred_fallthru
      _
    // Predicated region
    $region102: #{tpu_custom_call.1} parent=1 // pred_check
      _
    $region103: #{tpu_custom_call.1} parent=1 // pred_check_branch
      %242 = sbr.rel (0) target = $region105
    $region104: #{tpu_custom_call.1} parent=1 // pred_region
      _
    $region105: #{tpu_custom_call.1} parent=1 // pred_fallthru
      _
    // Predicated region
    $region106: #{tpu_custom_call.1} parent=1 // pred_check
      _
    $region107: #{tpu_custom_call.1} parent=1 // pred_check_branch
      %244 = sbr.rel (0) target = $region109
    $region108: #{tpu_custom_call.1} parent=1 // pred_region
      _
    $region109: #{tpu_custom_call.1} parent=1 // pred_fallthru
      _
    // Predicated region
    $region110: #{tpu_custom_call.1} parent=1 // pred_check
      _
    $region111: #{tpu_custom_call.1} parent=1 // pred_check_branch
      %246 = sbr.rel (0) target = $region113
    $region112: #{tpu_custom_call.1} parent=1 // pred_region
      %s248 = ssub.s32 16, 16
      %249 = vsyncadd [#allocation27], %s248
      %s251 = sshll.u32 [#allocation26], 4
      %s252 = int_to_ptr.vmem [resolvable:$true] %s251
      %254 = dma.hbm_to_vmem [thread:$0]  %s27, 16, %s252, [#allocation27]
    $region113: #{tpu_custom_call.1} parent=1 // pred_fallthru
      _
    // Predicated region
    $region114: #{tpu_custom_call.1} parent=1 // pred_check
      _
    $region115: #{tpu_custom_call.1} parent=1 // pred_check_branch
      %256 = sbr.rel (0) target = $region117
    $region116: #{tpu_custom_call.1} parent=1 // pred_region
      %257 = dma.done [#allocation3], 512
    $region117: #{tpu_custom_call.1} parent=1 // pred_fallthru
      _
    // Predicated region
    $region118: #{tpu_custom_call.1} parent=1 // pred_check
      _
    $region119: #{tpu_custom_call.1} parent=1 // pred_check_branch
      %259 = sbr.rel (0) target = $region121
    $region120: #{tpu_custom_call.1} parent=1 // pred_region
      %260 = dma.done [#allocation6], 256
    $region121: #{tpu_custom_call.1} parent=1 // pred_fallthru
      _
    // Predicated region
    $region122: #{tpu_custom_call.1} parent=1 // pred_check
      _
    $region123: #{tpu_custom_call.1} parent=1 // pred_check_branch
      %262 = sbr.rel (0) target = $region125
    $region124: #{tpu_custom_call.1} parent=1 // pred_region
      %263 = dma.done [#allocation6], 32
    $region125: #{tpu_custom_call.1} parent=1 // pred_fallthru
      _
    // Predicated region
    $region126: #{tpu_custom_call.1} parent=1 // pred_check
      _
    $region127: #{tpu_custom_call.1} parent=1 // pred_check_branch
      %265 = sbr.rel (0) target = $region129
    $region128: #{tpu_custom_call.1} parent=1 // pred_region
      %266 = dma.done [#allocation9], 64
    $region129: #{tpu_custom_call.1} parent=1 // pred_fallthru
      _
    // Predicated region
    $region130: #{tpu_custom_call.1} parent=1 // pred_check
      _
    $region131: #{tpu_custom_call.1} parent=1 // pred_check_branch
      %268 = sbr.rel (0) target = $region133
    $region132: #{tpu_custom_call.1} parent=1 // pred_region
      %269 = dma.done [#allocation9], 32
    $region133: #{tpu_custom_call.1} parent=1 // pred_fallthru
      _
    // Predicated region
    $region134: #{tpu_custom_call.1} parent=1 // pred_check
      _
    $region135: #{tpu_custom_call.1} parent=1 // pred_check_branch
      %271 = sbr.rel (0) target = $region137
    $region136: #{tpu_custom_call.1} parent=1 // pred_region
      %272 = dma.done [#allocation12], 32
    $region137: #{tpu_custom_call.1} parent=1 // pred_fallthru
      _
    // Predicated region
    $region138: #{tpu_custom_call.1} parent=1 // pred_check
      _
    $region139: #{tpu_custom_call.1} parent=1 // pred_check_branch
      %274 = sbr.rel (0) target = $region141
    $region140: #{tpu_custom_call.1} parent=1 // pred_region
      %275 = dma.done [#allocation12], 32
    $region141: #{tpu_custom_call.1} parent=1 // pred_fallthru
      _
    // Predicated region
    $region142: #{tpu_custom_call.1} parent=1 // pred_check
      _
    $region143: #{tpu_custom_call.1} parent=1 // pred_check_branch
      %277 = sbr.rel (0) target = $region145
    $region144: #{tpu_custom_call.1} parent=1 // pred_region
      %278 = dma.done [#allocation15], 32
    $region145: #{tpu_custom_call.1} parent=1 // pred_fallthru
      _
    // Predicated region
    $region146: #{tpu_custom_call.1} parent=1 // pred_check
      _
    $region147: #{tpu_custom_call.1} parent=1 // pred_check_branch
      %280 = sbr.rel (0) target = $region149
    $region148: #{tpu_custom_call.1} parent=1 // pred_region
      %281 = dma.done [#allocation15], 128
    $region149: #{tpu_custom_call.1} parent=1 // pred_fallthru
      _
    // Predicated region
    $region150: #{tpu_custom_call.1} parent=1 // pred_check
      _
    $region151: #{tpu_custom_call.1} parent=1 // pred_check_branch
      %283 = sbr.rel (0) target = $region153
    $region152: #{tpu_custom_call.1} parent=1 // pred_region
      %284 = dma.done [#allocation18], 32
    $region153: #{tpu_custom_call.1} parent=1 // pred_fallthru
      _
    // Predicated region
    $region154: #{tpu_custom_call.1} parent=1 // pred_check
      _
    $region155: #{tpu_custom_call.1} parent=1 // pred_check_branch
      %286 = sbr.rel (0) target = $region157
    $region156: #{tpu_custom_call.1} parent=1 // pred_region
      %287 = dma.done [#allocation18], 32
    $region157: #{tpu_custom_call.1} parent=1 // pred_fallthru
      _
    // Predicated region
    $region158: #{tpu_custom_call.1} parent=1 // pred_check
      _
    $region159: #{tpu_custom_call.1} parent=1 // pred_check_branch
      %289 = sbr.rel (0) target = $region161
    $region160: #{tpu_custom_call.1} parent=1 // pred_region
      %290 = dma.done [#allocation21], 32
    $region161: #{tpu_custom_call.1} parent=1 // pred_fallthru
      _
    // Predicated region
    $region162: #{tpu_custom_call.1} parent=1 // pred_check
      _
    $region163: #{tpu_custom_call.1} parent=1 // pred_check_branch
      %292 = sbr.rel (0) target = $region165
    $region164: #{tpu_custom_call.1} parent=1 // pred_region
      %293 = dma.done [#allocation21], 1024
    $region165: #{tpu_custom_call.1} parent=1 // pred_fallthru
      _
    // Predicated region
    $region166: #{tpu_custom_call.1} parent=1 // pred_check
      _
    $region167: #{tpu_custom_call.1} parent=1 // pred_check_branch
      %295 = sbr.rel (0) target = $region169
    $region168: #{tpu_custom_call.1} parent=1 // pred_region
      %296 = dma.done [#allocation24], 32
    $region169: #{tpu_custom_call.1} parent=1 // pred_fallthru
      _
    // Predicated region
    $region170: #{tpu_custom_call.1} parent=1 // pred_check
      _
    $region171: #{tpu_custom_call.1} parent=1 // pred_check_branch
      %298 = sbr.rel (0) target = $region173
    $region172: #{tpu_custom_call.1} parent=1 // pred_region
      %299 = dma.done [#allocation24], 32
    $region173: #{tpu_custom_call.1} parent=1 // pred_fallthru
      _
    // Predicated region
    $region174: #{tpu_custom_call.1} parent=1 // pred_check
      _
    $region175: #{tpu_custom_call.1} parent=1 // pred_check_branch
      %301 = sbr.rel (0) target = $region177
    $region176: #{tpu_custom_call.1} parent=1 // pred_region
      %302 = dma.done [#allocation27], 16
    $region177: #{tpu_custom_call.1} parent=1 // pred_fallthru
      _
    %v303 = vld [vmem:[%s0] sm:$0xff]
    %v304 = vld [vmem:[%s0 + $0x8] sm:$0xff]
    %v305 = vld [vmem:[%s0 + $0x10] sm:$0xff]
    %v306 = vld [vmem:[%s0 + $0x18] sm:$0xff]
    %v307 = vld [vmem:[#allocation8] sm:$0xf]
    %v308 = vld [vmem:[#allocation2] sm:$0xff]
    %v309 = vld [vmem:[#allocation2 + $0x8] sm:$0xff]
    %v310 = vld [vmem:[#allocation2 + $0x10] sm:$0xff]
    %v311 = vld [vmem:[#allocation2 + $0x18] sm:$0xff]
    %vm312 = vcmask 31744
    %v314 = vsel %vm312, %v303, 0
    %v317 = vsel %vm312, %v304, 0
    %v320 = vsel %vm312, %v305, 0
    %v323 = vsel %vm312, %v306, 0
    %vm325 = vcmask 1043456
    %v327 = vsel %vm325, %v307, 0
    %329 = vmatprep.subr.mxu0 0.0
    %330 = vmatpush1.msra.mxu0 %v327
    %331 = vmatprep.subr.mxu0 0.0
    %332 = vmatpush1.msra.mxu0 0.0
    %333 = vmatprep.subr.mxu0 0.0
    %334 = vmatpush1.msra.mxu0 0.0
    %335 = vmatprep.subr.mxu0 0.0
    %336 = vmatpush1.msra.mxu0 0.0
    %337 = vmatprep.subr.mxu0 0.0
    %338 = vmatpush1.msra.mxu0 0.0
    %339 = vmatprep.subr.mxu0 0.0
    %340 = vmatpush1.msra.mxu0 0.0
    %341 = vmatprep.subr.mxu0 0.0
    %342 = vmatpush1.msra.mxu0 0.0
    %343 = vmatprep.subr.mxu0 0.0
    %344 = vmatpush1.msra.mxu0 0.0
    %345 = vmatprep.subr.mxu0 0.0
    %346 = vmatpush1.msra.mxu0 0.0
    %347 = vmatprep.subr.mxu0 0.0
    %348 = vmatpush1.msra.mxu0 0.0
    %349 = vmatprep.subr.mxu0 0.0
    %350 = vmatpush1.msra.mxu0 0.0
    %351 = vmatprep.subr.mxu0 0.0
    %352 = vmatpush1.msra.mxu0 0.0
    %353 = vmatprep.subr.mxu0 0.0
    %354 = vmatpush1.msra.mxu0 0.0
    %355 = vmatprep.subr.mxu0 0.0
    %356 = vmatpush1.msra.mxu0 0.0
    %357 = vmatprep.subr.mxu0 0.0
    %358 = vmatpush1.msra.mxu0 0.0
    %359 = vmatprep.subr.mxu0 0.0
    %360 = vmatpush1.msra.mxu0 0.0
    %361 = vmatprep.subr.mxu0 0.0
    %362 = vmatpush1.msra.mxu0 0.0
    %363 = vmatprep.subr.mxu0 0.0
    %364 = vmatpush1.msra.mxu0 0.0
    %365 = vmatprep.subr.mxu0 0.0
    %366 = vmatpush1.msra.mxu0 0.0
    %367 = vmatprep.subr.mxu0 0.0
    %368 = vmatpush1.msra.mxu0 0.0
    %369 = vmatprep.subr.mxu0 0.0
    %370 = vmatpush1.msra.mxu0 0.0
    %371 = vmatprep.subr.mxu0 0.0
    %372 = vmatpush1.msra.mxu0 0.0
    %373 = vmatprep.subr.mxu0 0.0
    %374 = vmatpush1.msra.mxu0 0.0
    %375 = vmatprep.subr.mxu0 0.0
    %376 = vmatpush1.msra.mxu0 0.0
    %377 = vmatprep.subr.mxu0 0.0
    %378 = vmatpush1.msra.mxu0 0.0
    %379 = vmatprep.subr.mxu0 0.0
    %380 = vmatpush1.msra.mxu0 0.0
    %381 = vmatprep.subr.mxu0 0.0
    %382 = vmatpush1.msra.mxu0 0.0
    %383 = vmatprep.subr.mxu0 0.0
    %384 = vmatpush1.msra.mxu0 0.0
    %385 = vmatprep.subr.mxu0 0.0
    %386 = vmatpush1.msra.mxu0 0.0
    %387 = vmatprep.subr.mxu0 0.0
    %388 = vmatpush1.msra.mxu0 0.0
    %389 = vmatprep.subr.mxu0 0.0
    %390 = vmatpush1.msra.mxu0 0.0
    %391 = vmatprep.subr.mxu0 0.0
    %392 = vmatpush1.msra.mxu0 0.0
    %393 = vmatprep.mubr.f32.mxu0 0.0
    %394 = vmatmul.mubr.f32.gmra.mrb[0].mxu0 %v314
    %v395 = vpop.f32.mrb[0].mxu0
    %v396 = vadd.f32 %v308, %v395
    %v397 = vpop.f32.mrb[0].mxu0
    %398 = vmatprep.mubr.f32.mxu0 0.0
    %399 = vmatmul.mubr.f32.gmra.mrb[0].mxu0 %v317
    %v400 = vpop.f32.mrb[0].mxu0
    %v401 = vadd.f32 %v309, %v400
    %v402 = vpop.f32.mrb[0].mxu0
    %403 = vmatprep.mubr.f32.mxu0 0.0
    %404 = vmatmul.mubr.f32.gmra.mrb[0].mxu0 %v320
    %v405 = vpop.f32.mrb[0].mxu0
    %v406 = vadd.f32 %v310, %v405
    %v407 = vpop.f32.mrb[0].mxu0
    %408 = vmatprep.mubr.f32.mxu0 0.0
    %409 = vmatmul.mubr.f32.gmra.mrb[0].mxu0 %v323
    %v410 = vpop.f32.mrb[0].mxu0
    %v411 = vadd.f32 %v311, %v410
    %v412 = vpop.f32.mrb[0].mxu0
    %413 = vdwg.mxu0
    %v414 = vld [vmem:[%s3] sm:$0x1]
    %v416 = vlaneseq
    %v417 = vshrl.u32 %v416, 7
    %v418 = vsub.s32 0, %v417
    %v419 = vrot.slane %v414, %v418
    %s421 = scalar_lea.vmem %s3, 1
    %v422 = vld [vmem:[%s421] sm:$0x1]
    %v424 = vlaneseq
    %v425 = vshrl.u32 %v424, 7
    %v426 = vsub.s32 0, %v425
    %v427 = vrot.slane %v422, %v426
    %v429 = vld [vmem:[#allocation16] sm:$0xf]
    %v430 = vld [vmem:[%s6] sm:$0xff]
    %v431 = vld [vmem:[%s6 + $0x8] sm:$0xff]
    %v432 = vld [vmem:[%s6 + $0x10] sm:$0xff]
    %v433 = vld [vmem:[%s6 + $0x18] sm:$0xff]
    %v434 = vld [vmem:[#allocation10] sm:$0x1]
    %v435 = vld [vmem:[%s8] sm:$0xff]
    %v436 = vld [vmem:[%s8 + $0x8] sm:$0xff]
    %v437 = vld [vmem:[%s8 + $0x10] sm:$0xff]
    %v438 = vld [vmem:[%s8 + $0x18] sm:$0xff]
    %v439 = vld [vmem:[#allocation11] sm:$0x1]
    %v441 = vlaneseq
    %v442 = vshrl.u32 %v441, 7
    %v443 = vsub.s32 0, %v442
    %v444 = vrot.slane %v434, %v443
    %vm446 = vcmask 261120
    %v448 = vsel %vm446, %v396, 0
    %v451 = vsel %vm446, %v401, 0
    %v454 = vsel %vm446, %v406, 0
    %v457 = vsel %vm446, %v411, 0
    %459 = vmatprep.subr.mxu0 0.0
    %460 = vmatpush1.msra.mxu0 %v430
    %461 = vmatprep.subr.mxu0 0.0
    %462 = vmatpush1.msra.mxu0 %v431
    %463 = vmatprep.subr.mxu0 0.0
    %464 = vmatpush1.msra.mxu0 %v432
    %465 = vmatprep.subr.mxu0 0.0
    %466 = vmatpush1.msra.mxu0 %v433
    %467 = vmatprep.subr.mxu0 0.0
    %468 = vmatpush1.msra.mxu0 0.0
    %469 = vmatprep.subr.mxu0 0.0
    %470 = vmatpush1.msra.mxu0 0.0
    %471 = vmatprep.subr.mxu0 0.0
    %472 = vmatpush1.msra.mxu0 0.0
    %473 = vmatprep.subr.mxu0 0.0
    %474 = vmatpush1.msra.mxu0 0.0
    %475 = vmatprep.subr.mxu0 0.0
    %476 = vmatpush1.msra.mxu0 0.0
    %477 = vmatprep.subr.mxu0 0.0
    %478 = vmatpush1.msra.mxu0 0.0
    %479 = vmatprep.subr.mxu0 0.0
    %480 = vmatpush1.msra.mxu0 0.0
    %481 = vmatprep.subr.mxu0 0.0
    %482 = vmatpush1.msra.mxu0 0.0
    %483 = vmatprep.subr.mxu0 0.0
    %484 = vmatpush1.msra.mxu0 0.0
    %485 = vmatprep.subr.mxu0 0.0
    %486 = vmatpush1.msra.mxu0 0.0
    %487 = vmatprep.subr.mxu0 0.0
    %488 = vmatpush1.msra.mxu0 0.0
    %489 = vmatprep.subr.mxu0 0.0
    %490 = vmatpush1.msra.mxu0 0.0
    %491 = vmatprep.subr.mxu0 0.0
    %492 = vmatpush1.msra.mxu0 0.0
    %493 = vmatprep.subr.mxu0 0.0
    %494 = vmatpush1.msra.mxu0 0.0
    %495 = vmatprep.subr.mxu0 0.0
    %496 = vmatpush1.msra.mxu0 0.0
    %497 = vmatprep.subr.mxu0 0.0
    %498 = vmatpush1.msra.mxu0 0.0
    %499 = vmatprep.subr.mxu0 0.0
    %500 = vmatpush1.msra.mxu0 0.0
    %501 = vmatprep.subr.mxu0 0.0
    %502 = vmatpush1.msra.mxu0 0.0
    %503 = vmatprep.subr.mxu0 0.0
    %504 = vmatpush1.msra.mxu0 0.0
    %505 = vmatprep.subr.mxu0 0.0
    %506 = vmatpush1.msra.mxu0 0.0
    %507 = vmatprep.subr.mxu0 0.0
    %508 = vmatpush1.msra.mxu0 0.0
    %509 = vmatprep.subr.mxu0 0.0
    %510 = vmatpush1.msra.mxu0 0.0
    %511 = vmatprep.subr.mxu0 0.0
    %512 = vmatpush1.msra.mxu0 0.0
    %513 = vmatprep.subr.mxu0 0.0
    %514 = vmatpush1.msra.mxu0 0.0
    %515 = vmatprep.subr.mxu0 0.0
    %516 = vmatpush1.msra.mxu0 0.0
    %517 = vmatprep.subr.mxu0 0.0
    %518 = vmatpush1.msra.mxu0 0.0
    %519 = vmatprep.subr.mxu0 0.0
    %520 = vmatpush1.msra.mxu0 0.0
    %521 = vmatprep.subr.mxu0 0.0
    %522 = vmatpush1.msra.mxu0 0.0
    %523 = vmatprep.mubr.f32.mxu0 0.0
    %524 = vmatmul.mubr.f32.gmra.mrb[0].mxu0 %v448
    %v525 = vpop.f32.mrb[0].mxu0
    %v526 = vadd.f32 %v444, %v525
    %v527 = vpop.f32.mrb[0].mxu0
    %528 = vmatprep.mubr.f32.mxu0 0.0
    %529 = vmatmul.mubr.f32.gmra.mrb[0].mxu0 %v451
    %v530 = vpop.f32.mrb[0].mxu0
    %v531 = vadd.f32 %v444, %v530
    %v532 = vpop.f32.mrb[0].mxu0
    %533 = vmatprep.mubr.f32.mxu0 0.0
    %534 = vmatmul.mubr.f32.gmra.mrb[0].mxu0 %v454
    %v535 = vpop.f32.mrb[0].mxu0
    %v536 = vadd.f32 %v444, %v535
    %v537 = vpop.f32.mrb[0].mxu0
    %538 = vmatprep.mubr.f32.mxu0 0.0
    %539 = vmatmul.mubr.f32.gmra.mrb[0].mxu0 %v457
    %v540 = vpop.f32.mrb[0].mxu0
    %v541 = vadd.f32 %v444, %v540
    %v542 = vpop.f32.mrb[0].mxu0
    %543 = vdwg.mxu0
    %v544 = vmul.f32 %v526, 0.35355338
    %v545 = vmul.f32 %v531, 0.35355338
    %v546 = vmul.f32 %v536, 0.35355338
    %v547 = vmul.f32 %v541, 0.35355338
    %550 = vrot.lane.b32.xlu0 %v526, 96
    %v551 = vpop.permute.xlu0 %550
    %552 = vrot.lane.b32.xlu0 %v531, 96
    %v553 = vpop.permute.xlu0 %552
    %vm554 = vcmask 64512
    %v556 = vsel %vm554, %v544, 0
    %v559 = vsel %vm554, %v545, 0
    %v561 = vsel %vm554, %v551, 0
    %v563 = vsel %vm554, %v553, 0
    %565 = vmatprep.subr.mxu0 0.0
    %566 = vmatpush1.xpose.msra.mxu0 %v561
    %567 = vmatprep.subr.mxu0 0.0
    %568 = vmatpush1.xpose.msra.mxu0 %v563
    %569 = vmatprep.subr.mxu0 0.0
    %570 = vmatpush1.xpose.msra.mxu0 0.0
    %571 = vmatprep.subr.mxu0 0.0
    %572 = vmatpush1.xpose.msra.mxu0 0.0
    %573 = vmatprep.subr.mxu0 0.0
    %574 = vmatpush1.xpose.msra.mxu0 0.0
    %575 = vmatprep.subr.mxu0 0.0
    %576 = vmatpush1.xpose.msra.mxu0 0.0
    %577 = vmatprep.subr.mxu0 0.0
    %578 = vmatpush1.xpose.msra.mxu0 0.0
    %579 = vmatprep.subr.mxu0 0.0
    %580 = vmatpush1.xpose.msra.mxu0 0.0
    %581 = vmatprep.subr.mxu0 0.0
    %582 = vmatpush1.xpose.msra.mxu0 0.0
    %583 = vmatprep.subr.mxu0 0.0
    %584 = vmatpush1.xpose.msra.mxu0 0.0
    %585 = vmatprep.subr.mxu0 0.0
    %586 = vmatpush1.xpose.msra.mxu0 0.0
    %587 = vmatprep.subr.mxu0 0.0
    %588 = vmatpush1.xpose.msra.mxu0 0.0
    %589 = vmatprep.subr.mxu0 0.0
    %590 = vmatpush1.xpose.msra.mxu0 0.0
    %591 = vmatprep.subr.mxu0 0.0
    %592 = vmatpush1.xpose.msra.mxu0 0.0
    %593 = vmatprep.subr.mxu0 0.0
    %594 = vmatpush1.xpose.msra.mxu0 0.0
    %595 = vmatprep.subr.mxu0 0.0
    %596 = vmatpush1.xpose.msra.mxu0 0.0
    %597 = vmatprep.subr.mxu0 0.0
    %598 = vmatpush1.xpose.msra.mxu0 0.0
    %599 = vmatprep.subr.mxu0 0.0
    %600 = vmatpush1.xpose.msra.mxu0 0.0
    %601 = vmatprep.subr.mxu0 0.0
    %602 = vmatpush1.xpose.msra.mxu0 0.0
    %603 = vmatprep.subr.mxu0 0.0
    %604 = vmatpush1.xpose.msra.mxu0 0.0
    %605 = vmatprep.subr.mxu0 0.0
    %606 = vmatpush1.xpose.msra.mxu0 0.0
    %607 = vmatprep.subr.mxu0 0.0
    %608 = vmatpush1.xpose.msra.mxu0 0.0
    %609 = vmatprep.subr.mxu0 0.0
    %610 = vmatpush1.xpose.msra.mxu0 0.0
    %611 = vmatprep.subr.mxu0 0.0
    %612 = vmatpush1.xpose.msra.mxu0 0.0
    %613 = vmatprep.subr.mxu0 0.0
    %614 = vmatpush1.xpose.msra.mxu0 0.0
    %615 = vmatprep.subr.mxu0 0.0
    %616 = vmatpush1.xpose.msra.mxu0 0.0
    %617 = vmatprep.subr.mxu0 0.0
    %618 = vmatpush1.xpose.msra.mxu0 0.0
    %619 = vmatprep.subr.mxu0 0.0
    %620 = vmatpush1.xpose.msra.mxu0 0.0
    %621 = vmatprep.subr.mxu0 0.0
    %622 = vmatpush1.xpose.msra.mxu0 0.0
    %623 = vmatprep.subr.mxu0 0.0
    %624 = vmatpush1.xpose.msra.mxu0 0.0
    %625 = vmatprep.subr.mxu0 0.0
    %626 = vmatpush1.xpose.msra.mxu0 0.0
    %627 = vmatprep.subr.mxu0 0.0
    %628 = vmatpush1.xpose.msra.mxu0 0.0
    %629 = vmatprep.mubr.f32.mxu0 0.0
    %630 = vmatmul.mubr.f32.gmra.mrb[0].mxu0 %v556
    %v631 = vpop.f32.mrb[0].mxu0
    %v632 = vadd.f32 0.0, %v631
    %v633 = vpop.f32.mrb[0].mxu0
    %634 = vmatprep.mubr.f32.mxu0 0.0
    %635 = vmatmul.mubr.f32.gmra.mrb[0].mxu0 %v559
    %v636 = vpop.f32.mrb[0].mxu0
    %v637 = vadd.f32 0.0, %v636
    %v638 = vpop.f32.mrb[0].mxu0
    %639 = vdwg.mxu0
    %640 = vrot.lane.b32.xlu0 %v544, 120
    %v641 = vpop.permute.xlu0 %640
    %642 = vrot.lane.b32.xlu0 %v545, 120
    %v643 = vpop.permute.xlu0 %642
    %644 = vrot.lane.b32.xlu0 %v526, 88
    %v645 = vpop.permute.xlu0 %644
    %646 = vrot.lane.b32.xlu0 %v531, 88
    %v647 = vpop.permute.xlu0 %646
    %v648 = vsel %vm554, %v641, 0
    %v650 = vsel %vm554, %v643, 0
    %v652 = vsel %vm554, %v645, 0
    %v654 = vsel %vm554, %v647, 0
    %656 = vmatprep.subr.mxu0 0.0
    %657 = vmatpush1.xpose.msra.mxu0 %v652
    %658 = vmatprep.subr.mxu0 0.0
    %659 = vmatpush1.xpose.msra.mxu0 %v654
    %660 = vmatprep.subr.mxu0 0.0
    %661 = vmatpush1.xpose.msra.mxu0 0.0
    %662 = vmatprep.subr.mxu0 0.0
    %663 = vmatpush1.xpose.msra.mxu0 0.0
    %664 = vmatprep.subr.mxu0 0.0
    %665 = vmatpush1.xpose.msra.mxu0 0.0
    %666 = vmatprep.subr.mxu0 0.0
    %667 = vmatpush1.xpose.msra.mxu0 0.0
    %668 = vmatprep.subr.mxu0 0.0
    %669 = vmatpush1.xpose.msra.mxu0 0.0
    %670 = vmatprep.subr.mxu0 0.0
    %671 = vmatpush1.xpose.msra.mxu0 0.0
    %672 = vmatprep.subr.mxu0 0.0
    %673 = vmatpush1.xpose.msra.mxu0 0.0
    %674 = vmatprep.subr.mxu0 0.0
    %675 = vmatpush1.xpose.msra.mxu0 0.0
    %676 = vmatprep.subr.mxu0 0.0
    %677 = vmatpush1.xpose.msra.mxu0 0.0
    %678 = vmatprep.subr.mxu0 0.0
    %679 = vmatpush1.xpose.msra.mxu0 0.0
    %680 = vmatprep.subr.mxu0 0.0
    %681 = vmatpush1.xpose.msra.mxu0 0.0
    %682 = vmatprep.subr.mxu0 0.0
    %683 = vmatpush1.xpose.msra.mxu0 0.0
    %684 = vmatprep.subr.mxu0 0.0
    %685 = vmatpush1.xpose.msra.mxu0 0.0
    %686 = vmatprep.subr.mxu0 0.0
    %687 = vmatpush1.xpose.msra.mxu0 0.0
    %688 = vmatprep.subr.mxu0 0.0
    %689 = vmatpush1.xpose.msra.mxu0 0.0
    %690 = vmatprep.subr.mxu0 0.0
    %691 = vmatpush1.xpose.msra.mxu0 0.0
    %692 = vmatprep.subr.mxu0 0.0
    %693 = vmatpush1.xpose.msra.mxu0 0.0
    %694 = vmatprep.subr.mxu0 0.0
    %695 = vmatpush1.xpose.msra.mxu0 0.0
    %696 = vmatprep.subr.mxu0 0.0
    %697 = vmatpush1.xpose.msra.mxu0 0.0
    %698 = vmatprep.subr.mxu0 0.0
    %699 = vmatpush1.xpose.msra.mxu0 0.0
    %700 = vmatprep.subr.mxu0 0.0
    %701 = vmatpush1.xpose.msra.mxu0 0.0
    %702 = vmatprep.subr.mxu0 0.0
    %703 = vmatpush1.xpose.msra.mxu0 0.0
    %704 = vmatprep.subr.mxu0 0.0
    %705 = vmatpush1.xpose.msra.mxu0 0.0
    %706 = vmatprep.subr.mxu0 0.0
    %707 = vmatpush1.xpose.msra.mxu0 0.0
    %708 = vmatprep.subr.mxu0 0.0
    %709 = vmatpush1.xpose.msra.mxu0 0.0
    %710 = vmatprep.subr.mxu0 0.0
    %711 = vmatpush1.xpose.msra.mxu0 0.0
    %712 = vmatprep.subr.mxu0 0.0
    %713 = vmatpush1.xpose.msra.mxu0 0.0
    %714 = vmatprep.subr.mxu0 0.0
    %715 = vmatpush1.xpose.msra.mxu0 0.0
    %716 = vmatprep.subr.mxu0 0.0
    %717 = vmatpush1.xpose.msra.mxu0 0.0
    %718 = vmatprep.subr.mxu0 0.0
    %719 = vmatpush1.xpose.msra.mxu0 0.0
    %720 = vmatprep.mubr.f32.mxu0 0.0
    %721 = vmatmul.mubr.f32.gmra.mrb[0].mxu0 %v648
    %v722 = vpop.f32.mrb[0].mxu0
    %v723 = vadd.f32 0.0, %v722
    %v724 = vpop.f32.mrb[0].mxu0
    %725 = vmatprep.mubr.f32.mxu0 0.0
    %726 = vmatmul.mubr.f32.gmra.mrb[0].mxu0 %v650
    %v727 = vpop.f32.mrb[0].mxu0
    %v728 = vadd.f32 0.0, %v727
    %v729 = vpop.f32.mrb[0].mxu0
    %730 = vdwg.mxu0
    %731 = vrot.lane.b32.xlu0 %v544, 112
    %v732 = vpop.permute.xlu0 %731
    %733 = vrot.lane.b32.xlu0 %v545, 112
    %v734 = vpop.permute.xlu0 %733
    %735 = vrot.lane.b32.xlu0 %v526, 80
    %v736 = vpop.permute.xlu0 %735
    %737 = vrot.lane.b32.xlu0 %v531, 80
    %v738 = vpop.permute.xlu0 %737
    %v739 = vsel %vm554, %v732, 0
    %v741 = vsel %vm554, %v734, 0
    %v743 = vsel %vm554, %v736, 0
    %v745 = vsel %vm554, %v738, 0
    %747 = vmatprep.subr.mxu0 0.0
    %748 = vmatpush1.xpose.msra.mxu0 %v743
    %749 = vmatprep.subr.mxu0 0.0
    %750 = vmatpush1.xpose.msra.mxu0 %v745
    %751 = vmatprep.subr.mxu0 0.0
    %752 = vmatpush1.xpose.msra.mxu0 0.0
    %753 = vmatprep.subr.mxu0 0.0
    %754 = vmatpush1.xpose.msra.mxu0 0.0
    %755 = vmatprep.subr.mxu0 0.0
    %756 = vmatpush1.xpose.msra.mxu0 0.0
    %757 = vmatprep.subr.mxu0 0.0
    %758 = vmatpush1.xpose.msra.mxu0 0.0
    %759 = vmatprep.subr.mxu0 0.0
    %760 = vmatpush1.xpose.msra.mxu0 0.0
    %761 = vmatprep.subr.mxu0 0.0
    %762 = vmatpush1.xpose.msra.mxu0 0.0
    %763 = vmatprep.subr.mxu0 0.0
    %764 = vmatpush1.xpose.msra.mxu0 0.0
    %765 = vmatprep.subr.mxu0 0.0
    %766 = vmatpush1.xpose.msra.mxu0 0.0
    %767 = vmatprep.subr.mxu0 0.0
    %768 = vmatpush1.xpose.msra.mxu0 0.0
    %769 = vmatprep.subr.mxu0 0.0
    %770 = vmatpush1.xpose.msra.mxu0 0.0
    %771 = vmatprep.subr.mxu0 0.0
    %772 = vmatpush1.xpose.msra.mxu0 0.0
    %773 = vmatprep.subr.mxu0 0.0
    %774 = vmatpush1.xpose.msra.mxu0 0.0
    %775 = vmatprep.subr.mxu0 0.0
    %776 = vmatpush1.xpose.msra.mxu0 0.0
    %777 = vmatprep.subr.mxu0 0.0
    %778 = vmatpush1.xpose.msra.mxu0 0.0
    %779 = vmatprep.subr.mxu0 0.0
    %780 = vmatpush1.xpose.msra.mxu0 0.0
    %781 = vmatprep.subr.mxu0 0.0
    %782 = vmatpush1.xpose.msra.mxu0 0.0
    %783 = vmatprep.subr.mxu0 0.0
    %784 = vmatpush1.xpose.msra.mxu0 0.0
    %785 = vmatprep.subr.mxu0 0.0
    %786 = vmatpush1.xpose.msra.mxu0 0.0
    %787 = vmatprep.subr.mxu0 0.0
    %788 = vmatpush1.xpose.msra.mxu0 0.0
    %789 = vmatprep.subr.mxu0 0.0
    %790 = vmatpush1.xpose.msra.mxu0 0.0
    %791 = vmatprep.subr.mxu0 0.0
    %792 = vmatpush1.xpose.msra.mxu0 0.0
    %793 = vmatprep.subr.mxu0 0.0
    %794 = vmatpush1.xpose.msra.mxu0 0.0
    %795 = vmatprep.subr.mxu0 0.0
    %796 = vmatpush1.xpose.msra.mxu0 0.0
    %797 = vmatprep.subr.mxu0 0.0
    %798 = vmatpush1.xpose.msra.mxu0 0.0
    %799 = vmatprep.subr.mxu0 0.0
    %800 = vmatpush1.xpose.msra.mxu0 0.0
    %801 = vmatprep.subr.mxu0 0.0
    %802 = vmatpush1.xpose.msra.mxu0 0.0
    %803 = vmatprep.subr.mxu0 0.0
    %804 = vmatpush1.xpose.msra.mxu0 0.0
    %805 = vmatprep.subr.mxu0 0.0
    %806 = vmatpush1.xpose.msra.mxu0 0.0
    %807 = vmatprep.subr.mxu0 0.0
    %808 = vmatpush1.xpose.msra.mxu0 0.0
    %809 = vmatprep.subr.mxu0 0.0
    %810 = vmatpush1.xpose.msra.mxu0 0.0
    %811 = vmatprep.mubr.f32.mxu0 0.0
    %812 = vmatmul.mubr.f32.gmra.mrb[0].mxu0 %v739
    %v813 = vpop.f32.mrb[0].mxu0
    %v814 = vadd.f32 0.0, %v813
    %v815 = vpop.f32.mrb[0].mxu0
    %816 = vmatprep.mubr.f32.mxu0 0.0
    %817 = vmatmul.mubr.f32.gmra.mrb[0].mxu0 %v741
    %v818 = vpop.f32.mrb[0].mxu0
    %v819 = vadd.f32 0.0, %v818
    %v820 = vpop.f32.mrb[0].mxu0
    %821 = vdwg.mxu0
    %822 = vrot.lane.b32.xlu0 %v544, 104
    %v823 = vpop.permute.xlu0 %822
    %824 = vrot.lane.b32.xlu0 %v545, 104
    %v825 = vpop.permute.xlu0 %824
    %826 = vrot.lane.b32.xlu0 %v526, 72
    %v827 = vpop.permute.xlu0 %826
    %828 = vrot.lane.b32.xlu0 %v531, 72
    %v829 = vpop.permute.xlu0 %828
    %v830 = vsel %vm554, %v823, 0
    %v832 = vsel %vm554, %v825, 0
    %v834 = vsel %vm554, %v827, 0
    %v836 = vsel %vm554, %v829, 0
    %838 = vmatprep.subr.mxu0 0.0
    %839 = vmatpush1.xpose.msra.mxu0 %v834
    %840 = vmatprep.subr.mxu0 0.0
    %841 = vmatpush1.xpose.msra.mxu0 %v836
    %842 = vmatprep.subr.mxu0 0.0
    %843 = vmatpush1.xpose.msra.mxu0 0.0
    %844 = vmatprep.subr.mxu0 0.0
    %845 = vmatpush1.xpose.msra.mxu0 0.0
    %846 = vmatprep.subr.mxu0 0.0
    %847 = vmatpush1.xpose.msra.mxu0 0.0
    %848 = vmatprep.subr.mxu0 0.0
    %849 = vmatpush1.xpose.msra.mxu0 0.0
    %850 = vmatprep.subr.mxu0 0.0
    %851 = vmatpush1.xpose.msra.mxu0 0.0
    %852 = vmatprep.subr.mxu0 0.0
    %853 = vmatpush1.xpose.msra.mxu0 0.0
    %854 = vmatprep.subr.mxu0 0.0
    %855 = vmatpush1.xpose.msra.mxu0 0.0
    %856 = vmatprep.subr.mxu0 0.0
    %857 = vmatpush1.xpose.msra.mxu0 0.0
    %858 = vmatprep.subr.mxu0 0.0
    %859 = vmatpush1.xpose.msra.mxu0 0.0
    %860 = vmatprep.subr.mxu0 0.0
    %861 = vmatpush1.xpose.msra.mxu0 0.0
    %862 = vmatprep.subr.mxu0 0.0
    %863 = vmatpush1.xpose.msra.mxu0 0.0
    %864 = vmatprep.subr.mxu0 0.0
    %865 = vmatpush1.xpose.msra.mxu0 0.0
    %866 = vmatprep.subr.mxu0 0.0
    %867 = vmatpush1.xpose.msra.mxu0 0.0
    %868 = vmatprep.subr.mxu0 0.0
    %869 = vmatpush1.xpose.msra.mxu0 0.0
    %870 = vmatprep.subr.mxu0 0.0
    %871 = vmatpush1.xpose.msra.mxu0 0.0
    %872 = vmatprep.subr.mxu0 0.0
    %873 = vmatpush1.xpose.msra.mxu0 0.0
    %874 = vmatprep.subr.mxu0 0.0
    %875 = vmatpush1.xpose.msra.mxu0 0.0
    %876 = vmatprep.subr.mxu0 0.0
    %877 = vmatpush1.xpose.msra.mxu0 0.0
    %878 = vmatprep.subr.mxu0 0.0
    %879 = vmatpush1.xpose.msra.mxu0 0.0
    %880 = vmatprep.subr.mxu0 0.0
    %881 = vmatpush1.xpose.msra.mxu0 0.0
    %882 = vmatprep.subr.mxu0 0.0
    %883 = vmatpush1.xpose.msra.mxu0 0.0
    %884 = vmatprep.subr.mxu0 0.0
    %885 = vmatpush1.xpose.msra.mxu0 0.0
    %886 = vmatprep.subr.mxu0 0.0
    %887 = vmatpush1.xpose.msra.mxu0 0.0
    %888 = vmatprep.subr.mxu0 0.0
    %889 = vmatpush1.xpose.msra.mxu0 0.0
    %890 = vmatprep.subr.mxu0 0.0
    %891 = vmatpush1.xpose.msra.mxu0 0.0
    %892 = vmatprep.subr.mxu0 0.0
    %893 = vmatpush1.xpose.msra.mxu0 0.0
    %894 = vmatprep.subr.mxu0 0.0
    %895 = vmatpush1.xpose.msra.mxu0 0.0
    %896 = vmatprep.subr.mxu0 0.0
    %897 = vmatpush1.xpose.msra.mxu0 0.0
    %898 = vmatprep.subr.mxu0 0.0
    %899 = vmatpush1.xpose.msra.mxu0 0.0
    %900 = vmatprep.subr.mxu0 0.0
    %901 = vmatpush1.xpose.msra.mxu0 0.0
    %902 = vmatprep.mubr.f32.mxu0 0.0
    %903 = vmatmul.mubr.f32.gmra.mrb[0].mxu0 %v830
    %v904 = vpop.f32.mrb[0].mxu0
    %v905 = vadd.f32 0.0, %v904
    %v906 = vpop.f32.mrb[0].mxu0
    %907 = vmatprep.mubr.f32.mxu0 0.0
    %908 = vmatmul.mubr.f32.gmra.mrb[0].mxu0 %v832
    %v909 = vpop.f32.mrb[0].mxu0
    %v910 = vadd.f32 0.0, %v909
    %v911 = vpop.f32.mrb[0].mxu0
    %912 = vdwg.mxu0
    %915 = vrot.lane.b32.xlu0 %v723, 16
    %v916 = vpop.permute.xlu0 %915
    %917 = vrot.lane.b32.xlu0 %v728, 16
    %v918 = vpop.permute.xlu0 %917
    %923 = vrot.lane.b32.xlu0 %v814, 32
    %v924 = vpop.permute.xlu0 %923
    %925 = vrot.lane.b32.xlu0 %v819, 32
    %v926 = vpop.permute.xlu0 %925
    %931 = vrot.lane.b32.xlu0 %v905, 48
    %v932 = vpop.permute.xlu0 %931
    %933 = vrot.lane.b32.xlu0 %v910, 48
    %v934 = vpop.permute.xlu0 %933
    %vm937 = vcmask 130048
    %v938 = vsel %vm937, %v632, %v916
    %v939 = vsel %vm937, %v637, %v918
    %v940 = vsel %vm446, %v938, %v924
    %v941 = vsel %vm446, %v939, %v926
    %vm942 = vcmask 392192
    %v943 = vsel %vm942, %v940, %v932
    %v944 = vsel %vm942, %v941, %v934
    %v945 = vadd.f32 %v943, %v419
    %v946 = vadd.f32 %v944, %v419
    %vm947 = vcmask 523264
    %v948 = vsel %vm947, %v945, -inf
    %949 = vmax.xlane.f32.xlu0 %v948
    %v950 = vpop.xlane.xlu0 %949
    %v951 = vsel %vm947, %v946, -inf
    %952 = vmax.xlane.f32.xlu0 %v951
    %v953 = vpop.xlane.xlu0 %952
    %v954 = vsub.f32 %v945, %v950
    %v955 = vsub.f32 %v946, %v953
    %v956 = vmul.f32 %v954, 1.442695
    %v957 = vpow.pop %v956
    %v958 = vmul.f32 %v955, 1.442695
    %v959 = vpow.pop %v958
    %v960 = vsel %vm937, %v957, 0.0
    %961 = vadd.xlane.f32.xlu0 %v960
    %v962 = vpop.xlane.xlu0 %961
    %v963 = vsel %vm937, %v959, 0.0
    %964 = vadd.xlane.f32.xlu0 %v963
    %v965 = vpop.xlane.xlu0 %964
    %v966 = vrcp.pop %v962
    %v967 = vrcp.pop %v965
    %968 = vrot.lane.b32.xlu0 %v526, 64
    %v969 = vpop.permute.xlu0 %968
    %970 = vrot.lane.b32.xlu0 %v531, 64
    %v971 = vpop.permute.xlu0 %970
    %v975 = vsel %vm937, %v957, 0
    %v978 = vsel %vm937, %v959, 0
    %980 = vmatprep.subr.mxu0 0.0
    %981 = vmatpush1.msra.mxu0 %v969
    %982 = vmatprep.subr.mxu0 0.0
    %983 = vmatpush1.msra.mxu0 %v971
    %984 = vmatprep.subr.mxu0 0.0
    %985 = vmatpush1.msra.mxu0 0.0
    %986 = vmatprep.subr.mxu0 0.0
    %987 = vmatpush1.msra.mxu0 0.0
    %988 = vmatprep.subr.mxu0 0.0
    %989 = vmatpush1.msra.mxu0 0.0
    %990 = vmatprep.subr.mxu0 0.0
    %991 = vmatpush1.msra.mxu0 0.0
    %992 = vmatprep.subr.mxu0 0.0
    %993 = vmatpush1.msra.mxu0 0.0
    %994 = vmatprep.subr.mxu0 0.0
    %995 = vmatpush1.msra.mxu0 0.0
    %996 = vmatprep.subr.mxu0 0.0
    %997 = vmatpush1.msra.mxu0 0.0
    %998 = vmatprep.subr.mxu0 0.0
    %999 = vmatpush1.msra.mxu0 0.0
    %1000 = vmatprep.subr.mxu0 0.0
    %1001 = vmatpush1.msra.mxu0 0.0
    %1002 = vmatprep.subr.mxu0 0.0
    %1003 = vmatpush1.msra.mxu0 0.0
    %1004 = vmatprep.subr.mxu0 0.0
    %1005 = vmatpush1.msra.mxu0 0.0
    %1006 = vmatprep.subr.mxu0 0.0
    %1007 = vmatpush1.msra.mxu0 0.0
    %1008 = vmatprep.subr.mxu0 0.0
    %1009 = vmatpush1.msra.mxu0 0.0
    %1010 = vmatprep.subr.mxu0 0.0
    %1011 = vmatpush1.msra.mxu0 0.0
    %1012 = vmatprep.subr.mxu0 0.0
    %1013 = vmatpush1.msra.mxu0 0.0
    %1014 = vmatprep.subr.mxu0 0.0
    %1015 = vmatpush1.msra.mxu0 0.0
    %1016 = vmatprep.subr.mxu0 0.0
    %1017 = vmatpush1.msra.mxu0 0.0
    %1018 = vmatprep.subr.mxu0 0.0
    %1019 = vmatpush1.msra.mxu0 0.0
    %1020 = vmatprep.subr.mxu0 0.0
    %1021 = vmatpush1.msra.mxu0 0.0
    %1022 = vmatprep.subr.mxu0 0.0
    %1023 = vmatpush1.msra.mxu0 0.0
    %1024 = vmatprep.subr.mxu0 0.0
    %1025 = vmatpush1.msra.mxu0 0.0
    %1026 = vmatprep.subr.mxu0 0.0
    %1027 = vmatpush1.msra.mxu0 0.0
    %1028 = vmatprep.subr.mxu0 0.0
    %1029 = vmatpush1.msra.mxu0 0.0
    %1030 = vmatprep.subr.mxu0 0.0
    %1031 = vmatpush1.msra.mxu0 0.0
    %1032 = vmatprep.subr.mxu0 0.0
    %1033 = vmatpush1.msra.mxu0 0.0
    %1034 = vmatprep.subr.mxu0 0.0
    %1035 = vmatpush1.msra.mxu0 0.0
    %1036 = vmatprep.subr.mxu0 0.0
    %1037 = vmatpush1.msra.mxu0 0.0
    %1038 = vmatprep.subr.mxu0 0.0
    %1039 = vmatpush1.msra.mxu0 0.0
    %1040 = vmatprep.subr.mxu0 0.0
    %1041 = vmatpush1.msra.mxu0 0.0
    %1042 = vmatprep.subr.mxu0 0.0
    %1043 = vmatpush1.msra.mxu0 0.0
    %1044 = vmatprep.mubr.f32.mxu0 0.0
    %1045 = vmatmul.mubr.f32.gmra.mrb[0].mxu0 %v975
    %v1046 = vpop.f32.mrb[0].mxu0
    %v1047 = vadd.f32 0.0, %v1046
    %v1048 = vpop.f32.mrb[0].mxu0
    %1049 = vmatprep.mubr.f32.mxu0 0.0
    %1050 = vmatmul.mubr.f32.gmra.mrb[0].mxu0 %v978
    %v1051 = vpop.f32.mrb[0].mxu0
    %v1052 = vadd.f32 0.0, %v1051
    %v1053 = vpop.f32.mrb[0].mxu0
    %1054 = vdwg.mxu0
    %v1055 = vmul.f32 %v1047, %v966
    %v1056 = vmul.f32 %v1052, %v967
    %1057 = vrot.lane.b32.xlu0 %v957, 112
    %v1058 = vpop.permute.xlu0 %1057
    %1059 = vrot.lane.b32.xlu0 %v959, 112
    %v1060 = vpop.permute.xlu0 %1059
    %v1063 = vsel %vm937, %v1058, 0.0
    %1064 = vadd.xlane.f32.xlu0 %v1063
    %v1065 = vpop.xlane.xlu0 %1064
    %v1066 = vsel %vm937, %v1060, 0.0
    %1067 = vadd.xlane.f32.xlu0 %v1066
    %v1068 = vpop.xlane.xlu0 %1067
    %v1069 = vrcp.pop %v1065
    %v1070 = vrcp.pop %v1068
    %1071 = vrot.lane.b32.xlu0 %v526, 56
    %v1072 = vpop.permute.xlu0 %1071
    %1073 = vrot.lane.b32.xlu0 %v531, 56
    %v1074 = vpop.permute.xlu0 %1073
    %v1077 = vsel %vm937, %v1058, 0
    %v1079 = vsel %vm937, %v1060, 0
    %1081 = vmatprep.subr.mxu0 0.0
    %1082 = vmatpush1.msra.mxu0 %v1072
    %1083 = vmatprep.subr.mxu0 0.0
    %1084 = vmatpush1.msra.mxu0 %v1074
    %1085 = vmatprep.subr.mxu0 0.0
    %1086 = vmatpush1.msra.mxu0 0.0
    %1087 = vmatprep.subr.mxu0 0.0
    %1088 = vmatpush1.msra.mxu0 0.0
    %1089 = vmatprep.subr.mxu0 0.0
    %1090 = vmatpush1.msra.mxu0 0.0
    %1091 = vmatprep.subr.mxu0 0.0
    %1092 = vmatpush1.msra.mxu0 0.0
    %1093 = vmatprep.subr.mxu0 0.0
    %1094 = vmatpush1.msra.mxu0 0.0
    %1095 = vmatprep.subr.mxu0 0.0
    %1096 = vmatpush1.msra.mxu0 0.0
    %1097 = vmatprep.subr.mxu0 0.0
    %1098 = vmatpush1.msra.mxu0 0.0
    %1099 = vmatprep.subr.mxu0 0.0
    %1100 = vmatpush1.msra.mxu0 0.0
    %1101 = vmatprep.subr.mxu0 0.0
    %1102 = vmatpush1.msra.mxu0 0.0
    %1103 = vmatprep.subr.mxu0 0.0
    %1104 = vmatpush1.msra.mxu0 0.0
    %1105 = vmatprep.subr.mxu0 0.0
    %1106 = vmatpush1.msra.mxu0 0.0
    %1107 = vmatprep.subr.mxu0 0.0
    %1108 = vmatpush1.msra.mxu0 0.0
    %1109 = vmatprep.subr.mxu0 0.0
    %1110 = vmatpush1.msra.mxu0 0.0
    %1111 = vmatprep.subr.mxu0 0.0
    %1112 = vmatpush1.msra.mxu0 0.0
    %1113 = vmatprep.subr.mxu0 0.0
    %1114 = vmatpush1.msra.mxu0 0.0
    %1115 = vmatprep.subr.mxu0 0.0
    %1116 = vmatpush1.msra.mxu0 0.0
    %1117 = vmatprep.subr.mxu0 0.0
    %1118 = vmatpush1.msra.mxu0 0.0
    %1119 = vmatprep.subr.mxu0 0.0
    %1120 = vmatpush1.msra.mxu0 0.0
    %1121 = vmatprep.subr.mxu0 0.0
    %1122 = vmatpush1.msra.mxu0 0.0
    %1123 = vmatprep.subr.mxu0 0.0
    %1124 = vmatpush1.msra.mxu0 0.0
    %1125 = vmatprep.subr.mxu0 0.0
    %1126 = vmatpush1.msra.mxu0 0.0
    %1127 = vmatprep.subr.mxu0 0.0
    %1128 = vmatpush1.msra.mxu0 0.0
    %1129 = vmatprep.subr.mxu0 0.0
    %1130 = vmatpush1.msra.mxu0 0.0
    %1131 = vmatprep.subr.mxu0 0.0
    %1132 = vmatpush1.msra.mxu0 0.0
    %1133 = vmatprep.subr.mxu0 0.0
    %1134 = vmatpush1.msra.mxu0 0.0
    %1135 = vmatprep.subr.mxu0 0.0
    %1136 = vmatpush1.msra.mxu0 0.0
    %1137 = vmatprep.subr.mxu0 0.0
    %1138 = vmatpush1.msra.mxu0 0.0
    %1139 = vmatprep.subr.mxu0 0.0
    %1140 = vmatpush1.msra.mxu0 0.0
    %1141 = vmatprep.subr.mxu0 0.0
    %1142 = vmatpush1.msra.mxu0 0.0
    %1143 = vmatprep.subr.mxu0 0.0
    %1144 = vmatpush1.msra.mxu0 0.0
    %1145 = vmatprep.mubr.f32.mxu0 0.0
    %1146 = vmatmul.mubr.f32.gmra.mrb[0].mxu0 %v1077
    %v1147 = vpop.f32.mrb[0].mxu0
    %v1148 = vadd.f32 0.0, %v1147
    %v1149 = vpop.f32.mrb[0].mxu0
    %1150 = vmatprep.mubr.f32.mxu0 0.0
    %1151 = vmatmul.mubr.f32.gmra.mrb[0].mxu0 %v1079
    %v1152 = vpop.f32.mrb[0].mxu0
    %v1153 = vadd.f32 0.0, %v1152
    %v1154 = vpop.f32.mrb[0].mxu0
    %1155 = vdwg.mxu0
    %v1156 = vmul.f32 %v1148, %v1069
    %v1157 = vmul.f32 %v1153, %v1070
    %1158 = vrot.lane.b32.xlu0 %v957, 96
    %v1159 = vpop.permute.xlu0 %1158
    %1160 = vrot.lane.b32.xlu0 %v959, 96
    %v1161 = vpop.permute.xlu0 %1160
    %v1164 = vsel %vm937, %v1159, 0.0
    %1165 = vadd.xlane.f32.xlu0 %v1164
    %v1166 = vpop.xlane.xlu0 %1165
    %v1167 = vsel %vm937, %v1161, 0.0
    %1168 = vadd.xlane.f32.xlu0 %v1167
    %v1169 = vpop.xlane.xlu0 %1168
    %v1170 = vrcp.pop %v1166
    %v1171 = vrcp.pop %v1169
    %1172 = vrot.lane.b32.xlu0 %v526, 48
    %v1173 = vpop.permute.xlu0 %1172
    %1174 = vrot.lane.b32.xlu0 %v531, 48
    %v1175 = vpop.permute.xlu0 %1174
    %v1178 = vsel %vm937, %v1159, 0
    %v1180 = vsel %vm937, %v1161, 0
    %1182 = vmatprep.subr.mxu0 0.0
    %1183 = vmatpush1.msra.mxu0 %v1173
    %1184 = vmatprep.subr.mxu0 0.0
    %1185 = vmatpush1.msra.mxu0 %v1175
    %1186 = vmatprep.subr.mxu0 0.0
    %1187 = vmatpush1.msra.mxu0 0.0
    %1188 = vmatprep.subr.mxu0 0.0
    %1189 = vmatpush1.msra.mxu0 0.0
    %1190 = vmatprep.subr.mxu0 0.0
    %1191 = vmatpush1.msra.mxu0 0.0
    %1192 = vmatprep.subr.mxu0 0.0
    %1193 = vmatpush1.msra.mxu0 0.0
    %1194 = vmatprep.subr.mxu0 0.0
    %1195 = vmatpush1.msra.mxu0 0.0
    %1196 = vmatprep.subr.mxu0 0.0
    %1197 = vmatpush1.msra.mxu0 0.0
    %1198 = vmatprep.subr.mxu0 0.0
    %1199 = vmatpush1.msra.mxu0 0.0
    %1200 = vmatprep.subr.mxu0 0.0
    %1201 = vmatpush1.msra.mxu0 0.0
    %1202 = vmatprep.subr.mxu0 0.0
    %1203 = vmatpush1.msra.mxu0 0.0
    %1204 = vmatprep.subr.mxu0 0.0
    %1205 = vmatpush1.msra.mxu0 0.0
    %1206 = vmatprep.subr.mxu0 0.0
    %1207 = vmatpush1.msra.mxu0 0.0
    %1208 = vmatprep.subr.mxu0 0.0
    %1209 = vmatpush1.msra.mxu0 0.0
    %1210 = vmatprep.subr.mxu0 0.0
    %1211 = vmatpush1.msra.mxu0 0.0
    %1212 = vmatprep.subr.mxu0 0.0
    %1213 = vmatpush1.msra.mxu0 0.0
    %1214 = vmatprep.subr.mxu0 0.0
    %1215 = vmatpush1.msra.mxu0 0.0
    %1216 = vmatprep.subr.mxu0 0.0
    %1217 = vmatpush1.msra.mxu0 0.0
    %1218 = vmatprep.subr.mxu0 0.0
    %1219 = vmatpush1.msra.mxu0 0.0
    %1220 = vmatprep.subr.mxu0 0.0
    %1221 = vmatpush1.msra.mxu0 0.0
    %1222 = vmatprep.subr.mxu0 0.0
    %1223 = vmatpush1.msra.mxu0 0.0
    %1224 = vmatprep.subr.mxu0 0.0
    %1225 = vmatpush1.msra.mxu0 0.0
    %1226 = vmatprep.subr.mxu0 0.0
    %1227 = vmatpush1.msra.mxu0 0.0
    %1228 = vmatprep.subr.mxu0 0.0
    %1229 = vmatpush1.msra.mxu0 0.0
    %1230 = vmatprep.subr.mxu0 0.0
    %1231 = vmatpush1.msra.mxu0 0.0
    %1232 = vmatprep.subr.mxu0 0.0
    %1233 = vmatpush1.msra.mxu0 0.0
    %1234 = vmatprep.subr.mxu0 0.0
    %1235 = vmatpush1.msra.mxu0 0.0
    %1236 = vmatprep.subr.mxu0 0.0
    %1237 = vmatpush1.msra.mxu0 0.0
    %1238 = vmatprep.subr.mxu0 0.0
    %1239 = vmatpush1.msra.mxu0 0.0
    %1240 = vmatprep.subr.mxu0 0.0
    %1241 = vmatpush1.msra.mxu0 0.0
    %1242 = vmatprep.subr.mxu0 0.0
    %1243 = vmatpush1.msra.mxu0 0.0
    %1244 = vmatprep.subr.mxu0 0.0
    %1245 = vmatpush1.msra.mxu0 0.0
    %1246 = vmatprep.mubr.f32.mxu0 0.0
    %1247 = vmatmul.mubr.f32.gmra.mrb[0].mxu0 %v1178
    %v1248 = vpop.f32.mrb[0].mxu0
    %v1249 = vadd.f32 0.0, %v1248
    %v1250 = vpop.f32.mrb[0].mxu0
    %1251 = vmatprep.mubr.f32.mxu0 0.0
    %1252 = vmatmul.mubr.f32.gmra.mrb[0].mxu0 %v1180
    %v1253 = vpop.f32.mrb[0].mxu0
    %v1254 = vadd.f32 0.0, %v1253
    %v1255 = vpop.f32.mrb[0].mxu0
    %1256 = vdwg.mxu0
    %v1257 = vmul.f32 %v1249, %v1170
    %v1258 = vmul.f32 %v1254, %v1171
    %1259 = vrot.lane.b32.xlu0 %v957, 80
    %v1260 = vpop.permute.xlu0 %1259
    %1261 = vrot.lane.b32.xlu0 %v959, 80
    %v1262 = vpop.permute.xlu0 %1261
    %v1265 = vsel %vm937, %v1260, 0.0
    %1266 = vadd.xlane.f32.xlu0 %v1265
    %v1267 = vpop.xlane.xlu0 %1266
    %v1268 = vsel %vm937, %v1262, 0.0
    %1269 = vadd.xlane.f32.xlu0 %v1268
    %v1270 = vpop.xlane.xlu0 %1269
    %v1271 = vrcp.pop %v1267
    %v1272 = vrcp.pop %v1270
    %1273 = vrot.lane.b32.xlu0 %v526, 40
    %v1274 = vpop.permute.xlu0 %1273
    %1275 = vrot.lane.b32.xlu0 %v531, 40
    %v1276 = vpop.permute.xlu0 %1275
    %v1279 = vsel %vm937, %v1260, 0
    %v1281 = vsel %vm937, %v1262, 0
    %1283 = vmatprep.subr.mxu0 0.0
    %1284 = vmatpush1.msra.mxu0 %v1274
    %1285 = vmatprep.subr.mxu0 0.0
    %1286 = vmatpush1.msra.mxu0 %v1276
    %1287 = vmatprep.subr.mxu0 0.0
    %1288 = vmatpush1.msra.mxu0 0.0
    %1289 = vmatprep.subr.mxu0 0.0
    %1290 = vmatpush1.msra.mxu0 0.0
    %1291 = vmatprep.subr.mxu0 0.0
    %1292 = vmatpush1.msra.mxu0 0.0
    %1293 = vmatprep.subr.mxu0 0.0
    %1294 = vmatpush1.msra.mxu0 0.0
    %1295 = vmatprep.subr.mxu0 0.0
    %1296 = vmatpush1.msra.mxu0 0.0
    %1297 = vmatprep.subr.mxu0 0.0
    %1298 = vmatpush1.msra.mxu0 0.0
    %1299 = vmatprep.subr.mxu0 0.0
    %1300 = vmatpush1.msra.mxu0 0.0
    %1301 = vmatprep.subr.mxu0 0.0
    %1302 = vmatpush1.msra.mxu0 0.0
    %1303 = vmatprep.subr.mxu0 0.0
    %1304 = vmatpush1.msra.mxu0 0.0
    %1305 = vmatprep.subr.mxu0 0.0
    %1306 = vmatpush1.msra.mxu0 0.0
    %1307 = vmatprep.subr.mxu0 0.0
    %1308 = vmatpush1.msra.mxu0 0.0
    %1309 = vmatprep.subr.mxu0 0.0
    %1310 = vmatpush1.msra.mxu0 0.0
    %1311 = vmatprep.subr.mxu0 0.0
    %1312 = vmatpush1.msra.mxu0 0.0
    %1313 = vmatprep.subr.mxu0 0.0
    %1314 = vmatpush1.msra.mxu0 0.0
    %1315 = vmatprep.subr.mxu0 0.0
    %1316 = vmatpush1.msra.mxu0 0.0
    %1317 = vmatprep.subr.mxu0 0.0
    %1318 = vmatpush1.msra.mxu0 0.0
    %1319 = vmatprep.subr.mxu0 0.0
    %1320 = vmatpush1.msra.mxu0 0.0
    %1321 = vmatprep.subr.mxu0 0.0
    %1322 = vmatpush1.msra.mxu0 0.0
    %1323 = vmatprep.subr.mxu0 0.0
    %1324 = vmatpush1.msra.mxu0 0.0
    %1325 = vmatprep.subr.mxu0 0.0
    %1326 = vmatpush1.msra.mxu0 0.0
    %1327 = vmatprep.subr.mxu0 0.0
    %1328 = vmatpush1.msra.mxu0 0.0
    %1329 = vmatprep.subr.mxu0 0.0
    %1330 = vmatpush1.msra.mxu0 0.0
    %1331 = vmatprep.subr.mxu0 0.0
    %1332 = vmatpush1.msra.mxu0 0.0
    %1333 = vmatprep.subr.mxu0 0.0
    %1334 = vmatpush1.msra.mxu0 0.0
    %1335 = vmatprep.subr.mxu0 0.0
    %1336 = vmatpush1.msra.mxu0 0.0
    %1337 = vmatprep.subr.mxu0 0.0
    %1338 = vmatpush1.msra.mxu0 0.0
    %1339 = vmatprep.subr.mxu0 0.0
    %1340 = vmatpush1.msra.mxu0 0.0
    %1341 = vmatprep.subr.mxu0 0.0
    %1342 = vmatpush1.msra.mxu0 0.0
    %1343 = vmatprep.subr.mxu0 0.0
    %1344 = vmatpush1.msra.mxu0 0.0
    %1345 = vmatprep.subr.mxu0 0.0
    %1346 = vmatpush1.msra.mxu0 0.0
    %1347 = vmatprep.mubr.f32.mxu0 0.0
    %1348 = vmatmul.mubr.f32.gmra.mrb[0].mxu0 %v1279
    %v1349 = vpop.f32.mrb[0].mxu0
    %v1350 = vadd.f32 0.0, %v1349
    %v1351 = vpop.f32.mrb[0].mxu0
    %1352 = vmatprep.mubr.f32.mxu0 0.0
    %1353 = vmatmul.mubr.f32.gmra.mrb[0].mxu0 %v1281
    %v1354 = vpop.f32.mrb[0].mxu0
    %v1355 = vadd.f32 0.0, %v1354
    %v1356 = vpop.f32.mrb[0].mxu0
    %1357 = vdwg.mxu0
    %v1358 = vmul.f32 %v1350, %v1271
    %v1359 = vmul.f32 %v1355, %v1272
    %1362 = vrot.lane.b32.xlu0 %v1156, 8
    %v1363 = vpop.permute.xlu0 %1362
    %1364 = vrot.lane.b32.xlu0 %v1157, 8
    %v1365 = vpop.permute.xlu0 %1364
    %1370 = vrot.lane.b32.xlu0 %v1257, 16
    %v1371 = vpop.permute.xlu0 %1370
    %1372 = vrot.lane.b32.xlu0 %v1258, 16
    %v1373 = vpop.permute.xlu0 %1372
    %1378 = vrot.lane.b32.xlu0 %v1358, 24
    %v1379 = vpop.permute.xlu0 %1378
    %1380 = vrot.lane.b32.xlu0 %v1359, 24
    %v1381 = vpop.permute.xlu0 %1380
    %v1384 = vsel %vm554, %v1055, %v1363
    %v1385 = vsel %vm554, %v1056, %v1365
    %v1386 = vsel %vm937, %v1384, %v1371
    %v1387 = vsel %vm937, %v1385, %v1373
    %vm1388 = vcmask 195584
    %v1389 = vsel %vm1388, %v1386, %v1379
    %v1390 = vsel %vm1388, %v1387, %v1381
    %1393 = vrot.lane.b32.xlu0 %v536, 96
    %v1394 = vpop.permute.xlu0 %1393
    %1395 = vrot.lane.b32.xlu0 %v541, 96
    %v1396 = vpop.permute.xlu0 %1395
    %v1398 = vsel %vm554, %v546, 0
    %v1401 = vsel %vm554, %v547, 0
    %v1403 = vsel %vm554, %v1394, 0
    %v1405 = vsel %vm554, %v1396, 0
    %1407 = vmatprep.subr.mxu0 0.0
    %1408 = vmatpush1.xpose.msra.mxu0 %v1403
    %1409 = vmatprep.subr.mxu0 0.0
    %1410 = vmatpush1.xpose.msra.mxu0 %v1405
    %1411 = vmatprep.subr.mxu0 0.0
    %1412 = vmatpush1.xpose.msra.mxu0 0.0
    %1413 = vmatprep.subr.mxu0 0.0
    %1414 = vmatpush1.xpose.msra.mxu0 0.0
    %1415 = vmatprep.subr.mxu0 0.0
    %1416 = vmatpush1.xpose.msra.mxu0 0.0
    %1417 = vmatprep.subr.mxu0 0.0
    %1418 = vmatpush1.xpose.msra.mxu0 0.0
    %1419 = vmatprep.subr.mxu0 0.0
    %1420 = vmatpush1.xpose.msra.mxu0 0.0
    %1421 = vmatprep.subr.mxu0 0.0
    %1422 = vmatpush1.xpose.msra.mxu0 0.0
    %1423 = vmatprep.subr.mxu0 0.0
    %1424 = vmatpush1.xpose.msra.mxu0 0.0
    %1425 = vmatprep.subr.mxu0 0.0
    %1426 = vmatpush1.xpose.msra.mxu0 0.0
    %1427 = vmatprep.subr.mxu0 0.0
    %1428 = vmatpush1.xpose.msra.mxu0 0.0
    %1429 = vmatprep.subr.mxu0 0.0
    %1430 = vmatpush1.xpose.msra.mxu0 0.0
    %1431 = vmatprep.subr.mxu0 0.0
    %1432 = vmatpush1.xpose.msra.mxu0 0.0
    %1433 = vmatprep.subr.mxu0 0.0
    %1434 = vmatpush1.xpose.msra.mxu0 0.0
    %1435 = vmatprep.subr.mxu0 0.0
    %1436 = vmatpush1.xpose.msra.mxu0 0.0
    %1437 = vmatprep.subr.mxu0 0.0
    %1438 = vmatpush1.xpose.msra.mxu0 0.0
    %1439 = vmatprep.subr.mxu0 0.0
    %1440 = vmatpush1.xpose.msra.mxu0 0.0
    %1441 = vmatprep.subr.mxu0 0.0
    %1442 = vmatpush1.xpose.msra.mxu0 0.0
    %1443 = vmatprep.subr.mxu0 0.0
    %1444 = vmatpush1.xpose.msra.mxu0 0.0
    %1445 = vmatprep.subr.mxu0 0.0
    %1446 = vmatpush1.xpose.msra.mxu0 0.0
    %1447 = vmatprep.subr.mxu0 0.0
    %1448 = vmatpush1.xpose.msra.mxu0 0.0
    %1449 = vmatprep.subr.mxu0 0.0
    %1450 = vmatpush1.xpose.msra.mxu0 0.0
    %1451 = vmatprep.subr.mxu0 0.0
    %1452 = vmatpush1.xpose.msra.mxu0 0.0
    %1453 = vmatprep.subr.mxu0 0.0
    %1454 = vmatpush1.xpose.msra.mxu0 0.0
    %1455 = vmatprep.subr.mxu0 0.0
    %1456 = vmatpush1.xpose.msra.mxu0 0.0
    %1457 = vmatprep.subr.mxu0 0.0
    %1458 = vmatpush1.xpose.msra.mxu0 0.0
    %1459 = vmatprep.subr.mxu0 0.0
    %1460 = vmatpush1.xpose.msra.mxu0 0.0
    %1461 = vmatprep.subr.mxu0 0.0
    %1462 = vmatpush1.xpose.msra.mxu0 0.0
    %1463 = vmatprep.subr.mxu0 0.0
    %1464 = vmatpush1.xpose.msra.mxu0 0.0
    %1465 = vmatprep.subr.mxu0 0.0
    %1466 = vmatpush1.xpose.msra.mxu0 0.0
    %1467 = vmatprep.subr.mxu0 0.0
    %1468 = vmatpush1.xpose.msra.mxu0 0.0
    %1469 = vmatprep.subr.mxu0 0.0
    %1470 = vmatpush1.xpose.msra.mxu0 0.0
    %1471 = vmatprep.mubr.f32.mxu0 0.0
    %1472 = vmatmul.mubr.f32.gmra.mrb[0].mxu0 %v1398
    %v1473 = vpop.f32.mrb[0].mxu0
    %v1474 = vadd.f32 0.0, %v1473
    %v1475 = vpop.f32.mrb[0].mxu0
    %1476 = vmatprep.mubr.f32.mxu0 0.0
    %1477 = vmatmul.mubr.f32.gmra.mrb[0].mxu0 %v1401
    %v1478 = vpop.f32.mrb[0].mxu0
    %v1479 = vadd.f32 0.0, %v1478
    %v1480 = vpop.f32.mrb[0].mxu0
    %1481 = vdwg.mxu0
    %1482 = vrot.lane.b32.xlu0 %v546, 120
    %v1483 = vpop.permute.xlu0 %1482
    %1484 = vrot.lane.b32.xlu0 %v547, 120
    %v1485 = vpop.permute.xlu0 %1484
    %1486 = vrot.lane.b32.xlu0 %v536, 88
    %v1487 = vpop.permute.xlu0 %1486
    %1488 = vrot.lane.b32.xlu0 %v541, 88
    %v1489 = vpop.permute.xlu0 %1488
    %v1490 = vsel %vm554, %v1483, 0
    %v1492 = vsel %vm554, %v1485, 0
    %v1494 = vsel %vm554, %v1487, 0
    %v1496 = vsel %vm554, %v1489, 0
    %1498 = vmatprep.subr.mxu0 0.0
    %1499 = vmatpush1.xpose.msra.mxu0 %v1494
    %1500 = vmatprep.subr.mxu0 0.0
    %1501 = vmatpush1.xpose.msra.mxu0 %v1496
    %1502 = vmatprep.subr.mxu0 0.0
    %1503 = vmatpush1.xpose.msra.mxu0 0.0
    %1504 = vmatprep.subr.mxu0 0.0
    %1505 = vmatpush1.xpose.msra.mxu0 0.0
    %1506 = vmatprep.subr.mxu0 0.0
    %1507 = vmatpush1.xpose.msra.mxu0 0.0
    %1508 = vmatprep.subr.mxu0 0.0
    %1509 = vmatpush1.xpose.msra.mxu0 0.0
    %1510 = vmatprep.subr.mxu0 0.0
    %1511 = vmatpush1.xpose.msra.mxu0 0.0
    %1512 = vmatprep.subr.mxu0 0.0
    %1513 = vmatpush1.xpose.msra.mxu0 0.0
    %1514 = vmatprep.subr.mxu0 0.0
    %1515 = vmatpush1.xpose.msra.mxu0 0.0
    %1516 = vmatprep.subr.mxu0 0.0
    %1517 = vmatpush1.xpose.msra.mxu0 0.0
    %1518 = vmatprep.subr.mxu0 0.0
    %1519 = vmatpush1.xpose.msra.mxu0 0.0
    %1520 = vmatprep.subr.mxu0 0.0
    %1521 = vmatpush1.xpose.msra.mxu0 0.0
    %1522 = vmatprep.subr.mxu0 0.0
    %1523 = vmatpush1.xpose.msra.mxu0 0.0
    %1524 = vmatprep.subr.mxu0 0.0
    %1525 = vmatpush1.xpose.msra.mxu0 0.0
    %1526 = vmatprep.subr.mxu0 0.0
    %1527 = vmatpush1.xpose.msra.mxu0 0.0
    %1528 = vmatprep.subr.mxu0 0.0
    %1529 = vmatpush1.xpose.msra.mxu0 0.0
    %1530 = vmatprep.subr.mxu0 0.0
    %1531 = vmatpush1.xpose.msra.mxu0 0.0
    %1532 = vmatprep.subr.mxu0 0.0
    %1533 = vmatpush1.xpose.msra.mxu0 0.0
    %1534 = vmatprep.subr.mxu0 0.0
    %1535 = vmatpush1.xpose.msra.mxu0 0.0
    %1536 = vmatprep.subr.mxu0 0.0
    %1537 = vmatpush1.xpose.msra.mxu0 0.0
    %1538 = vmatprep.subr.mxu0 0.0
    %1539 = vmatpush1.xpose.msra.mxu0 0.0
    %1540 = vmatprep.subr.mxu0 0.0
    %1541 = vmatpush1.xpose.msra.mxu0 0.0
    %1542 = vmatprep.subr.mxu0 0.0
    %1543 = vmatpush1.xpose.msra.mxu0 0.0
    %1544 = vmatprep.subr.mxu0 0.0
    %1545 = vmatpush1.xpose.msra.mxu0 0.0
    %1546 = vmatprep.subr.mxu0 0.0
    %1547 = vmatpush1.xpose.msra.mxu0 0.0
    %1548 = vmatprep.subr.mxu0 0.0
    %1549 = vmatpush1.xpose.msra.mxu0 0.0
    %1550 = vmatprep.subr.mxu0 0.0
    %1551 = vmatpush1.xpose.msra.mxu0 0.0
    %1552 = vmatprep.subr.mxu0 0.0
    %1553 = vmatpush1.xpose.msra.mxu0 0.0
    %1554 = vmatprep.subr.mxu0 0.0
    %1555 = vmatpush1.xpose.msra.mxu0 0.0
    %1556 = vmatprep.subr.mxu0 0.0
    %1557 = vmatpush1.xpose.msra.mxu0 0.0
    %1558 = vmatprep.subr.mxu0 0.0
    %1559 = vmatpush1.xpose.msra.mxu0 0.0
    %1560 = vmatprep.subr.mxu0 0.0
    %1561 = vmatpush1.xpose.msra.mxu0 0.0
    %1562 = vmatprep.mubr.f32.mxu0 0.0
    %1563 = vmatmul.mubr.f32.gmra.mrb[0].mxu0 %v1490
    %v1564 = vpop.f32.mrb[0].mxu0
    %v1565 = vadd.f32 0.0, %v1564
    %v1566 = vpop.f32.mrb[0].mxu0
    %1567 = vmatprep.mubr.f32.mxu0 0.0
    %1568 = vmatmul.mubr.f32.gmra.mrb[0].mxu0 %v1492
    %v1569 = vpop.f32.mrb[0].mxu0
    %v1570 = vadd.f32 0.0, %v1569
    %v1571 = vpop.f32.mrb[0].mxu0
    %1572 = vdwg.mxu0
    %1573 = vrot.lane.b32.xlu0 %v546, 112
    %v1574 = vpop.permute.xlu0 %1573
    %1575 = vrot.lane.b32.xlu0 %v547, 112
    %v1576 = vpop.permute.xlu0 %1575
    %1577 = vrot.lane.b32.xlu0 %v536, 80
    %v1578 = vpop.permute.xlu0 %1577
    %1579 = vrot.lane.b32.xlu0 %v541, 80
    %v1580 = vpop.permute.xlu0 %1579
    %v1581 = vsel %vm554, %v1574, 0
    %v1583 = vsel %vm554, %v1576, 0
    %v1585 = vsel %vm554, %v1578, 0
    %v1587 = vsel %vm554, %v1580, 0
    %1589 = vmatprep.subr.mxu0 0.0
    %1590 = vmatpush1.xpose.msra.mxu0 %v1585
    %1591 = vmatprep.subr.mxu0 0.0
    %1592 = vmatpush1.xpose.msra.mxu0 %v1587
    %1593 = vmatprep.subr.mxu0 0.0
    %1594 = vmatpush1.xpose.msra.mxu0 0.0
    %1595 = vmatprep.subr.mxu0 0.0
    %1596 = vmatpush1.xpose.msra.mxu0 0.0
    %1597 = vmatprep.subr.mxu0 0.0
    %1598 = vmatpush1.xpose.msra.mxu0 0.0
    %1599 = vmatprep.subr.mxu0 0.0
    %1600 = vmatpush1.xpose.msra.mxu0 0.0
    %1601 = vmatprep.subr.mxu0 0.0
    %1602 = vmatpush1.xpose.msra.mxu0 0.0
    %1603 = vmatprep.subr.mxu0 0.0
    %1604 = vmatpush1.xpose.msra.mxu0 0.0
    %1605 = vmatprep.subr.mxu0 0.0
    %1606 = vmatpush1.xpose.msra.mxu0 0.0
    %1607 = vmatprep.subr.mxu0 0.0
    %1608 = vmatpush1.xpose.msra.mxu0 0.0
    %1609 = vmatprep.subr.mxu0 0.0
    %1610 = vmatpush1.xpose.msra.mxu0 0.0
    %1611 = vmatprep.subr.mxu0 0.0
    %1612 = vmatpush1.xpose.msra.mxu0 0.0
    %1613 = vmatprep.subr.mxu0 0.0
    %1614 = vmatpush1.xpose.msra.mxu0 0.0
    %1615 = vmatprep.subr.mxu0 0.0
    %1616 = vmatpush1.xpose.msra.mxu0 0.0
    %1617 = vmatprep.subr.mxu0 0.0
    %1618 = vmatpush1.xpose.msra.mxu0 0.0
    %1619 = vmatprep.subr.mxu0 0.0
    %1620 = vmatpush1.xpose.msra.mxu0 0.0
    %1621 = vmatprep.subr.mxu0 0.0
    %1622 = vmatpush1.xpose.msra.mxu0 0.0
    %1623 = vmatprep.subr.mxu0 0.0
    %1624 = vmatpush1.xpose.msra.mxu0 0.0
    %1625 = vmatprep.subr.mxu0 0.0
    %1626 = vmatpush1.xpose.msra.mxu0 0.0
    %1627 = vmatprep.subr.mxu0 0.0
    %1628 = vmatpush1.xpose.msra.mxu0 0.0
    %1629 = vmatprep.subr.mxu0 0.0
    %1630 = vmatpush1.xpose.msra.mxu0 0.0
    %1631 = vmatprep.subr.mxu0 0.0
    %1632 = vmatpush1.xpose.msra.mxu0 0.0
    %1633 = vmatprep.subr.mxu0 0.0
    %1634 = vmatpush1.xpose.msra.mxu0 0.0
    %1635 = vmatprep.subr.mxu0 0.0
    %1636 = vmatpush1.xpose.msra.mxu0 0.0
    %1637 = vmatprep.subr.mxu0 0.0
    %1638 = vmatpush1.xpose.msra.mxu0 0.0
    %1639 = vmatprep.subr.mxu0 0.0
    %1640 = vmatpush1.xpose.msra.mxu0 0.0
    %1641 = vmatprep.subr.mxu0 0.0
    %1642 = vmatpush1.xpose.msra.mxu0 0.0
    %1643 = vmatprep.subr.mxu0 0.0
    %1644 = vmatpush1.xpose.msra.mxu0 0.0
    %1645 = vmatprep.subr.mxu0 0.0
    %1646 = vmatpush1.xpose.msra.mxu0 0.0
    %1647 = vmatprep.subr.mxu0 0.0
    %1648 = vmatpush1.xpose.msra.mxu0 0.0
    %1649 = vmatprep.subr.mxu0 0.0
    %1650 = vmatpush1.xpose.msra.mxu0 0.0
    %1651 = vmatprep.subr.mxu0 0.0
    %1652 = vmatpush1.xpose.msra.mxu0 0.0
    %1653 = vmatprep.mubr.f32.mxu0 0.0
    %1654 = vmatmul.mubr.f32.gmra.mrb[0].mxu0 %v1581
    %v1655 = vpop.f32.mrb[0].mxu0
    %v1656 = vadd.f32 0.0, %v1655
    %v1657 = vpop.f32.mrb[0].mxu0
    %1658 = vmatprep.mubr.f32.mxu0 0.0
    %1659 = vmatmul.mubr.f32.gmra.mrb[0].mxu0 %v1583
    %v1660 = vpop.f32.mrb[0].mxu0
    %v1661 = vadd.f32 0.0, %v1660
    %v1662 = vpop.f32.mrb[0].mxu0
    %1663 = vdwg.mxu0
    %1664 = vrot.lane.b32.xlu0 %v546, 104
    %v1665 = vpop.permute.xlu0 %1664
    %1666 = vrot.lane.b32.xlu0 %v547, 104
    %v1667 = vpop.permute.xlu0 %1666
    %1668 = vrot.lane.b32.xlu0 %v536, 72
    %v1669 = vpop.permute.xlu0 %1668
    %1670 = vrot.lane.b32.xlu0 %v541, 72
    %v1671 = vpop.permute.xlu0 %1670
    %v1672 = vsel %vm554, %v1665, 0
    %v1674 = vsel %vm554, %v1667, 0
    %v1676 = vsel %vm554, %v1669, 0
    %v1678 = vsel %vm554, %v1671, 0
    %1680 = vmatprep.subr.mxu0 0.0
    %1681 = vmatpush1.xpose.msra.mxu0 %v1676
    %1682 = vmatprep.subr.mxu0 0.0
    %1683 = vmatpush1.xpose.msra.mxu0 %v1678
    %1684 = vmatprep.subr.mxu0 0.0
    %1685 = vmatpush1.xpose.msra.mxu0 0.0
    %1686 = vmatprep.subr.mxu0 0.0
    %1687 = vmatpush1.xpose.msra.mxu0 0.0
    %1688 = vmatprep.subr.mxu0 0.0
    %1689 = vmatpush1.xpose.msra.mxu0 0.0
    %1690 = vmatprep.subr.mxu0 0.0
    %1691 = vmatpush1.xpose.msra.mxu0 0.0
    %1692 = vmatprep.subr.mxu0 0.0
    %1693 = vmatpush1.xpose.msra.mxu0 0.0
    %1694 = vmatprep.subr.mxu0 0.0
    %1695 = vmatpush1.xpose.msra.mxu0 0.0
    %1696 = vmatprep.subr.mxu0 0.0
    %1697 = vmatpush1.xpose.msra.mxu0 0.0
    %1698 = vmatprep.subr.mxu0 0.0
    %1699 = vmatpush1.xpose.msra.mxu0 0.0
    %1700 = vmatprep.subr.mxu0 0.0
    %1701 = vmatpush1.xpose.msra.mxu0 0.0
    %1702 = vmatprep.subr.mxu0 0.0
    %1703 = vmatpush1.xpose.msra.mxu0 0.0
    %1704 = vmatprep.subr.mxu0 0.0
    %1705 = vmatpush1.xpose.msra.mxu0 0.0
    %1706 = vmatprep.subr.mxu0 0.0
    %1707 = vmatpush1.xpose.msra.mxu0 0.0
    %1708 = vmatprep.subr.mxu0 0.0
    %1709 = vmatpush1.xpose.msra.mxu0 0.0
    %1710 = vmatprep.subr.mxu0 0.0
    %1711 = vmatpush1.xpose.msra.mxu0 0.0
    %1712 = vmatprep.subr.mxu0 0.0
    %1713 = vmatpush1.xpose.msra.mxu0 0.0
    %1714 = vmatprep.subr.mxu0 0.0
    %1715 = vmatpush1.xpose.msra.mxu0 0.0
    %1716 = vmatprep.subr.mxu0 0.0
    %1717 = vmatpush1.xpose.msra.mxu0 0.0
    %1718 = vmatprep.subr.mxu0 0.0
    %1719 = vmatpush1.xpose.msra.mxu0 0.0
    %1720 = vmatprep.subr.mxu0 0.0
    %1721 = vmatpush1.xpose.msra.mxu0 0.0
    %1722 = vmatprep.subr.mxu0 0.0
    %1723 = vmatpush1.xpose.msra.mxu0 0.0
    %1724 = vmatprep.subr.mxu0 0.0
    %1725 = vmatpush1.xpose.msra.mxu0 0.0
    %1726 = vmatprep.subr.mxu0 0.0
    %1727 = vmatpush1.xpose.msra.mxu0 0.0
    %1728 = vmatprep.subr.mxu0 0.0
    %1729 = vmatpush1.xpose.msra.mxu0 0.0
    %1730 = vmatprep.subr.mxu0 0.0
    %1731 = vmatpush1.xpose.msra.mxu0 0.0
    %1732 = vmatprep.subr.mxu0 0.0
    %1733 = vmatpush1.xpose.msra.mxu0 0.0
    %1734 = vmatprep.subr.mxu0 0.0
    %1735 = vmatpush1.xpose.msra.mxu0 0.0
    %1736 = vmatprep.subr.mxu0 0.0
    %1737 = vmatpush1.xpose.msra.mxu0 0.0
    %1738 = vmatprep.subr.mxu0 0.0
    %1739 = vmatpush1.xpose.msra.mxu0 0.0
    %1740 = vmatprep.subr.mxu0 0.0
    %1741 = vmatpush1.xpose.msra.mxu0 0.0
    %1742 = vmatprep.subr.mxu0 0.0
    %1743 = vmatpush1.xpose.msra.mxu0 0.0
    %1744 = vmatprep.mubr.f32.mxu0 0.0
    %1745 = vmatmul.mubr.f32.gmra.mrb[0].mxu0 %v1672
    %v1746 = vpop.f32.mrb[0].mxu0
    %v1747 = vadd.f32 0.0, %v1746
    %v1748 = vpop.f32.mrb[0].mxu0
    %1749 = vmatprep.mubr.f32.mxu0 0.0
    %1750 = vmatmul.mubr.f32.gmra.mrb[0].mxu0 %v1674
    %v1751 = vpop.f32.mrb[0].mxu0
    %v1752 = vadd.f32 0.0, %v1751
    %v1753 = vpop.f32.mrb[0].mxu0
    %1754 = vdwg.mxu0
    %1757 = vrot.lane.b32.xlu0 %v1565, 16
    %v1758 = vpop.permute.xlu0 %1757
    %1759 = vrot.lane.b32.xlu0 %v1570, 16
    %v1760 = vpop.permute.xlu0 %1759
    %1765 = vrot.lane.b32.xlu0 %v1656, 32
    %v1766 = vpop.permute.xlu0 %1765
    %1767 = vrot.lane.b32.xlu0 %v1661, 32
    %v1768 = vpop.permute.xlu0 %1767
    %1773 = vrot.lane.b32.xlu0 %v1747, 48
    %v1774 = vpop.permute.xlu0 %1773
    %1775 = vrot.lane.b32.xlu0 %v1752, 48
    %v1776 = vpop.permute.xlu0 %1775
    %v1779 = vsel %vm937, %v1474, %v1758
    %v1780 = vsel %vm937, %v1479, %v1760
    %v1781 = vsel %vm446, %v1779, %v1766
    %v1782 = vsel %vm446, %v1780, %v1768
    %v1783 = vsel %vm942, %v1781, %v1774
    %v1784 = vsel %vm942, %v1782, %v1776
    %v1785 = vadd.f32 %v1783, %v427
    %v1786 = vadd.f32 %v1784, %v427
    %v1787 = vsel %vm947, %v1785, -inf
    %1788 = vmax.xlane.f32.xlu0 %v1787
    %v1789 = vpop.xlane.xlu0 %1788
    %v1790 = vsel %vm947, %v1786, -inf
    %1791 = vmax.xlane.f32.xlu0 %v1790
    %v1792 = vpop.xlane.xlu0 %1791
    %v1793 = vsub.f32 %v1785, %v1789
    %v1794 = vsub.f32 %v1786, %v1792
    %v1795 = vmul.f32 %v1793, 1.442695
    %v1796 = vpow.pop %v1795
    %v1797 = vmul.f32 %v1794, 1.442695
    %v1798 = vpow.pop %v1797
    %v1799 = vsel %vm937, %v1796, 0.0
    %1800 = vadd.xlane.f32.xlu0 %v1799
    %v1801 = vpop.xlane.xlu0 %1800
    %v1802 = vsel %vm937, %v1798, 0.0
    %1803 = vadd.xlane.f32.xlu0 %v1802
    %v1804 = vpop.xlane.xlu0 %1803
    %v1805 = vrcp.pop %v1801
    %v1806 = vrcp.pop %v1804
    %1807 = vrot.lane.b32.xlu0 %v536, 64
    %v1808 = vpop.permute.xlu0 %1807
    %1809 = vrot.lane.b32.xlu0 %v541, 64
    %v1810 = vpop.permute.xlu0 %1809
    %v1814 = vsel %vm937, %v1796, 0
    %v1817 = vsel %vm937, %v1798, 0
    %1819 = vmatprep.subr.mxu0 0.0
    %1820 = vmatpush1.msra.mxu0 %v1808
    %1821 = vmatprep.subr.mxu0 0.0
    %1822 = vmatpush1.msra.mxu0 %v1810
    %1823 = vmatprep.subr.mxu0 0.0
    %1824 = vmatpush1.msra.mxu0 0.0
    %1825 = vmatprep.subr.mxu0 0.0
    %1826 = vmatpush1.msra.mxu0 0.0
    %1827 = vmatprep.subr.mxu0 0.0
    %1828 = vmatpush1.msra.mxu0 0.0
    %1829 = vmatprep.subr.mxu0 0.0
    %1830 = vmatpush1.msra.mxu0 0.0
    %1831 = vmatprep.subr.mxu0 0.0
    %1832 = vmatpush1.msra.mxu0 0.0
    %1833 = vmatprep.subr.mxu0 0.0
    %1834 = vmatpush1.msra.mxu0 0.0
    %1835 = vmatprep.subr.mxu0 0.0
    %1836 = vmatpush1.msra.mxu0 0.0
    %1837 = vmatprep.subr.mxu0 0.0
    %1838 = vmatpush1.msra.mxu0 0.0
    %1839 = vmatprep.subr.mxu0 0.0
    %1840 = vmatpush1.msra.mxu0 0.0
    %1841 = vmatprep.subr.mxu0 0.0
    %1842 = vmatpush1.msra.mxu0 0.0
    %1843 = vmatprep.subr.mxu0 0.0
    %1844 = vmatpush1.msra.mxu0 0.0
    %1845 = vmatprep.subr.mxu0 0.0
    %1846 = vmatpush1.msra.mxu0 0.0
    %1847 = vmatprep.subr.mxu0 0.0
    %1848 = vmatpush1.msra.mxu0 0.0
    %1849 = vmatprep.subr.mxu0 0.0
    %1850 = vmatpush1.msra.mxu0 0.0
    %1851 = vmatprep.subr.mxu0 0.0
    %1852 = vmatpush1.msra.mxu0 0.0
    %1853 = vmatprep.subr.mxu0 0.0
    %1854 = vmatpush1.msra.mxu0 0.0
    %1855 = vmatprep.subr.mxu0 0.0
    %1856 = vmatpush1.msra.mxu0 0.0
    %1857 = vmatprep.subr.mxu0 0.0
    %1858 = vmatpush1.msra.mxu0 0.0
    %1859 = vmatprep.subr.mxu0 0.0
    %1860 = vmatpush1.msra.mxu0 0.0
    %1861 = vmatprep.subr.mxu0 0.0
    %1862 = vmatpush1.msra.mxu0 0.0
    %1863 = vmatprep.subr.mxu0 0.0
    %1864 = vmatpush1.msra.mxu0 0.0
    %1865 = vmatprep.subr.mxu0 0.0
    %1866 = vmatpush1.msra.mxu0 0.0
    %1867 = vmatprep.subr.mxu0 0.0
    %1868 = vmatpush1.msra.mxu0 0.0
    %1869 = vmatprep.subr.mxu0 0.0
    %1870 = vmatpush1.msra.mxu0 0.0
    %1871 = vmatprep.subr.mxu0 0.0
    %1872 = vmatpush1.msra.mxu0 0.0
    %1873 = vmatprep.subr.mxu0 0.0
    %1874 = vmatpush1.msra.mxu0 0.0
    %1875 = vmatprep.subr.mxu0 0.0
    %1876 = vmatpush1.msra.mxu0 0.0
    %1877 = vmatprep.subr.mxu0 0.0
    %1878 = vmatpush1.msra.mxu0 0.0
    %1879 = vmatprep.subr.mxu0 0.0
    %1880 = vmatpush1.msra.mxu0 0.0
    %1881 = vmatprep.subr.mxu0 0.0
    %1882 = vmatpush1.msra.mxu0 0.0
    %1883 = vmatprep.mubr.f32.mxu0 0.0
    %1884 = vmatmul.mubr.f32.gmra.mrb[0].mxu0 %v1814
    %v1885 = vpop.f32.mrb[0].mxu0
    %v1886 = vadd.f32 0.0, %v1885
    %v1887 = vpop.f32.mrb[0].mxu0
    %1888 = vmatprep.mubr.f32.mxu0 0.0
    %1889 = vmatmul.mubr.f32.gmra.mrb[0].mxu0 %v1817
    %v1890 = vpop.f32.mrb[0].mxu0
    %v1891 = vadd.f32 0.0, %v1890
    %v1892 = vpop.f32.mrb[0].mxu0
    %1893 = vdwg.mxu0
    %v1894 = vmul.f32 %v1886, %v1805
    %v1895 = vmul.f32 %v1891, %v1806
    %1896 = vrot.lane.b32.xlu0 %v1796, 112
    %v1897 = vpop.permute.xlu0 %1896
    %1898 = vrot.lane.b32.xlu0 %v1798, 112
    %v1899 = vpop.permute.xlu0 %1898
    %v1902 = vsel %vm937, %v1897, 0.0
    %1903 = vadd.xlane.f32.xlu0 %v1902
    %v1904 = vpop.xlane.xlu0 %1903
    %v1905 = vsel %vm937, %v1899, 0.0
    %1906 = vadd.xlane.f32.xlu0 %v1905
    %v1907 = vpop.xlane.xlu0 %1906
    %v1908 = vrcp.pop %v1904
    %v1909 = vrcp.pop %v1907
    %1910 = vrot.lane.b32.xlu0 %v536, 56
    %v1911 = vpop.permute.xlu0 %1910
    %1912 = vrot.lane.b32.xlu0 %v541, 56
    %v1913 = vpop.permute.xlu0 %1912
    %v1916 = vsel %vm937, %v1897, 0
    %v1918 = vsel %vm937, %v1899, 0
    %1920 = vmatprep.subr.mxu0 0.0
    %1921 = vmatpush1.msra.mxu0 %v1911
    %1922 = vmatprep.subr.mxu0 0.0
    %1923 = vmatpush1.msra.mxu0 %v1913
    %1924 = vmatprep.subr.mxu0 0.0
    %1925 = vmatpush1.msra.mxu0 0.0
    %1926 = vmatprep.subr.mxu0 0.0
    %1927 = vmatpush1.msra.mxu0 0.0
    %1928 = vmatprep.subr.mxu0 0.0
    %1929 = vmatpush1.msra.mxu0 0.0
    %1930 = vmatprep.subr.mxu0 0.0
    %1931 = vmatpush1.msra.mxu0 0.0
    %1932 = vmatprep.subr.mxu0 0.0
    %1933 = vmatpush1.msra.mxu0 0.0
    %1934 = vmatprep.subr.mxu0 0.0
    %1935 = vmatpush1.msra.mxu0 0.0
    %1936 = vmatprep.subr.mxu0 0.0
    %1937 = vmatpush1.msra.mxu0 0.0
    %1938 = vmatprep.subr.mxu0 0.0
    %1939 = vmatpush1.msra.mxu0 0.0
    %1940 = vmatprep.subr.mxu0 0.0
    %1941 = vmatpush1.msra.mxu0 0.0
    %1942 = vmatprep.subr.mxu0 0.0
    %1943 = vmatpush1.msra.mxu0 0.0
    %1944 = vmatprep.subr.mxu0 0.0
    %1945 = vmatpush1.msra.mxu0 0.0
    %1946 = vmatprep.subr.mxu0 0.0
    %1947 = vmatpush1.msra.mxu0 0.0
    %1948 = vmatprep.subr.mxu0 0.0
    %1949 = vmatpush1.msra.mxu0 0.0
    %1950 = vmatprep.subr.mxu0 0.0
    %1951 = vmatpush1.msra.mxu0 0.0
    %1952 = vmatprep.subr.mxu0 0.0
    %1953 = vmatpush1.msra.mxu0 0.0
    %1954 = vmatprep.subr.mxu0 0.0
    %1955 = vmatpush1.msra.mxu0 0.0
    %1956 = vmatprep.subr.mxu0 0.0
    %1957 = vmatpush1.msra.mxu0 0.0
    %1958 = vmatprep.subr.mxu0 0.0
    %1959 = vmatpush1.msra.mxu0 0.0
    %1960 = vmatprep.subr.mxu0 0.0
    %1961 = vmatpush1.msra.mxu0 0.0
    %1962 = vmatprep.subr.mxu0 0.0
    %1963 = vmatpush1.msra.mxu0 0.0
    %1964 = vmatprep.subr.mxu0 0.0
    %1965 = vmatpush1.msra.mxu0 0.0
    %1966 = vmatprep.subr.mxu0 0.0
    %1967 = vmatpush1.msra.mxu0 0.0
    %1968 = vmatprep.subr.mxu0 0.0
    %1969 = vmatpush1.msra.mxu0 0.0
    %1970 = vmatprep.subr.mxu0 0.0
    %1971 = vmatpush1.msra.mxu0 0.0
    %1972 = vmatprep.subr.mxu0 0.0
    %1973 = vmatpush1.msra.mxu0 0.0
    %1974 = vmatprep.subr.mxu0 0.0
    %1975 = vmatpush1.msra.mxu0 0.0
    %1976 = vmatprep.subr.mxu0 0.0
    %1977 = vmatpush1.msra.mxu0 0.0
    %1978 = vmatprep.subr.mxu0 0.0
    %1979 = vmatpush1.msra.mxu0 0.0
    %1980 = vmatprep.subr.mxu0 0.0
    %1981 = vmatpush1.msra.mxu0 0.0
    %1982 = vmatprep.subr.mxu0 0.0
    %1983 = vmatpush1.msra.mxu0 0.0
    %1984 = vmatprep.mubr.f32.mxu0 0.0
    %1985 = vmatmul.mubr.f32.gmra.mrb[0].mxu0 %v1916
    %v1986 = vpop.f32.mrb[0].mxu0
    %v1987 = vadd.f32 0.0, %v1986
    %v1988 = vpop.f32.mrb[0].mxu0
    %1989 = vmatprep.mubr.f32.mxu0 0.0
    %1990 = vmatmul.mubr.f32.gmra.mrb[0].mxu0 %v1918
    %v1991 = vpop.f32.mrb[0].mxu0
    %v1992 = vadd.f32 0.0, %v1991
    %v1993 = vpop.f32.mrb[0].mxu0
    %1994 = vdwg.mxu0
    %v1995 = vmul.f32 %v1987, %v1908
    %v1996 = vmul.f32 %v1992, %v1909
    %1997 = vrot.lane.b32.xlu0 %v1796, 96
    %v1998 = vpop.permute.xlu0 %1997
    %1999 = vrot.lane.b32.xlu0 %v1798, 96
    %v2000 = vpop.permute.xlu0 %1999
    %v2003 = vsel %vm937, %v1998, 0.0
    %2004 = vadd.xlane.f32.xlu0 %v2003
    %v2005 = vpop.xlane.xlu0 %2004
    %v2006 = vsel %vm937, %v2000, 0.0
    %2007 = vadd.xlane.f32.xlu0 %v2006
    %v2008 = vpop.xlane.xlu0 %2007
    %v2009 = vrcp.pop %v2005
    %v2010 = vrcp.pop %v2008
    %2011 = vrot.lane.b32.xlu0 %v536, 48
    %v2012 = vpop.permute.xlu0 %2011
    %2013 = vrot.lane.b32.xlu0 %v541, 48
    %v2014 = vpop.permute.xlu0 %2013
    %v2017 = vsel %vm937, %v1998, 0
    %v2019 = vsel %vm937, %v2000, 0
    %2021 = vmatprep.subr.mxu0 0.0
    %2022 = vmatpush1.msra.mxu0 %v2012
    %2023 = vmatprep.subr.mxu0 0.0
    %2024 = vmatpush1.msra.mxu0 %v2014
    %2025 = vmatprep.subr.mxu0 0.0
    %2026 = vmatpush1.msra.mxu0 0.0
    %2027 = vmatprep.subr.mxu0 0.0
    %2028 = vmatpush1.msra.mxu0 0.0
    %2029 = vmatprep.subr.mxu0 0.0
    %2030 = vmatpush1.msra.mxu0 0.0
    %2031 = vmatprep.subr.mxu0 0.0
    %2032 = vmatpush1.msra.mxu0 0.0
    %2033 = vmatprep.subr.mxu0 0.0
    %2034 = vmatpush1.msra.mxu0 0.0
    %2035 = vmatprep.subr.mxu0 0.0
    %2036 = vmatpush1.msra.mxu0 0.0
    %2037 = vmatprep.subr.mxu0 0.0
    %2038 = vmatpush1.msra.mxu0 0.0
    %2039 = vmatprep.subr.mxu0 0.0
    %2040 = vmatpush1.msra.mxu0 0.0
    %2041 = vmatprep.subr.mxu0 0.0
    %2042 = vmatpush1.msra.mxu0 0.0
    %2043 = vmatprep.subr.mxu0 0.0
    %2044 = vmatpush1.msra.mxu0 0.0
    %2045 = vmatprep.subr.mxu0 0.0
    %2046 = vmatpush1.msra.mxu0 0.0
    %2047 = vmatprep.subr.mxu0 0.0
    %2048 = vmatpush1.msra.mxu0 0.0
    %2049 = vmatprep.subr.mxu0 0.0
    %2050 = vmatpush1.msra.mxu0 0.0
    %2051 = vmatprep.subr.mxu0 0.0
    %2052 = vmatpush1.msra.mxu0 0.0
    %2053 = vmatprep.subr.mxu0 0.0
    %2054 = vmatpush1.msra.mxu0 0.0
    %2055 = vmatprep.subr.mxu0 0.0
    %2056 = vmatpush1.msra.mxu0 0.0
    %2057 = vmatprep.subr.mxu0 0.0
    %2058 = vmatpush1.msra.mxu0 0.0
    %2059 = vmatprep.subr.mxu0 0.0
    %2060 = vmatpush1.msra.mxu0 0.0
    %2061 = vmatprep.subr.mxu0 0.0
    %2062 = vmatpush1.msra.mxu0 0.0
    %2063 = vmatprep.subr.mxu0 0.0
    %2064 = vmatpush1.msra.mxu0 0.0
    %2065 = vmatprep.subr.mxu0 0.0
    %2066 = vmatpush1.msra.mxu0 0.0
    %2067 = vmatprep.subr.mxu0 0.0
    %2068 = vmatpush1.msra.mxu0 0.0
    %2069 = vmatprep.subr.mxu0 0.0
    %2070 = vmatpush1.msra.mxu0 0.0
    %2071 = vmatprep.subr.mxu0 0.0
    %2072 = vmatpush1.msra.mxu0 0.0
    %2073 = vmatprep.subr.mxu0 0.0
    %2074 = vmatpush1.msra.mxu0 0.0
    %2075 = vmatprep.subr.mxu0 0.0
    %2076 = vmatpush1.msra.mxu0 0.0
    %2077 = vmatprep.subr.mxu0 0.0
    %2078 = vmatpush1.msra.mxu0 0.0
    %2079 = vmatprep.subr.mxu0 0.0
    %2080 = vmatpush1.msra.mxu0 0.0
    %2081 = vmatprep.subr.mxu0 0.0
    %2082 = vmatpush1.msra.mxu0 0.0
    %2083 = vmatprep.subr.mxu0 0.0
    %2084 = vmatpush1.msra.mxu0 0.0
    %2085 = vmatprep.mubr.f32.mxu0 0.0
    %2086 = vmatmul.mubr.f32.gmra.mrb[0].mxu0 %v2017
    %v2087 = vpop.f32.mrb[0].mxu0
    %v2088 = vadd.f32 0.0, %v2087
    %v2089 = vpop.f32.mrb[0].mxu0
    %2090 = vmatprep.mubr.f32.mxu0 0.0
    %2091 = vmatmul.mubr.f32.gmra.mrb[0].mxu0 %v2019
    %v2092 = vpop.f32.mrb[0].mxu0
    %v2093 = vadd.f32 0.0, %v2092
    %v2094 = vpop.f32.mrb[0].mxu0
    %2095 = vdwg.mxu0
    %v2096 = vmul.f32 %v2088, %v2009
    %v2097 = vmul.f32 %v2093, %v2010
    %2098 = vrot.lane.b32.xlu0 %v1796, 80
    %v2099 = vpop.permute.xlu0 %2098
    %2100 = vrot.lane.b32.xlu0 %v1798, 80
    %v2101 = vpop.permute.xlu0 %2100
    %v2104 = vsel %vm937, %v2099, 0.0
    %2105 = vadd.xlane.f32.xlu0 %v2104
    %v2106 = vpop.xlane.xlu0 %2105
    %v2107 = vsel %vm937, %v2101, 0.0
    %2108 = vadd.xlane.f32.xlu0 %v2107
    %v2109 = vpop.xlane.xlu0 %2108
    %v2110 = vrcp.pop %v2106
    %v2111 = vrcp.pop %v2109
    %2112 = vrot.lane.b32.xlu0 %v536, 40
    %v2113 = vpop.permute.xlu0 %2112
    %2114 = vrot.lane.b32.xlu0 %v541, 40
    %v2115 = vpop.permute.xlu0 %2114
    %v2118 = vsel %vm937, %v2099, 0
    %v2120 = vsel %vm937, %v2101, 0
    %2122 = vmatprep.subr.mxu0 0.0
    %2123 = vmatpush1.msra.mxu0 %v2113
    %2124 = vmatprep.subr.mxu0 0.0
    %2125 = vmatpush1.msra.mxu0 %v2115
    %2126 = vmatprep.subr.mxu0 0.0
    %2127 = vmatpush1.msra.mxu0 0.0
    %2128 = vmatprep.subr.mxu0 0.0
    %2129 = vmatpush1.msra.mxu0 0.0
    %2130 = vmatprep.subr.mxu0 0.0
    %2131 = vmatpush1.msra.mxu0 0.0
    %2132 = vmatprep.subr.mxu0 0.0
    %2133 = vmatpush1.msra.mxu0 0.0
    %2134 = vmatprep.subr.mxu0 0.0
    %2135 = vmatpush1.msra.mxu0 0.0
    %2136 = vmatprep.subr.mxu0 0.0
    %2137 = vmatpush1.msra.mxu0 0.0
    %2138 = vmatprep.subr.mxu0 0.0
    %2139 = vmatpush1.msra.mxu0 0.0
    %2140 = vmatprep.subr.mxu0 0.0
    %2141 = vmatpush1.msra.mxu0 0.0
    %2142 = vmatprep.subr.mxu0 0.0
    %2143 = vmatpush1.msra.mxu0 0.0
    %2144 = vmatprep.subr.mxu0 0.0
    %2145 = vmatpush1.msra.mxu0 0.0
    %2146 = vmatprep.subr.mxu0 0.0
    %2147 = vmatpush1.msra.mxu0 0.0
    %2148 = vmatprep.subr.mxu0 0.0
    %2149 = vmatpush1.msra.mxu0 0.0
    %2150 = vmatprep.subr.mxu0 0.0
    %2151 = vmatpush1.msra.mxu0 0.0
    %2152 = vmatprep.subr.mxu0 0.0
    %2153 = vmatpush1.msra.mxu0 0.0
    %2154 = vmatprep.subr.mxu0 0.0
    %2155 = vmatpush1.msra.mxu0 0.0
    %2156 = vmatprep.subr.mxu0 0.0
    %2157 = vmatpush1.msra.mxu0 0.0
    %2158 = vmatprep.subr.mxu0 0.0
    %2159 = vmatpush1.msra.mxu0 0.0
    %2160 = vmatprep.subr.mxu0 0.0
    %2161 = vmatpush1.msra.mxu0 0.0
    %2162 = vmatprep.subr.mxu0 0.0
    %2163 = vmatpush1.msra.mxu0 0.0
    %2164 = vmatprep.subr.mxu0 0.0
    %2165 = vmatpush1.msra.mxu0 0.0
    %2166 = vmatprep.subr.mxu0 0.0
    %2167 = vmatpush1.msra.mxu0 0.0
    %2168 = vmatprep.subr.mxu0 0.0
    %2169 = vmatpush1.msra.mxu0 0.0
    %2170 = vmatprep.subr.mxu0 0.0
    %2171 = vmatpush1.msra.mxu0 0.0
    %2172 = vmatprep.subr.mxu0 0.0
    %2173 = vmatpush1.msra.mxu0 0.0
    %2174 = vmatprep.subr.mxu0 0.0
    %2175 = vmatpush1.msra.mxu0 0.0
    %2176 = vmatprep.subr.mxu0 0.0
    %2177 = vmatpush1.msra.mxu0 0.0
    %2178 = vmatprep.subr.mxu0 0.0
    %2179 = vmatpush1.msra.mxu0 0.0
    %2180 = vmatprep.subr.mxu0 0.0
    %2181 = vmatpush1.msra.mxu0 0.0
    %2182 = vmatprep.subr.mxu0 0.0
    %2183 = vmatpush1.msra.mxu0 0.0
    %2184 = vmatprep.subr.mxu0 0.0
    %2185 = vmatpush1.msra.mxu0 0.0
    %2186 = vmatprep.mubr.f32.mxu0 0.0
    %2187 = vmatmul.mubr.f32.gmra.mrb[0].mxu0 %v2118
    %v2188 = vpop.f32.mrb[0].mxu0
    %v2189 = vadd.f32 0.0, %v2188
    %v2190 = vpop.f32.mrb[0].mxu0
    %2191 = vmatprep.mubr.f32.mxu0 0.0
    %2192 = vmatmul.mubr.f32.gmra.mrb[0].mxu0 %v2120
    %v2193 = vpop.f32.mrb[0].mxu0
    %v2194 = vadd.f32 0.0, %v2193
    %v2195 = vpop.f32.mrb[0].mxu0
    %2196 = vdwg.mxu0
    %v2197 = vmul.f32 %v2189, %v2110
    %v2198 = vmul.f32 %v2194, %v2111
    %2201 = vrot.lane.b32.xlu0 %v1995, 8
    %v2202 = vpop.permute.xlu0 %2201
    %2203 = vrot.lane.b32.xlu0 %v1996, 8
    %v2204 = vpop.permute.xlu0 %2203
    %2209 = vrot.lane.b32.xlu0 %v2096, 16
    %v2210 = vpop.permute.xlu0 %2209
    %2211 = vrot.lane.b32.xlu0 %v2097, 16
    %v2212 = vpop.permute.xlu0 %2211
    %2217 = vrot.lane.b32.xlu0 %v2197, 24
    %v2218 = vpop.permute.xlu0 %2217
    %2219 = vrot.lane.b32.xlu0 %v2198, 24
    %v2220 = vpop.permute.xlu0 %2219
    %v2223 = vsel %vm554, %v1894, %v2202
    %v2224 = vsel %vm554, %v1895, %v2204
    %v2225 = vsel %vm937, %v2223, %v2210
    %v2226 = vsel %vm937, %v2224, %v2212
    %v2227 = vsel %vm1388, %v2225, %v2218
    %v2228 = vsel %vm1388, %v2226, %v2220
    %v2230 = vlaneseq
    %v2231 = vshrl.u32 %v2230, 7
    %v2232 = vsub.s32 0, %v2231
    %v2233 = vrot.slane %v439, %v2232
    %v2236 = vsel %vm446, %v1389, 0
    %v2239 = vsel %vm446, %v1390, 0
    %v2242 = vsel %vm446, %v2227, 0
    %v2245 = vsel %vm446, %v2228, 0
    %2247 = vmatprep.subr.mxu0 0.0
    %2248 = vmatpush1.msra.mxu0 %v435
    %2249 = vmatprep.subr.mxu0 0.0
    %2250 = vmatpush1.msra.mxu0 %v436
    %2251 = vmatprep.subr.mxu0 0.0
    %2252 = vmatpush1.msra.mxu0 %v437
    %2253 = vmatprep.subr.mxu0 0.0
    %2254 = vmatpush1.msra.mxu0 %v438
    %2255 = vmatprep.subr.mxu0 0.0
    %2256 = vmatpush1.msra.mxu0 0.0
    %2257 = vmatprep.subr.mxu0 0.0
    %2258 = vmatpush1.msra.mxu0 0.0
    %2259 = vmatprep.subr.mxu0 0.0
    %2260 = vmatpush1.msra.mxu0 0.0
    %2261 = vmatprep.subr.mxu0 0.0
    %2262 = vmatpush1.msra.mxu0 0.0
    %2263 = vmatprep.subr.mxu0 0.0
    %2264 = vmatpush1.msra.mxu0 0.0
    %2265 = vmatprep.subr.mxu0 0.0
    %2266 = vmatpush1.msra.mxu0 0.0
    %2267 = vmatprep.subr.mxu0 0.0
    %2268 = vmatpush1.msra.mxu0 0.0
    %2269 = vmatprep.subr.mxu0 0.0
    %2270 = vmatpush1.msra.mxu0 0.0
    %2271 = vmatprep.subr.mxu0 0.0
    %2272 = vmatpush1.msra.mxu0 0.0
    %2273 = vmatprep.subr.mxu0 0.0
    %2274 = vmatpush1.msra.mxu0 0.0
    %2275 = vmatprep.subr.mxu0 0.0
    %2276 = vmatpush1.msra.mxu0 0.0
    %2277 = vmatprep.subr.mxu0 0.0
    %2278 = vmatpush1.msra.mxu0 0.0
    %2279 = vmatprep.subr.mxu0 0.0
    %2280 = vmatpush1.msra.mxu0 0.0
    %2281 = vmatprep.subr.mxu0 0.0
    %2282 = vmatpush1.msra.mxu0 0.0
    %2283 = vmatprep.subr.mxu0 0.0
    %2284 = vmatpush1.msra.mxu0 0.0
    %2285 = vmatprep.subr.mxu0 0.0
    %2286 = vmatpush1.msra.mxu0 0.0
    %2287 = vmatprep.subr.mxu0 0.0
    %2288 = vmatpush1.msra.mxu0 0.0
    %2289 = vmatprep.subr.mxu0 0.0
    %2290 = vmatpush1.msra.mxu0 0.0
    %2291 = vmatprep.subr.mxu0 0.0
    %2292 = vmatpush1.msra.mxu0 0.0
    %2293 = vmatprep.subr.mxu0 0.0
    %2294 = vmatpush1.msra.mxu0 0.0
    %2295 = vmatprep.subr.mxu0 0.0
    %2296 = vmatpush1.msra.mxu0 0.0
    %2297 = vmatprep.subr.mxu0 0.0
    %2298 = vmatpush1.msra.mxu0 0.0
    %2299 = vmatprep.subr.mxu0 0.0
    %2300 = vmatpush1.msra.mxu0 0.0
    %2301 = vmatprep.subr.mxu0 0.0
    %2302 = vmatpush1.msra.mxu0 0.0
    %2303 = vmatprep.subr.mxu0 0.0
    %2304 = vmatpush1.msra.mxu0 0.0
    %2305 = vmatprep.subr.mxu0 0.0
    %2306 = vmatpush1.msra.mxu0 0.0
    %2307 = vmatprep.subr.mxu0 0.0
    %2308 = vmatpush1.msra.mxu0 0.0
    %2309 = vmatprep.subr.mxu0 0.0
    %2310 = vmatpush1.msra.mxu0 0.0
    %2311 = vmatprep.mubr.f32.mxu0 0.0
    %2312 = vmatmul.mubr.f32.gmra.mrb[0].mxu0 %v2236
    %v2313 = vpop.f32.mrb[0].mxu0
    %v2314 = vadd.f32 %v2233, %v2313
    %v2315 = vpop.f32.mrb[0].mxu0
    %2316 = vmatprep.mubr.f32.mxu0 0.0
    %2317 = vmatmul.mubr.f32.gmra.mrb[0].mxu0 %v2239
    %v2318 = vpop.f32.mrb[0].mxu0
    %v2319 = vadd.f32 %v2233, %v2318
    %v2320 = vpop.f32.mrb[0].mxu0
    %2321 = vmatprep.mubr.f32.mxu0 0.0
    %2322 = vmatmul.mubr.f32.gmra.mrb[0].mxu0 %v2242
    %v2323 = vpop.f32.mrb[0].mxu0
    %v2324 = vadd.f32 %v2233, %v2323
    %v2325 = vpop.f32.mrb[0].mxu0
    %2326 = vmatprep.mubr.f32.mxu0 0.0
    %2327 = vmatmul.mubr.f32.gmra.mrb[0].mxu0 %v2245
    %v2328 = vpop.f32.mrb[0].mxu0
    %v2329 = vadd.f32 %v2233, %v2328
    %v2330 = vpop.f32.mrb[0].mxu0
    %2331 = vdwg.mxu0
    %v2332 = vadd.f32 %v396, %v2314
    %v2333 = vadd.f32 %v401, %v2319
    %v2334 = vadd.f32 %v406, %v2324
    %v2335 = vadd.f32 %v411, %v2329
    %v2336 = vsel %vm446, %v2332, 0.0
    %2337 = vadd.xlane.f32.xlu0 %v2336
    %v2338 = vpop.xlane.xlu0 %2337
    %v2339 = vsel %vm446, %v2333, 0.0
    %2340 = vadd.xlane.f32.xlu0 %v2339
    %v2341 = vpop.xlane.xlu0 %2340
    %v2342 = vsel %vm446, %v2334, 0.0
    %2343 = vadd.xlane.f32.xlu0 %v2342
    %v2344 = vpop.xlane.xlu0 %2343
    %v2345 = vsel %vm446, %v2335, 0.0
    %2346 = vadd.xlane.f32.xlu0 %v2345
    %v2347 = vpop.xlane.xlu0 %2346
    %v2348 = vrcp.pop 32.0
    %v2349 = vmul.f32 %v2338, %v2348
    %v2350 = vmul.f32 %v2341, %v2348
    %v2351 = vmul.f32 %v2344, %v2348
    %v2352 = vmul.f32 %v2347, %v2348
    %v2353 = vsub.f32 %v2332, %v2349
    %v2354 = vsub.f32 %v2333, %v2350
    %v2355 = vsub.f32 %v2334, %v2351
    %v2356 = vsub.f32 %v2335, %v2352
    %v2357 = vmul.f32 %v2353, %v2353
    %v2358 = vmul.f32 %v2354, %v2354
    %v2359 = vmul.f32 %v2355, %v2355
    %v2360 = vmul.f32 %v2356, %v2356
    %v2361 = vsel %vm446, %v2357, 0.0
    %2362 = vadd.xlane.f32.xlu0 %v2361
    %v2363 = vpop.xlane.xlu0 %2362
    %v2364 = vsel %vm446, %v2358, 0.0
    %2365 = vadd.xlane.f32.xlu0 %v2364
    %v2366 = vpop.xlane.xlu0 %2365
    %v2367 = vsel %vm446, %v2359, 0.0
    %2368 = vadd.xlane.f32.xlu0 %v2367
    %v2369 = vpop.xlane.xlu0 %2368
    %v2370 = vsel %vm446, %v2360, 0.0
    %2371 = vadd.xlane.f32.xlu0 %v2370
    %v2372 = vpop.xlane.xlu0 %2371
    %v2373 = vmul.f32 %v2363, %v2348
    %v2374 = vmul.f32 %v2366, %v2348
    %v2375 = vmul.f32 %v2369, %v2348
    %v2376 = vmul.f32 %v2372, %v2348
    %v2377 = vadd.f32 %v2373, 1e-05
    %v2378 = vadd.f32 %v2374, 1e-05
    %v2379 = vadd.f32 %v2375, 1e-05
    %v2380 = vadd.f32 %v2376, 1e-05
    %v2381 = vrsqrt.pop %v2377
    %v2382 = vrsqrt.pop %v2378
    %v2383 = vrsqrt.pop %v2379
    %v2384 = vrsqrt.pop %v2380
    %v2385 = vmul.f32 %v2353, %v2381
    %v2386 = vmul.f32 %v2354, %v2382
    %v2387 = vmul.f32 %v2355, %v2383
    %v2388 = vmul.f32 %v2356, %v2384
    %v2389 = vlaneseq
    %v2390 = vshrl.u32 %v2389, 7
    %v2391 = vsub.s32 0, %v2390
    %v2392 = vrot.slane %v429, %v2391
    %v2393 = vmul.f32 %v2385, %v2392
    %v2394 = vmul.f32 %v2386, %v2392
    %v2395 = vmul.f32 %v2387, %v2392
    %v2396 = vmul.f32 %v2388, %v2392
    %v2397 = vlaneseq
    %v2398 = vshrl.u32 %v2397, 7
    %v2399 = vsub.s32 1, %v2398
    %v2400 = vrot.slane %v429, %v2399
    %v2401 = vadd.f32 %v2393, %v2400
    %v2402 = vadd.f32 %v2394, %v2400
    %v2403 = vadd.f32 %v2395, %v2400
    %v2404 = vadd.f32 %v2396, %v2400
    %v2405 = vld [vmem:[%s10] sm:$0xff]
    %v2406 = vld [vmem:[%s10 + $0x8] sm:$0xff]
    %v2407 = vld [vmem:[%s10 + $0x10] sm:$0xff]
    %v2408 = vld [vmem:[%s10 + $0x18] sm:$0xff]
    %v2409 = vld [vmem:[#allocation13] sm:$0x1]
    %v2410 = vld [vmem:[%s12] sm:$0xff]
    %v2411 = vld [vmem:[%s12 + $0x8] sm:$0xff]
    %v2412 = vld [vmem:[%s12 + $0x10] sm:$0xff]
    %v2413 = vld [vmem:[%s12 + $0x18] sm:$0xff]
    %v2414 = vld [vmem:[%s12 + $0x20] sm:$0xff]
    %v2415 = vld [vmem:[%s12 + $0x28] sm:$0xff]
    %v2416 = vld [vmem:[%s12 + $0x30] sm:$0xff]
    %v2417 = vld [vmem:[%s12 + $0x38] sm:$0xff]
    %v2418 = vld [vmem:[#allocation14] sm:$0x1]
    %v2420 = vlaneseq
    %v2421 = vshrl.u32 %v2420, 7
    %v2422 = vsub.s32 0, %v2421
    %v2423 = vrot.slane %v2409, %v2422
    %v2426 = vsel %vm446, %v2401, 0
    %v2429 = vsel %vm446, %v2402, 0
    %v2432 = vsel %vm446, %v2403, 0
    %v2435 = vsel %vm446, %v2404, 0
    %2437 = vmatprep.subr.mxu0 0.0
    %2438 = vmatpush1.msra.mxu0 %v2405
    %2439 = vmatprep.subr.mxu0 0.0
    %2440 = vmatpush1.msra.mxu0 %v2406
    %2441 = vmatprep.subr.mxu0 0.0
    %2442 = vmatpush1.msra.mxu0 %v2407
    %2443 = vmatprep.subr.mxu0 0.0
    %2444 = vmatpush1.msra.mxu0 %v2408
    %2445 = vmatprep.subr.mxu0 0.0
    %2446 = vmatpush1.msra.mxu0 0.0
    %2447 = vmatprep.subr.mxu0 0.0
    %2448 = vmatpush1.msra.mxu0 0.0
    %2449 = vmatprep.subr.mxu0 0.0
    %2450 = vmatpush1.msra.mxu0 0.0
    %2451 = vmatprep.subr.mxu0 0.0
    %2452 = vmatpush1.msra.mxu0 0.0
    %2453 = vmatprep.subr.mxu0 0.0
    %2454 = vmatpush1.msra.mxu0 0.0
    %2455 = vmatprep.subr.mxu0 0.0
    %2456 = vmatpush1.msra.mxu0 0.0
    %2457 = vmatprep.subr.mxu0 0.0
    %2458 = vmatpush1.msra.mxu0 0.0
    %2459 = vmatprep.subr.mxu0 0.0
    %2460 = vmatpush1.msra.mxu0 0.0
    %2461 = vmatprep.subr.mxu0 0.0
    %2462 = vmatpush1.msra.mxu0 0.0
    %2463 = vmatprep.subr.mxu0 0.0
    %2464 = vmatpush1.msra.mxu0 0.0
    %2465 = vmatprep.subr.mxu0 0.0
    %2466 = vmatpush1.msra.mxu0 0.0
    %2467 = vmatprep.subr.mxu0 0.0
    %2468 = vmatpush1.msra.mxu0 0.0
    %2469 = vmatprep.subr.mxu0 0.0
    %2470 = vmatpush1.msra.mxu0 0.0
    %2471 = vmatprep.subr.mxu0 0.0
    %2472 = vmatpush1.msra.mxu0 0.0
    %2473 = vmatprep.subr.mxu0 0.0
    %2474 = vmatpush1.msra.mxu0 0.0
    %2475 = vmatprep.subr.mxu0 0.0
    %2476 = vmatpush1.msra.mxu0 0.0
    %2477 = vmatprep.subr.mxu0 0.0
    %2478 = vmatpush1.msra.mxu0 0.0
    %2479 = vmatprep.subr.mxu0 0.0
    %2480 = vmatpush1.msra.mxu0 0.0
    %2481 = vmatprep.subr.mxu0 0.0
    %2482 = vmatpush1.msra.mxu0 0.0
    %2483 = vmatprep.subr.mxu0 0.0
    %2484 = vmatpush1.msra.mxu0 0.0
    %2485 = vmatprep.subr.mxu0 0.0
    %2486 = vmatpush1.msra.mxu0 0.0
    %2487 = vmatprep.subr.mxu0 0.0
    %2488 = vmatpush1.msra.mxu0 0.0
    %2489 = vmatprep.subr.mxu0 0.0
    %2490 = vmatpush1.msra.mxu0 0.0
    %2491 = vmatprep.subr.mxu0 0.0
    %2492 = vmatpush1.msra.mxu0 0.0
    %2493 = vmatprep.subr.mxu0 0.0
    %2494 = vmatpush1.msra.mxu0 0.0
    %2495 = vmatprep.subr.mxu0 0.0
    %2496 = vmatpush1.msra.mxu0 0.0
    %2497 = vmatprep.subr.mxu0 0.0
    %2498 = vmatpush1.msra.mxu0 0.0
    %2499 = vmatprep.subr.mxu0 0.0
    %2500 = vmatpush1.msra.mxu0 0.0
    %2501 = vmatprep.mubr.f32.mxu0 0.0
    %2502 = vmatmul.mubr.f32.gmra.mrb[0].mxu0 %v2426
    %v2503 = vpop.f32.mrb[0].mxu0
    %v2504 = vadd.f32 %v2423, %v2503
    %v2505 = vpop.f32.mrb[0].mxu0
    %2506 = vmatprep.mubr.f32.mxu0 0.0
    %2507 = vmatmul.mubr.f32.gmra.mrb[0].mxu0 %v2429
    %v2508 = vpop.f32.mrb[0].mxu0
    %v2509 = vadd.f32 %v2423, %v2508
    %v2510 = vpop.f32.mrb[0].mxu0
    %2511 = vmatprep.mubr.f32.mxu0 0.0
    %2512 = vmatmul.mubr.f32.gmra.mrb[0].mxu0 %v2432
    %v2513 = vpop.f32.mrb[0].mxu0
    %v2514 = vadd.f32 %v2423, %v2513
    %v2515 = vpop.f32.mrb[0].mxu0
    %2516 = vmatprep.mubr.f32.mxu0 0.0
    %2517 = vmatmul.mubr.f32.gmra.mrb[0].mxu0 %v2435
    %v2518 = vpop.f32.mrb[0].mxu0
    %v2519 = vadd.f32 %v2423, %v2518
    %v2520 = vpop.f32.mrb[0].mxu0
    %2521 = vdwg.mxu0
    %v2522 = vmax.f32 %v2504, 0.0
    %v2523 = vmax.f32 %v2509, 0.0
    %v2524 = vmax.f32 %v2514, 0.0
    %v2525 = vmax.f32 %v2519, 0.0
    %v2527 = vlaneseq
    %v2528 = vshrl.u32 %v2527, 7
    %v2529 = vsub.s32 0, %v2528
    %v2530 = vrot.slane %v2418, %v2529
    %v2533 = vsel %vm947, %v2522, 0
    %v2536 = vsel %vm947, %v2523, 0
    %v2539 = vsel %vm947, %v2524, 0
    %v2542 = vsel %vm947, %v2525, 0
    %2544 = vmatprep.subr.mxu0 0.0
    %2545 = vmatpush1.msra.mxu0 %v2410
    %2546 = vmatprep.subr.mxu0 0.0
    %2547 = vmatpush1.msra.mxu0 %v2411
    %2548 = vmatprep.subr.mxu0 0.0
    %2549 = vmatpush1.msra.mxu0 %v2412
    %2550 = vmatprep.subr.mxu0 0.0
    %2551 = vmatpush1.msra.mxu0 %v2413
    %2552 = vmatprep.subr.mxu0 0.0
    %2553 = vmatpush1.msra.mxu0 %v2414
    %2554 = vmatprep.subr.mxu0 0.0
    %2555 = vmatpush1.msra.mxu0 %v2415
    %2556 = vmatprep.subr.mxu0 0.0
    %2557 = vmatpush1.msra.mxu0 %v2416
    %2558 = vmatprep.subr.mxu0 0.0
    %2559 = vmatpush1.msra.mxu0 %v2417
    %2560 = vmatprep.subr.mxu0 0.0
    %2561 = vmatpush1.msra.mxu0 0.0
    %2562 = vmatprep.subr.mxu0 0.0
    %2563 = vmatpush1.msra.mxu0 0.0
    %2564 = vmatprep.subr.mxu0 0.0
    %2565 = vmatpush1.msra.mxu0 0.0
    %2566 = vmatprep.subr.mxu0 0.0
    %2567 = vmatpush1.msra.mxu0 0.0
    %2568 = vmatprep.subr.mxu0 0.0
    %2569 = vmatpush1.msra.mxu0 0.0
    %2570 = vmatprep.subr.mxu0 0.0
    %2571 = vmatpush1.msra.mxu0 0.0
    %2572 = vmatprep.subr.mxu0 0.0
    %2573 = vmatpush1.msra.mxu0 0.0
    %2574 = vmatprep.subr.mxu0 0.0
    %2575 = vmatpush1.msra.mxu0 0.0
    %2576 = vmatprep.subr.mxu0 0.0
    %2577 = vmatpush1.msra.mxu0 0.0
    %2578 = vmatprep.subr.mxu0 0.0
    %2579 = vmatpush1.msra.mxu0 0.0
    %2580 = vmatprep.subr.mxu0 0.0
    %2581 = vmatpush1.msra.mxu0 0.0
    %2582 = vmatprep.subr.mxu0 0.0
    %2583 = vmatpush1.msra.mxu0 0.0
    %2584 = vmatprep.subr.mxu0 0.0
    %2585 = vmatpush1.msra.mxu0 0.0
    %2586 = vmatprep.subr.mxu0 0.0
    %2587 = vmatpush1.msra.mxu0 0.0
    %2588 = vmatprep.subr.mxu0 0.0
    %2589 = vmatpush1.msra.mxu0 0.0
    %2590 = vmatprep.subr.mxu0 0.0
    %2591 = vmatpush1.msra.mxu0 0.0
    %2592 = vmatprep.subr.mxu0 0.0
    %2593 = vmatpush1.msra.mxu0 0.0
    %2594 = vmatprep.subr.mxu0 0.0
    %2595 = vmatpush1.msra.mxu0 0.0
    %2596 = vmatprep.subr.mxu0 0.0
    %2597 = vmatpush1.msra.mxu0 0.0
    %2598 = vmatprep.subr.mxu0 0.0
    %2599 = vmatpush1.msra.mxu0 0.0
    %2600 = vmatprep.subr.mxu0 0.0
    %2601 = vmatpush1.msra.mxu0 0.0
    %2602 = vmatprep.subr.mxu0 0.0
    %2603 = vmatpush1.msra.mxu0 0.0
    %2604 = vmatprep.subr.mxu0 0.0
    %2605 = vmatpush1.msra.mxu0 0.0
    %2606 = vmatprep.subr.mxu0 0.0
    %2607 = vmatpush1.msra.mxu0 0.0
    %2608 = vmatprep.mubr.f32.mxu0 0.0
    %2609 = vmatmul.mubr.f32.gmra.mrb[0].mxu0 %v2533
    %v2610 = vpop.f32.mrb[0].mxu0
    %v2611 = vadd.f32 %v2530, %v2610
    %v2612 = vpop.f32.mrb[0].mxu0
    %2613 = vmatprep.mubr.f32.mxu0 0.0
    %2614 = vmatmul.mubr.f32.gmra.mrb[0].mxu0 %v2536
    %v2615 = vpop.f32.mrb[0].mxu0
    %v2616 = vadd.f32 %v2530, %v2615
    %v2617 = vpop.f32.mrb[0].mxu0
    %2618 = vmatprep.mubr.f32.mxu0 0.0
    %2619 = vmatmul.mubr.f32.gmra.mrb[0].mxu0 %v2539
    %v2620 = vpop.f32.mrb[0].mxu0
    %v2621 = vadd.f32 %v2530, %v2620
    %v2622 = vpop.f32.mrb[0].mxu0
    %2623 = vmatprep.mubr.f32.mxu0 0.0
    %2624 = vmatmul.mubr.f32.gmra.mrb[0].mxu0 %v2542
    %v2625 = vpop.f32.mrb[0].mxu0
    %v2626 = vadd.f32 %v2530, %v2625
    %v2627 = vpop.f32.mrb[0].mxu0
    %2628 = vdwg.mxu0
    %v2629 = vadd.f32 %v2401, %v2611
    %v2630 = vadd.f32 %v2402, %v2616
    %v2631 = vadd.f32 %v2403, %v2621
    %v2632 = vadd.f32 %v2404, %v2626
    %v2633 = vsel %vm446, %v2629, 0.0
    %2634 = vadd.xlane.f32.xlu0 %v2633
    %v2635 = vpop.xlane.xlu0 %2634
    %v2636 = vsel %vm446, %v2630, 0.0
    %2637 = vadd.xlane.f32.xlu0 %v2636
    %v2638 = vpop.xlane.xlu0 %2637
    %v2639 = vsel %vm446, %v2631, 0.0
    %2640 = vadd.xlane.f32.xlu0 %v2639
    %v2641 = vpop.xlane.xlu0 %2640
    %v2642 = vsel %vm446, %v2632, 0.0
    %2643 = vadd.xlane.f32.xlu0 %v2642
    %v2644 = vpop.xlane.xlu0 %2643
    %v2645 = vmul.f32 %v2635, %v2348
    %v2646 = vmul.f32 %v2638, %v2348
    %v2647 = vmul.f32 %v2641, %v2348
    %v2648 = vmul.f32 %v2644, %v2348
    %v2649 = vsub.f32 %v2629, %v2645
    %v2650 = vsub.f32 %v2630, %v2646
    %v2651 = vsub.f32 %v2631, %v2647
    %v2652 = vsub.f32 %v2632, %v2648
    %v2653 = vmul.f32 %v2649, %v2649
    %v2654 = vmul.f32 %v2650, %v2650
    %v2655 = vmul.f32 %v2651, %v2651
    %v2656 = vmul.f32 %v2652, %v2652
    %v2657 = vsel %vm446, %v2653, 0.0
    %2658 = vadd.xlane.f32.xlu0 %v2657
    %v2659 = vpop.xlane.xlu0 %2658
    %v2660 = vsel %vm446, %v2654, 0.0
    %2661 = vadd.xlane.f32.xlu0 %v2660
    %v2662 = vpop.xlane.xlu0 %2661
    %v2663 = vsel %vm446, %v2655, 0.0
    %2664 = vadd.xlane.f32.xlu0 %v2663
    %v2665 = vpop.xlane.xlu0 %2664
    %v2666 = vsel %vm446, %v2656, 0.0
    %2667 = vadd.xlane.f32.xlu0 %v2666
    %v2668 = vpop.xlane.xlu0 %2667
    %v2669 = vmul.f32 %v2659, %v2348
    %v2670 = vmul.f32 %v2662, %v2348
    %v2671 = vmul.f32 %v2665, %v2348
    %v2672 = vmul.f32 %v2668, %v2348
    %v2673 = vadd.f32 %v2669, 1e-05
    %v2674 = vadd.f32 %v2670, 1e-05
    %v2675 = vadd.f32 %v2671, 1e-05
    %v2676 = vadd.f32 %v2672, 1e-05
    %v2677 = vrsqrt.pop %v2673
    %v2678 = vrsqrt.pop %v2674
    %v2679 = vrsqrt.pop %v2675
    %v2680 = vrsqrt.pop %v2676
    %v2681 = vmul.f32 %v2649, %v2677
    %v2682 = vmul.f32 %v2650, %v2678
    %v2683 = vmul.f32 %v2651, %v2679
    %v2684 = vmul.f32 %v2652, %v2680
    %v2685 = vlaneseq
    %v2686 = vshrl.u32 %v2685, 7
    %v2687 = vsub.s32 2, %v2686
    %v2688 = vrot.slane %v429, %v2687
    %v2689 = vmul.f32 %v2681, %v2688
    %v2690 = vmul.f32 %v2682, %v2688
    %v2691 = vmul.f32 %v2683, %v2688
    %v2692 = vmul.f32 %v2684, %v2688
    %v2693 = vlaneseq
    %v2694 = vshrl.u32 %v2693, 7
    %v2695 = vsub.s32 3, %v2694
    %v2696 = vrot.slane %v429, %v2695
    %v2697 = vadd.f32 %v2689, %v2696
    %v2698 = vadd.f32 %v2690, %v2696
    %v2699 = vadd.f32 %v2691, %v2696
    %v2700 = vadd.f32 %v2692, %v2696
    %s2701 = scalar_lea.vmem [#allocation16], 4
    %v2702 = vld [vmem:[%s2701] sm:$0xf]
    %s2703 = scalar_lea.vmem %s6, 32
    %v2704 = vld [vmem:[%s2703] sm:$0xff]
    %v2705 = vld [vmem:[%s2703 + $0x8] sm:$0xff]
    %v2706 = vld [vmem:[%s2703 + $0x10] sm:$0xff]
    %v2707 = vld [vmem:[%s2703 + $0x18] sm:$0xff]
    %s2708 = scalar_lea.vmem [#allocation10], 1
    %v2709 = vld [vmem:[%s2708] sm:$0x1]
    %s2710 = scalar_lea.vmem %s8, 32
    %v2711 = vld [vmem:[%s2710] sm:$0xff]
    %v2712 = vld [vmem:[%s2710 + $0x8] sm:$0xff]
    %v2713 = vld [vmem:[%s2710 + $0x10] sm:$0xff]
    %v2714 = vld [vmem:[%s2710 + $0x18] sm:$0xff]
    %s2715 = scalar_lea.vmem [#allocation11], 1
    %v2716 = vld [vmem:[%s2715] sm:$0x1]
    %v2718 = vlaneseq
    %v2719 = vshrl.u32 %v2718, 7
    %v2720 = vsub.s32 0, %v2719
    %v2721 = vrot.slane %v2709, %v2720
    %v2724 = vsel %vm446, %v2697, 0
    %v2727 = vsel %vm446, %v2698, 0
    %v2730 = vsel %vm446, %v2699, 0
    %v2733 = vsel %vm446, %v2700, 0
    %2735 = vmatprep.subr.mxu0 0.0
    %2736 = vmatpush1.msra.mxu0 %v2704
    %2737 = vmatprep.subr.mxu0 0.0
    %2738 = vmatpush1.msra.mxu0 %v2705
    %2739 = vmatprep.subr.mxu0 0.0
    %2740 = vmatpush1.msra.mxu0 %v2706
    %2741 = vmatprep.subr.mxu0 0.0
    %2742 = vmatpush1.msra.mxu0 %v2707
    %2743 = vmatprep.subr.mxu0 0.0
    %2744 = vmatpush1.msra.mxu0 0.0
    %2745 = vmatprep.subr.mxu0 0.0
    %2746 = vmatpush1.msra.mxu0 0.0
    %2747 = vmatprep.subr.mxu0 0.0
    %2748 = vmatpush1.msra.mxu0 0.0
    %2749 = vmatprep.subr.mxu0 0.0
    %2750 = vmatpush1.msra.mxu0 0.0
    %2751 = vmatprep.subr.mxu0 0.0
    %2752 = vmatpush1.msra.mxu0 0.0
    %2753 = vmatprep.subr.mxu0 0.0
    %2754 = vmatpush1.msra.mxu0 0.0
    %2755 = vmatprep.subr.mxu0 0.0
    %2756 = vmatpush1.msra.mxu0 0.0
    %2757 = vmatprep.subr.mxu0 0.0
    %2758 = vmatpush1.msra.mxu0 0.0
    %2759 = vmatprep.subr.mxu0 0.0
    %2760 = vmatpush1.msra.mxu0 0.0
    %2761 = vmatprep.subr.mxu0 0.0
    %2762 = vmatpush1.msra.mxu0 0.0
    %2763 = vmatprep.subr.mxu0 0.0
    %2764 = vmatpush1.msra.mxu0 0.0
    %2765 = vmatprep.subr.mxu0 0.0
    %2766 = vmatpush1.msra.mxu0 0.0
    %2767 = vmatprep.subr.mxu0 0.0
    %2768 = vmatpush1.msra.mxu0 0.0
    %2769 = vmatprep.subr.mxu0 0.0
    %2770 = vmatpush1.msra.mxu0 0.0
    %2771 = vmatprep.subr.mxu0 0.0
    %2772 = vmatpush1.msra.mxu0 0.0
    %2773 = vmatprep.subr.mxu0 0.0
    %2774 = vmatpush1.msra.mxu0 0.0
    %2775 = vmatprep.subr.mxu0 0.0
    %2776 = vmatpush1.msra.mxu0 0.0
    %2777 = vmatprep.subr.mxu0 0.0
    %2778 = vmatpush1.msra.mxu0 0.0
    %2779 = vmatprep.subr.mxu0 0.0
    %2780 = vmatpush1.msra.mxu0 0.0
    %2781 = vmatprep.subr.mxu0 0.0
    %2782 = vmatpush1.msra.mxu0 0.0
    %2783 = vmatprep.subr.mxu0 0.0
    %2784 = vmatpush1.msra.mxu0 0.0
    %2785 = vmatprep.subr.mxu0 0.0
    %2786 = vmatpush1.msra.mxu0 0.0
    %2787 = vmatprep.subr.mxu0 0.0
    %2788 = vmatpush1.msra.mxu0 0.0
    %2789 = vmatprep.subr.mxu0 0.0
    %2790 = vmatpush1.msra.mxu0 0.0
    %2791 = vmatprep.subr.mxu0 0.0
    %2792 = vmatpush1.msra.mxu0 0.0
    %2793 = vmatprep.subr.mxu0 0.0
    %2794 = vmatpush1.msra.mxu0 0.0
    %2795 = vmatprep.subr.mxu0 0.0
    %2796 = vmatpush1.msra.mxu0 0.0
    %2797 = vmatprep.subr.mxu0 0.0
    %2798 = vmatpush1.msra.mxu0 0.0
    %2799 = vmatprep.mubr.f32.mxu0 0.0
    %2800 = vmatmul.mubr.f32.gmra.mrb[0].mxu0 %v2724
    %v2801 = vpop.f32.mrb[0].mxu0
    %v2802 = vadd.f32 %v2721, %v2801
    %v2803 = vpop.f32.mrb[0].mxu0
    %2804 = vmatprep.mubr.f32.mxu0 0.0
    %2805 = vmatmul.mubr.f32.gmra.mrb[0].mxu0 %v2727
    %v2806 = vpop.f32.mrb[0].mxu0
    %v2807 = vadd.f32 %v2721, %v2806
    %v2808 = vpop.f32.mrb[0].mxu0
    %2809 = vmatprep.mubr.f32.mxu0 0.0
    %2810 = vmatmul.mubr.f32.gmra.mrb[0].mxu0 %v2730
    %v2811 = vpop.f32.mrb[0].mxu0
    %v2812 = vadd.f32 %v2721, %v2811
    %v2813 = vpop.f32.mrb[0].mxu0
    %2814 = vmatprep.mubr.f32.mxu0 0.0
    %2815 = vmatmul.mubr.f32.gmra.mrb[0].mxu0 %v2733
    %v2816 = vpop.f32.mrb[0].mxu0
    %v2817 = vadd.f32 %v2721, %v2816
    %v2818 = vpop.f32.mrb[0].mxu0
    %2819 = vdwg.mxu0
    %v2820 = vmul.f32 %v2802, 0.35355338
    %v2821 = vmul.f32 %v2807, 0.35355338
    %v2822 = vmul.f32 %v2812, 0.35355338
    %v2823 = vmul.f32 %v2817, 0.35355338
    %2826 = vrot.lane.b32.xlu0 %v2802, 96
    %v2827 = vpop.permute.xlu0 %2826
    %2828 = vrot.lane.b32.xlu0 %v2807, 96
    %v2829 = vpop.permute.xlu0 %2828
    %v2831 = vsel %vm554, %v2820, 0
    %v2834 = vsel %vm554, %v2821, 0
    %v2836 = vsel %vm554, %v2827, 0
    %v2838 = vsel %vm554, %v2829, 0
    %2840 = vmatprep.subr.mxu0 0.0
    %2841 = vmatpush1.xpose.msra.mxu0 %v2836
    %2842 = vmatprep.subr.mxu0 0.0
    %2843 = vmatpush1.xpose.msra.mxu0 %v2838
    %2844 = vmatprep.subr.mxu0 0.0
    %2845 = vmatpush1.xpose.msra.mxu0 0.0
    %2846 = vmatprep.subr.mxu0 0.0
    %2847 = vmatpush1.xpose.msra.mxu0 0.0
    %2848 = vmatprep.subr.mxu0 0.0
    %2849 = vmatpush1.xpose.msra.mxu0 0.0
    %2850 = vmatprep.subr.mxu0 0.0
    %2851 = vmatpush1.xpose.msra.mxu0 0.0
    %2852 = vmatprep.subr.mxu0 0.0
    %2853 = vmatpush1.xpose.msra.mxu0 0.0
    %2854 = vmatprep.subr.mxu0 0.0
    %2855 = vmatpush1.xpose.msra.mxu0 0.0
    %2856 = vmatprep.subr.mxu0 0.0
    %2857 = vmatpush1.xpose.msra.mxu0 0.0
    %2858 = vmatprep.subr.mxu0 0.0
    %2859 = vmatpush1.xpose.msra.mxu0 0.0
    %2860 = vmatprep.subr.mxu0 0.0
    %2861 = vmatpush1.xpose.msra.mxu0 0.0
    %2862 = vmatprep.subr.mxu0 0.0
    %2863 = vmatpush1.xpose.msra.mxu0 0.0
    %2864 = vmatprep.subr.mxu0 0.0
    %2865 = vmatpush1.xpose.msra.mxu0 0.0
    %2866 = vmatprep.subr.mxu0 0.0
    %2867 = vmatpush1.xpose.msra.mxu0 0.0
    %2868 = vmatprep.subr.mxu0 0.0
    %2869 = vmatpush1.xpose.msra.mxu0 0.0
    %2870 = vmatprep.subr.mxu0 0.0
    %2871 = vmatpush1.xpose.msra.mxu0 0.0
    %2872 = vmatprep.subr.mxu0 0.0
    %2873 = vmatpush1.xpose.msra.mxu0 0.0
    %2874 = vmatprep.subr.mxu0 0.0
    %2875 = vmatpush1.xpose.msra.mxu0 0.0
    %2876 = vmatprep.subr.mxu0 0.0
    %2877 = vmatpush1.xpose.msra.mxu0 0.0
    %2878 = vmatprep.subr.mxu0 0.0
    %2879 = vmatpush1.xpose.msra.mxu0 0.0
    %2880 = vmatprep.subr.mxu0 0.0
    %2881 = vmatpush1.xpose.msra.mxu0 0.0
    %2882 = vmatprep.subr.mxu0 0.0
    %2883 = vmatpush1.xpose.msra.mxu0 0.0
    %2884 = vmatprep.subr.mxu0 0.0
    %2885 = vmatpush1.xpose.msra.mxu0 0.0
    %2886 = vmatprep.subr.mxu0 0.0
    %2887 = vmatpush1.xpose.msra.mxu0 0.0
    %2888 = vmatprep.subr.mxu0 0.0
    %2889 = vmatpush1.xpose.msra.mxu0 0.0
    %2890 = vmatprep.subr.mxu0 0.0
    %2891 = vmatpush1.xpose.msra.mxu0 0.0
    %2892 = vmatprep.subr.mxu0 0.0
    %2893 = vmatpush1.xpose.msra.mxu0 0.0
    %2894 = vmatprep.subr.mxu0 0.0
    %2895 = vmatpush1.xpose.msra.mxu0 0.0
    %2896 = vmatprep.subr.mxu0 0.0
    %2897 = vmatpush1.xpose.msra.mxu0 0.0
    %2898 = vmatprep.subr.mxu0 0.0
    %2899 = vmatpush1.xpose.msra.mxu0 0.0
    %2900 = vmatprep.subr.mxu0 0.0
    %2901 = vmatpush1.xpose.msra.mxu0 0.0
    %2902 = vmatprep.subr.mxu0 0.0
    %2903 = vmatpush1.xpose.msra.mxu0 0.0
    %2904 = vmatprep.mubr.f32.mxu0 0.0
    %2905 = vmatmul.mubr.f32.gmra.mrb[0].mxu0 %v2831
    %v2906 = vpop.f32.mrb[0].mxu0
    %v2907 = vadd.f32 0.0, %v2906
    %v2908 = vpop.f32.mrb[0].mxu0
    %2909 = vmatprep.mubr.f32.mxu0 0.0
    %2910 = vmatmul.mubr.f32.gmra.mrb[0].mxu0 %v2834
    %v2911 = vpop.f32.mrb[0].mxu0
    %v2912 = vadd.f32 0.0, %v2911
    %v2913 = vpop.f32.mrb[0].mxu0
    %2914 = vdwg.mxu0
    %2915 = vrot.lane.b32.xlu0 %v2820, 120
    %v2916 = vpop.permute.xlu0 %2915
    %2917 = vrot.lane.b32.xlu0 %v2821, 120
    %v2918 = vpop.permute.xlu0 %2917
    %2919 = vrot.lane.b32.xlu0 %v2802, 88
    %v2920 = vpop.permute.xlu0 %2919
    %2921 = vrot.lane.b32.xlu0 %v2807, 88
    %v2922 = vpop.permute.xlu0 %2921
    %v2923 = vsel %vm554, %v2916, 0
    %v2925 = vsel %vm554, %v2918, 0
    %v2927 = vsel %vm554, %v2920, 0
    %v2929 = vsel %vm554, %v2922, 0
    %2931 = vmatprep.subr.mxu0 0.0
    %2932 = vmatpush1.xpose.msra.mxu0 %v2927
    %2933 = vmatprep.subr.mxu0 0.0
    %2934 = vmatpush1.xpose.msra.mxu0 %v2929
    %2935 = vmatprep.subr.mxu0 0.0
    %2936 = vmatpush1.xpose.msra.mxu0 0.0
    %2937 = vmatprep.subr.mxu0 0.0
    %2938 = vmatpush1.xpose.msra.mxu0 0.0
    %2939 = vmatprep.subr.mxu0 0.0
    %2940 = vmatpush1.xpose.msra.mxu0 0.0
    %2941 = vmatprep.subr.mxu0 0.0
    %2942 = vmatpush1.xpose.msra.mxu0 0.0
    %2943 = vmatprep.subr.mxu0 0.0
    %2944 = vmatpush1.xpose.msra.mxu0 0.0
    %2945 = vmatprep.subr.mxu0 0.0
    %2946 = vmatpush1.xpose.msra.mxu0 0.0
    %2947 = vmatprep.subr.mxu0 0.0
    %2948 = vmatpush1.xpose.msra.mxu0 0.0
    %2949 = vmatprep.subr.mxu0 0.0
    %2950 = vmatpush1.xpose.msra.mxu0 0.0
    %2951 = vmatprep.subr.mxu0 0.0
    %2952 = vmatpush1.xpose.msra.mxu0 0.0
    %2953 = vmatprep.subr.mxu0 0.0
    %2954 = vmatpush1.xpose.msra.mxu0 0.0
    %2955 = vmatprep.subr.mxu0 0.0
    %2956 = vmatpush1.xpose.msra.mxu0 0.0
    %2957 = vmatprep.subr.mxu0 0.0
    %2958 = vmatpush1.xpose.msra.mxu0 0.0
    %2959 = vmatprep.subr.mxu0 0.0
    %2960 = vmatpush1.xpose.msra.mxu0 0.0
    %2961 = vmatprep.subr.mxu0 0.0
    %2962 = vmatpush1.xpose.msra.mxu0 0.0
    %2963 = vmatprep.subr.mxu0 0.0
    %2964 = vmatpush1.xpose.msra.mxu0 0.0
    %2965 = vmatprep.subr.mxu0 0.0
    %2966 = vmatpush1.xpose.msra.mxu0 0.0
    %2967 = vmatprep.subr.mxu0 0.0
    %2968 = vmatpush1.xpose.msra.mxu0 0.0
    %2969 = vmatprep.subr.mxu0 0.0
    %2970 = vmatpush1.xpose.msra.mxu0 0.0
    %2971 = vmatprep.subr.mxu0 0.0
    %2972 = vmatpush1.xpose.msra.mxu0 0.0
    %2973 = vmatprep.subr.mxu0 0.0
    %2974 = vmatpush1.xpose.msra.mxu0 0.0
    %2975 = vmatprep.subr.mxu0 0.0
    %2976 = vmatpush1.xpose.msra.mxu0 0.0
    %2977 = vmatprep.subr.mxu0 0.0
    %2978 = vmatpush1.xpose.msra.mxu0 0.0
    %2979 = vmatprep.subr.mxu0 0.0
    %2980 = vmatpush1.xpose.msra.mxu0 0.0
    %2981 = vmatprep.subr.mxu0 0.0
    %2982 = vmatpush1.xpose.msra.mxu0 0.0
    %2983 = vmatprep.subr.mxu0 0.0
    %2984 = vmatpush1.xpose.msra.mxu0 0.0
    %2985 = vmatprep.subr.mxu0 0.0
    %2986 = vmatpush1.xpose.msra.mxu0 0.0
    %2987 = vmatprep.subr.mxu0 0.0
    %2988 = vmatpush1.xpose.msra.mxu0 0.0
    %2989 = vmatprep.subr.mxu0 0.0
    %2990 = vmatpush1.xpose.msra.mxu0 0.0
    %2991 = vmatprep.subr.mxu0 0.0
    %2992 = vmatpush1.xpose.msra.mxu0 0.0
    %2993 = vmatprep.subr.mxu0 0.0
    %2994 = vmatpush1.xpose.msra.mxu0 0.0
    %2995 = vmatprep.mubr.f32.mxu0 0.0
    %2996 = vmatmul.mubr.f32.gmra.mrb[0].mxu0 %v2923
    %v2997 = vpop.f32.mrb[0].mxu0
    %v2998 = vadd.f32 0.0, %v2997
    %v2999 = vpop.f32.mrb[0].mxu0
    %3000 = vmatprep.mubr.f32.mxu0 0.0
    %3001 = vmatmul.mubr.f32.gmra.mrb[0].mxu0 %v2925
    %v3002 = vpop.f32.mrb[0].mxu0
    %v3003 = vadd.f32 0.0, %v3002
    %v3004 = vpop.f32.mrb[0].mxu0
    %3005 = vdwg.mxu0
    %3006 = vrot.lane.b32.xlu0 %v2820, 112
    %v3007 = vpop.permute.xlu0 %3006
    %3008 = vrot.lane.b32.xlu0 %v2821, 112
    %v3009 = vpop.permute.xlu0 %3008
    %3010 = vrot.lane.b32.xlu0 %v2802, 80
    %v3011 = vpop.permute.xlu0 %3010
    %3012 = vrot.lane.b32.xlu0 %v2807, 80
    %v3013 = vpop.permute.xlu0 %3012
    %v3014 = vsel %vm554, %v3007, 0
    %v3016 = vsel %vm554, %v3009, 0
    %v3018 = vsel %vm554, %v3011, 0
    %v3020 = vsel %vm554, %v3013, 0
    %3022 = vmatprep.subr.mxu0 0.0
    %3023 = vmatpush1.xpose.msra.mxu0 %v3018
    %3024 = vmatprep.subr.mxu0 0.0
    %3025 = vmatpush1.xpose.msra.mxu0 %v3020
    %3026 = vmatprep.subr.mxu0 0.0
    %3027 = vmatpush1.xpose.msra.mxu0 0.0
    %3028 = vmatprep.subr.mxu0 0.0
    %3029 = vmatpush1.xpose.msra.mxu0 0.0
    %3030 = vmatprep.subr.mxu0 0.0
    %3031 = vmatpush1.xpose.msra.mxu0 0.0
    %3032 = vmatprep.subr.mxu0 0.0
    %3033 = vmatpush1.xpose.msra.mxu0 0.0
    %3034 = vmatprep.subr.mxu0 0.0
    %3035 = vmatpush1.xpose.msra.mxu0 0.0
    %3036 = vmatprep.subr.mxu0 0.0
    %3037 = vmatpush1.xpose.msra.mxu0 0.0
    %3038 = vmatprep.subr.mxu0 0.0
    %3039 = vmatpush1.xpose.msra.mxu0 0.0
    %3040 = vmatprep.subr.mxu0 0.0
    %3041 = vmatpush1.xpose.msra.mxu0 0.0
    %3042 = vmatprep.subr.mxu0 0.0
    %3043 = vmatpush1.xpose.msra.mxu0 0.0
    %3044 = vmatprep.subr.mxu0 0.0
    %3045 = vmatpush1.xpose.msra.mxu0 0.0
    %3046 = vmatprep.subr.mxu0 0.0
    %3047 = vmatpush1.xpose.msra.mxu0 0.0
    %3048 = vmatprep.subr.mxu0 0.0
    %3049 = vmatpush1.xpose.msra.mxu0 0.0
    %3050 = vmatprep.subr.mxu0 0.0
    %3051 = vmatpush1.xpose.msra.mxu0 0.0
    %3052 = vmatprep.subr.mxu0 0.0
    %3053 = vmatpush1.xpose.msra.mxu0 0.0
    %3054 = vmatprep.subr.mxu0 0.0
    %3055 = vmatpush1.xpose.msra.mxu0 0.0
    %3056 = vmatprep.subr.mxu0 0.0
    %3057 = vmatpush1.xpose.msra.mxu0 0.0
    %3058 = vmatprep.subr.mxu0 0.0
    %3059 = vmatpush1.xpose.msra.mxu0 0.0
    %3060 = vmatprep.subr.mxu0 0.0
    %3061 = vmatpush1.xpose.msra.mxu0 0.0
    %3062 = vmatprep.subr.mxu0 0.0
    %3063 = vmatpush1.xpose.msra.mxu0 0.0
    %3064 = vmatprep.subr.mxu0 0.0
    %3065 = vmatpush1.xpose.msra.mxu0 0.0
    %3066 = vmatprep.subr.mxu0 0.0
    %3067 = vmatpush1.xpose.msra.mxu0 0.0
    %3068 = vmatprep.subr.mxu0 0.0
    %3069 = vmatpush1.xpose.msra.mxu0 0.0
    %3070 = vmatprep.subr.mxu0 0.0
    %3071 = vmatpush1.xpose.msra.mxu0 0.0
    %3072 = vmatprep.subr.mxu0 0.0
    %3073 = vmatpush1.xpose.msra.mxu0 0.0
    %3074 = vmatprep.subr.mxu0 0.0
    %3075 = vmatpush1.xpose.msra.mxu0 0.0
    %3076 = vmatprep.subr.mxu0 0.0
    %3077 = vmatpush1.xpose.msra.mxu0 0.0
    %3078 = vmatprep.subr.mxu0 0.0
    %3079 = vmatpush1.xpose.msra.mxu0 0.0
    %3080 = vmatprep.subr.mxu0 0.0
    %3081 = vmatpush1.xpose.msra.mxu0 0.0
    %3082 = vmatprep.subr.mxu0 0.0
    %3083 = vmatpush1.xpose.msra.mxu0 0.0
    %3084 = vmatprep.subr.mxu0 0.0
    %3085 = vmatpush1.xpose.msra.mxu0 0.0
    %3086 = vmatprep.mubr.f32.mxu0 0.0
    %3087 = vmatmul.mubr.f32.gmra.mrb[0].mxu0 %v3014
    %v3088 = vpop.f32.mrb[0].mxu0
    %v3089 = vadd.f32 0.0, %v3088
    %v3090 = vpop.f32.mrb[0].mxu0
    %3091 = vmatprep.mubr.f32.mxu0 0.0
    %3092 = vmatmul.mubr.f32.gmra.mrb[0].mxu0 %v3016
    %v3093 = vpop.f32.mrb[0].mxu0
    %v3094 = vadd.f32 0.0, %v3093
    %v3095 = vpop.f32.mrb[0].mxu0
    %3096 = vdwg.mxu0
    %3097 = vrot.lane.b32.xlu0 %v2820, 104
    %v3098 = vpop.permute.xlu0 %3097
    %3099 = vrot.lane.b32.xlu0 %v2821, 104
    %v3100 = vpop.permute.xlu0 %3099
    %3101 = vrot.lane.b32.xlu0 %v2802, 72
    %v3102 = vpop.permute.xlu0 %3101
    %3103 = vrot.lane.b32.xlu0 %v2807, 72
    %v3104 = vpop.permute.xlu0 %3103
    %v3105 = vsel %vm554, %v3098, 0
    %v3107 = vsel %vm554, %v3100, 0
    %v3109 = vsel %vm554, %v3102, 0
    %v3111 = vsel %vm554, %v3104, 0
    %3113 = vmatprep.subr.mxu0 0.0
    %3114 = vmatpush1.xpose.msra.mxu0 %v3109
    %3115 = vmatprep.subr.mxu0 0.0
    %3116 = vmatpush1.xpose.msra.mxu0 %v3111
    %3117 = vmatprep.subr.mxu0 0.0
    %3118 = vmatpush1.xpose.msra.mxu0 0.0
    %3119 = vmatprep.subr.mxu0 0.0
    %3120 = vmatpush1.xpose.msra.mxu0 0.0
    %3121 = vmatprep.subr.mxu0 0.0
    %3122 = vmatpush1.xpose.msra.mxu0 0.0
    %3123 = vmatprep.subr.mxu0 0.0
    %3124 = vmatpush1.xpose.msra.mxu0 0.0
    %3125 = vmatprep.subr.mxu0 0.0
    %3126 = vmatpush1.xpose.msra.mxu0 0.0
    %3127 = vmatprep.subr.mxu0 0.0
    %3128 = vmatpush1.xpose.msra.mxu0 0.0
    %3129 = vmatprep.subr.mxu0 0.0
    %3130 = vmatpush1.xpose.msra.mxu0 0.0
    %3131 = vmatprep.subr.mxu0 0.0
    %3132 = vmatpush1.xpose.msra.mxu0 0.0
    %3133 = vmatprep.subr.mxu0 0.0
    %3134 = vmatpush1.xpose.msra.mxu0 0.0
    %3135 = vmatprep.subr.mxu0 0.0
    %3136 = vmatpush1.xpose.msra.mxu0 0.0
    %3137 = vmatprep.subr.mxu0 0.0
    %3138 = vmatpush1.xpose.msra.mxu0 0.0
    %3139 = vmatprep.subr.mxu0 0.0
    %3140 = vmatpush1.xpose.msra.mxu0 0.0
    %3141 = vmatprep.subr.mxu0 0.0
    %3142 = vmatpush1.xpose.msra.mxu0 0.0
    %3143 = vmatprep.subr.mxu0 0.0
    %3144 = vmatpush1.xpose.msra.mxu0 0.0
    %3145 = vmatprep.subr.mxu0 0.0
    %3146 = vmatpush1.xpose.msra.mxu0 0.0
    %3147 = vmatprep.subr.mxu0 0.0
    %3148 = vmatpush1.xpose.msra.mxu0 0.0
    %3149 = vmatprep.subr.mxu0 0.0
    %3150 = vmatpush1.xpose.msra.mxu0 0.0
    %3151 = vmatprep.subr.mxu0 0.0
    %3152 = vmatpush1.xpose.msra.mxu0 0.0
    %3153 = vmatprep.subr.mxu0 0.0
    %3154 = vmatpush1.xpose.msra.mxu0 0.0
    %3155 = vmatprep.subr.mxu0 0.0
    %3156 = vmatpush1.xpose.msra.mxu0 0.0
    %3157 = vmatprep.subr.mxu0 0.0
    %3158 = vmatpush1.xpose.msra.mxu0 0.0
    %3159 = vmatprep.subr.mxu0 0.0
    %3160 = vmatpush1.xpose.msra.mxu0 0.0
    %3161 = vmatprep.subr.mxu0 0.0
    %3162 = vmatpush1.xpose.msra.mxu0 0.0
    %3163 = vmatprep.subr.mxu0 0.0
    %3164 = vmatpush1.xpose.msra.mxu0 0.0
    %3165 = vmatprep.subr.mxu0 0.0
    %3166 = vmatpush1.xpose.msra.mxu0 0.0
    %3167 = vmatprep.subr.mxu0 0.0
    %3168 = vmatpush1.xpose.msra.mxu0 0.0
    %3169 = vmatprep.subr.mxu0 0.0
    %3170 = vmatpush1.xpose.msra.mxu0 0.0
    %3171 = vmatprep.subr.mxu0 0.0
    %3172 = vmatpush1.xpose.msra.mxu0 0.0
    %3173 = vmatprep.subr.mxu0 0.0
    %3174 = vmatpush1.xpose.msra.mxu0 0.0
    %3175 = vmatprep.subr.mxu0 0.0
    %3176 = vmatpush1.xpose.msra.mxu0 0.0
    %3177 = vmatprep.mubr.f32.mxu0 0.0
    %3178 = vmatmul.mubr.f32.gmra.mrb[0].mxu0 %v3105
    %v3179 = vpop.f32.mrb[0].mxu0
    %v3180 = vadd.f32 0.0, %v3179
    %v3181 = vpop.f32.mrb[0].mxu0
    %3182 = vmatprep.mubr.f32.mxu0 0.0
    %3183 = vmatmul.mubr.f32.gmra.mrb[0].mxu0 %v3107
    %v3184 = vpop.f32.mrb[0].mxu0
    %v3185 = vadd.f32 0.0, %v3184
    %v3186 = vpop.f32.mrb[0].mxu0
    %3187 = vdwg.mxu0
    %3190 = vrot.lane.b32.xlu0 %v2998, 16
    %v3191 = vpop.permute.xlu0 %3190
    %3192 = vrot.lane.b32.xlu0 %v3003, 16
    %v3193 = vpop.permute.xlu0 %3192
    %3198 = vrot.lane.b32.xlu0 %v3089, 32
    %v3199 = vpop.permute.xlu0 %3198
    %3200 = vrot.lane.b32.xlu0 %v3094, 32
    %v3201 = vpop.permute.xlu0 %3200
    %3206 = vrot.lane.b32.xlu0 %v3180, 48
    %v3207 = vpop.permute.xlu0 %3206
    %3208 = vrot.lane.b32.xlu0 %v3185, 48
    %v3209 = vpop.permute.xlu0 %3208
    %v3212 = vsel %vm937, %v2907, %v3191
    %v3213 = vsel %vm937, %v2912, %v3193
    %v3214 = vsel %vm446, %v3212, %v3199
    %v3215 = vsel %vm446, %v3213, %v3201
    %v3216 = vsel %vm942, %v3214, %v3207
    %v3217 = vsel %vm942, %v3215, %v3209
    %v3218 = vadd.f32 %v3216, %v419
    %v3219 = vadd.f32 %v3217, %v419
    %v3220 = vsel %vm947, %v3218, -inf
    %3221 = vmax.xlane.f32.xlu0 %v3220
    %v3222 = vpop.xlane.xlu0 %3221
    %v3223 = vsel %vm947, %v3219, -inf
    %3224 = vmax.xlane.f32.xlu0 %v3223
    %v3225 = vpop.xlane.xlu0 %3224
    %v3226 = vsub.f32 %v3218, %v3222
    %v3227 = vsub.f32 %v3219, %v3225
    %v3228 = vmul.f32 %v3226, 1.442695
    %v3229 = vpow.pop %v3228
    %v3230 = vmul.f32 %v3227, 1.442695
    %v3231 = vpow.pop %v3230
    %v3232 = vsel %vm937, %v3229, 0.0
    %3233 = vadd.xlane.f32.xlu0 %v3232
    %v3234 = vpop.xlane.xlu0 %3233
    %v3235 = vsel %vm937, %v3231, 0.0
    %3236 = vadd.xlane.f32.xlu0 %v3235
    %v3237 = vpop.xlane.xlu0 %3236
    %v3238 = vrcp.pop %v3234
    %v3239 = vrcp.pop %v3237
    %3240 = vrot.lane.b32.xlu0 %v2802, 64
    %v3241 = vpop.permute.xlu0 %3240
    %3242 = vrot.lane.b32.xlu0 %v2807, 64
    %v3243 = vpop.permute.xlu0 %3242
    %v3247 = vsel %vm937, %v3229, 0
    %v3250 = vsel %vm937, %v3231, 0
    %3252 = vmatprep.subr.mxu0 0.0
    %3253 = vmatpush1.msra.mxu0 %v3241
    %3254 = vmatprep.subr.mxu0 0.0
    %3255 = vmatpush1.msra.mxu0 %v3243
    %3256 = vmatprep.subr.mxu0 0.0
    %3257 = vmatpush1.msra.mxu0 0.0
    %3258 = vmatprep.subr.mxu0 0.0
    %3259 = vmatpush1.msra.mxu0 0.0
    %3260 = vmatprep.subr.mxu0 0.0
    %3261 = vmatpush1.msra.mxu0 0.0
    %3262 = vmatprep.subr.mxu0 0.0
    %3263 = vmatpush1.msra.mxu0 0.0
    %3264 = vmatprep.subr.mxu0 0.0
    %3265 = vmatpush1.msra.mxu0 0.0
    %3266 = vmatprep.subr.mxu0 0.0
    %3267 = vmatpush1.msra.mxu0 0.0
    %3268 = vmatprep.subr.mxu0 0.0
    %3269 = vmatpush1.msra.mxu0 0.0
    %3270 = vmatprep.subr.mxu0 0.0
    %3271 = vmatpush1.msra.mxu0 0.0
    %3272 = vmatprep.subr.mxu0 0.0
    %3273 = vmatpush1.msra.mxu0 0.0
    %3274 = vmatprep.subr.mxu0 0.0
    %3275 = vmatpush1.msra.mxu0 0.0
    %3276 = vmatprep.subr.mxu0 0.0
    %3277 = vmatpush1.msra.mxu0 0.0
    %3278 = vmatprep.subr.mxu0 0.0
    %3279 = vmatpush1.msra.mxu0 0.0
    %3280 = vmatprep.subr.mxu0 0.0
    %3281 = vmatpush1.msra.mxu0 0.0
    %3282 = vmatprep.subr.mxu0 0.0
    %3283 = vmatpush1.msra.mxu0 0.0
    %3284 = vmatprep.subr.mxu0 0.0
    %3285 = vmatpush1.msra.mxu0 0.0
    %3286 = vmatprep.subr.mxu0 0.0
    %3287 = vmatpush1.msra.mxu0 0.0
    %3288 = vmatprep.subr.mxu0 0.0
    %3289 = vmatpush1.msra.mxu0 0.0
    %3290 = vmatprep.subr.mxu0 0.0
    %3291 = vmatpush1.msra.mxu0 0.0
    %3292 = vmatprep.subr.mxu0 0.0
    %3293 = vmatpush1.msra.mxu0 0.0
    %3294 = vmatprep.subr.mxu0 0.0
    %3295 = vmatpush1.msra.mxu0 0.0
    %3296 = vmatprep.subr.mxu0 0.0
    %3297 = vmatpush1.msra.mxu0 0.0
    %3298 = vmatprep.subr.mxu0 0.0
    %3299 = vmatpush1.msra.mxu0 0.0
    %3300 = vmatprep.subr.mxu0 0.0
    %3301 = vmatpush1.msra.mxu0 0.0
    %3302 = vmatprep.subr.mxu0 0.0
    %3303 = vmatpush1.msra.mxu0 0.0
    %3304 = vmatprep.subr.mxu0 0.0
    %3305 = vmatpush1.msra.mxu0 0.0
    %3306 = vmatprep.subr.mxu0 0.0
    %3307 = vmatpush1.msra.mxu0 0.0
    %3308 = vmatprep.subr.mxu0 0.0
    %3309 = vmatpush1.msra.mxu0 0.0
    %3310 = vmatprep.subr.mxu0 0.0
    %3311 = vmatpush1.msra.mxu0 0.0
    %3312 = vmatprep.subr.mxu0 0.0
    %3313 = vmatpush1.msra.mxu0 0.0
    %3314 = vmatprep.subr.mxu0 0.0
    %3315 = vmatpush1.msra.mxu0 0.0
    %3316 = vmatprep.mubr.f32.mxu0 0.0
    %3317 = vmatmul.mubr.f32.gmra.mrb[0].mxu0 %v3247
    %v3318 = vpop.f32.mrb[0].mxu0
    %v3319 = vadd.f32 0.0, %v3318
    %v3320 = vpop.f32.mrb[0].mxu0
    %3321 = vmatprep.mubr.f32.mxu0 0.0
    %3322 = vmatmul.mubr.f32.gmra.mrb[0].mxu0 %v3250
    %v3323 = vpop.f32.mrb[0].mxu0
    %v3324 = vadd.f32 0.0, %v3323
    %v3325 = vpop.f32.mrb[0].mxu0
    %3326 = vdwg.mxu0
    %v3327 = vmul.f32 %v3319, %v3238
    %v3328 = vmul.f32 %v3324, %v3239
    %3329 = vrot.lane.b32.xlu0 %v3229, 112
    %v3330 = vpop.permute.xlu0 %3329
    %3331 = vrot.lane.b32.xlu0 %v3231, 112
    %v3332 = vpop.permute.xlu0 %3331
    %v3335 = vsel %vm937, %v3330, 0.0
    %3336 = vadd.xlane.f32.xlu0 %v3335
    %v3337 = vpop.xlane.xlu0 %3336
    %v3338 = vsel %vm937, %v3332, 0.0
    %3339 = vadd.xlane.f32.xlu0 %v3338
    %v3340 = vpop.xlane.xlu0 %3339
    %v3341 = vrcp.pop %v3337
    %v3342 = vrcp.pop %v3340
    %3343 = vrot.lane.b32.xlu0 %v2802, 56
    %v3344 = vpop.permute.xlu0 %3343
    %3345 = vrot.lane.b32.xlu0 %v2807, 56
    %v3346 = vpop.permute.xlu0 %3345
    %v3349 = vsel %vm937, %v3330, 0
    %v3351 = vsel %vm937, %v3332, 0
    %3353 = vmatprep.subr.mxu0 0.0
    %3354 = vmatpush1.msra.mxu0 %v3344
    %3355 = vmatprep.subr.mxu0 0.0
    %3356 = vmatpush1.msra.mxu0 %v3346
    %3357 = vmatprep.subr.mxu0 0.0
    %3358 = vmatpush1.msra.mxu0 0.0
    %3359 = vmatprep.subr.mxu0 0.0
    %3360 = vmatpush1.msra.mxu0 0.0
    %3361 = vmatprep.subr.mxu0 0.0
    %3362 = vmatpush1.msra.mxu0 0.0
    %3363 = vmatprep.subr.mxu0 0.0
    %3364 = vmatpush1.msra.mxu0 0.0
    %3365 = vmatprep.subr.mxu0 0.0
    %3366 = vmatpush1.msra.mxu0 0.0
    %3367 = vmatprep.subr.mxu0 0.0
    %3368 = vmatpush1.msra.mxu0 0.0
    %3369 = vmatprep.subr.mxu0 0.0
    %3370 = vmatpush1.msra.mxu0 0.0
    %3371 = vmatprep.subr.mxu0 0.0
    %3372 = vmatpush1.msra.mxu0 0.0
    %3373 = vmatprep.subr.mxu0 0.0
    %3374 = vmatpush1.msra.mxu0 0.0
    %3375 = vmatprep.subr.mxu0 0.0
    %3376 = vmatpush1.msra.mxu0 0.0
    %3377 = vmatprep.subr.mxu0 0.0
    %3378 = vmatpush1.msra.mxu0 0.0
    %3379 = vmatprep.subr.mxu0 0.0
    %3380 = vmatpush1.msra.mxu0 0.0
    %3381 = vmatprep.subr.mxu0 0.0
    %3382 = vmatpush1.msra.mxu0 0.0
    %3383 = vmatprep.subr.mxu0 0.0
    %3384 = vmatpush1.msra.mxu0 0.0
    %3385 = vmatprep.subr.mxu0 0.0
    %3386 = vmatpush1.msra.mxu0 0.0
    %3387 = vmatprep.subr.mxu0 0.0
    %3388 = vmatpush1.msra.mxu0 0.0
    %3389 = vmatprep.subr.mxu0 0.0
    %3390 = vmatpush1.msra.mxu0 0.0
    %3391 = vmatprep.subr.mxu0 0.0
    %3392 = vmatpush1.msra.mxu0 0.0
    %3393 = vmatprep.subr.mxu0 0.0
    %3394 = vmatpush1.msra.mxu0 0.0
    %3395 = vmatprep.subr.mxu0 0.0
    %3396 = vmatpush1.msra.mxu0 0.0
    %3397 = vmatprep.subr.mxu0 0.0
    %3398 = vmatpush1.msra.mxu0 0.0
    %3399 = vmatprep.subr.mxu0 0.0
    %3400 = vmatpush1.msra.mxu0 0.0
    %3401 = vmatprep.subr.mxu0 0.0
    %3402 = vmatpush1.msra.mxu0 0.0
    %3403 = vmatprep.subr.mxu0 0.0
    %3404 = vmatpush1.msra.mxu0 0.0
    %3405 = vmatprep.subr.mxu0 0.0
    %3406 = vmatpush1.msra.mxu0 0.0
    %3407 = vmatprep.subr.mxu0 0.0
    %3408 = vmatpush1.msra.mxu0 0.0
    %3409 = vmatprep.subr.mxu0 0.0
    %3410 = vmatpush1.msra.mxu0 0.0
    %3411 = vmatprep.subr.mxu0 0.0
    %3412 = vmatpush1.msra.mxu0 0.0
    %3413 = vmatprep.subr.mxu0 0.0
    %3414 = vmatpush1.msra.mxu0 0.0
    %3415 = vmatprep.subr.mxu0 0.0
    %3416 = vmatpush1.msra.mxu0 0.0
    %3417 = vmatprep.mubr.f32.mxu0 0.0
    %3418 = vmatmul.mubr.f32.gmra.mrb[0].mxu0 %v3349
    %v3419 = vpop.f32.mrb[0].mxu0
    %v3420 = vadd.f32 0.0, %v3419
    %v3421 = vpop.f32.mrb[0].mxu0
    %3422 = vmatprep.mubr.f32.mxu0 0.0
    %3423 = vmatmul.mubr.f32.gmra.mrb[0].mxu0 %v3351
    %v3424 = vpop.f32.mrb[0].mxu0
    %v3425 = vadd.f32 0.0, %v3424
    %v3426 = vpop.f32.mrb[0].mxu0
    %3427 = vdwg.mxu0
    %v3428 = vmul.f32 %v3420, %v3341
    %v3429 = vmul.f32 %v3425, %v3342
    %3430 = vrot.lane.b32.xlu0 %v3229, 96
    %v3431 = vpop.permute.xlu0 %3430
    %3432 = vrot.lane.b32.xlu0 %v3231, 96
    %v3433 = vpop.permute.xlu0 %3432
    %v3436 = vsel %vm937, %v3431, 0.0
    %3437 = vadd.xlane.f32.xlu0 %v3436
    %v3438 = vpop.xlane.xlu0 %3437
    %v3439 = vsel %vm937, %v3433, 0.0
    %3440 = vadd.xlane.f32.xlu0 %v3439
    %v3441 = vpop.xlane.xlu0 %3440
    %v3442 = vrcp.pop %v3438
    %v3443 = vrcp.pop %v3441
    %3444 = vrot.lane.b32.xlu0 %v2802, 48
    %v3445 = vpop.permute.xlu0 %3444
    %3446 = vrot.lane.b32.xlu0 %v2807, 48
    %v3447 = vpop.permute.xlu0 %3446
    %v3450 = vsel %vm937, %v3431, 0
    %v3452 = vsel %vm937, %v3433, 0
    %3454 = vmatprep.subr.mxu0 0.0
    %3455 = vmatpush1.msra.mxu0 %v3445
    %3456 = vmatprep.subr.mxu0 0.0
    %3457 = vmatpush1.msra.mxu0 %v3447
    %3458 = vmatprep.subr.mxu0 0.0
    %3459 = vmatpush1.msra.mxu0 0.0
    %3460 = vmatprep.subr.mxu0 0.0
    %3461 = vmatpush1.msra.mxu0 0.0
    %3462 = vmatprep.subr.mxu0 0.0
    %3463 = vmatpush1.msra.mxu0 0.0
    %3464 = vmatprep.subr.mxu0 0.0
    %3465 = vmatpush1.msra.mxu0 0.0
    %3466 = vmatprep.subr.mxu0 0.0
    %3467 = vmatpush1.msra.mxu0 0.0
    %3468 = vmatprep.subr.mxu0 0.0
    %3469 = vmatpush1.msra.mxu0 0.0
    %3470 = vmatprep.subr.mxu0 0.0
    %3471 = vmatpush1.msra.mxu0 0.0
    %3472 = vmatprep.subr.mxu0 0.0
    %3473 = vmatpush1.msra.mxu0 0.0
    %3474 = vmatprep.subr.mxu0 0.0
    %3475 = vmatpush1.msra.mxu0 0.0
    %3476 = vmatprep.subr.mxu0 0.0
    %3477 = vmatpush1.msra.mxu0 0.0
    %3478 = vmatprep.subr.mxu0 0.0
    %3479 = vmatpush1.msra.mxu0 0.0
    %3480 = vmatprep.subr.mxu0 0.0
    %3481 = vmatpush1.msra.mxu0 0.0
    %3482 = vmatprep.subr.mxu0 0.0
    %3483 = vmatpush1.msra.mxu0 0.0
    %3484 = vmatprep.subr.mxu0 0.0
    %3485 = vmatpush1.msra.mxu0 0.0
    %3486 = vmatprep.subr.mxu0 0.0
    %3487 = vmatpush1.msra.mxu0 0.0
    %3488 = vmatprep.subr.mxu0 0.0
    %3489 = vmatpush1.msra.mxu0 0.0
    %3490 = vmatprep.subr.mxu0 0.0
    %3491 = vmatpush1.msra.mxu0 0.0
    %3492 = vmatprep.subr.mxu0 0.0
    %3493 = vmatpush1.msra.mxu0 0.0
    %3494 = vmatprep.subr.mxu0 0.0
    %3495 = vmatpush1.msra.mxu0 0.0
    %3496 = vmatprep.subr.mxu0 0.0
    %3497 = vmatpush1.msra.mxu0 0.0
    %3498 = vmatprep.subr.mxu0 0.0
    %3499 = vmatpush1.msra.mxu0 0.0
    %3500 = vmatprep.subr.mxu0 0.0
    %3501 = vmatpush1.msra.mxu0 0.0
    %3502 = vmatprep.subr.mxu0 0.0
    %3503 = vmatpush1.msra.mxu0 0.0
    %3504 = vmatprep.subr.mxu0 0.0
    %3505 = vmatpush1.msra.mxu0 0.0
    %3506 = vmatprep.subr.mxu0 0.0
    %3507 = vmatpush1.msra.mxu0 0.0
    %3508 = vmatprep.subr.mxu0 0.0
    %3509 = vmatpush1.msra.mxu0 0.0
    %3510 = vmatprep.subr.mxu0 0.0
    %3511 = vmatpush1.msra.mxu0 0.0
    %3512 = vmatprep.subr.mxu0 0.0
    %3513 = vmatpush1.msra.mxu0 0.0
    %3514 = vmatprep.subr.mxu0 0.0
    %3515 = vmatpush1.msra.mxu0 0.0
    %3516 = vmatprep.subr.mxu0 0.0
    %3517 = vmatpush1.msra.mxu0 0.0
    %3518 = vmatprep.mubr.f32.mxu0 0.0
    %3519 = vmatmul.mubr.f32.gmra.mrb[0].mxu0 %v3450
    %v3520 = vpop.f32.mrb[0].mxu0
    %v3521 = vadd.f32 0.0, %v3520
    %v3522 = vpop.f32.mrb[0].mxu0
    %3523 = vmatprep.mubr.f32.mxu0 0.0
    %3524 = vmatmul.mubr.f32.gmra.mrb[0].mxu0 %v3452
    %v3525 = vpop.f32.mrb[0].mxu0
    %v3526 = vadd.f32 0.0, %v3525
    %v3527 = vpop.f32.mrb[0].mxu0
    %3528 = vdwg.mxu0
    %v3529 = vmul.f32 %v3521, %v3442
    %v3530 = vmul.f32 %v3526, %v3443
    %3531 = vrot.lane.b32.xlu0 %v3229, 80
    %v3532 = vpop.permute.xlu0 %3531
    %3533 = vrot.lane.b32.xlu0 %v3231, 80
    %v3534 = vpop.permute.xlu0 %3533
    %v3537 = vsel %vm937, %v3532, 0.0
    %3538 = vadd.xlane.f32.xlu0 %v3537
    %v3539 = vpop.xlane.xlu0 %3538
    %v3540 = vsel %vm937, %v3534, 0.0
    %3541 = vadd.xlane.f32.xlu0 %v3540
    %v3542 = vpop.xlane.xlu0 %3541
    %v3543 = vrcp.pop %v3539
    %v3544 = vrcp.pop %v3542
    %3545 = vrot.lane.b32.xlu0 %v2802, 40
    %v3546 = vpop.permute.xlu0 %3545
    %3547 = vrot.lane.b32.xlu0 %v2807, 40
    %v3548 = vpop.permute.xlu0 %3547
    %v3551 = vsel %vm937, %v3532, 0
    %v3553 = vsel %vm937, %v3534, 0
    %3555 = vmatprep.subr.mxu0 0.0
    %3556 = vmatpush1.msra.mxu0 %v3546
    %3557 = vmatprep.subr.mxu0 0.0
    %3558 = vmatpush1.msra.mxu0 %v3548
    %3559 = vmatprep.subr.mxu0 0.0
    %3560 = vmatpush1.msra.mxu0 0.0
    %3561 = vmatprep.subr.mxu0 0.0
    %3562 = vmatpush1.msra.mxu0 0.0
    %3563 = vmatprep.subr.mxu0 0.0
    %3564 = vmatpush1.msra.mxu0 0.0
    %3565 = vmatprep.subr.mxu0 0.0
    %3566 = vmatpush1.msra.mxu0 0.0
    %3567 = vmatprep.subr.mxu0 0.0
    %3568 = vmatpush1.msra.mxu0 0.0
    %3569 = vmatprep.subr.mxu0 0.0
    %3570 = vmatpush1.msra.mxu0 0.0
    %3571 = vmatprep.subr.mxu0 0.0
    %3572 = vmatpush1.msra.mxu0 0.0
    %3573 = vmatprep.subr.mxu0 0.0
    %3574 = vmatpush1.msra.mxu0 0.0
    %3575 = vmatprep.subr.mxu0 0.0
    %3576 = vmatpush1.msra.mxu0 0.0
    %3577 = vmatprep.subr.mxu0 0.0
    %3578 = vmatpush1.msra.mxu0 0.0
    %3579 = vmatprep.subr.mxu0 0.0
    %3580 = vmatpush1.msra.mxu0 0.0
    %3581 = vmatprep.subr.mxu0 0.0
    %3582 = vmatpush1.msra.mxu0 0.0
    %3583 = vmatprep.subr.mxu0 0.0
    %3584 = vmatpush1.msra.mxu0 0.0
    %3585 = vmatprep.subr.mxu0 0.0
    %3586 = vmatpush1.msra.mxu0 0.0
    %3587 = vmatprep.subr.mxu0 0.0
    %3588 = vmatpush1.msra.mxu0 0.0
    %3589 = vmatprep.subr.mxu0 0.0
    %3590 = vmatpush1.msra.mxu0 0.0
    %3591 = vmatprep.subr.mxu0 0.0
    %3592 = vmatpush1.msra.mxu0 0.0
    %3593 = vmatprep.subr.mxu0 0.0
    %3594 = vmatpush1.msra.mxu0 0.0
    %3595 = vmatprep.subr.mxu0 0.0
    %3596 = vmatpush1.msra.mxu0 0.0
    %3597 = vmatprep.subr.mxu0 0.0
    %3598 = vmatpush1.msra.mxu0 0.0
    %3599 = vmatprep.subr.mxu0 0.0
    %3600 = vmatpush1.msra.mxu0 0.0
    %3601 = vmatprep.subr.mxu0 0.0
    %3602 = vmatpush1.msra.mxu0 0.0
    %3603 = vmatprep.subr.mxu0 0.0
    %3604 = vmatpush1.msra.mxu0 0.0
    %3605 = vmatprep.subr.mxu0 0.0
    %3606 = vmatpush1.msra.mxu0 0.0
    %3607 = vmatprep.subr.mxu0 0.0
    %3608 = vmatpush1.msra.mxu0 0.0
    %3609 = vmatprep.subr.mxu0 0.0
    %3610 = vmatpush1.msra.mxu0 0.0
    %3611 = vmatprep.subr.mxu0 0.0
    %3612 = vmatpush1.msra.mxu0 0.0
    %3613 = vmatprep.subr.mxu0 0.0
    %3614 = vmatpush1.msra.mxu0 0.0
    %3615 = vmatprep.subr.mxu0 0.0
    %3616 = vmatpush1.msra.mxu0 0.0
    %3617 = vmatprep.subr.mxu0 0.0
    %3618 = vmatpush1.msra.mxu0 0.0
    %3619 = vmatprep.mubr.f32.mxu0 0.0
    %3620 = vmatmul.mubr.f32.gmra.mrb[0].mxu0 %v3551
    %v3621 = vpop.f32.mrb[0].mxu0
    %v3622 = vadd.f32 0.0, %v3621
    %v3623 = vpop.f32.mrb[0].mxu0
    %3624 = vmatprep.mubr.f32.mxu0 0.0
    %3625 = vmatmul.mubr.f32.gmra.mrb[0].mxu0 %v3553
    %v3626 = vpop.f32.mrb[0].mxu0
    %v3627 = vadd.f32 0.0, %v3626
    %v3628 = vpop.f32.mrb[0].mxu0
    %3629 = vdwg.mxu0
    %v3630 = vmul.f32 %v3622, %v3543
    %v3631 = vmul.f32 %v3627, %v3544
    %3634 = vrot.lane.b32.xlu0 %v3428, 8
    %v3635 = vpop.permute.xlu0 %3634
    %3636 = vrot.lane.b32.xlu0 %v3429, 8
    %v3637 = vpop.permute.xlu0 %3636
    %3642 = vrot.lane.b32.xlu0 %v3529, 16
    %v3643 = vpop.permute.xlu0 %3642
    %3644 = vrot.lane.b32.xlu0 %v3530, 16
    %v3645 = vpop.permute.xlu0 %3644
    %3650 = vrot.lane.b32.xlu0 %v3630, 24
    %v3651 = vpop.permute.xlu0 %3650
    %3652 = vrot.lane.b32.xlu0 %v3631, 24
    %v3653 = vpop.permute.xlu0 %3652
    %v3656 = vsel %vm554, %v3327, %v3635
    %v3657 = vsel %vm554, %v3328, %v3637
    %v3658 = vsel %vm937, %v3656, %v3643
    %v3659 = vsel %vm937, %v3657, %v3645
    %v3660 = vsel %vm1388, %v3658, %v3651
    %v3661 = vsel %vm1388, %v3659, %v3653
    %3664 = vrot.lane.b32.xlu0 %v2812, 96
    %v3665 = vpop.permute.xlu0 %3664
    %3666 = vrot.lane.b32.xlu0 %v2817, 96
    %v3667 = vpop.permute.xlu0 %3666
    %v3669 = vsel %vm554, %v2822, 0
    %v3672 = vsel %vm554, %v2823, 0
    %v3674 = vsel %vm554, %v3665, 0
    %v3676 = vsel %vm554, %v3667, 0
    %3678 = vmatprep.subr.mxu0 0.0
    %3679 = vmatpush1.xpose.msra.mxu0 %v3674
    %3680 = vmatprep.subr.mxu0 0.0
    %3681 = vmatpush1.xpose.msra.mxu0 %v3676
    %3682 = vmatprep.subr.mxu0 0.0
    %3683 = vmatpush1.xpose.msra.mxu0 0.0
    %3684 = vmatprep.subr.mxu0 0.0
    %3685 = vmatpush1.xpose.msra.mxu0 0.0
    %3686 = vmatprep.subr.mxu0 0.0
    %3687 = vmatpush1.xpose.msra.mxu0 0.0
    %3688 = vmatprep.subr.mxu0 0.0
    %3689 = vmatpush1.xpose.msra.mxu0 0.0
    %3690 = vmatprep.subr.mxu0 0.0
    %3691 = vmatpush1.xpose.msra.mxu0 0.0
    %3692 = vmatprep.subr.mxu0 0.0
    %3693 = vmatpush1.xpose.msra.mxu0 0.0
    %3694 = vmatprep.subr.mxu0 0.0
    %3695 = vmatpush1.xpose.msra.mxu0 0.0
    %3696 = vmatprep.subr.mxu0 0.0
    %3697 = vmatpush1.xpose.msra.mxu0 0.0
    %3698 = vmatprep.subr.mxu0 0.0
    %3699 = vmatpush1.xpose.msra.mxu0 0.0
    %3700 = vmatprep.subr.mxu0 0.0
    %3701 = vmatpush1.xpose.msra.mxu0 0.0
    %3702 = vmatprep.subr.mxu0 0.0
    %3703 = vmatpush1.xpose.msra.mxu0 0.0
    %3704 = vmatprep.subr.mxu0 0.0
    %3705 = vmatpush1.xpose.msra.mxu0 0.0
    %3706 = vmatprep.subr.mxu0 0.0
    %3707 = vmatpush1.xpose.msra.mxu0 0.0
    %3708 = vmatprep.subr.mxu0 0.0
    %3709 = vmatpush1.xpose.msra.mxu0 0.0
    %3710 = vmatprep.subr.mxu0 0.0
    %3711 = vmatpush1.xpose.msra.mxu0 0.0
    %3712 = vmatprep.subr.mxu0 0.0
    %3713 = vmatpush1.xpose.msra.mxu0 0.0
    %3714 = vmatprep.subr.mxu0 0.0
    %3715 = vmatpush1.xpose.msra.mxu0 0.0
    %3716 = vmatprep.subr.mxu0 0.0
    %3717 = vmatpush1.xpose.msra.mxu0 0.0
    %3718 = vmatprep.subr.mxu0 0.0
    %3719 = vmatpush1.xpose.msra.mxu0 0.0
    %3720 = vmatprep.subr.mxu0 0.0
    %3721 = vmatpush1.xpose.msra.mxu0 0.0
    %3722 = vmatprep.subr.mxu0 0.0
    %3723 = vmatpush1.xpose.msra.mxu0 0.0
    %3724 = vmatprep.subr.mxu0 0.0
    %3725 = vmatpush1.xpose.msra.mxu0 0.0
    %3726 = vmatprep.subr.mxu0 0.0
    %3727 = vmatpush1.xpose.msra.mxu0 0.0
    %3728 = vmatprep.subr.mxu0 0.0
    %3729 = vmatpush1.xpose.msra.mxu0 0.0
    %3730 = vmatprep.subr.mxu0 0.0
    %3731 = vmatpush1.xpose.msra.mxu0 0.0
    %3732 = vmatprep.subr.mxu0 0.0
    %3733 = vmatpush1.xpose.msra.mxu0 0.0
    %3734 = vmatprep.subr.mxu0 0.0
    %3735 = vmatpush1.xpose.msra.mxu0 0.0
    %3736 = vmatprep.subr.mxu0 0.0
    %3737 = vmatpush1.xpose.msra.mxu0 0.0
    %3738 = vmatprep.subr.mxu0 0.0
    %3739 = vmatpush1.xpose.msra.mxu0 0.0
    %3740 = vmatprep.subr.mxu0 0.0
    %3741 = vmatpush1.xpose.msra.mxu0 0.0
    %3742 = vmatprep.mubr.f32.mxu0 0.0
    %3743 = vmatmul.mubr.f32.gmra.mrb[0].mxu0 %v3669
    %v3744 = vpop.f32.mrb[0].mxu0
    %v3745 = vadd.f32 0.0, %v3744
    %v3746 = vpop.f32.mrb[0].mxu0
    %3747 = vmatprep.mubr.f32.mxu0 0.0
    %3748 = vmatmul.mubr.f32.gmra.mrb[0].mxu0 %v3672
    %v3749 = vpop.f32.mrb[0].mxu0
    %v3750 = vadd.f32 0.0, %v3749
    %v3751 = vpop.f32.mrb[0].mxu0
    %3752 = vdwg.mxu0
    %3753 = vrot.lane.b32.xlu0 %v2822, 120
    %v3754 = vpop.permute.xlu0 %3753
    %3755 = vrot.lane.b32.xlu0 %v2823, 120
    %v3756 = vpop.permute.xlu0 %3755
    %3757 = vrot.lane.b32.xlu0 %v2812, 88
    %v3758 = vpop.permute.xlu0 %3757
    %3759 = vrot.lane.b32.xlu0 %v2817, 88
    %v3760 = vpop.permute.xlu0 %3759
    %v3761 = vsel %vm554, %v3754, 0
    %v3763 = vsel %vm554, %v3756, 0
    %v3765 = vsel %vm554, %v3758, 0
    %v3767 = vsel %vm554, %v3760, 0
    %3769 = vmatprep.subr.mxu0 0.0
    %3770 = vmatpush1.xpose.msra.mxu0 %v3765
    %3771 = vmatprep.subr.mxu0 0.0
    %3772 = vmatpush1.xpose.msra.mxu0 %v3767
    %3773 = vmatprep.subr.mxu0 0.0
    %3774 = vmatpush1.xpose.msra.mxu0 0.0
    %3775 = vmatprep.subr.mxu0 0.0
    %3776 = vmatpush1.xpose.msra.mxu0 0.0
    %3777 = vmatprep.subr.mxu0 0.0
    %3778 = vmatpush1.xpose.msra.mxu0 0.0
    %3779 = vmatprep.subr.mxu0 0.0
    %3780 = vmatpush1.xpose.msra.mxu0 0.0
    %3781 = vmatprep.subr.mxu0 0.0
    %3782 = vmatpush1.xpose.msra.mxu0 0.0
    %3783 = vmatprep.subr.mxu0 0.0
    %3784 = vmatpush1.xpose.msra.mxu0 0.0
    %3785 = vmatprep.subr.mxu0 0.0
    %3786 = vmatpush1.xpose.msra.mxu0 0.0
    %3787 = vmatprep.subr.mxu0 0.0
    %3788 = vmatpush1.xpose.msra.mxu0 0.0
    %3789 = vmatprep.subr.mxu0 0.0
    %3790 = vmatpush1.xpose.msra.mxu0 0.0
    %3791 = vmatprep.subr.mxu0 0.0
    %3792 = vmatpush1.xpose.msra.mxu0 0.0
    %3793 = vmatprep.subr.mxu0 0.0
    %3794 = vmatpush1.xpose.msra.mxu0 0.0
    %3795 = vmatprep.subr.mxu0 0.0
    %3796 = vmatpush1.xpose.msra.mxu0 0.0
    %3797 = vmatprep.subr.mxu0 0.0
    %3798 = vmatpush1.xpose.msra.mxu0 0.0
    %3799 = vmatprep.subr.mxu0 0.0
    %3800 = vmatpush1.xpose.msra.mxu0 0.0
    %3801 = vmatprep.subr.mxu0 0.0
    %3802 = vmatpush1.xpose.msra.mxu0 0.0
    %3803 = vmatprep.subr.mxu0 0.0
    %3804 = vmatpush1.xpose.msra.mxu0 0.0
    %3805 = vmatprep.subr.mxu0 0.0
    %3806 = vmatpush1.xpose.msra.mxu0 0.0
    %3807 = vmatprep.subr.mxu0 0.0
    %3808 = vmatpush1.xpose.msra.mxu0 0.0
    %3809 = vmatprep.subr.mxu0 0.0
    %3810 = vmatpush1.xpose.msra.mxu0 0.0
    %3811 = vmatprep.subr.mxu0 0.0
    %3812 = vmatpush1.xpose.msra.mxu0 0.0
    %3813 = vmatprep.subr.mxu0 0.0
    %3814 = vmatpush1.xpose.msra.mxu0 0.0
    %3815 = vmatprep.subr.mxu0 0.0
    %3816 = vmatpush1.xpose.msra.mxu0 0.0
    %3817 = vmatprep.subr.mxu0 0.0
    %3818 = vmatpush1.xpose.msra.mxu0 0.0
    %3819 = vmatprep.subr.mxu0 0.0
    %3820 = vmatpush1.xpose.msra.mxu0 0.0
    %3821 = vmatprep.subr.mxu0 0.0
    %3822 = vmatpush1.xpose.msra.mxu0 0.0
    %3823 = vmatprep.subr.mxu0 0.0
    %3824 = vmatpush1.xpose.msra.mxu0 0.0
    %3825 = vmatprep.subr.mxu0 0.0
    %3826 = vmatpush1.xpose.msra.mxu0 0.0
    %3827 = vmatprep.subr.mxu0 0.0
    %3828 = vmatpush1.xpose.msra.mxu0 0.0
    %3829 = vmatprep.subr.mxu0 0.0
    %3830 = vmatpush1.xpose.msra.mxu0 0.0
    %3831 = vmatprep.subr.mxu0 0.0
    %3832 = vmatpush1.xpose.msra.mxu0 0.0
    %3833 = vmatprep.mubr.f32.mxu0 0.0
    %3834 = vmatmul.mubr.f32.gmra.mrb[0].mxu0 %v3761
    %v3835 = vpop.f32.mrb[0].mxu0
    %v3836 = vadd.f32 0.0, %v3835
    %v3837 = vpop.f32.mrb[0].mxu0
    %3838 = vmatprep.mubr.f32.mxu0 0.0
    %3839 = vmatmul.mubr.f32.gmra.mrb[0].mxu0 %v3763
    %v3840 = vpop.f32.mrb[0].mxu0
    %v3841 = vadd.f32 0.0, %v3840
    %v3842 = vpop.f32.mrb[0].mxu0
    %3843 = vdwg.mxu0
    %3844 = vrot.lane.b32.xlu0 %v2822, 112
    %v3845 = vpop.permute.xlu0 %3844
    %3846 = vrot.lane.b32.xlu0 %v2823, 112
    %v3847 = vpop.permute.xlu0 %3846
    %3848 = vrot.lane.b32.xlu0 %v2812, 80
    %v3849 = vpop.permute.xlu0 %3848
    %3850 = vrot.lane.b32.xlu0 %v2817, 80
    %v3851 = vpop.permute.xlu0 %3850
    %v3852 = vsel %vm554, %v3845, 0
    %v3854 = vsel %vm554, %v3847, 0
    %v3856 = vsel %vm554, %v3849, 0
    %v3858 = vsel %vm554, %v3851, 0
    %3860 = vmatprep.subr.mxu0 0.0
    %3861 = vmatpush1.xpose.msra.mxu0 %v3856
    %3862 = vmatprep.subr.mxu0 0.0
    %3863 = vmatpush1.xpose.msra.mxu0 %v3858
    %3864 = vmatprep.subr.mxu0 0.0
    %3865 = vmatpush1.xpose.msra.mxu0 0.0
    %3866 = vmatprep.subr.mxu0 0.0
    %3867 = vmatpush1.xpose.msra.mxu0 0.0
    %3868 = vmatprep.subr.mxu0 0.0
    %3869 = vmatpush1.xpose.msra.mxu0 0.0
    %3870 = vmatprep.subr.mxu0 0.0
    %3871 = vmatpush1.xpose.msra.mxu0 0.0
    %3872 = vmatprep.subr.mxu0 0.0
    %3873 = vmatpush1.xpose.msra.mxu0 0.0
    %3874 = vmatprep.subr.mxu0 0.0
    %3875 = vmatpush1.xpose.msra.mxu0 0.0
    %3876 = vmatprep.subr.mxu0 0.0
    %3877 = vmatpush1.xpose.msra.mxu0 0.0
    %3878 = vmatprep.subr.mxu0 0.0
    %3879 = vmatpush1.xpose.msra.mxu0 0.0
    %3880 = vmatprep.subr.mxu0 0.0
    %3881 = vmatpush1.xpose.msra.mxu0 0.0
    %3882 = vmatprep.subr.mxu0 0.0
    %3883 = vmatpush1.xpose.msra.mxu0 0.0
    %3884 = vmatprep.subr.mxu0 0.0
    %3885 = vmatpush1.xpose.msra.mxu0 0.0
    %3886 = vmatprep.subr.mxu0 0.0
    %3887 = vmatpush1.xpose.msra.mxu0 0.0
    %3888 = vmatprep.subr.mxu0 0.0
    %3889 = vmatpush1.xpose.msra.mxu0 0.0
    %3890 = vmatprep.subr.mxu0 0.0
    %3891 = vmatpush1.xpose.msra.mxu0 0.0
    %3892 = vmatprep.subr.mxu0 0.0
    %3893 = vmatpush1.xpose.msra.mxu0 0.0
    %3894 = vmatprep.subr.mxu0 0.0
    %3895 = vmatpush1.xpose.msra.mxu0 0.0
    %3896 = vmatprep.subr.mxu0 0.0
    %3897 = vmatpush1.xpose.msra.mxu0 0.0
    %3898 = vmatprep.subr.mxu0 0.0
    %3899 = vmatpush1.xpose.msra.mxu0 0.0
    %3900 = vmatprep.subr.mxu0 0.0
    %3901 = vmatpush1.xpose.msra.mxu0 0.0
    %3902 = vmatprep.subr.mxu0 0.0
    %3903 = vmatpush1.xpose.msra.mxu0 0.0
    %3904 = vmatprep.subr.mxu0 0.0
    %3905 = vmatpush1.xpose.msra.mxu0 0.0
    %3906 = vmatprep.subr.mxu0 0.0
    %3907 = vmatpush1.xpose.msra.mxu0 0.0
    %3908 = vmatprep.subr.mxu0 0.0
    %3909 = vmatpush1.xpose.msra.mxu0 0.0
    %3910 = vmatprep.subr.mxu0 0.0
    %3911 = vmatpush1.xpose.msra.mxu0 0.0
    %3912 = vmatprep.subr.mxu0 0.0
    %3913 = vmatpush1.xpose.msra.mxu0 0.0
    %3914 = vmatprep.subr.mxu0 0.0
    %3915 = vmatpush1.xpose.msra.mxu0 0.0
    %3916 = vmatprep.subr.mxu0 0.0
    %3917 = vmatpush1.xpose.msra.mxu0 0.0
    %3918 = vmatprep.subr.mxu0 0.0
    %3919 = vmatpush1.xpose.msra.mxu0 0.0
    %3920 = vmatprep.subr.mxu0 0.0
    %3921 = vmatpush1.xpose.msra.mxu0 0.0
    %3922 = vmatprep.subr.mxu0 0.0
    %3923 = vmatpush1.xpose.msra.mxu0 0.0
    %3924 = vmatprep.mubr.f32.mxu0 0.0
    %3925 = vmatmul.mubr.f32.gmra.mrb[0].mxu0 %v3852
    %v3926 = vpop.f32.mrb[0].mxu0
    %v3927 = vadd.f32 0.0, %v3926
    %v3928 = vpop.f32.mrb[0].mxu0
    %3929 = vmatprep.mubr.f32.mxu0 0.0
    %3930 = vmatmul.mubr.f32.gmra.mrb[0].mxu0 %v3854
    %v3931 = vpop.f32.mrb[0].mxu0
    %v3932 = vadd.f32 0.0, %v3931
    %v3933 = vpop.f32.mrb[0].mxu0
    %3934 = vdwg.mxu0
    %3935 = vrot.lane.b32.xlu0 %v2822, 104
    %v3936 = vpop.permute.xlu0 %3935
    %3937 = vrot.lane.b32.xlu0 %v2823, 104
    %v3938 = vpop.permute.xlu0 %3937
    %3939 = vrot.lane.b32.xlu0 %v2812, 72
    %v3940 = vpop.permute.xlu0 %3939
    %3941 = vrot.lane.b32.xlu0 %v2817, 72
    %v3942 = vpop.permute.xlu0 %3941
    %v3943 = vsel %vm554, %v3936, 0
    %v3945 = vsel %vm554, %v3938, 0
    %v3947 = vsel %vm554, %v3940, 0
    %v3949 = vsel %vm554, %v3942, 0
    %3951 = vmatprep.subr.mxu0 0.0
    %3952 = vmatpush1.xpose.msra.mxu0 %v3947
    %3953 = vmatprep.subr.mxu0 0.0
    %3954 = vmatpush1.xpose.msra.mxu0 %v3949
    %3955 = vmatprep.subr.mxu0 0.0
    %3956 = vmatpush1.xpose.msra.mxu0 0.0
    %3957 = vmatprep.subr.mxu0 0.0
    %3958 = vmatpush1.xpose.msra.mxu0 0.0
    %3959 = vmatprep.subr.mxu0 0.0
    %3960 = vmatpush1.xpose.msra.mxu0 0.0
    %3961 = vmatprep.subr.mxu0 0.0
    %3962 = vmatpush1.xpose.msra.mxu0 0.0
    %3963 = vmatprep.subr.mxu0 0.0
    %3964 = vmatpush1.xpose.msra.mxu0 0.0
    %3965 = vmatprep.subr.mxu0 0.0
    %3966 = vmatpush1.xpose.msra.mxu0 0.0
    %3967 = vmatprep.subr.mxu0 0.0
    %3968 = vmatpush1.xpose.msra.mxu0 0.0
    %3969 = vmatprep.subr.mxu0 0.0
    %3970 = vmatpush1.xpose.msra.mxu0 0.0
    %3971 = vmatprep.subr.mxu0 0.0
    %3972 = vmatpush1.xpose.msra.mxu0 0.0
    %3973 = vmatprep.subr.mxu0 0.0
    %3974 = vmatpush1.xpose.msra.mxu0 0.0
    %3975 = vmatprep.subr.mxu0 0.0
    %3976 = vmatpush1.xpose.msra.mxu0 0.0
    %3977 = vmatprep.subr.mxu0 0.0
    %3978 = vmatpush1.xpose.msra.mxu0 0.0
    %3979 = vmatprep.subr.mxu0 0.0
    %3980 = vmatpush1.xpose.msra.mxu0 0.0
    %3981 = vmatprep.subr.mxu0 0.0
    %3982 = vmatpush1.xpose.msra.mxu0 0.0
    %3983 = vmatprep.subr.mxu0 0.0
    %3984 = vmatpush1.xpose.msra.mxu0 0.0
    %3985 = vmatprep.subr.mxu0 0.0
    %3986 = vmatpush1.xpose.msra.mxu0 0.0
    %3987 = vmatprep.subr.mxu0 0.0
    %3988 = vmatpush1.xpose.msra.mxu0 0.0
    %3989 = vmatprep.subr.mxu0 0.0
    %3990 = vmatpush1.xpose.msra.mxu0 0.0
    %3991 = vmatprep.subr.mxu0 0.0
    %3992 = vmatpush1.xpose.msra.mxu0 0.0
    %3993 = vmatprep.subr.mxu0 0.0
    %3994 = vmatpush1.xpose.msra.mxu0 0.0
    %3995 = vmatprep.subr.mxu0 0.0
    %3996 = vmatpush1.xpose.msra.mxu0 0.0
    %3997 = vmatprep.subr.mxu0 0.0
    %3998 = vmatpush1.xpose.msra.mxu0 0.0
    %3999 = vmatprep.subr.mxu0 0.0
    %4000 = vmatpush1.xpose.msra.mxu0 0.0
    %4001 = vmatprep.subr.mxu0 0.0
    %4002 = vmatpush1.xpose.msra.mxu0 0.0
    %4003 = vmatprep.subr.mxu0 0.0
    %4004 = vmatpush1.xpose.msra.mxu0 0.0
    %4005 = vmatprep.subr.mxu0 0.0
    %4006 = vmatpush1.xpose.msra.mxu0 0.0
    %4007 = vmatprep.subr.mxu0 0.0
    %4008 = vmatpush1.xpose.msra.mxu0 0.0
    %4009 = vmatprep.subr.mxu0 0.0
    %4010 = vmatpush1.xpose.msra.mxu0 0.0
    %4011 = vmatprep.subr.mxu0 0.0
    %4012 = vmatpush1.xpose.msra.mxu0 0.0
    %4013 = vmatprep.subr.mxu0 0.0
    %4014 = vmatpush1.xpose.msra.mxu0 0.0
    %4015 = vmatprep.mubr.f32.mxu0 0.0
    %4016 = vmatmul.mubr.f32.gmra.mrb[0].mxu0 %v3943
    %v4017 = vpop.f32.mrb[0].mxu0
    %v4018 = vadd.f32 0.0, %v4017
    %v4019 = vpop.f32.mrb[0].mxu0
    %4020 = vmatprep.mubr.f32.mxu0 0.0
    %4021 = vmatmul.mubr.f32.gmra.mrb[0].mxu0 %v3945
    %v4022 = vpop.f32.mrb[0].mxu0
    %v4023 = vadd.f32 0.0, %v4022
    %v4024 = vpop.f32.mrb[0].mxu0
    %4025 = vdwg.mxu0
    %4028 = vrot.lane.b32.xlu0 %v3836, 16
    %v4029 = vpop.permute.xlu0 %4028
    %4030 = vrot.lane.b32.xlu0 %v3841, 16
    %v4031 = vpop.permute.xlu0 %4030
    %4036 = vrot.lane.b32.xlu0 %v3927, 32
    %v4037 = vpop.permute.xlu0 %4036
    %4038 = vrot.lane.b32.xlu0 %v3932, 32
    %v4039 = vpop.permute.xlu0 %4038
    %4044 = vrot.lane.b32.xlu0 %v4018, 48
    %v4045 = vpop.permute.xlu0 %4044
    %4046 = vrot.lane.b32.xlu0 %v4023, 48
    %v4047 = vpop.permute.xlu0 %4046
    %v4050 = vsel %vm937, %v3745, %v4029
    %v4051 = vsel %vm937, %v3750, %v4031
    %v4052 = vsel %vm446, %v4050, %v4037
    %v4053 = vsel %vm446, %v4051, %v4039
    %v4054 = vsel %vm942, %v4052, %v4045
    %v4055 = vsel %vm942, %v4053, %v4047
    %v4056 = vadd.f32 %v4054, %v427
    %v4057 = vadd.f32 %v4055, %v427
    %v4058 = vsel %vm947, %v4056, -inf
    %4059 = vmax.xlane.f32.xlu0 %v4058
    %v4060 = vpop.xlane.xlu0 %4059
    %v4061 = vsel %vm947, %v4057, -inf
    %4062 = vmax.xlane.f32.xlu0 %v4061
    %v4063 = vpop.xlane.xlu0 %4062
    %v4064 = vsub.f32 %v4056, %v4060
    %v4065 = vsub.f32 %v4057, %v4063
    %v4066 = vmul.f32 %v4064, 1.442695
    %v4067 = vpow.pop %v4066
    %v4068 = vmul.f32 %v4065, 1.442695
    %v4069 = vpow.pop %v4068
    %v4070 = vsel %vm937, %v4067, 0.0
    %4071 = vadd.xlane.f32.xlu0 %v4070
    %v4072 = vpop.xlane.xlu0 %4071
    %v4073 = vsel %vm937, %v4069, 0.0
    %4074 = vadd.xlane.f32.xlu0 %v4073
    %v4075 = vpop.xlane.xlu0 %4074
    %v4076 = vrcp.pop %v4072
    %v4077 = vrcp.pop %v4075
    %4078 = vrot.lane.b32.xlu0 %v2812, 64
    %v4079 = vpop.permute.xlu0 %4078
    %4080 = vrot.lane.b32.xlu0 %v2817, 64
    %v4081 = vpop.permute.xlu0 %4080
    %v4085 = vsel %vm937, %v4067, 0
    %v4088 = vsel %vm937, %v4069, 0
    %4090 = vmatprep.subr.mxu0 0.0
    %4091 = vmatpush1.msra.mxu0 %v4079
    %4092 = vmatprep.subr.mxu0 0.0
    %4093 = vmatpush1.msra.mxu0 %v4081
    %4094 = vmatprep.subr.mxu0 0.0
    %4095 = vmatpush1.msra.mxu0 0.0
    %4096 = vmatprep.subr.mxu0 0.0
    %4097 = vmatpush1.msra.mxu0 0.0
    %4098 = vmatprep.subr.mxu0 0.0
    %4099 = vmatpush1.msra.mxu0 0.0
    %4100 = vmatprep.subr.mxu0 0.0
    %4101 = vmatpush1.msra.mxu0 0.0
    %4102 = vmatprep.subr.mxu0 0.0
    %4103 = vmatpush1.msra.mxu0 0.0
    %4104 = vmatprep.subr.mxu0 0.0
    %4105 = vmatpush1.msra.mxu0 0.0
    %4106 = vmatprep.subr.mxu0 0.0
    %4107 = vmatpush1.msra.mxu0 0.0
    %4108 = vmatprep.subr.mxu0 0.0
    %4109 = vmatpush1.msra.mxu0 0.0
    %4110 = vmatprep.subr.mxu0 0.0
    %4111 = vmatpush1.msra.mxu0 0.0
    %4112 = vmatprep.subr.mxu0 0.0
    %4113 = vmatpush1.msra.mxu0 0.0
    %4114 = vmatprep.subr.mxu0 0.0
    %4115 = vmatpush1.msra.mxu0 0.0
    %4116 = vmatprep.subr.mxu0 0.0
    %4117 = vmatpush1.msra.mxu0 0.0
    %4118 = vmatprep.subr.mxu0 0.0
    %4119 = vmatpush1.msra.mxu0 0.0
    %4120 = vmatprep.subr.mxu0 0.0
    %4121 = vmatpush1.msra.mxu0 0.0
    %4122 = vmatprep.subr.mxu0 0.0
    %4123 = vmatpush1.msra.mxu0 0.0
    %4124 = vmatprep.subr.mxu0 0.0
    %4125 = vmatpush1.msra.mxu0 0.0
    %4126 = vmatprep.subr.mxu0 0.0
    %4127 = vmatpush1.msra.mxu0 0.0
    %4128 = vmatprep.subr.mxu0 0.0
    %4129 = vmatpush1.msra.mxu0 0.0
    %4130 = vmatprep.subr.mxu0 0.0
    %4131 = vmatpush1.msra.mxu0 0.0
    %4132 = vmatprep.subr.mxu0 0.0
    %4133 = vmatpush1.msra.mxu0 0.0
    %4134 = vmatprep.subr.mxu0 0.0
    %4135 = vmatpush1.msra.mxu0 0.0
    %4136 = vmatprep.subr.mxu0 0.0
    %4137 = vmatpush1.msra.mxu0 0.0
    %4138 = vmatprep.subr.mxu0 0.0
    %4139 = vmatpush1.msra.mxu0 0.0
    %4140 = vmatprep.subr.mxu0 0.0
    %4141 = vmatpush1.msra.mxu0 0.0
    %4142 = vmatprep.subr.mxu0 0.0
    %4143 = vmatpush1.msra.mxu0 0.0
    %4144 = vmatprep.subr.mxu0 0.0
    %4145 = vmatpush1.msra.mxu0 0.0
    %4146 = vmatprep.subr.mxu0 0.0
    %4147 = vmatpush1.msra.mxu0 0.0
    %4148 = vmatprep.subr.mxu0 0.0
    %4149 = vmatpush1.msra.mxu0 0.0
    %4150 = vmatprep.subr.mxu0 0.0
    %4151 = vmatpush1.msra.mxu0 0.0
    %4152 = vmatprep.subr.mxu0 0.0
    %4153 = vmatpush1.msra.mxu0 0.0
    %4154 = vmatprep.mubr.f32.mxu0 0.0
    %4155 = vmatmul.mubr.f32.gmra.mrb[0].mxu0 %v4085
    %v4156 = vpop.f32.mrb[0].mxu0
    %v4157 = vadd.f32 0.0, %v4156
    %v4158 = vpop.f32.mrb[0].mxu0
    %4159 = vmatprep.mubr.f32.mxu0 0.0
    %4160 = vmatmul.mubr.f32.gmra.mrb[0].mxu0 %v4088
    %v4161 = vpop.f32.mrb[0].mxu0
    %v4162 = vadd.f32 0.0, %v4161
    %v4163 = vpop.f32.mrb[0].mxu0
    %4164 = vdwg.mxu0
    %v4165 = vmul.f32 %v4157, %v4076
    %v4166 = vmul.f32 %v4162, %v4077
    %4167 = vrot.lane.b32.xlu0 %v4067, 112
    %v4168 = vpop.permute.xlu0 %4167
    %4169 = vrot.lane.b32.xlu0 %v4069, 112
    %v4170 = vpop.permute.xlu0 %4169
    %v4173 = vsel %vm937, %v4168, 0.0
    %4174 = vadd.xlane.f32.xlu0 %v4173
    %v4175 = vpop.xlane.xlu0 %4174
    %v4176 = vsel %vm937, %v4170, 0.0
    %4177 = vadd.xlane.f32.xlu0 %v4176
    %v4178 = vpop.xlane.xlu0 %4177
    %v4179 = vrcp.pop %v4175
    %v4180 = vrcp.pop %v4178
    %4181 = vrot.lane.b32.xlu0 %v2812, 56
    %v4182 = vpop.permute.xlu0 %4181
    %4183 = vrot.lane.b32.xlu0 %v2817, 56
    %v4184 = vpop.permute.xlu0 %4183
    %v4187 = vsel %vm937, %v4168, 0
    %v4189 = vsel %vm937, %v4170, 0
    %4191 = vmatprep.subr.mxu0 0.0
    %4192 = vmatpush1.msra.mxu0 %v4182
    %4193 = vmatprep.subr.mxu0 0.0
    %4194 = vmatpush1.msra.mxu0 %v4184
    %4195 = vmatprep.subr.mxu0 0.0
    %4196 = vmatpush1.msra.mxu0 0.0
    %4197 = vmatprep.subr.mxu0 0.0
    %4198 = vmatpush1.msra.mxu0 0.0
    %4199 = vmatprep.subr.mxu0 0.0
    %4200 = vmatpush1.msra.mxu0 0.0
    %4201 = vmatprep.subr.mxu0 0.0
    %4202 = vmatpush1.msra.mxu0 0.0
    %4203 = vmatprep.subr.mxu0 0.0
    %4204 = vmatpush1.msra.mxu0 0.0
    %4205 = vmatprep.subr.mxu0 0.0
    %4206 = vmatpush1.msra.mxu0 0.0
    %4207 = vmatprep.subr.mxu0 0.0
    %4208 = vmatpush1.msra.mxu0 0.0
    %4209 = vmatprep.subr.mxu0 0.0
    %4210 = vmatpush1.msra.mxu0 0.0
    %4211 = vmatprep.subr.mxu0 0.0
    %4212 = vmatpush1.msra.mxu0 0.0
    %4213 = vmatprep.subr.mxu0 0.0
    %4214 = vmatpush1.msra.mxu0 0.0
    %4215 = vmatprep.subr.mxu0 0.0
    %4216 = vmatpush1.msra.mxu0 0.0
    %4217 = vmatprep.subr.mxu0 0.0
    %4218 = vmatpush1.msra.mxu0 0.0
    %4219 = vmatprep.subr.mxu0 0.0
    %4220 = vmatpush1.msra.mxu0 0.0
    %4221 = vmatprep.subr.mxu0 0.0
    %4222 = vmatpush1.msra.mxu0 0.0
    %4223 = vmatprep.subr.mxu0 0.0
    %4224 = vmatpush1.msra.mxu0 0.0
    %4225 = vmatprep.subr.mxu0 0.0
    %4226 = vmatpush1.msra.mxu0 0.0
    %4227 = vmatprep.subr.mxu0 0.0
    %4228 = vmatpush1.msra.mxu0 0.0
    %4229 = vmatprep.subr.mxu0 0.0
    %4230 = vmatpush1.msra.mxu0 0.0
    %4231 = vmatprep.subr.mxu0 0.0
    %4232 = vmatpush1.msra.mxu0 0.0
    %4233 = vmatprep.subr.mxu0 0.0
    %4234 = vmatpush1.msra.mxu0 0.0
    %4235 = vmatprep.subr.mxu0 0.0
    %4236 = vmatpush1.msra.mxu0 0.0
    %4237 = vmatprep.subr.mxu0 0.0
    %4238 = vmatpush1.msra.mxu0 0.0
    %4239 = vmatprep.subr.mxu0 0.0
    %4240 = vmatpush1.msra.mxu0 0.0
    %4241 = vmatprep.subr.mxu0 0.0
    %4242 = vmatpush1.msra.mxu0 0.0
    %4243 = vmatprep.subr.mxu0 0.0
    %4244 = vmatpush1.msra.mxu0 0.0
    %4245 = vmatprep.subr.mxu0 0.0
    %4246 = vmatpush1.msra.mxu0 0.0
    %4247 = vmatprep.subr.mxu0 0.0
    %4248 = vmatpush1.msra.mxu0 0.0
    %4249 = vmatprep.subr.mxu0 0.0
    %4250 = vmatpush1.msra.mxu0 0.0
    %4251 = vmatprep.subr.mxu0 0.0
    %4252 = vmatpush1.msra.mxu0 0.0
    %4253 = vmatprep.subr.mxu0 0.0
    %4254 = vmatpush1.msra.mxu0 0.0
    %4255 = vmatprep.mubr.f32.mxu0 0.0
    %4256 = vmatmul.mubr.f32.gmra.mrb[0].mxu0 %v4187
    %v4257 = vpop.f32.mrb[0].mxu0
    %v4258 = vadd.f32 0.0, %v4257
    %v4259 = vpop.f32.mrb[0].mxu0
    %4260 = vmatprep.mubr.f32.mxu0 0.0
    %4261 = vmatmul.mubr.f32.gmra.mrb[0].mxu0 %v4189
    %v4262 = vpop.f32.mrb[0].mxu0
    %v4263 = vadd.f32 0.0, %v4262
    %v4264 = vpop.f32.mrb[0].mxu0
    %4265 = vdwg.mxu0
    %v4266 = vmul.f32 %v4258, %v4179
    %v4267 = vmul.f32 %v4263, %v4180
    %4268 = vrot.lane.b32.xlu0 %v4067, 96
    %v4269 = vpop.permute.xlu0 %4268
    %4270 = vrot.lane.b32.xlu0 %v4069, 96
    %v4271 = vpop.permute.xlu0 %4270
    %v4274 = vsel %vm937, %v4269, 0.0
    %4275 = vadd.xlane.f32.xlu0 %v4274
    %v4276 = vpop.xlane.xlu0 %4275
    %v4277 = vsel %vm937, %v4271, 0.0
    %4278 = vadd.xlane.f32.xlu0 %v4277
    %v4279 = vpop.xlane.xlu0 %4278
    %v4280 = vrcp.pop %v4276
    %v4281 = vrcp.pop %v4279
    %4282 = vrot.lane.b32.xlu0 %v2812, 48
    %v4283 = vpop.permute.xlu0 %4282
    %4284 = vrot.lane.b32.xlu0 %v2817, 48
    %v4285 = vpop.permute.xlu0 %4284
    %v4288 = vsel %vm937, %v4269, 0
    %v4290 = vsel %vm937, %v4271, 0
    %4292 = vmatprep.subr.mxu0 0.0
    %4293 = vmatpush1.msra.mxu0 %v4283
    %4294 = vmatprep.subr.mxu0 0.0
    %4295 = vmatpush1.msra.mxu0 %v4285
    %4296 = vmatprep.subr.mxu0 0.0
    %4297 = vmatpush1.msra.mxu0 0.0
    %4298 = vmatprep.subr.mxu0 0.0
    %4299 = vmatpush1.msra.mxu0 0.0
    %4300 = vmatprep.subr.mxu0 0.0
    %4301 = vmatpush1.msra.mxu0 0.0
    %4302 = vmatprep.subr.mxu0 0.0
    %4303 = vmatpush1.msra.mxu0 0.0
    %4304 = vmatprep.subr.mxu0 0.0
    %4305 = vmatpush1.msra.mxu0 0.0
    %4306 = vmatprep.subr.mxu0 0.0
    %4307 = vmatpush1.msra.mxu0 0.0
    %4308 = vmatprep.subr.mxu0 0.0
    %4309 = vmatpush1.msra.mxu0 0.0
    %4310 = vmatprep.subr.mxu0 0.0
    %4311 = vmatpush1.msra.mxu0 0.0
    %4312 = vmatprep.subr.mxu0 0.0
    %4313 = vmatpush1.msra.mxu0 0.0
    %4314 = vmatprep.subr.mxu0 0.0
    %4315 = vmatpush1.msra.mxu0 0.0
    %4316 = vmatprep.subr.mxu0 0.0
    %4317 = vmatpush1.msra.mxu0 0.0
    %4318 = vmatprep.subr.mxu0 0.0
    %4319 = vmatpush1.msra.mxu0 0.0
    %4320 = vmatprep.subr.mxu0 0.0
    %4321 = vmatpush1.msra.mxu0 0.0
    %4322 = vmatprep.subr.mxu0 0.0
    %4323 = vmatpush1.msra.mxu0 0.0
    %4324 = vmatprep.subr.mxu0 0.0
    %4325 = vmatpush1.msra.mxu0 0.0
    %4326 = vmatprep.subr.mxu0 0.0
    %4327 = vmatpush1.msra.mxu0 0.0
    %4328 = vmatprep.subr.mxu0 0.0
    %4329 = vmatpush1.msra.mxu0 0.0
    %4330 = vmatprep.subr.mxu0 0.0
    %4331 = vmatpush1.msra.mxu0 0.0
    %4332 = vmatprep.subr.mxu0 0.0
    %4333 = vmatpush1.msra.mxu0 0.0
    %4334 = vmatprep.subr.mxu0 0.0
    %4335 = vmatpush1.msra.mxu0 0.0
    %4336 = vmatprep.subr.mxu0 0.0
    %4337 = vmatpush1.msra.mxu0 0.0
    %4338 = vmatprep.subr.mxu0 0.0
    %4339 = vmatpush1.msra.mxu0 0.0
    %4340 = vmatprep.subr.mxu0 0.0
    %4341 = vmatpush1.msra.mxu0 0.0
    %4342 = vmatprep.subr.mxu0 0.0
    %4343 = vmatpush1.msra.mxu0 0.0
    %4344 = vmatprep.subr.mxu0 0.0
    %4345 = vmatpush1.msra.mxu0 0.0
    %4346 = vmatprep.subr.mxu0 0.0
    %4347 = vmatpush1.msra.mxu0 0.0
    %4348 = vmatprep.subr.mxu0 0.0
    %4349 = vmatpush1.msra.mxu0 0.0
    %4350 = vmatprep.subr.mxu0 0.0
    %4351 = vmatpush1.msra.mxu0 0.0
    %4352 = vmatprep.subr.mxu0 0.0
    %4353 = vmatpush1.msra.mxu0 0.0
    %4354 = vmatprep.subr.mxu0 0.0
    %4355 = vmatpush1.msra.mxu0 0.0
    %4356 = vmatprep.mubr.f32.mxu0 0.0
    %4357 = vmatmul.mubr.f32.gmra.mrb[0].mxu0 %v4288
    %v4358 = vpop.f32.mrb[0].mxu0
    %v4359 = vadd.f32 0.0, %v4358
    %v4360 = vpop.f32.mrb[0].mxu0
    %4361 = vmatprep.mubr.f32.mxu0 0.0
    %4362 = vmatmul.mubr.f32.gmra.mrb[0].mxu0 %v4290
    %v4363 = vpop.f32.mrb[0].mxu0
    %v4364 = vadd.f32 0.0, %v4363
    %v4365 = vpop.f32.mrb[0].mxu0
    %4366 = vdwg.mxu0
    %v4367 = vmul.f32 %v4359, %v4280
    %v4368 = vmul.f32 %v4364, %v4281
    %4369 = vrot.lane.b32.xlu0 %v4067, 80
    %v4370 = vpop.permute.xlu0 %4369
    %4371 = vrot.lane.b32.xlu0 %v4069, 80
    %v4372 = vpop.permute.xlu0 %4371
    %v4375 = vsel %vm937, %v4370, 0.0
    %4376 = vadd.xlane.f32.xlu0 %v4375
    %v4377 = vpop.xlane.xlu0 %4376
    %v4378 = vsel %vm937, %v4372, 0.0
    %4379 = vadd.xlane.f32.xlu0 %v4378
    %v4380 = vpop.xlane.xlu0 %4379
    %v4381 = vrcp.pop %v4377
    %v4382 = vrcp.pop %v4380
    %4383 = vrot.lane.b32.xlu0 %v2812, 40
    %v4384 = vpop.permute.xlu0 %4383
    %4385 = vrot.lane.b32.xlu0 %v2817, 40
    %v4386 = vpop.permute.xlu0 %4385
    %v4389 = vsel %vm937, %v4370, 0
    %v4391 = vsel %vm937, %v4372, 0
    %4393 = vmatprep.subr.mxu0 0.0
    %4394 = vmatpush1.msra.mxu0 %v4384
    %4395 = vmatprep.subr.mxu0 0.0
    %4396 = vmatpush1.msra.mxu0 %v4386
    %4397 = vmatprep.subr.mxu0 0.0
    %4398 = vmatpush1.msra.mxu0 0.0
    %4399 = vmatprep.subr.mxu0 0.0
    %4400 = vmatpush1.msra.mxu0 0.0
    %4401 = vmatprep.subr.mxu0 0.0
    %4402 = vmatpush1.msra.mxu0 0.0
    %4403 = vmatprep.subr.mxu0 0.0
    %4404 = vmatpush1.msra.mxu0 0.0
    %4405 = vmatprep.subr.mxu0 0.0
    %4406 = vmatpush1.msra.mxu0 0.0
    %4407 = vmatprep.subr.mxu0 0.0
    %4408 = vmatpush1.msra.mxu0 0.0
    %4409 = vmatprep.subr.mxu0 0.0
    %4410 = vmatpush1.msra.mxu0 0.0
    %4411 = vmatprep.subr.mxu0 0.0
    %4412 = vmatpush1.msra.mxu0 0.0
    %4413 = vmatprep.subr.mxu0 0.0
    %4414 = vmatpush1.msra.mxu0 0.0
    %4415 = vmatprep.subr.mxu0 0.0
    %4416 = vmatpush1.msra.mxu0 0.0
    %4417 = vmatprep.subr.mxu0 0.0
    %4418 = vmatpush1.msra.mxu0 0.0
    %4419 = vmatprep.subr.mxu0 0.0
    %4420 = vmatpush1.msra.mxu0 0.0
    %4421 = vmatprep.subr.mxu0 0.0
    %4422 = vmatpush1.msra.mxu0 0.0
    %4423 = vmatprep.subr.mxu0 0.0
    %4424 = vmatpush1.msra.mxu0 0.0
    %4425 = vmatprep.subr.mxu0 0.0
    %4426 = vmatpush1.msra.mxu0 0.0
    %4427 = vmatprep.subr.mxu0 0.0
    %4428 = vmatpush1.msra.mxu0 0.0
    %4429 = vmatprep.subr.mxu0 0.0
    %4430 = vmatpush1.msra.mxu0 0.0
    %4431 = vmatprep.subr.mxu0 0.0
    %4432 = vmatpush1.msra.mxu0 0.0
    %4433 = vmatprep.subr.mxu0 0.0
    %4434 = vmatpush1.msra.mxu0 0.0
    %4435 = vmatprep.subr.mxu0 0.0
    %4436 = vmatpush1.msra.mxu0 0.0
    %4437 = vmatprep.subr.mxu0 0.0
    %4438 = vmatpush1.msra.mxu0 0.0
    %4439 = vmatprep.subr.mxu0 0.0
    %4440 = vmatpush1.msra.mxu0 0.0
    %4441 = vmatprep.subr.mxu0 0.0
    %4442 = vmatpush1.msra.mxu0 0.0
    %4443 = vmatprep.subr.mxu0 0.0
    %4444 = vmatpush1.msra.mxu0 0.0
    %4445 = vmatprep.subr.mxu0 0.0
    %4446 = vmatpush1.msra.mxu0 0.0
    %4447 = vmatprep.subr.mxu0 0.0
    %4448 = vmatpush1.msra.mxu0 0.0
    %4449 = vmatprep.subr.mxu0 0.0
    %4450 = vmatpush1.msra.mxu0 0.0
    %4451 = vmatprep.subr.mxu0 0.0
    %4452 = vmatpush1.msra.mxu0 0.0
    %4453 = vmatprep.subr.mxu0 0.0
    %4454 = vmatpush1.msra.mxu0 0.0
    %4455 = vmatprep.subr.mxu0 0.0
    %4456 = vmatpush1.msra.mxu0 0.0
    %4457 = vmatprep.mubr.f32.mxu0 0.0
    %4458 = vmatmul.mubr.f32.gmra.mrb[0].mxu0 %v4389
    %v4459 = vpop.f32.mrb[0].mxu0
    %v4460 = vadd.f32 0.0, %v4459
    %v4461 = vpop.f32.mrb[0].mxu0
    %4462 = vmatprep.mubr.f32.mxu0 0.0
    %4463 = vmatmul.mubr.f32.gmra.mrb[0].mxu0 %v4391
    %v4464 = vpop.f32.mrb[0].mxu0
    %v4465 = vadd.f32 0.0, %v4464
    %v4466 = vpop.f32.mrb[0].mxu0
    %4467 = vdwg.mxu0
    %v4468 = vmul.f32 %v4460, %v4381
    %v4469 = vmul.f32 %v4465, %v4382
    %4472 = vrot.lane.b32.xlu0 %v4266, 8
    %v4473 = vpop.permute.xlu0 %4472
    %4474 = vrot.lane.b32.xlu0 %v4267, 8
    %v4475 = vpop.permute.xlu0 %4474
    %4480 = vrot.lane.b32.xlu0 %v4367, 16
    %v4481 = vpop.permute.xlu0 %4480
    %4482 = vrot.lane.b32.xlu0 %v4368, 16
    %v4483 = vpop.permute.xlu0 %4482
    %4488 = vrot.lane.b32.xlu0 %v4468, 24
    %v4489 = vpop.permute.xlu0 %4488
    %4490 = vrot.lane.b32.xlu0 %v4469, 24
    %v4491 = vpop.permute.xlu0 %4490
    %v4494 = vsel %vm554, %v4165, %v4473
    %v4495 = vsel %vm554, %v4166, %v4475
    %v4496 = vsel %vm937, %v4494, %v4481
    %v4497 = vsel %vm937, %v4495, %v4483
    %v4498 = vsel %vm1388, %v4496, %v4489
    %v4499 = vsel %vm1388, %v4497, %v4491
    %v4501 = vlaneseq
    %v4502 = vshrl.u32 %v4501, 7
    %v4503 = vsub.s32 0, %v4502
    %v4504 = vrot.slane %v2716, %v4503
    %v4507 = vsel %vm446, %v3660, 0
    %v4510 = vsel %vm446, %v3661, 0
    %v4513 = vsel %vm446, %v4498, 0
    %v4516 = vsel %vm446, %v4499, 0
    %4518 = vmatprep.subr.mxu0 0.0
    %4519 = vmatpush1.msra.mxu0 %v2711
    %4520 = vmatprep.subr.mxu0 0.0
    %4521 = vmatpush1.msra.mxu0 %v2712
    %4522 = vmatprep.subr.mxu0 0.0
    %4523 = vmatpush1.msra.mxu0 %v2713
    %4524 = vmatprep.subr.mxu0 0.0
    %4525 = vmatpush1.msra.mxu0 %v2714
    %4526 = vmatprep.subr.mxu0 0.0
    %4527 = vmatpush1.msra.mxu0 0.0
    %4528 = vmatprep.subr.mxu0 0.0
    %4529 = vmatpush1.msra.mxu0 0.0
    %4530 = vmatprep.subr.mxu0 0.0
    %4531 = vmatpush1.msra.mxu0 0.0
    %4532 = vmatprep.subr.mxu0 0.0
    %4533 = vmatpush1.msra.mxu0 0.0
    %4534 = vmatprep.subr.mxu0 0.0
    %4535 = vmatpush1.msra.mxu0 0.0
    %4536 = vmatprep.subr.mxu0 0.0
    %4537 = vmatpush1.msra.mxu0 0.0
    %4538 = vmatprep.subr.mxu0 0.0
    %4539 = vmatpush1.msra.mxu0 0.0
    %4540 = vmatprep.subr.mxu0 0.0
    %4541 = vmatpush1.msra.mxu0 0.0
    %4542 = vmatprep.subr.mxu0 0.0
    %4543 = vmatpush1.msra.mxu0 0.0
    %4544 = vmatprep.subr.mxu0 0.0
    %4545 = vmatpush1.msra.mxu0 0.0
    %4546 = vmatprep.subr.mxu0 0.0
    %4547 = vmatpush1.msra.mxu0 0.0
    %4548 = vmatprep.subr.mxu0 0.0
    %4549 = vmatpush1.msra.mxu0 0.0
    %4550 = vmatprep.subr.mxu0 0.0
    %4551 = vmatpush1.msra.mxu0 0.0
    %4552 = vmatprep.subr.mxu0 0.0
    %4553 = vmatpush1.msra.mxu0 0.0
    %4554 = vmatprep.subr.mxu0 0.0
    %4555 = vmatpush1.msra.mxu0 0.0
    %4556 = vmatprep.subr.mxu0 0.0
    %4557 = vmatpush1.msra.mxu0 0.0
    %4558 = vmatprep.subr.mxu0 0.0
    %4559 = vmatpush1.msra.mxu0 0.0
    %4560 = vmatprep.subr.mxu0 0.0
    %4561 = vmatpush1.msra.mxu0 0.0
    %4562 = vmatprep.subr.mxu0 0.0
    %4563 = vmatpush1.msra.mxu0 0.0
    %4564 = vmatprep.subr.mxu0 0.0
    %4565 = vmatpush1.msra.mxu0 0.0
    %4566 = vmatprep.subr.mxu0 0.0
    %4567 = vmatpush1.msra.mxu0 0.0
    %4568 = vmatprep.subr.mxu0 0.0
    %4569 = vmatpush1.msra.mxu0 0.0
    %4570 = vmatprep.subr.mxu0 0.0
    %4571 = vmatpush1.msra.mxu0 0.0
    %4572 = vmatprep.subr.mxu0 0.0
    %4573 = vmatpush1.msra.mxu0 0.0
    %4574 = vmatprep.subr.mxu0 0.0
    %4575 = vmatpush1.msra.mxu0 0.0
    %4576 = vmatprep.subr.mxu0 0.0
    %4577 = vmatpush1.msra.mxu0 0.0
    %4578 = vmatprep.subr.mxu0 0.0
    %4579 = vmatpush1.msra.mxu0 0.0
    %4580 = vmatprep.subr.mxu0 0.0
    %4581 = vmatpush1.msra.mxu0 0.0
    %4582 = vmatprep.mubr.f32.mxu0 0.0
    %4583 = vmatmul.mubr.f32.gmra.mrb[0].mxu0 %v4507
    %v4584 = vpop.f32.mrb[0].mxu0
    %v4585 = vadd.f32 %v4504, %v4584
    %v4586 = vpop.f32.mrb[0].mxu0
    %4587 = vmatprep.mubr.f32.mxu0 0.0
    %4588 = vmatmul.mubr.f32.gmra.mrb[0].mxu0 %v4510
    %v4589 = vpop.f32.mrb[0].mxu0
    %v4590 = vadd.f32 %v4504, %v4589
    %v4591 = vpop.f32.mrb[0].mxu0
    %4592 = vmatprep.mubr.f32.mxu0 0.0
    %4593 = vmatmul.mubr.f32.gmra.mrb[0].mxu0 %v4513
    %v4594 = vpop.f32.mrb[0].mxu0
    %v4595 = vadd.f32 %v4504, %v4594
    %v4596 = vpop.f32.mrb[0].mxu0
    %4597 = vmatprep.mubr.f32.mxu0 0.0
    %4598 = vmatmul.mubr.f32.gmra.mrb[0].mxu0 %v4516
    %v4599 = vpop.f32.mrb[0].mxu0
    %v4600 = vadd.f32 %v4504, %v4599
    %v4601 = vpop.f32.mrb[0].mxu0
    %4602 = vdwg.mxu0
    %v4603 = vadd.f32 %v2697, %v4585
    %v4604 = vadd.f32 %v2698, %v4590
    %v4605 = vadd.f32 %v2699, %v4595
    %v4606 = vadd.f32 %v2700, %v4600
    %v4607 = vsel %vm446, %v4603, 0.0
    %4608 = vadd.xlane.f32.xlu0 %v4607
    %v4609 = vpop.xlane.xlu0 %4608
    %v4610 = vsel %vm446, %v4604, 0.0
    %4611 = vadd.xlane.f32.xlu0 %v4610
    %v4612 = vpop.xlane.xlu0 %4611
    %v4613 = vsel %vm446, %v4605, 0.0
    %4614 = vadd.xlane.f32.xlu0 %v4613
    %v4615 = vpop.xlane.xlu0 %4614
    %v4616 = vsel %vm446, %v4606, 0.0
    %4617 = vadd.xlane.f32.xlu0 %v4616
    %v4618 = vpop.xlane.xlu0 %4617
    %v4619 = vmul.f32 %v4609, %v2348
    %v4620 = vmul.f32 %v4612, %v2348
    %v4621 = vmul.f32 %v4615, %v2348
    %v4622 = vmul.f32 %v4618, %v2348
    %v4623 = vsub.f32 %v4603, %v4619
    %v4624 = vsub.f32 %v4604, %v4620
    %v4625 = vsub.f32 %v4605, %v4621
    %v4626 = vsub.f32 %v4606, %v4622
    %v4627 = vmul.f32 %v4623, %v4623
    %v4628 = vmul.f32 %v4624, %v4624
    %v4629 = vmul.f32 %v4625, %v4625
    %v4630 = vmul.f32 %v4626, %v4626
    %v4631 = vsel %vm446, %v4627, 0.0
    %4632 = vadd.xlane.f32.xlu0 %v4631
    %v4633 = vpop.xlane.xlu0 %4632
    %v4634 = vsel %vm446, %v4628, 0.0
    %4635 = vadd.xlane.f32.xlu0 %v4634
    %v4636 = vpop.xlane.xlu0 %4635
    %v4637 = vsel %vm446, %v4629, 0.0
    %4638 = vadd.xlane.f32.xlu0 %v4637
    %v4639 = vpop.xlane.xlu0 %4638
    %v4640 = vsel %vm446, %v4630, 0.0
    %4641 = vadd.xlane.f32.xlu0 %v4640
    %v4642 = vpop.xlane.xlu0 %4641
    %v4643 = vmul.f32 %v4633, %v2348
    %v4644 = vmul.f32 %v4636, %v2348
    %v4645 = vmul.f32 %v4639, %v2348
    %v4646 = vmul.f32 %v4642, %v2348
    %v4647 = vadd.f32 %v4643, 1e-05
    %v4648 = vadd.f32 %v4644, 1e-05
    %v4649 = vadd.f32 %v4645, 1e-05
    %v4650 = vadd.f32 %v4646, 1e-05
    %v4651 = vrsqrt.pop %v4647
    %v4652 = vrsqrt.pop %v4648
    %v4653 = vrsqrt.pop %v4649
    %v4654 = vrsqrt.pop %v4650
    %v4655 = vmul.f32 %v4623, %v4651
    %v4656 = vmul.f32 %v4624, %v4652
    %v4657 = vmul.f32 %v4625, %v4653
    %v4658 = vmul.f32 %v4626, %v4654
    %v4659 = vlaneseq
    %v4660 = vshrl.u32 %v4659, 7
    %v4661 = vsub.s32 0, %v4660
    %v4662 = vrot.slane %v2702, %v4661
    %v4663 = vmul.f32 %v4655, %v4662
    %v4664 = vmul.f32 %v4656, %v4662
    %v4665 = vmul.f32 %v4657, %v4662
    %v4666 = vmul.f32 %v4658, %v4662
    %v4667 = vlaneseq
    %v4668 = vshrl.u32 %v4667, 7
    %v4669 = vsub.s32 1, %v4668
    %v4670 = vrot.slane %v2702, %v4669
    %v4671 = vadd.f32 %v4663, %v4670
    %v4672 = vadd.f32 %v4664, %v4670
    %v4673 = vadd.f32 %v4665, %v4670
    %v4674 = vadd.f32 %v4666, %v4670
    %s4675 = scalar_lea.vmem %s10, 32
    %v4676 = vld [vmem:[%s4675] sm:$0xff]
    %v4677 = vld [vmem:[%s4675 + $0x8] sm:$0xff]
    %v4678 = vld [vmem:[%s4675 + $0x10] sm:$0xff]
    %v4679 = vld [vmem:[%s4675 + $0x18] sm:$0xff]
    %s4680 = scalar_lea.vmem [#allocation13], 1
    %v4681 = vld [vmem:[%s4680] sm:$0x1]
    %s4682 = scalar_lea.vmem %s12, 64
    %v4683 = vld [vmem:[%s4682] sm:$0xff]
    %v4684 = vld [vmem:[%s4682 + $0x8] sm:$0xff]
    %v4685 = vld [vmem:[%s4682 + $0x10] sm:$0xff]
    %v4686 = vld [vmem:[%s4682 + $0x18] sm:$0xff]
    %v4687 = vld [vmem:[%s4682 + $0x20] sm:$0xff]
    %v4688 = vld [vmem:[%s4682 + $0x28] sm:$0xff]
    %v4689 = vld [vmem:[%s4682 + $0x30] sm:$0xff]
    %v4690 = vld [vmem:[%s4682 + $0x38] sm:$0xff]
    %s4691 = scalar_lea.vmem [#allocation14], 1
    %v4692 = vld [vmem:[%s4691] sm:$0x1]
    %v4694 = vlaneseq
    %v4695 = vshrl.u32 %v4694, 7
    %v4696 = vsub.s32 0, %v4695
    %v4697 = vrot.slane %v4681, %v4696
    %v4700 = vsel %vm446, %v4671, 0
    %v4703 = vsel %vm446, %v4672, 0
    %v4706 = vsel %vm446, %v4673, 0
    %v4709 = vsel %vm446, %v4674, 0
    %4711 = vmatprep.subr.mxu0 0.0
    %4712 = vmatpush1.msra.mxu0 %v4676
    %4713 = vmatprep.subr.mxu0 0.0
    %4714 = vmatpush1.msra.mxu0 %v4677
    %4715 = vmatprep.subr.mxu0 0.0
    %4716 = vmatpush1.msra.mxu0 %v4678
    %4717 = vmatprep.subr.mxu0 0.0
    %4718 = vmatpush1.msra.mxu0 %v4679
    %4719 = vmatprep.subr.mxu0 0.0
    %4720 = vmatpush1.msra.mxu0 0.0
    %4721 = vmatprep.subr.mxu0 0.0
    %4722 = vmatpush1.msra.mxu0 0.0
    %4723 = vmatprep.subr.mxu0 0.0
    %4724 = vmatpush1.msra.mxu0 0.0
    %4725 = vmatprep.subr.mxu0 0.0
    %4726 = vmatpush1.msra.mxu0 0.0
    %4727 = vmatprep.subr.mxu0 0.0
    %4728 = vmatpush1.msra.mxu0 0.0
    %4729 = vmatprep.subr.mxu0 0.0
    %4730 = vmatpush1.msra.mxu0 0.0
    %4731 = vmatprep.subr.mxu0 0.0
    %4732 = vmatpush1.msra.mxu0 0.0
    %4733 = vmatprep.subr.mxu0 0.0
    %4734 = vmatpush1.msra.mxu0 0.0
    %4735 = vmatprep.subr.mxu0 0.0
    %4736 = vmatpush1.msra.mxu0 0.0
    %4737 = vmatprep.subr.mxu0 0.0
    %4738 = vmatpush1.msra.mxu0 0.0
    %4739 = vmatprep.subr.mxu0 0.0
    %4740 = vmatpush1.msra.mxu0 0.0
    %4741 = vmatprep.subr.mxu0 0.0
    %4742 = vmatpush1.msra.mxu0 0.0
    %4743 = vmatprep.subr.mxu0 0.0
    %4744 = vmatpush1.msra.mxu0 0.0
    %4745 = vmatprep.subr.mxu0 0.0
    %4746 = vmatpush1.msra.mxu0 0.0
    %4747 = vmatprep.subr.mxu0 0.0
    %4748 = vmatpush1.msra.mxu0 0.0
    %4749 = vmatprep.subr.mxu0 0.0
    %4750 = vmatpush1.msra.mxu0 0.0
    %4751 = vmatprep.subr.mxu0 0.0
    %4752 = vmatpush1.msra.mxu0 0.0
    %4753 = vmatprep.subr.mxu0 0.0
    %4754 = vmatpush1.msra.mxu0 0.0
    %4755 = vmatprep.subr.mxu0 0.0
    %4756 = vmatpush1.msra.mxu0 0.0
    %4757 = vmatprep.subr.mxu0 0.0
    %4758 = vmatpush1.msra.mxu0 0.0
    %4759 = vmatprep.subr.mxu0 0.0
    %4760 = vmatpush1.msra.mxu0 0.0
    %4761 = vmatprep.subr.mxu0 0.0
    %4762 = vmatpush1.msra.mxu0 0.0
    %4763 = vmatprep.subr.mxu0 0.0
    %4764 = vmatpush1.msra.mxu0 0.0
    %4765 = vmatprep.subr.mxu0 0.0
    %4766 = vmatpush1.msra.mxu0 0.0
    %4767 = vmatprep.subr.mxu0 0.0
    %4768 = vmatpush1.msra.mxu0 0.0
    %4769 = vmatprep.subr.mxu0 0.0
    %4770 = vmatpush1.msra.mxu0 0.0
    %4771 = vmatprep.subr.mxu0 0.0
    %4772 = vmatpush1.msra.mxu0 0.0
    %4773 = vmatprep.subr.mxu0 0.0
    %4774 = vmatpush1.msra.mxu0 0.0
    %4775 = vmatprep.mubr.f32.mxu0 0.0
    %4776 = vmatmul.mubr.f32.gmra.mrb[0].mxu0 %v4700
    %v4777 = vpop.f32.mrb[0].mxu0
    %v4778 = vadd.f32 %v4697, %v4777
    %v4779 = vpop.f32.mrb[0].mxu0
    %4780 = vmatprep.mubr.f32.mxu0 0.0
    %4781 = vmatmul.mubr.f32.gmra.mrb[0].mxu0 %v4703
    %v4782 = vpop.f32.mrb[0].mxu0
    %v4783 = vadd.f32 %v4697, %v4782
    %v4784 = vpop.f32.mrb[0].mxu0
    %4785 = vmatprep.mubr.f32.mxu0 0.0
    %4786 = vmatmul.mubr.f32.gmra.mrb[0].mxu0 %v4706
    %v4787 = vpop.f32.mrb[0].mxu0
    %v4788 = vadd.f32 %v4697, %v4787
    %v4789 = vpop.f32.mrb[0].mxu0
    %4790 = vmatprep.mubr.f32.mxu0 0.0
    %4791 = vmatmul.mubr.f32.gmra.mrb[0].mxu0 %v4709
    %v4792 = vpop.f32.mrb[0].mxu0
    %v4793 = vadd.f32 %v4697, %v4792
    %v4794 = vpop.f32.mrb[0].mxu0
    %4795 = vdwg.mxu0
    %v4796 = vmax.f32 %v4778, 0.0
    %v4797 = vmax.f32 %v4783, 0.0
    %v4798 = vmax.f32 %v4788, 0.0
    %v4799 = vmax.f32 %v4793, 0.0
    %v4801 = vlaneseq
    %v4802 = vshrl.u32 %v4801, 7
    %v4803 = vsub.s32 0, %v4802
    %v4804 = vrot.slane %v4692, %v4803
    %v4807 = vsel %vm947, %v4796, 0
    %v4810 = vsel %vm947, %v4797, 0
    %v4813 = vsel %vm947, %v4798, 0
    %v4816 = vsel %vm947, %v4799, 0
    %4818 = vmatprep.subr.mxu0 0.0
    %4819 = vmatpush1.msra.mxu0 %v4683
    %4820 = vmatprep.subr.mxu0 0.0
    %4821 = vmatpush1.msra.mxu0 %v4684
    %4822 = vmatprep.subr.mxu0 0.0
    %4823 = vmatpush1.msra.mxu0 %v4685
    %4824 = vmatprep.subr.mxu0 0.0
    %4825 = vmatpush1.msra.mxu0 %v4686
    %4826 = vmatprep.subr.mxu0 0.0
    %4827 = vmatpush1.msra.mxu0 %v4687
    %4828 = vmatprep.subr.mxu0 0.0
    %4829 = vmatpush1.msra.mxu0 %v4688
    %4830 = vmatprep.subr.mxu0 0.0
    %4831 = vmatpush1.msra.mxu0 %v4689
    %4832 = vmatprep.subr.mxu0 0.0
    %4833 = vmatpush1.msra.mxu0 %v4690
    %4834 = vmatprep.subr.mxu0 0.0
    %4835 = vmatpush1.msra.mxu0 0.0
    %4836 = vmatprep.subr.mxu0 0.0
    %4837 = vmatpush1.msra.mxu0 0.0
    %4838 = vmatprep.subr.mxu0 0.0
    %4839 = vmatpush1.msra.mxu0 0.0
    %4840 = vmatprep.subr.mxu0 0.0
    %4841 = vmatpush1.msra.mxu0 0.0
    %4842 = vmatprep.subr.mxu0 0.0
    %4843 = vmatpush1.msra.mxu0 0.0
    %4844 = vmatprep.subr.mxu0 0.0
    %4845 = vmatpush1.msra.mxu0 0.0
    %4846 = vmatprep.subr.mxu0 0.0
    %4847 = vmatpush1.msra.mxu0 0.0
    %4848 = vmatprep.subr.mxu0 0.0
    %4849 = vmatpush1.msra.mxu0 0.0
    %4850 = vmatprep.subr.mxu0 0.0
    %4851 = vmatpush1.msra.mxu0 0.0
    %4852 = vmatprep.subr.mxu0 0.0
    %4853 = vmatpush1.msra.mxu0 0.0
    %4854 = vmatprep.subr.mxu0 0.0
    %4855 = vmatpush1.msra.mxu0 0.0
    %4856 = vmatprep.subr.mxu0 0.0
    %4857 = vmatpush1.msra.mxu0 0.0
    %4858 = vmatprep.subr.mxu0 0.0
    %4859 = vmatpush1.msra.mxu0 0.0
    %4860 = vmatprep.subr.mxu0 0.0
    %4861 = vmatpush1.msra.mxu0 0.0
    %4862 = vmatprep.subr.mxu0 0.0
    %4863 = vmatpush1.msra.mxu0 0.0
    %4864 = vmatprep.subr.mxu0 0.0
    %4865 = vmatpush1.msra.mxu0 0.0
    %4866 = vmatprep.subr.mxu0 0.0
    %4867 = vmatpush1.msra.mxu0 0.0
    %4868 = vmatprep.subr.mxu0 0.0
    %4869 = vmatpush1.msra.mxu0 0.0
    %4870 = vmatprep.subr.mxu0 0.0
    %4871 = vmatpush1.msra.mxu0 0.0
    %4872 = vmatprep.subr.mxu0 0.0
    %4873 = vmatpush1.msra.mxu0 0.0
    %4874 = vmatprep.subr.mxu0 0.0
    %4875 = vmatpush1.msra.mxu0 0.0
    %4876 = vmatprep.subr.mxu0 0.0
    %4877 = vmatpush1.msra.mxu0 0.0
    %4878 = vmatprep.subr.mxu0 0.0
    %4879 = vmatpush1.msra.mxu0 0.0
    %4880 = vmatprep.subr.mxu0 0.0
    %4881 = vmatpush1.msra.mxu0 0.0
    %4882 = vmatprep.mubr.f32.mxu0 0.0
    %4883 = vmatmul.mubr.f32.gmra.mrb[0].mxu0 %v4807
    %v4884 = vpop.f32.mrb[0].mxu0
    %v4885 = vadd.f32 %v4804, %v4884
    %v4886 = vpop.f32.mrb[0].mxu0
    %4887 = vmatprep.mubr.f32.mxu0 0.0
    %4888 = vmatmul.mubr.f32.gmra.mrb[0].mxu0 %v4810
    %v4889 = vpop.f32.mrb[0].mxu0
    %v4890 = vpop.f32.mrb[0].mxu0
    %4891 = vmatprep.mubr.f32.mxu0 0.0
    %4892 = vmatmul.mubr.f32.gmra.mrb[0].mxu0 %v4813
    %v4893 = vpop.f32.mrb[0].mxu0
    %v4894 = vadd.f32 %v4804, %v4893
    %v4895 = vpop.f32.mrb[0].mxu0
    %4896 = vmatprep.mubr.f32.mxu0 0.0
    %4897 = vmatmul.mubr.f32.gmra.mrb[0].mxu0 %v4816
    %v4898 = vpop.f32.mrb[0].mxu0
    %v4899 = vpop.f32.mrb[0].mxu0
    %4900 = vdwg.mxu0
    %v4901 = vadd.f32 %v4671, %v4885
    %v4902 = vadd.f32 %v4673, %v4894
    %v4903 = vsel %vm446, %v4901, 0.0
    %4904 = vadd.xlane.f32.xlu0 %v4903
    %v4905 = vpop.xlane.xlu0 %4904
    %v4906 = vsel %vm446, %v4902, 0.0
    %4907 = vadd.xlane.f32.xlu0 %v4906
    %v4908 = vpop.xlane.xlu0 %4907
    %v4909 = vmul.f32 %v4905, %v2348
    %v4910 = vmul.f32 %v4908, %v2348
    %v4911 = vsub.f32 %v4901, %v4909
    %v4912 = vsub.f32 %v4902, %v4910
    %v4913 = vmul.f32 %v4911, %v4911
    %v4914 = vmul.f32 %v4912, %v4912
    %v4915 = vsel %vm446, %v4913, 0.0
    %4916 = vadd.xlane.f32.xlu0 %v4915
    %v4917 = vpop.xlane.xlu0 %4916
    %v4918 = vsel %vm446, %v4914, 0.0
    %4919 = vadd.xlane.f32.xlu0 %v4918
    %v4920 = vpop.xlane.xlu0 %4919
    %v4921 = vmul.f32 %v4917, %v2348
    %v4922 = vmul.f32 %v4920, %v2348
    %v4923 = vadd.f32 %v4921, 1e-05
    %v4924 = vadd.f32 %v4922, 1e-05
    %v4925 = vrsqrt.pop %v4923
    %v4926 = vrsqrt.pop %v4924
    %v4927 = vmul.f32 %v4911, %v4925
    %v4928 = vmul.f32 %v4912, %v4926
    %v4929 = vlaneseq
    %v4930 = vshrl.u32 %v4929, 7
    %v4931 = vsub.s32 2, %v4930
    %v4932 = vrot.slane %v2702, %v4931
    %v4933 = vmul.f32 %v4927, %v4932
    %v4934 = vmul.f32 %v4928, %v4932
    %v4935 = vlaneseq
    %v4936 = vshrl.u32 %v4935, 7
    %v4937 = vsub.s32 3, %v4936
    %v4938 = vrot.slane %v2702, %v4937
    %v4939 = vadd.f32 %v4933, %v4938
    %v4940 = vadd.f32 %v4934, %v4938
    %v4942 = vrot.slane %v4940, 7
    %vm4944 = vcmask 1040384
    %v4945 = vsel %vm4944, %v4939, %v4942
    %v4946 = vld [vmem:[#allocation5] sm:$0xff]
    %v4947 = vld [vmem:[#allocation5 + $0x8] sm:$0xff]
    %v4948 = vld [vmem:[#allocation7] sm:$0x1]
    %v4950 = vlaneseq
    %v4951 = vshrl.u32 %v4950, 7
    %v4952 = vsub.s32 0, %v4951
    %v4953 = vrot.slane %v4948, %v4952
    %s4955 = scalar_lea.vmem [#allocation7], 1
    %v4956 = vld [vmem:[%s4955] sm:$0x1]
    %v4958 = vlaneseq
    %v4959 = vshrl.u32 %v4958, 7
    %v4960 = vsub.s32 0, %v4959
    %v4961 = vrot.slane %v4956, %v4960
    %v4963 = vld [vmem:[%s25] sm:$0x3f]
    %v4964 = vld [vmem:[%s15] sm:$0xff]
    %v4965 = vld [vmem:[%s15 + $0x8] sm:$0xff]
    %v4966 = vld [vmem:[%s15 + $0x10] sm:$0xff]
    %v4967 = vld [vmem:[%s15 + $0x18] sm:$0xff]
    %v4968 = vld [vmem:[#allocation17] sm:$0x1]
    %v4969 = vld [vmem:[%s17] sm:$0xff]
    %v4970 = vld [vmem:[%s17 + $0x8] sm:$0xff]
    %v4971 = vld [vmem:[%s17 + $0x10] sm:$0xff]
    %v4972 = vld [vmem:[%s17 + $0x18] sm:$0xff]
    %v4973 = vld [vmem:[#allocation19] sm:$0x1]
    %v4975 = vlaneseq
    %v4976 = vshrl.u32 %v4975, 7
    %v4977 = vsub.s32 0, %v4976
    %v4978 = vrot.slane %v4968, %v4977
    %v4981 = vsel %vm446, %v4946, 0
    %v4984 = vsel %vm446, %v4947, 0
    %4986 = vmatprep.subr.mxu0 0.0
    %4987 = vmatpush1.msra.mxu0 %v4964
    %4988 = vmatprep.subr.mxu0 0.0
    %4989 = vmatpush1.msra.mxu0 %v4965
    %4990 = vmatprep.subr.mxu0 0.0
    %4991 = vmatpush1.msra.mxu0 %v4966
    %4992 = vmatprep.subr.mxu0 0.0
    %4993 = vmatpush1.msra.mxu0 %v4967
    %4994 = vmatprep.subr.mxu0 0.0
    %4995 = vmatpush1.msra.mxu0 0.0
    %4996 = vmatprep.subr.mxu0 0.0
    %4997 = vmatpush1.msra.mxu0 0.0
    %4998 = vmatprep.subr.mxu0 0.0
    %4999 = vmatpush1.msra.mxu0 0.0
    %5000 = vmatprep.subr.mxu0 0.0
    %5001 = vmatpush1.msra.mxu0 0.0
    %5002 = vmatprep.subr.mxu0 0.0
    %5003 = vmatpush1.msra.mxu0 0.0
    %5004 = vmatprep.subr.mxu0 0.0
    %5005 = vmatpush1.msra.mxu0 0.0
    %5006 = vmatprep.subr.mxu0 0.0
    %5007 = vmatpush1.msra.mxu0 0.0
    %5008 = vmatprep.subr.mxu0 0.0
    %5009 = vmatpush1.msra.mxu0 0.0
    %5010 = vmatprep.subr.mxu0 0.0
    %5011 = vmatpush1.msra.mxu0 0.0
    %5012 = vmatprep.subr.mxu0 0.0
    %5013 = vmatpush1.msra.mxu0 0.0
    %5014 = vmatprep.subr.mxu0 0.0
    %5015 = vmatpush1.msra.mxu0 0.0
    %5016 = vmatprep.subr.mxu0 0.0
    %5017 = vmatpush1.msra.mxu0 0.0
    %5018 = vmatprep.subr.mxu0 0.0
    %5019 = vmatpush1.msra.mxu0 0.0
    %5020 = vmatprep.subr.mxu0 0.0
    %5021 = vmatpush1.msra.mxu0 0.0
    %5022 = vmatprep.subr.mxu0 0.0
    %5023 = vmatpush1.msra.mxu0 0.0
    %5024 = vmatprep.subr.mxu0 0.0
    %5025 = vmatpush1.msra.mxu0 0.0
    %5026 = vmatprep.subr.mxu0 0.0
    %5027 = vmatpush1.msra.mxu0 0.0
    %5028 = vmatprep.subr.mxu0 0.0
    %5029 = vmatpush1.msra.mxu0 0.0
    %5030 = vmatprep.subr.mxu0 0.0
    %5031 = vmatpush1.msra.mxu0 0.0
    %5032 = vmatprep.subr.mxu0 0.0
    %5033 = vmatpush1.msra.mxu0 0.0
    %5034 = vmatprep.subr.mxu0 0.0
    %5035 = vmatpush1.msra.mxu0 0.0
    %5036 = vmatprep.subr.mxu0 0.0
    %5037 = vmatpush1.msra.mxu0 0.0
    %5038 = vmatprep.subr.mxu0 0.0
    %5039 = vmatpush1.msra.mxu0 0.0
    %5040 = vmatprep.subr.mxu0 0.0
    %5041 = vmatpush1.msra.mxu0 0.0
    %5042 = vmatprep.subr.mxu0 0.0
    %5043 = vmatpush1.msra.mxu0 0.0
    %5044 = vmatprep.subr.mxu0 0.0
    %5045 = vmatpush1.msra.mxu0 0.0
    %5046 = vmatprep.subr.mxu0 0.0
    %5047 = vmatpush1.msra.mxu0 0.0
    %5048 = vmatprep.subr.mxu0 0.0
    %5049 = vmatpush1.msra.mxu0 0.0
    %5050 = vmatprep.mubr.f32.mxu0 0.0
    %5051 = vmatmul.mubr.f32.gmra.mrb[0].mxu0 %v4981
    %v5052 = vpop.f32.mrb[0].mxu0
    %v5053 = vadd.f32 %v4978, %v5052
    %v5054 = vpop.f32.mrb[0].mxu0
    %5055 = vmatprep.mubr.f32.mxu0 0.0
    %5056 = vmatmul.mubr.f32.gmra.mrb[0].mxu0 %v4984
    %v5057 = vpop.f32.mrb[0].mxu0
    %v5058 = vadd.f32 %v4978, %v5057
    %v5059 = vpop.f32.mrb[0].mxu0
    %5060 = vdwg.mxu0
    %v5061 = vmul.f32 %v5053, 0.35355338
    %v5062 = vmul.f32 %v5058, 0.35355338
    %5064 = vrot.lane.b32.xlu0 %v5053, 96
    %v5065 = vpop.permute.xlu0 %5064
    %v5067 = vsel %vm554, %v5061, 0
    %v5069 = vsel %vm554, %v5065, 0
    %5071 = vmatprep.subr.mxu0 0.0
    %5072 = vmatpush1.xpose.msra.mxu0 %v5069
    %5073 = vmatprep.subr.mxu0 0.0
    %5074 = vmatpush1.xpose.msra.mxu0 0.0
    %5075 = vmatprep.subr.mxu0 0.0
    %5076 = vmatpush1.xpose.msra.mxu0 0.0
    %5077 = vmatprep.subr.mxu0 0.0
    %5078 = vmatpush1.xpose.msra.mxu0 0.0
    %5079 = vmatprep.subr.mxu0 0.0
    %5080 = vmatpush1.xpose.msra.mxu0 0.0
    %5081 = vmatprep.subr.mxu0 0.0
    %5082 = vmatpush1.xpose.msra.mxu0 0.0
    %5083 = vmatprep.subr.mxu0 0.0
    %5084 = vmatpush1.xpose.msra.mxu0 0.0
    %5085 = vmatprep.subr.mxu0 0.0
    %5086 = vmatpush1.xpose.msra.mxu0 0.0
    %5087 = vmatprep.subr.mxu0 0.0
    %5088 = vmatpush1.xpose.msra.mxu0 0.0
    %5089 = vmatprep.subr.mxu0 0.0
    %5090 = vmatpush1.xpose.msra.mxu0 0.0
    %5091 = vmatprep.subr.mxu0 0.0
    %5092 = vmatpush1.xpose.msra.mxu0 0.0
    %5093 = vmatprep.subr.mxu0 0.0
    %5094 = vmatpush1.xpose.msra.mxu0 0.0
    %5095 = vmatprep.subr.mxu0 0.0
    %5096 = vmatpush1.xpose.msra.mxu0 0.0
    %5097 = vmatprep.subr.mxu0 0.0
    %5098 = vmatpush1.xpose.msra.mxu0 0.0
    %5099 = vmatprep.subr.mxu0 0.0
    %5100 = vmatpush1.xpose.msra.mxu0 0.0
    %5101 = vmatprep.subr.mxu0 0.0
    %5102 = vmatpush1.xpose.msra.mxu0 0.0
    %5103 = vmatprep.subr.mxu0 0.0
    %5104 = vmatpush1.xpose.msra.mxu0 0.0
    %5105 = vmatprep.subr.mxu0 0.0
    %5106 = vmatpush1.xpose.msra.mxu0 0.0
    %5107 = vmatprep.subr.mxu0 0.0
    %5108 = vmatpush1.xpose.msra.mxu0 0.0
    %5109 = vmatprep.subr.mxu0 0.0
    %5110 = vmatpush1.xpose.msra.mxu0 0.0
    %5111 = vmatprep.subr.mxu0 0.0
    %5112 = vmatpush1.xpose.msra.mxu0 0.0
    %5113 = vmatprep.subr.mxu0 0.0
    %5114 = vmatpush1.xpose.msra.mxu0 0.0
    %5115 = vmatprep.subr.mxu0 0.0
    %5116 = vmatpush1.xpose.msra.mxu0 0.0
    %5117 = vmatprep.subr.mxu0 0.0
    %5118 = vmatpush1.xpose.msra.mxu0 0.0
    %5119 = vmatprep.subr.mxu0 0.0
    %5120 = vmatpush1.xpose.msra.mxu0 0.0
    %5121 = vmatprep.subr.mxu0 0.0
    %5122 = vmatpush1.xpose.msra.mxu0 0.0
    %5123 = vmatprep.subr.mxu0 0.0
    %5124 = vmatpush1.xpose.msra.mxu0 0.0
    %5125 = vmatprep.subr.mxu0 0.0
    %5126 = vmatpush1.xpose.msra.mxu0 0.0
    %5127 = vmatprep.subr.mxu0 0.0
    %5128 = vmatpush1.xpose.msra.mxu0 0.0
    %5129 = vmatprep.subr.mxu0 0.0
    %5130 = vmatpush1.xpose.msra.mxu0 0.0
    %5131 = vmatprep.subr.mxu0 0.0
    %5132 = vmatpush1.xpose.msra.mxu0 0.0
    %5133 = vmatprep.subr.mxu0 0.0
    %5134 = vmatpush1.xpose.msra.mxu0 0.0
    %5135 = vmatprep.mubr.f32.mxu0 0.0
    %5136 = vmatmul.mubr.f32.gmra.mrb[0].mxu0 %v5067
    %v5137 = vpop.f32.mrb[0].mxu0
    %v5138 = vadd.f32 0.0, %v5137
    %v5139 = vpop.f32.mrb[0].mxu0
    %5140 = vdwg.mxu0
    %5141 = vrot.lane.b32.xlu0 %v5061, 120
    %v5142 = vpop.permute.xlu0 %5141
    %5143 = vrot.lane.b32.xlu0 %v5053, 88
    %v5144 = vpop.permute.xlu0 %5143
    %v5145 = vsel %vm554, %v5142, 0
    %v5147 = vsel %vm554, %v5144, 0
    %5149 = vmatprep.subr.mxu0 0.0
    %5150 = vmatpush1.xpose.msra.mxu0 %v5147
    %5151 = vmatprep.subr.mxu0 0.0
    %5152 = vmatpush1.xpose.msra.mxu0 0.0
    %5153 = vmatprep.subr.mxu0 0.0
    %5154 = vmatpush1.xpose.msra.mxu0 0.0
    %5155 = vmatprep.subr.mxu0 0.0
    %5156 = vmatpush1.xpose.msra.mxu0 0.0
    %5157 = vmatprep.subr.mxu0 0.0
    %5158 = vmatpush1.xpose.msra.mxu0 0.0
    %5159 = vmatprep.subr.mxu0 0.0
    %5160 = vmatpush1.xpose.msra.mxu0 0.0
    %5161 = vmatprep.subr.mxu0 0.0
    %5162 = vmatpush1.xpose.msra.mxu0 0.0
    %5163 = vmatprep.subr.mxu0 0.0
    %5164 = vmatpush1.xpose.msra.mxu0 0.0
    %5165 = vmatprep.subr.mxu0 0.0
    %5166 = vmatpush1.xpose.msra.mxu0 0.0
    %5167 = vmatprep.subr.mxu0 0.0
    %5168 = vmatpush1.xpose.msra.mxu0 0.0
    %5169 = vmatprep.subr.mxu0 0.0
    %5170 = vmatpush1.xpose.msra.mxu0 0.0
    %5171 = vmatprep.subr.mxu0 0.0
    %5172 = vmatpush1.xpose.msra.mxu0 0.0
    %5173 = vmatprep.subr.mxu0 0.0
    %5174 = vmatpush1.xpose.msra.mxu0 0.0
    %5175 = vmatprep.subr.mxu0 0.0
    %5176 = vmatpush1.xpose.msra.mxu0 0.0
    %5177 = vmatprep.subr.mxu0 0.0
    %5178 = vmatpush1.xpose.msra.mxu0 0.0
    %5179 = vmatprep.subr.mxu0 0.0
    %5180 = vmatpush1.xpose.msra.mxu0 0.0
    %5181 = vmatprep.subr.mxu0 0.0
    %5182 = vmatpush1.xpose.msra.mxu0 0.0
    %5183 = vmatprep.subr.mxu0 0.0
    %5184 = vmatpush1.xpose.msra.mxu0 0.0
    %5185 = vmatprep.subr.mxu0 0.0
    %5186 = vmatpush1.xpose.msra.mxu0 0.0
    %5187 = vmatprep.subr.mxu0 0.0
    %5188 = vmatpush1.xpose.msra.mxu0 0.0
    %5189 = vmatprep.subr.mxu0 0.0
    %5190 = vmatpush1.xpose.msra.mxu0 0.0
    %5191 = vmatprep.subr.mxu0 0.0
    %5192 = vmatpush1.xpose.msra.mxu0 0.0
    %5193 = vmatprep.subr.mxu0 0.0
    %5194 = vmatpush1.xpose.msra.mxu0 0.0
    %5195 = vmatprep.subr.mxu0 0.0
    %5196 = vmatpush1.xpose.msra.mxu0 0.0
    %5197 = vmatprep.subr.mxu0 0.0
    %5198 = vmatpush1.xpose.msra.mxu0 0.0
    %5199 = vmatprep.subr.mxu0 0.0
    %5200 = vmatpush1.xpose.msra.mxu0 0.0
    %5201 = vmatprep.subr.mxu0 0.0
    %5202 = vmatpush1.xpose.msra.mxu0 0.0
    %5203 = vmatprep.subr.mxu0 0.0
    %5204 = vmatpush1.xpose.msra.mxu0 0.0
    %5205 = vmatprep.subr.mxu0 0.0
    %5206 = vmatpush1.xpose.msra.mxu0 0.0
    %5207 = vmatprep.subr.mxu0 0.0
    %5208 = vmatpush1.xpose.msra.mxu0 0.0
    %5209 = vmatprep.subr.mxu0 0.0
    %5210 = vmatpush1.xpose.msra.mxu0 0.0
    %5211 = vmatprep.subr.mxu0 0.0
    %5212 = vmatpush1.xpose.msra.mxu0 0.0
    %5213 = vmatprep.mubr.f32.mxu0 0.0
    %5214 = vmatmul.mubr.f32.gmra.mrb[0].mxu0 %v5145
    %v5215 = vpop.f32.mrb[0].mxu0
    %v5216 = vadd.f32 0.0, %v5215
    %v5217 = vpop.f32.mrb[0].mxu0
    %5218 = vdwg.mxu0
    %5219 = vrot.lane.b32.xlu0 %v5061, 112
    %v5220 = vpop.permute.xlu0 %5219
    %5221 = vrot.lane.b32.xlu0 %v5053, 80
    %v5222 = vpop.permute.xlu0 %5221
    %v5223 = vsel %vm554, %v5220, 0
    %v5225 = vsel %vm554, %v5222, 0
    %5227 = vmatprep.subr.mxu0 0.0
    %5228 = vmatpush1.xpose.msra.mxu0 %v5225
    %5229 = vmatprep.subr.mxu0 0.0
    %5230 = vmatpush1.xpose.msra.mxu0 0.0
    %5231 = vmatprep.subr.mxu0 0.0
    %5232 = vmatpush1.xpose.msra.mxu0 0.0
    %5233 = vmatprep.subr.mxu0 0.0
    %5234 = vmatpush1.xpose.msra.mxu0 0.0
    %5235 = vmatprep.subr.mxu0 0.0
    %5236 = vmatpush1.xpose.msra.mxu0 0.0
    %5237 = vmatprep.subr.mxu0 0.0
    %5238 = vmatpush1.xpose.msra.mxu0 0.0
    %5239 = vmatprep.subr.mxu0 0.0
    %5240 = vmatpush1.xpose.msra.mxu0 0.0
    %5241 = vmatprep.subr.mxu0 0.0
    %5242 = vmatpush1.xpose.msra.mxu0 0.0
    %5243 = vmatprep.subr.mxu0 0.0
    %5244 = vmatpush1.xpose.msra.mxu0 0.0
    %5245 = vmatprep.subr.mxu0 0.0
    %5246 = vmatpush1.xpose.msra.mxu0 0.0
    %5247 = vmatprep.subr.mxu0 0.0
    %5248 = vmatpush1.xpose.msra.mxu0 0.0
    %5249 = vmatprep.subr.mxu0 0.0
    %5250 = vmatpush1.xpose.msra.mxu0 0.0
    %5251 = vmatprep.subr.mxu0 0.0
    %5252 = vmatpush1.xpose.msra.mxu0 0.0
    %5253 = vmatprep.subr.mxu0 0.0
    %5254 = vmatpush1.xpose.msra.mxu0 0.0
    %5255 = vmatprep.subr.mxu0 0.0
    %5256 = vmatpush1.xpose.msra.mxu0 0.0
    %5257 = vmatprep.subr.mxu0 0.0
    %5258 = vmatpush1.xpose.msra.mxu0 0.0
    %5259 = vmatprep.subr.mxu0 0.0
    %5260 = vmatpush1.xpose.msra.mxu0 0.0
    %5261 = vmatprep.subr.mxu0 0.0
    %5262 = vmatpush1.xpose.msra.mxu0 0.0
    %5263 = vmatprep.subr.mxu0 0.0
    %5264 = vmatpush1.xpose.msra.mxu0 0.0
    %5265 = vmatprep.subr.mxu0 0.0
    %5266 = vmatpush1.xpose.msra.mxu0 0.0
    %5267 = vmatprep.subr.mxu0 0.0
    %5268 = vmatpush1.xpose.msra.mxu0 0.0
    %5269 = vmatprep.subr.mxu0 0.0
    %5270 = vmatpush1.xpose.msra.mxu0 0.0
    %5271 = vmatprep.subr.mxu0 0.0
    %5272 = vmatpush1.xpose.msra.mxu0 0.0
    %5273 = vmatprep.subr.mxu0 0.0
    %5274 = vmatpush1.xpose.msra.mxu0 0.0
    %5275 = vmatprep.subr.mxu0 0.0
    %5276 = vmatpush1.xpose.msra.mxu0 0.0
    %5277 = vmatprep.subr.mxu0 0.0
    %5278 = vmatpush1.xpose.msra.mxu0 0.0
    %5279 = vmatprep.subr.mxu0 0.0
    %5280 = vmatpush1.xpose.msra.mxu0 0.0
    %5281 = vmatprep.subr.mxu0 0.0
    %5282 = vmatpush1.xpose.msra.mxu0 0.0
    %5283 = vmatprep.subr.mxu0 0.0
    %5284 = vmatpush1.xpose.msra.mxu0 0.0
    %5285 = vmatprep.subr.mxu0 0.0
    %5286 = vmatpush1.xpose.msra.mxu0 0.0
    %5287 = vmatprep.subr.mxu0 0.0
    %5288 = vmatpush1.xpose.msra.mxu0 0.0
    %5289 = vmatprep.subr.mxu0 0.0
    %5290 = vmatpush1.xpose.msra.mxu0 0.0
    %5291 = vmatprep.mubr.f32.mxu0 0.0
    %5292 = vmatmul.mubr.f32.gmra.mrb[0].mxu0 %v5223
    %v5293 = vpop.f32.mrb[0].mxu0
    %v5294 = vadd.f32 0.0, %v5293
    %v5295 = vpop.f32.mrb[0].mxu0
    %5296 = vdwg.mxu0
    %5297 = vrot.lane.b32.xlu0 %v5061, 104
    %v5298 = vpop.permute.xlu0 %5297
    %5299 = vrot.lane.b32.xlu0 %v5053, 72
    %v5300 = vpop.permute.xlu0 %5299
    %v5301 = vsel %vm554, %v5298, 0
    %v5303 = vsel %vm554, %v5300, 0
    %5305 = vmatprep.subr.mxu0 0.0
    %5306 = vmatpush1.xpose.msra.mxu0 %v5303
    %5307 = vmatprep.subr.mxu0 0.0
    %5308 = vmatpush1.xpose.msra.mxu0 0.0
    %5309 = vmatprep.subr.mxu0 0.0
    %5310 = vmatpush1.xpose.msra.mxu0 0.0
    %5311 = vmatprep.subr.mxu0 0.0
    %5312 = vmatpush1.xpose.msra.mxu0 0.0
    %5313 = vmatprep.subr.mxu0 0.0
    %5314 = vmatpush1.xpose.msra.mxu0 0.0
    %5315 = vmatprep.subr.mxu0 0.0
    %5316 = vmatpush1.xpose.msra.mxu0 0.0
    %5317 = vmatprep.subr.mxu0 0.0
    %5318 = vmatpush1.xpose.msra.mxu0 0.0
    %5319 = vmatprep.subr.mxu0 0.0
    %5320 = vmatpush1.xpose.msra.mxu0 0.0
    %5321 = vmatprep.subr.mxu0 0.0
    %5322 = vmatpush1.xpose.msra.mxu0 0.0
    %5323 = vmatprep.subr.mxu0 0.0
    %5324 = vmatpush1.xpose.msra.mxu0 0.0
    %5325 = vmatprep.subr.mxu0 0.0
    %5326 = vmatpush1.xpose.msra.mxu0 0.0
    %5327 = vmatprep.subr.mxu0 0.0
    %5328 = vmatpush1.xpose.msra.mxu0 0.0
    %5329 = vmatprep.subr.mxu0 0.0
    %5330 = vmatpush1.xpose.msra.mxu0 0.0
    %5331 = vmatprep.subr.mxu0 0.0
    %5332 = vmatpush1.xpose.msra.mxu0 0.0
    %5333 = vmatprep.subr.mxu0 0.0
    %5334 = vmatpush1.xpose.msra.mxu0 0.0
    %5335 = vmatprep.subr.mxu0 0.0
    %5336 = vmatpush1.xpose.msra.mxu0 0.0
    %5337 = vmatprep.subr.mxu0 0.0
    %5338 = vmatpush1.xpose.msra.mxu0 0.0
    %5339 = vmatprep.subr.mxu0 0.0
    %5340 = vmatpush1.xpose.msra.mxu0 0.0
    %5341 = vmatprep.subr.mxu0 0.0
    %5342 = vmatpush1.xpose.msra.mxu0 0.0
    %5343 = vmatprep.subr.mxu0 0.0
    %5344 = vmatpush1.xpose.msra.mxu0 0.0
    %5345 = vmatprep.subr.mxu0 0.0
    %5346 = vmatpush1.xpose.msra.mxu0 0.0
    %5347 = vmatprep.subr.mxu0 0.0
    %5348 = vmatpush1.xpose.msra.mxu0 0.0
    %5349 = vmatprep.subr.mxu0 0.0
    %5350 = vmatpush1.xpose.msra.mxu0 0.0
    %5351 = vmatprep.subr.mxu0 0.0
    %5352 = vmatpush1.xpose.msra.mxu0 0.0
    %5353 = vmatprep.subr.mxu0 0.0
    %5354 = vmatpush1.xpose.msra.mxu0 0.0
    %5355 = vmatprep.subr.mxu0 0.0
    %5356 = vmatpush1.xpose.msra.mxu0 0.0
    %5357 = vmatprep.subr.mxu0 0.0
    %5358 = vmatpush1.xpose.msra.mxu0 0.0
    %5359 = vmatprep.subr.mxu0 0.0
    %5360 = vmatpush1.xpose.msra.mxu0 0.0
    %5361 = vmatprep.subr.mxu0 0.0
    %5362 = vmatpush1.xpose.msra.mxu0 0.0
    %5363 = vmatprep.subr.mxu0 0.0
    %5364 = vmatpush1.xpose.msra.mxu0 0.0
    %5365 = vmatprep.subr.mxu0 0.0
    %5366 = vmatpush1.xpose.msra.mxu0 0.0
    %5367 = vmatprep.subr.mxu0 0.0
    %5368 = vmatpush1.xpose.msra.mxu0 0.0
    %5369 = vmatprep.mubr.f32.mxu0 0.0
    %5370 = vmatmul.mubr.f32.gmra.mrb[0].mxu0 %v5301
    %v5371 = vpop.f32.mrb[0].mxu0
    %v5372 = vadd.f32 0.0, %v5371
    %v5373 = vpop.f32.mrb[0].mxu0
    %5374 = vdwg.mxu0
    %5376 = vrot.lane.b32.xlu0 %v5216, 8
    %v5377 = vpop.permute.xlu0 %5376
    %5380 = vrot.lane.b32.xlu0 %v5294, 16
    %v5381 = vpop.permute.xlu0 %5380
    %5384 = vrot.lane.b32.xlu0 %v5372, 24
    %v5385 = vpop.permute.xlu0 %5384
    %v5387 = vsel %vm554, %v5138, %v5377
    %v5388 = vsel %vm937, %v5387, %v5381
    %v5389 = vsel %vm1388, %v5388, %v5385
    %v5390 = vadd.f32 %v5389, %v4953
    %v5391 = vsel %vm446, %v5390, -inf
    %5392 = vmax.xlane.f32.xlu0 %v5391
    %v5393 = vpop.xlane.xlu0 %5392
    %v5394 = vsub.f32 %v5390, %v5393
    %v5395 = vmul.f32 %v5394, 1.442695
    %v5396 = vpow.pop %v5395
    %v5397 = vsel %vm554, %v5396, 0.0
    %5398 = vadd.xlane.f32.xlu0 %v5397
    %v5399 = vpop.xlane.xlu0 %5398
    %v5400 = vrcp.pop %v5399
    %5401 = vrot.lane.b32.xlu0 %v5053, 64
    %v5402 = vpop.permute.xlu0 %5401
    %v5405 = vsel %vm554, %v5396, 0
    %5407 = vmatprep.subr.mxu0 0.0
    %5408 = vmatpush1.msra.mxu0 %v5402
    %5409 = vmatprep.subr.mxu0 0.0
    %5410 = vmatpush1.msra.mxu0 0.0
    %5411 = vmatprep.subr.mxu0 0.0
    %5412 = vmatpush1.msra.mxu0 0.0
    %5413 = vmatprep.subr.mxu0 0.0
    %5414 = vmatpush1.msra.mxu0 0.0
    %5415 = vmatprep.subr.mxu0 0.0
    %5416 = vmatpush1.msra.mxu0 0.0
    %5417 = vmatprep.subr.mxu0 0.0
    %5418 = vmatpush1.msra.mxu0 0.0
    %5419 = vmatprep.subr.mxu0 0.0
    %5420 = vmatpush1.msra.mxu0 0.0
    %5421 = vmatprep.subr.mxu0 0.0
    %5422 = vmatpush1.msra.mxu0 0.0
    %5423 = vmatprep.subr.mxu0 0.0
    %5424 = vmatpush1.msra.mxu0 0.0
    %5425 = vmatprep.subr.mxu0 0.0
    %5426 = vmatpush1.msra.mxu0 0.0
    %5427 = vmatprep.subr.mxu0 0.0
    %5428 = vmatpush1.msra.mxu0 0.0
    %5429 = vmatprep.subr.mxu0 0.0
    %5430 = vmatpush1.msra.mxu0 0.0
    %5431 = vmatprep.subr.mxu0 0.0
    %5432 = vmatpush1.msra.mxu0 0.0
    %5433 = vmatprep.subr.mxu0 0.0
    %5434 = vmatpush1.msra.mxu0 0.0
    %5435 = vmatprep.subr.mxu0 0.0
    %5436 = vmatpush1.msra.mxu0 0.0
    %5437 = vmatprep.subr.mxu0 0.0
    %5438 = vmatpush1.msra.mxu0 0.0
    %5439 = vmatprep.subr.mxu0 0.0
    %5440 = vmatpush1.msra.mxu0 0.0
    %5441 = vmatprep.subr.mxu0 0.0
    %5442 = vmatpush1.msra.mxu0 0.0
    %5443 = vmatprep.subr.mxu0 0.0
    %5444 = vmatpush1.msra.mxu0 0.0
    %5445 = vmatprep.subr.mxu0 0.0
    %5446 = vmatpush1.msra.mxu0 0.0
    %5447 = vmatprep.subr.mxu0 0.0
    %5448 = vmatpush1.msra.mxu0 0.0
    %5449 = vmatprep.subr.mxu0 0.0
    %5450 = vmatpush1.msra.mxu0 0.0
    %5451 = vmatprep.subr.mxu0 0.0
    %5452 = vmatpush1.msra.mxu0 0.0
    %5453 = vmatprep.subr.mxu0 0.0
    %5454 = vmatpush1.msra.mxu0 0.0
    %5455 = vmatprep.subr.mxu0 0.0
    %5456 = vmatpush1.msra.mxu0 0.0
    %5457 = vmatprep.subr.mxu0 0.0
    %5458 = vmatpush1.msra.mxu0 0.0
    %5459 = vmatprep.subr.mxu0 0.0
    %5460 = vmatpush1.msra.mxu0 0.0
    %5461 = vmatprep.subr.mxu0 0.0
    %5462 = vmatpush1.msra.mxu0 0.0
    %5463 = vmatprep.subr.mxu0 0.0
    %5464 = vmatpush1.msra.mxu0 0.0
    %5465 = vmatprep.subr.mxu0 0.0
    %5466 = vmatpush1.msra.mxu0 0.0
    %5467 = vmatprep.subr.mxu0 0.0
    %5468 = vmatpush1.msra.mxu0 0.0
    %5469 = vmatprep.subr.mxu0 0.0
    %5470 = vmatpush1.msra.mxu0 0.0
    %5471 = vmatprep.mubr.f32.mxu0 0.0
    %5472 = vmatmul.mubr.f32.gmra.mrb[0].mxu0 %v5405
    %v5473 = vpop.f32.mrb[0].mxu0
    %v5474 = vadd.f32 0.0, %v5473
    %v5475 = vpop.f32.mrb[0].mxu0
    %5476 = vdwg.mxu0
    %v5477 = vmul.f32 %v5474, %v5400
    %5478 = vrot.lane.b32.xlu0 %v5396, 120
    %v5479 = vpop.permute.xlu0 %5478
    %v5481 = vsel %vm554, %v5479, 0.0
    %5482 = vadd.xlane.f32.xlu0 %v5481
    %v5483 = vpop.xlane.xlu0 %5482
    %v5484 = vrcp.pop %v5483
    %5485 = vrot.lane.b32.xlu0 %v5053, 56
    %v5486 = vpop.permute.xlu0 %5485
    %v5488 = vsel %vm554, %v5479, 0
    %5490 = vmatprep.subr.mxu0 0.0
    %5491 = vmatpush1.msra.mxu0 %v5486
    %5492 = vmatprep.subr.mxu0 0.0
    %5493 = vmatpush1.msra.mxu0 0.0
    %5494 = vmatprep.subr.mxu0 0.0
    %5495 = vmatpush1.msra.mxu0 0.0
    %5496 = vmatprep.subr.mxu0 0.0
    %5497 = vmatpush1.msra.mxu0 0.0
    %5498 = vmatprep.subr.mxu0 0.0
    %5499 = vmatpush1.msra.mxu0 0.0
    %5500 = vmatprep.subr.mxu0 0.0
    %5501 = vmatpush1.msra.mxu0 0.0
    %5502 = vmatprep.subr.mxu0 0.0
    %5503 = vmatpush1.msra.mxu0 0.0
    %5504 = vmatprep.subr.mxu0 0.0
    %5505 = vmatpush1.msra.mxu0 0.0
    %5506 = vmatprep.subr.mxu0 0.0
    %5507 = vmatpush1.msra.mxu0 0.0
    %5508 = vmatprep.subr.mxu0 0.0
    %5509 = vmatpush1.msra.mxu0 0.0
    %5510 = vmatprep.subr.mxu0 0.0
    %5511 = vmatpush1.msra.mxu0 0.0
    %5512 = vmatprep.subr.mxu0 0.0
    %5513 = vmatpush1.msra.mxu0 0.0
    %5514 = vmatprep.subr.mxu0 0.0
    %5515 = vmatpush1.msra.mxu0 0.0
    %5516 = vmatprep.subr.mxu0 0.0
    %5517 = vmatpush1.msra.mxu0 0.0
    %5518 = vmatprep.subr.mxu0 0.0
    %5519 = vmatpush1.msra.mxu0 0.0
    %5520 = vmatprep.subr.mxu0 0.0
    %5521 = vmatpush1.msra.mxu0 0.0
    %5522 = vmatprep.subr.mxu0 0.0
    %5523 = vmatpush1.msra.mxu0 0.0
    %5524 = vmatprep.subr.mxu0 0.0
    %5525 = vmatpush1.msra.mxu0 0.0
    %5526 = vmatprep.subr.mxu0 0.0
    %5527 = vmatpush1.msra.mxu0 0.0
    %5528 = vmatprep.subr.mxu0 0.0
    %5529 = vmatpush1.msra.mxu0 0.0
    %5530 = vmatprep.subr.mxu0 0.0
    %5531 = vmatpush1.msra.mxu0 0.0
    %5532 = vmatprep.subr.mxu0 0.0
    %5533 = vmatpush1.msra.mxu0 0.0
    %5534 = vmatprep.subr.mxu0 0.0
    %5535 = vmatpush1.msra.mxu0 0.0
    %5536 = vmatprep.subr.mxu0 0.0
    %5537 = vmatpush1.msra.mxu0 0.0
    %5538 = vmatprep.subr.mxu0 0.0
    %5539 = vmatpush1.msra.mxu0 0.0
    %5540 = vmatprep.subr.mxu0 0.0
    %5541 = vmatpush1.msra.mxu0 0.0
    %5542 = vmatprep.subr.mxu0 0.0
    %5543 = vmatpush1.msra.mxu0 0.0
    %5544 = vmatprep.subr.mxu0 0.0
    %5545 = vmatpush1.msra.mxu0 0.0
    %5546 = vmatprep.subr.mxu0 0.0
    %5547 = vmatpush1.msra.mxu0 0.0
    %5548 = vmatprep.subr.mxu0 0.0
    %5549 = vmatpush1.msra.mxu0 0.0
    %5550 = vmatprep.subr.mxu0 0.0
    %5551 = vmatpush1.msra.mxu0 0.0
    %5552 = vmatprep.subr.mxu0 0.0
    %5553 = vmatpush1.msra.mxu0 0.0
    %5554 = vmatprep.mubr.f32.mxu0 0.0
    %5555 = vmatmul.mubr.f32.gmra.mrb[0].mxu0 %v5488
    %v5556 = vpop.f32.mrb[0].mxu0
    %v5557 = vadd.f32 0.0, %v5556
    %v5558 = vpop.f32.mrb[0].mxu0
    %5559 = vdwg.mxu0
    %v5560 = vmul.f32 %v5557, %v5484
    %5561 = vrot.lane.b32.xlu0 %v5396, 112
    %v5562 = vpop.permute.xlu0 %5561
    %v5564 = vsel %vm554, %v5562, 0.0
    %5565 = vadd.xlane.f32.xlu0 %v5564
    %v5566 = vpop.xlane.xlu0 %5565
    %v5567 = vrcp.pop %v5566
    %5568 = vrot.lane.b32.xlu0 %v5053, 48
    %v5569 = vpop.permute.xlu0 %5568
    %v5571 = vsel %vm554, %v5562, 0
    %5573 = vmatprep.subr.mxu0 0.0
    %5574 = vmatpush1.msra.mxu0 %v5569
    %5575 = vmatprep.subr.mxu0 0.0
    %5576 = vmatpush1.msra.mxu0 0.0
    %5577 = vmatprep.subr.mxu0 0.0
    %5578 = vmatpush1.msra.mxu0 0.0
    %5579 = vmatprep.subr.mxu0 0.0
    %5580 = vmatpush1.msra.mxu0 0.0
    %5581 = vmatprep.subr.mxu0 0.0
    %5582 = vmatpush1.msra.mxu0 0.0
    %5583 = vmatprep.subr.mxu0 0.0
    %5584 = vmatpush1.msra.mxu0 0.0
    %5585 = vmatprep.subr.mxu0 0.0
    %5586 = vmatpush1.msra.mxu0 0.0
    %5587 = vmatprep.subr.mxu0 0.0
    %5588 = vmatpush1.msra.mxu0 0.0
    %5589 = vmatprep.subr.mxu0 0.0
    %5590 = vmatpush1.msra.mxu0 0.0
    %5591 = vmatprep.subr.mxu0 0.0
    %5592 = vmatpush1.msra.mxu0 0.0
    %5593 = vmatprep.subr.mxu0 0.0
    %5594 = vmatpush1.msra.mxu0 0.0
    %5595 = vmatprep.subr.mxu0 0.0
    %5596 = vmatpush1.msra.mxu0 0.0
    %5597 = vmatprep.subr.mxu0 0.0
    %5598 = vmatpush1.msra.mxu0 0.0
    %5599 = vmatprep.subr.mxu0 0.0
    %5600 = vmatpush1.msra.mxu0 0.0
    %5601 = vmatprep.subr.mxu0 0.0
    %5602 = vmatpush1.msra.mxu0 0.0
    %5603 = vmatprep.subr.mxu0 0.0
    %5604 = vmatpush1.msra.mxu0 0.0
    %5605 = vmatprep.subr.mxu0 0.0
    %5606 = vmatpush1.msra.mxu0 0.0
    %5607 = vmatprep.subr.mxu0 0.0
    %5608 = vmatpush1.msra.mxu0 0.0
    %5609 = vmatprep.subr.mxu0 0.0
    %5610 = vmatpush1.msra.mxu0 0.0
    %5611 = vmatprep.subr.mxu0 0.0
    %5612 = vmatpush1.msra.mxu0 0.0
    %5613 = vmatprep.subr.mxu0 0.0
    %5614 = vmatpush1.msra.mxu0 0.0
    %5615 = vmatprep.subr.mxu0 0.0
    %5616 = vmatpush1.msra.mxu0 0.0
    %5617 = vmatprep.subr.mxu0 0.0
    %5618 = vmatpush1.msra.mxu0 0.0
    %5619 = vmatprep.subr.mxu0 0.0
    %5620 = vmatpush1.msra.mxu0 0.0
    %5621 = vmatprep.subr.mxu0 0.0
    %5622 = vmatpush1.msra.mxu0 0.0
    %5623 = vmatprep.subr.mxu0 0.0
    %5624 = vmatpush1.msra.mxu0 0.0
    %5625 = vmatprep.subr.mxu0 0.0
    %5626 = vmatpush1.msra.mxu0 0.0
    %5627 = vmatprep.subr.mxu0 0.0
    %5628 = vmatpush1.msra.mxu0 0.0
    %5629 = vmatprep.subr.mxu0 0.0
    %5630 = vmatpush1.msra.mxu0 0.0
    %5631 = vmatprep.subr.mxu0 0.0
    %5632 = vmatpush1.msra.mxu0 0.0
    %5633 = vmatprep.subr.mxu0 0.0
    %5634 = vmatpush1.msra.mxu0 0.0
    %5635 = vmatprep.subr.mxu0 0.0
    %5636 = vmatpush1.msra.mxu0 0.0
    %5637 = vmatprep.mubr.f32.mxu0 0.0
    %5638 = vmatmul.mubr.f32.gmra.mrb[0].mxu0 %v5571
    %v5639 = vpop.f32.mrb[0].mxu0
    %v5640 = vadd.f32 0.0, %v5639
    %v5641 = vpop.f32.mrb[0].mxu0
    %5642 = vdwg.mxu0
    %v5643 = vmul.f32 %v5640, %v5567
    %5644 = vrot.lane.b32.xlu0 %v5396, 104
    %v5645 = vpop.permute.xlu0 %5644
    %v5647 = vsel %vm554, %v5645, 0.0
    %5648 = vadd.xlane.f32.xlu0 %v5647
    %v5649 = vpop.xlane.xlu0 %5648
    %v5650 = vrcp.pop %v5649
    %5651 = vrot.lane.b32.xlu0 %v5053, 40
    %v5652 = vpop.permute.xlu0 %5651
    %v5654 = vsel %vm554, %v5645, 0
    %5656 = vmatprep.subr.mxu0 0.0
    %5657 = vmatpush1.msra.mxu0 %v5652
    %5658 = vmatprep.subr.mxu0 0.0
    %5659 = vmatpush1.msra.mxu0 0.0
    %5660 = vmatprep.subr.mxu0 0.0
    %5661 = vmatpush1.msra.mxu0 0.0
    %5662 = vmatprep.subr.mxu0 0.0
    %5663 = vmatpush1.msra.mxu0 0.0
    %5664 = vmatprep.subr.mxu0 0.0
    %5665 = vmatpush1.msra.mxu0 0.0
    %5666 = vmatprep.subr.mxu0 0.0
    %5667 = vmatpush1.msra.mxu0 0.0
    %5668 = vmatprep.subr.mxu0 0.0
    %5669 = vmatpush1.msra.mxu0 0.0
    %5670 = vmatprep.subr.mxu0 0.0
    %5671 = vmatpush1.msra.mxu0 0.0
    %5672 = vmatprep.subr.mxu0 0.0
    %5673 = vmatpush1.msra.mxu0 0.0
    %5674 = vmatprep.subr.mxu0 0.0
    %5675 = vmatpush1.msra.mxu0 0.0
    %5676 = vmatprep.subr.mxu0 0.0
    %5677 = vmatpush1.msra.mxu0 0.0
    %5678 = vmatprep.subr.mxu0 0.0
    %5679 = vmatpush1.msra.mxu0 0.0
    %5680 = vmatprep.subr.mxu0 0.0
    %5681 = vmatpush1.msra.mxu0 0.0
    %5682 = vmatprep.subr.mxu0 0.0
    %5683 = vmatpush1.msra.mxu0 0.0
    %5684 = vmatprep.subr.mxu0 0.0
    %5685 = vmatpush1.msra.mxu0 0.0
    %5686 = vmatprep.subr.mxu0 0.0
    %5687 = vmatpush1.msra.mxu0 0.0
    %5688 = vmatprep.subr.mxu0 0.0
    %5689 = vmatpush1.msra.mxu0 0.0
    %5690 = vmatprep.subr.mxu0 0.0
    %5691 = vmatpush1.msra.mxu0 0.0
    %5692 = vmatprep.subr.mxu0 0.0
    %5693 = vmatpush1.msra.mxu0 0.0
    %5694 = vmatprep.subr.mxu0 0.0
    %5695 = vmatpush1.msra.mxu0 0.0
    %5696 = vmatprep.subr.mxu0 0.0
    %5697 = vmatpush1.msra.mxu0 0.0
    %5698 = vmatprep.subr.mxu0 0.0
    %5699 = vmatpush1.msra.mxu0 0.0
    %5700 = vmatprep.subr.mxu0 0.0
    %5701 = vmatpush1.msra.mxu0 0.0
    %5702 = vmatprep.subr.mxu0 0.0
    %5703 = vmatpush1.msra.mxu0 0.0
    %5704 = vmatprep.subr.mxu0 0.0
    %5705 = vmatpush1.msra.mxu0 0.0
    %5706 = vmatprep.subr.mxu0 0.0
    %5707 = vmatpush1.msra.mxu0 0.0
    %5708 = vmatprep.subr.mxu0 0.0
    %5709 = vmatpush1.msra.mxu0 0.0
    %5710 = vmatprep.subr.mxu0 0.0
    %5711 = vmatpush1.msra.mxu0 0.0
    %5712 = vmatprep.subr.mxu0 0.0
    %5713 = vmatpush1.msra.mxu0 0.0
    %5714 = vmatprep.subr.mxu0 0.0
    %5715 = vmatpush1.msra.mxu0 0.0
    %5716 = vmatprep.subr.mxu0 0.0
    %5717 = vmatpush1.msra.mxu0 0.0
    %5718 = vmatprep.subr.mxu0 0.0
    %5719 = vmatpush1.msra.mxu0 0.0
    %5720 = vmatprep.mubr.f32.mxu0 0.0
    %5721 = vmatmul.mubr.f32.gmra.mrb[0].mxu0 %v5654
    %v5722 = vpop.f32.mrb[0].mxu0
    %v5723 = vadd.f32 0.0, %v5722
    %v5724 = vpop.f32.mrb[0].mxu0
    %5725 = vdwg.mxu0
    %v5726 = vmul.f32 %v5723, %v5650
    %5728 = vrot.lane.b32.xlu0 %v5560, 8
    %v5729 = vpop.permute.xlu0 %5728
    %5732 = vrot.lane.b32.xlu0 %v5643, 16
    %v5733 = vpop.permute.xlu0 %5732
    %5736 = vrot.lane.b32.xlu0 %v5726, 24
    %v5737 = vpop.permute.xlu0 %5736
    %v5739 = vsel %vm554, %v5477, %v5729
    %v5740 = vsel %vm937, %v5739, %v5733
    %v5741 = vsel %vm1388, %v5740, %v5737
    %5743 = vrot.lane.b32.xlu0 %v5058, 96
    %v5744 = vpop.permute.xlu0 %5743
    %v5746 = vsel %vm554, %v5062, 0
    %v5748 = vsel %vm554, %v5744, 0
    %5750 = vmatprep.subr.mxu0 0.0
    %5751 = vmatpush1.xpose.msra.mxu0 %v5748
    %5752 = vmatprep.subr.mxu0 0.0
    %5753 = vmatpush1.xpose.msra.mxu0 0.0
    %5754 = vmatprep.subr.mxu0 0.0
    %5755 = vmatpush1.xpose.msra.mxu0 0.0
    %5756 = vmatprep.subr.mxu0 0.0
    %5757 = vmatpush1.xpose.msra.mxu0 0.0
    %5758 = vmatprep.subr.mxu0 0.0
    %5759 = vmatpush1.xpose.msra.mxu0 0.0
    %5760 = vmatprep.subr.mxu0 0.0
    %5761 = vmatpush1.xpose.msra.mxu0 0.0
    %5762 = vmatprep.subr.mxu0 0.0
    %5763 = vmatpush1.xpose.msra.mxu0 0.0
    %5764 = vmatprep.subr.mxu0 0.0
    %5765 = vmatpush1.xpose.msra.mxu0 0.0
    %5766 = vmatprep.subr.mxu0 0.0
    %5767 = vmatpush1.xpose.msra.mxu0 0.0
    %5768 = vmatprep.subr.mxu0 0.0
    %5769 = vmatpush1.xpose.msra.mxu0 0.0
    %5770 = vmatprep.subr.mxu0 0.0
    %5771 = vmatpush1.xpose.msra.mxu0 0.0
    %5772 = vmatprep.subr.mxu0 0.0
    %5773 = vmatpush1.xpose.msra.mxu0 0.0
    %5774 = vmatprep.subr.mxu0 0.0
    %5775 = vmatpush1.xpose.msra.mxu0 0.0
    %5776 = vmatprep.subr.mxu0 0.0
    %5777 = vmatpush1.xpose.msra.mxu0 0.0
    %5778 = vmatprep.subr.mxu0 0.0
    %5779 = vmatpush1.xpose.msra.mxu0 0.0
    %5780 = vmatprep.subr.mxu0 0.0
    %5781 = vmatpush1.xpose.msra.mxu0 0.0
    %5782 = vmatprep.subr.mxu0 0.0
    %5783 = vmatpush1.xpose.msra.mxu0 0.0
    %5784 = vmatprep.subr.mxu0 0.0
    %5785 = vmatpush1.xpose.msra.mxu0 0.0
    %5786 = vmatprep.subr.mxu0 0.0
    %5787 = vmatpush1.xpose.msra.mxu0 0.0
    %5788 = vmatprep.subr.mxu0 0.0
    %5789 = vmatpush1.xpose.msra.mxu0 0.0
    %5790 = vmatprep.subr.mxu0 0.0
    %5791 = vmatpush1.xpose.msra.mxu0 0.0
    %5792 = vmatprep.subr.mxu0 0.0
    %5793 = vmatpush1.xpose.msra.mxu0 0.0
    %5794 = vmatprep.subr.mxu0 0.0
    %5795 = vmatpush1.xpose.msra.mxu0 0.0
    %5796 = vmatprep.subr.mxu0 0.0
    %5797 = vmatpush1.xpose.msra.mxu0 0.0
    %5798 = vmatprep.subr.mxu0 0.0
    %5799 = vmatpush1.xpose.msra.mxu0 0.0
    %5800 = vmatprep.subr.mxu0 0.0
    %5801 = vmatpush1.xpose.msra.mxu0 0.0
    %5802 = vmatprep.subr.mxu0 0.0
    %5803 = vmatpush1.xpose.msra.mxu0 0.0
    %5804 = vmatprep.subr.mxu0 0.0
    %5805 = vmatpush1.xpose.msra.mxu0 0.0
    %5806 = vmatprep.subr.mxu0 0.0
    %5807 = vmatpush1.xpose.msra.mxu0 0.0
    %5808 = vmatprep.subr.mxu0 0.0
    %5809 = vmatpush1.xpose.msra.mxu0 0.0
    %5810 = vmatprep.subr.mxu0 0.0
    %5811 = vmatpush1.xpose.msra.mxu0 0.0
    %5812 = vmatprep.subr.mxu0 0.0
    %5813 = vmatpush1.xpose.msra.mxu0 0.0
    %5814 = vmatprep.mubr.f32.mxu0 0.0
    %5815 = vmatmul.mubr.f32.gmra.mrb[0].mxu0 %v5746
    %v5816 = vpop.f32.mrb[0].mxu0
    %v5817 = vadd.f32 0.0, %v5816
    %v5818 = vpop.f32.mrb[0].mxu0
    %5819 = vdwg.mxu0
    %5820 = vrot.lane.b32.xlu0 %v5062, 120
    %v5821 = vpop.permute.xlu0 %5820
    %5822 = vrot.lane.b32.xlu0 %v5058, 88
    %v5823 = vpop.permute.xlu0 %5822
    %v5824 = vsel %vm554, %v5821, 0
    %v5826 = vsel %vm554, %v5823, 0
    %5828 = vmatprep.subr.mxu0 0.0
    %5829 = vmatpush1.xpose.msra.mxu0 %v5826
    %5830 = vmatprep.subr.mxu0 0.0
    %5831 = vmatpush1.xpose.msra.mxu0 0.0
    %5832 = vmatprep.subr.mxu0 0.0
    %5833 = vmatpush1.xpose.msra.mxu0 0.0
    %5834 = vmatprep.subr.mxu0 0.0
    %5835 = vmatpush1.xpose.msra.mxu0 0.0
    %5836 = vmatprep.subr.mxu0 0.0
    %5837 = vmatpush1.xpose.msra.mxu0 0.0
    %5838 = vmatprep.subr.mxu0 0.0
    %5839 = vmatpush1.xpose.msra.mxu0 0.0
    %5840 = vmatprep.subr.mxu0 0.0
    %5841 = vmatpush1.xpose.msra.mxu0 0.0
    %5842 = vmatprep.subr.mxu0 0.0
    %5843 = vmatpush1.xpose.msra.mxu0 0.0
    %5844 = vmatprep.subr.mxu0 0.0
    %5845 = vmatpush1.xpose.msra.mxu0 0.0
    %5846 = vmatprep.subr.mxu0 0.0
    %5847 = vmatpush1.xpose.msra.mxu0 0.0
    %5848 = vmatprep.subr.mxu0 0.0
    %5849 = vmatpush1.xpose.msra.mxu0 0.0
    %5850 = vmatprep.subr.mxu0 0.0
    %5851 = vmatpush1.xpose.msra.mxu0 0.0
    %5852 = vmatprep.subr.mxu0 0.0
    %5853 = vmatpush1.xpose.msra.mxu0 0.0
    %5854 = vmatprep.subr.mxu0 0.0
    %5855 = vmatpush1.xpose.msra.mxu0 0.0
    %5856 = vmatprep.subr.mxu0 0.0
    %5857 = vmatpush1.xpose.msra.mxu0 0.0
    %5858 = vmatprep.subr.mxu0 0.0
    %5859 = vmatpush1.xpose.msra.mxu0 0.0
    %5860 = vmatprep.subr.mxu0 0.0
    %5861 = vmatpush1.xpose.msra.mxu0 0.0
    %5862 = vmatprep.subr.mxu0 0.0
    %5863 = vmatpush1.xpose.msra.mxu0 0.0
    %5864 = vmatprep.subr.mxu0 0.0
    %5865 = vmatpush1.xpose.msra.mxu0 0.0
    %5866 = vmatprep.subr.mxu0 0.0
    %5867 = vmatpush1.xpose.msra.mxu0 0.0
    %5868 = vmatprep.subr.mxu0 0.0
    %5869 = vmatpush1.xpose.msra.mxu0 0.0
    %5870 = vmatprep.subr.mxu0 0.0
    %5871 = vmatpush1.xpose.msra.mxu0 0.0
    %5872 = vmatprep.subr.mxu0 0.0
    %5873 = vmatpush1.xpose.msra.mxu0 0.0
    %5874 = vmatprep.subr.mxu0 0.0
    %5875 = vmatpush1.xpose.msra.mxu0 0.0
    %5876 = vmatprep.subr.mxu0 0.0
    %5877 = vmatpush1.xpose.msra.mxu0 0.0
    %5878 = vmatprep.subr.mxu0 0.0
    %5879 = vmatpush1.xpose.msra.mxu0 0.0
    %5880 = vmatprep.subr.mxu0 0.0
    %5881 = vmatpush1.xpose.msra.mxu0 0.0
    %5882 = vmatprep.subr.mxu0 0.0
    %5883 = vmatpush1.xpose.msra.mxu0 0.0
    %5884 = vmatprep.subr.mxu0 0.0
    %5885 = vmatpush1.xpose.msra.mxu0 0.0
    %5886 = vmatprep.subr.mxu0 0.0
    %5887 = vmatpush1.xpose.msra.mxu0 0.0
    %5888 = vmatprep.subr.mxu0 0.0
    %5889 = vmatpush1.xpose.msra.mxu0 0.0
    %5890 = vmatprep.subr.mxu0 0.0
    %5891 = vmatpush1.xpose.msra.mxu0 0.0
    %5892 = vmatprep.mubr.f32.mxu0 0.0
    %5893 = vmatmul.mubr.f32.gmra.mrb[0].mxu0 %v5824
    %v5894 = vpop.f32.mrb[0].mxu0
    %v5895 = vadd.f32 0.0, %v5894
    %v5896 = vpop.f32.mrb[0].mxu0
    %5897 = vdwg.mxu0
    %5898 = vrot.lane.b32.xlu0 %v5062, 112
    %v5899 = vpop.permute.xlu0 %5898
    %5900 = vrot.lane.b32.xlu0 %v5058, 80
    %v5901 = vpop.permute.xlu0 %5900
    %v5902 = vsel %vm554, %v5899, 0
    %v5904 = vsel %vm554, %v5901, 0
    %5906 = vmatprep.subr.mxu0 0.0
    %5907 = vmatpush1.xpose.msra.mxu0 %v5904
    %5908 = vmatprep.subr.mxu0 0.0
    %5909 = vmatpush1.xpose.msra.mxu0 0.0
    %5910 = vmatprep.subr.mxu0 0.0
    %5911 = vmatpush1.xpose.msra.mxu0 0.0
    %5912 = vmatprep.subr.mxu0 0.0
    %5913 = vmatpush1.xpose.msra.mxu0 0.0
    %5914 = vmatprep.subr.mxu0 0.0
    %5915 = vmatpush1.xpose.msra.mxu0 0.0
    %5916 = vmatprep.subr.mxu0 0.0
    %5917 = vmatpush1.xpose.msra.mxu0 0.0
    %5918 = vmatprep.subr.mxu0 0.0
    %5919 = vmatpush1.xpose.msra.mxu0 0.0
    %5920 = vmatprep.subr.mxu0 0.0
    %5921 = vmatpush1.xpose.msra.mxu0 0.0
    %5922 = vmatprep.subr.mxu0 0.0
    %5923 = vmatpush1.xpose.msra.mxu0 0.0
    %5924 = vmatprep.subr.mxu0 0.0
    %5925 = vmatpush1.xpose.msra.mxu0 0.0
    %5926 = vmatprep.subr.mxu0 0.0
    %5927 = vmatpush1.xpose.msra.mxu0 0.0
    %5928 = vmatprep.subr.mxu0 0.0
    %5929 = vmatpush1.xpose.msra.mxu0 0.0
    %5930 = vmatprep.subr.mxu0 0.0
    %5931 = vmatpush1.xpose.msra.mxu0 0.0
    %5932 = vmatprep.subr.mxu0 0.0
    %5933 = vmatpush1.xpose.msra.mxu0 0.0
    %5934 = vmatprep.subr.mxu0 0.0
    %5935 = vmatpush1.xpose.msra.mxu0 0.0
    %5936 = vmatprep.subr.mxu0 0.0
    %5937 = vmatpush1.xpose.msra.mxu0 0.0
    %5938 = vmatprep.subr.mxu0 0.0
    %5939 = vmatpush1.xpose.msra.mxu0 0.0
    %5940 = vmatprep.subr.mxu0 0.0
    %5941 = vmatpush1.xpose.msra.mxu0 0.0
    %5942 = vmatprep.subr.mxu0 0.0
    %5943 = vmatpush1.xpose.msra.mxu0 0.0
    %5944 = vmatprep.subr.mxu0 0.0
    %5945 = vmatpush1.xpose.msra.mxu0 0.0
    %5946 = vmatprep.subr.mxu0 0.0
    %5947 = vmatpush1.xpose.msra.mxu0 0.0
    %5948 = vmatprep.subr.mxu0 0.0
    %5949 = vmatpush1.xpose.msra.mxu0 0.0
    %5950 = vmatprep.subr.mxu0 0.0
    %5951 = vmatpush1.xpose.msra.mxu0 0.0
    %5952 = vmatprep.subr.mxu0 0.0
    %5953 = vmatpush1.xpose.msra.mxu0 0.0
    %5954 = vmatprep.subr.mxu0 0.0
    %5955 = vmatpush1.xpose.msra.mxu0 0.0
    %5956 = vmatprep.subr.mxu0 0.0
    %5957 = vmatpush1.xpose.msra.mxu0 0.0
    %5958 = vmatprep.subr.mxu0 0.0
    %5959 = vmatpush1.xpose.msra.mxu0 0.0
    %5960 = vmatprep.subr.mxu0 0.0
    %5961 = vmatpush1.xpose.msra.mxu0 0.0
    %5962 = vmatprep.subr.mxu0 0.0
    %5963 = vmatpush1.xpose.msra.mxu0 0.0
    %5964 = vmatprep.subr.mxu0 0.0
    %5965 = vmatpush1.xpose.msra.mxu0 0.0
    %5966 = vmatprep.subr.mxu0 0.0
    %5967 = vmatpush1.xpose.msra.mxu0 0.0
    %5968 = vmatprep.subr.mxu0 0.0
    %5969 = vmatpush1.xpose.msra.mxu0 0.0
    %5970 = vmatprep.mubr.f32.mxu0 0.0
    %5971 = vmatmul.mubr.f32.gmra.mrb[0].mxu0 %v5902
    %v5972 = vpop.f32.mrb[0].mxu0
    %v5973 = vadd.f32 0.0, %v5972
    %v5974 = vpop.f32.mrb[0].mxu0
    %5975 = vdwg.mxu0
    %5976 = vrot.lane.b32.xlu0 %v5062, 104
    %v5977 = vpop.permute.xlu0 %5976
    %5978 = vrot.lane.b32.xlu0 %v5058, 72
    %v5979 = vpop.permute.xlu0 %5978
    %v5980 = vsel %vm554, %v5977, 0
    %v5982 = vsel %vm554, %v5979, 0
    %5984 = vmatprep.subr.mxu0 0.0
    %5985 = vmatpush1.xpose.msra.mxu0 %v5982
    %5986 = vmatprep.subr.mxu0 0.0
    %5987 = vmatpush1.xpose.msra.mxu0 0.0
    %5988 = vmatprep.subr.mxu0 0.0
    %5989 = vmatpush1.xpose.msra.mxu0 0.0
    %5990 = vmatprep.subr.mxu0 0.0
    %5991 = vmatpush1.xpose.msra.mxu0 0.0
    %5992 = vmatprep.subr.mxu0 0.0
    %5993 = vmatpush1.xpose.msra.mxu0 0.0
    %5994 = vmatprep.subr.mxu0 0.0
    %5995 = vmatpush1.xpose.msra.mxu0 0.0
    %5996 = vmatprep.subr.mxu0 0.0
    %5997 = vmatpush1.xpose.msra.mxu0 0.0
    %5998 = vmatprep.subr.mxu0 0.0
    %5999 = vmatpush1.xpose.msra.mxu0 0.0
    %6000 = vmatprep.subr.mxu0 0.0
    %6001 = vmatpush1.xpose.msra.mxu0 0.0
    %6002 = vmatprep.subr.mxu0 0.0
    %6003 = vmatpush1.xpose.msra.mxu0 0.0
    %6004 = vmatprep.subr.mxu0 0.0
    %6005 = vmatpush1.xpose.msra.mxu0 0.0
    %6006 = vmatprep.subr.mxu0 0.0
    %6007 = vmatpush1.xpose.msra.mxu0 0.0
    %6008 = vmatprep.subr.mxu0 0.0
    %6009 = vmatpush1.xpose.msra.mxu0 0.0
    %6010 = vmatprep.subr.mxu0 0.0
    %6011 = vmatpush1.xpose.msra.mxu0 0.0
    %6012 = vmatprep.subr.mxu0 0.0
    %6013 = vmatpush1.xpose.msra.mxu0 0.0
    %6014 = vmatprep.subr.mxu0 0.0
    %6015 = vmatpush1.xpose.msra.mxu0 0.0
    %6016 = vmatprep.subr.mxu0 0.0
    %6017 = vmatpush1.xpose.msra.mxu0 0.0
    %6018 = vmatprep.subr.mxu0 0.0
    %6019 = vmatpush1.xpose.msra.mxu0 0.0
    %6020 = vmatprep.subr.mxu0 0.0
    %6021 = vmatpush1.xpose.msra.mxu0 0.0
    %6022 = vmatprep.subr.mxu0 0.0
    %6023 = vmatpush1.xpose.msra.mxu0 0.0
    %6024 = vmatprep.subr.mxu0 0.0
    %6025 = vmatpush1.xpose.msra.mxu0 0.0
    %6026 = vmatprep.subr.mxu0 0.0
    %6027 = vmatpush1.xpose.msra.mxu0 0.0
    %6028 = vmatprep.subr.mxu0 0.0
    %6029 = vmatpush1.xpose.msra.mxu0 0.0
    %6030 = vmatprep.subr.mxu0 0.0
    %6031 = vmatpush1.xpose.msra.mxu0 0.0
    %6032 = vmatprep.subr.mxu0 0.0
    %6033 = vmatpush1.xpose.msra.mxu0 0.0
    %6034 = vmatprep.subr.mxu0 0.0
    %6035 = vmatpush1.xpose.msra.mxu0 0.0
    %6036 = vmatprep.subr.mxu0 0.0
    %6037 = vmatpush1.xpose.msra.mxu0 0.0
    %6038 = vmatprep.subr.mxu0 0.0
    %6039 = vmatpush1.xpose.msra.mxu0 0.0
    %6040 = vmatprep.subr.mxu0 0.0
    %6041 = vmatpush1.xpose.msra.mxu0 0.0
    %6042 = vmatprep.subr.mxu0 0.0
    %6043 = vmatpush1.xpose.msra.mxu0 0.0
    %6044 = vmatprep.subr.mxu0 0.0
    %6045 = vmatpush1.xpose.msra.mxu0 0.0
    %6046 = vmatprep.subr.mxu0 0.0
    %6047 = vmatpush1.xpose.msra.mxu0 0.0
    %6048 = vmatprep.mubr.f32.mxu0 0.0
    %6049 = vmatmul.mubr.f32.gmra.mrb[0].mxu0 %v5980
    %v6050 = vpop.f32.mrb[0].mxu0
    %v6051 = vadd.f32 0.0, %v6050
    %v6052 = vpop.f32.mrb[0].mxu0
    %6053 = vdwg.mxu0
    %6055 = vrot.lane.b32.xlu0 %v5895, 8
    %v6056 = vpop.permute.xlu0 %6055
    %6059 = vrot.lane.b32.xlu0 %v5973, 16
    %v6060 = vpop.permute.xlu0 %6059
    %6063 = vrot.lane.b32.xlu0 %v6051, 24
    %v6064 = vpop.permute.xlu0 %6063
    %v6066 = vsel %vm554, %v5817, %v6056
    %v6067 = vsel %vm937, %v6066, %v6060
    %v6068 = vsel %vm1388, %v6067, %v6064
    %v6069 = vadd.f32 %v6068, %v4961
    %v6070 = vsel %vm446, %v6069, -inf
    %6071 = vmax.xlane.f32.xlu0 %v6070
    %v6072 = vpop.xlane.xlu0 %6071
    %v6073 = vsub.f32 %v6069, %v6072
    %v6074 = vmul.f32 %v6073, 1.442695
    %v6075 = vpow.pop %v6074
    %v6076 = vsel %vm554, %v6075, 0.0
    %6077 = vadd.xlane.f32.xlu0 %v6076
    %v6078 = vpop.xlane.xlu0 %6077
    %v6079 = vrcp.pop %v6078
    %6080 = vrot.lane.b32.xlu0 %v5058, 64
    %v6081 = vpop.permute.xlu0 %6080
    %v6084 = vsel %vm554, %v6075, 0
    %6086 = vmatprep.subr.mxu0 0.0
    %6087 = vmatpush1.msra.mxu0 %v6081
    %6088 = vmatprep.subr.mxu0 0.0
    %6089 = vmatpush1.msra.mxu0 0.0
    %6090 = vmatprep.subr.mxu0 0.0
    %6091 = vmatpush1.msra.mxu0 0.0
    %6092 = vmatprep.subr.mxu0 0.0
    %6093 = vmatpush1.msra.mxu0 0.0
    %6094 = vmatprep.subr.mxu0 0.0
    %6095 = vmatpush1.msra.mxu0 0.0
    %6096 = vmatprep.subr.mxu0 0.0
    %6097 = vmatpush1.msra.mxu0 0.0
    %6098 = vmatprep.subr.mxu0 0.0
    %6099 = vmatpush1.msra.mxu0 0.0
    %6100 = vmatprep.subr.mxu0 0.0
    %6101 = vmatpush1.msra.mxu0 0.0
    %6102 = vmatprep.subr.mxu0 0.0
    %6103 = vmatpush1.msra.mxu0 0.0
    %6104 = vmatprep.subr.mxu0 0.0
    %6105 = vmatpush1.msra.mxu0 0.0
    %6106 = vmatprep.subr.mxu0 0.0
    %6107 = vmatpush1.msra.mxu0 0.0
    %6108 = vmatprep.subr.mxu0 0.0
    %6109 = vmatpush1.msra.mxu0 0.0
    %6110 = vmatprep.subr.mxu0 0.0
    %6111 = vmatpush1.msra.mxu0 0.0
    %6112 = vmatprep.subr.mxu0 0.0
    %6113 = vmatpush1.msra.mxu0 0.0
    %6114 = vmatprep.subr.mxu0 0.0
    %6115 = vmatpush1.msra.mxu0 0.0
    %6116 = vmatprep.subr.mxu0 0.0
    %6117 = vmatpush1.msra.mxu0 0.0
    %6118 = vmatprep.subr.mxu0 0.0
    %6119 = vmatpush1.msra.mxu0 0.0
    %6120 = vmatprep.subr.mxu0 0.0
    %6121 = vmatpush1.msra.mxu0 0.0
    %6122 = vmatprep.subr.mxu0 0.0
    %6123 = vmatpush1.msra.mxu0 0.0
    %6124 = vmatprep.subr.mxu0 0.0
    %6125 = vmatpush1.msra.mxu0 0.0
    %6126 = vmatprep.subr.mxu0 0.0
    %6127 = vmatpush1.msra.mxu0 0.0
    %6128 = vmatprep.subr.mxu0 0.0
    %6129 = vmatpush1.msra.mxu0 0.0
    %6130 = vmatprep.subr.mxu0 0.0
    %6131 = vmatpush1.msra.mxu0 0.0
    %6132 = vmatprep.subr.mxu0 0.0
    %6133 = vmatpush1.msra.mxu0 0.0
    %6134 = vmatprep.subr.mxu0 0.0
    %6135 = vmatpush1.msra.mxu0 0.0
    %6136 = vmatprep.subr.mxu0 0.0
    %6137 = vmatpush1.msra.mxu0 0.0
    %6138 = vmatprep.subr.mxu0 0.0
    %6139 = vmatpush1.msra.mxu0 0.0
    %6140 = vmatprep.subr.mxu0 0.0
    %6141 = vmatpush1.msra.mxu0 0.0
    %6142 = vmatprep.subr.mxu0 0.0
    %6143 = vmatpush1.msra.mxu0 0.0
    %6144 = vmatprep.subr.mxu0 0.0
    %6145 = vmatpush1.msra.mxu0 0.0
    %6146 = vmatprep.subr.mxu0 0.0
    %6147 = vmatpush1.msra.mxu0 0.0
    %6148 = vmatprep.subr.mxu0 0.0
    %6149 = vmatpush1.msra.mxu0 0.0
    %6150 = vmatprep.mubr.f32.mxu0 0.0
    %6151 = vmatmul.mubr.f32.gmra.mrb[0].mxu0 %v6084
    %v6152 = vpop.f32.mrb[0].mxu0
    %v6153 = vadd.f32 0.0, %v6152
    %v6154 = vpop.f32.mrb[0].mxu0
    %6155 = vdwg.mxu0
    %v6156 = vmul.f32 %v6153, %v6079
    %6157 = vrot.lane.b32.xlu0 %v6075, 120
    %v6158 = vpop.permute.xlu0 %6157
    %v6160 = vsel %vm554, %v6158, 0.0
    %6161 = vadd.xlane.f32.xlu0 %v6160
    %v6162 = vpop.xlane.xlu0 %6161
    %v6163 = vrcp.pop %v6162
    %6164 = vrot.lane.b32.xlu0 %v5058, 56
    %v6165 = vpop.permute.xlu0 %6164
    %v6167 = vsel %vm554, %v6158, 0
    %6169 = vmatprep.subr.mxu0 0.0
    %6170 = vmatpush1.msra.mxu0 %v6165
    %6171 = vmatprep.subr.mxu0 0.0
    %6172 = vmatpush1.msra.mxu0 0.0
    %6173 = vmatprep.subr.mxu0 0.0
    %6174 = vmatpush1.msra.mxu0 0.0
    %6175 = vmatprep.subr.mxu0 0.0
    %6176 = vmatpush1.msra.mxu0 0.0
    %6177 = vmatprep.subr.mxu0 0.0
    %6178 = vmatpush1.msra.mxu0 0.0
    %6179 = vmatprep.subr.mxu0 0.0
    %6180 = vmatpush1.msra.mxu0 0.0
    %6181 = vmatprep.subr.mxu0 0.0
    %6182 = vmatpush1.msra.mxu0 0.0
    %6183 = vmatprep.subr.mxu0 0.0
    %6184 = vmatpush1.msra.mxu0 0.0
    %6185 = vmatprep.subr.mxu0 0.0
    %6186 = vmatpush1.msra.mxu0 0.0
    %6187 = vmatprep.subr.mxu0 0.0
    %6188 = vmatpush1.msra.mxu0 0.0
    %6189 = vmatprep.subr.mxu0 0.0
    %6190 = vmatpush1.msra.mxu0 0.0
    %6191 = vmatprep.subr.mxu0 0.0
    %6192 = vmatpush1.msra.mxu0 0.0
    %6193 = vmatprep.subr.mxu0 0.0
    %6194 = vmatpush1.msra.mxu0 0.0
    %6195 = vmatprep.subr.mxu0 0.0
    %6196 = vmatpush1.msra.mxu0 0.0
    %6197 = vmatprep.subr.mxu0 0.0
    %6198 = vmatpush1.msra.mxu0 0.0
    %6199 = vmatprep.subr.mxu0 0.0
    %6200 = vmatpush1.msra.mxu0 0.0
    %6201 = vmatprep.subr.mxu0 0.0
    %6202 = vmatpush1.msra.mxu0 0.0
    %6203 = vmatprep.subr.mxu0 0.0
    %6204 = vmatpush1.msra.mxu0 0.0
    %6205 = vmatprep.subr.mxu0 0.0
    %6206 = vmatpush1.msra.mxu0 0.0
    %6207 = vmatprep.subr.mxu0 0.0
    %6208 = vmatpush1.msra.mxu0 0.0
    %6209 = vmatprep.subr.mxu0 0.0
    %6210 = vmatpush1.msra.mxu0 0.0
    %6211 = vmatprep.subr.mxu0 0.0
    %6212 = vmatpush1.msra.mxu0 0.0
    %6213 = vmatprep.subr.mxu0 0.0
    %6214 = vmatpush1.msra.mxu0 0.0
    %6215 = vmatprep.subr.mxu0 0.0
    %6216 = vmatpush1.msra.mxu0 0.0
    %6217 = vmatprep.subr.mxu0 0.0
    %6218 = vmatpush1.msra.mxu0 0.0
    %6219 = vmatprep.subr.mxu0 0.0
    %6220 = vmatpush1.msra.mxu0 0.0
    %6221 = vmatprep.subr.mxu0 0.0
    %6222 = vmatpush1.msra.mxu0 0.0
    %6223 = vmatprep.subr.mxu0 0.0
    %6224 = vmatpush1.msra.mxu0 0.0
    %6225 = vmatprep.subr.mxu0 0.0
    %6226 = vmatpush1.msra.mxu0 0.0
    %6227 = vmatprep.subr.mxu0 0.0
    %6228 = vmatpush1.msra.mxu0 0.0
    %6229 = vmatprep.subr.mxu0 0.0
    %6230 = vmatpush1.msra.mxu0 0.0
    %6231 = vmatprep.subr.mxu0 0.0
    %6232 = vmatpush1.msra.mxu0 0.0
    %6233 = vmatprep.mubr.f32.mxu0 0.0
    %6234 = vmatmul.mubr.f32.gmra.mrb[0].mxu0 %v6167
    %v6235 = vpop.f32.mrb[0].mxu0
    %v6236 = vadd.f32 0.0, %v6235
    %v6237 = vpop.f32.mrb[0].mxu0
    %6238 = vdwg.mxu0
    %v6239 = vmul.f32 %v6236, %v6163
    %6240 = vrot.lane.b32.xlu0 %v6075, 112
    %v6241 = vpop.permute.xlu0 %6240
    %v6243 = vsel %vm554, %v6241, 0.0
    %6244 = vadd.xlane.f32.xlu0 %v6243
    %v6245 = vpop.xlane.xlu0 %6244
    %v6246 = vrcp.pop %v6245
    %6247 = vrot.lane.b32.xlu0 %v5058, 48
    %v6248 = vpop.permute.xlu0 %6247
    %v6250 = vsel %vm554, %v6241, 0
    %6252 = vmatprep.subr.mxu0 0.0
    %6253 = vmatpush1.msra.mxu0 %v6248
    %6254 = vmatprep.subr.mxu0 0.0
    %6255 = vmatpush1.msra.mxu0 0.0
    %6256 = vmatprep.subr.mxu0 0.0
    %6257 = vmatpush1.msra.mxu0 0.0
    %6258 = vmatprep.subr.mxu0 0.0
    %6259 = vmatpush1.msra.mxu0 0.0
    %6260 = vmatprep.subr.mxu0 0.0
    %6261 = vmatpush1.msra.mxu0 0.0
    %6262 = vmatprep.subr.mxu0 0.0
    %6263 = vmatpush1.msra.mxu0 0.0
    %6264 = vmatprep.subr.mxu0 0.0
    %6265 = vmatpush1.msra.mxu0 0.0
    %6266 = vmatprep.subr.mxu0 0.0
    %6267 = vmatpush1.msra.mxu0 0.0
    %6268 = vmatprep.subr.mxu0 0.0
    %6269 = vmatpush1.msra.mxu0 0.0
    %6270 = vmatprep.subr.mxu0 0.0
    %6271 = vmatpush1.msra.mxu0 0.0
    %6272 = vmatprep.subr.mxu0 0.0
    %6273 = vmatpush1.msra.mxu0 0.0
    %6274 = vmatprep.subr.mxu0 0.0
    %6275 = vmatpush1.msra.mxu0 0.0
    %6276 = vmatprep.subr.mxu0 0.0
    %6277 = vmatpush1.msra.mxu0 0.0
    %6278 = vmatprep.subr.mxu0 0.0
    %6279 = vmatpush1.msra.mxu0 0.0
    %6280 = vmatprep.subr.mxu0 0.0
    %6281 = vmatpush1.msra.mxu0 0.0
    %6282 = vmatprep.subr.mxu0 0.0
    %6283 = vmatpush1.msra.mxu0 0.0
    %6284 = vmatprep.subr.mxu0 0.0
    %6285 = vmatpush1.msra.mxu0 0.0
    %6286 = vmatprep.subr.mxu0 0.0
    %6287 = vmatpush1.msra.mxu0 0.0
    %6288 = vmatprep.subr.mxu0 0.0
    %6289 = vmatpush1.msra.mxu0 0.0
    %6290 = vmatprep.subr.mxu0 0.0
    %6291 = vmatpush1.msra.mxu0 0.0
    %6292 = vmatprep.subr.mxu0 0.0
    %6293 = vmatpush1.msra.mxu0 0.0
    %6294 = vmatprep.subr.mxu0 0.0
    %6295 = vmatpush1.msra.mxu0 0.0
    %6296 = vmatprep.subr.mxu0 0.0
    %6297 = vmatpush1.msra.mxu0 0.0
    %6298 = vmatprep.subr.mxu0 0.0
    %6299 = vmatpush1.msra.mxu0 0.0
    %6300 = vmatprep.subr.mxu0 0.0
    %6301 = vmatpush1.msra.mxu0 0.0
    %6302 = vmatprep.subr.mxu0 0.0
    %6303 = vmatpush1.msra.mxu0 0.0
    %6304 = vmatprep.subr.mxu0 0.0
    %6305 = vmatpush1.msra.mxu0 0.0
    %6306 = vmatprep.subr.mxu0 0.0
    %6307 = vmatpush1.msra.mxu0 0.0
    %6308 = vmatprep.subr.mxu0 0.0
    %6309 = vmatpush1.msra.mxu0 0.0
    %6310 = vmatprep.subr.mxu0 0.0
    %6311 = vmatpush1.msra.mxu0 0.0
    %6312 = vmatprep.subr.mxu0 0.0
    %6313 = vmatpush1.msra.mxu0 0.0
    %6314 = vmatprep.subr.mxu0 0.0
    %6315 = vmatpush1.msra.mxu0 0.0
    %6316 = vmatprep.mubr.f32.mxu0 0.0
    %6317 = vmatmul.mubr.f32.gmra.mrb[0].mxu0 %v6250
    %v6318 = vpop.f32.mrb[0].mxu0
    %v6319 = vadd.f32 0.0, %v6318
    %v6320 = vpop.f32.mrb[0].mxu0
    %6321 = vdwg.mxu0
    %v6322 = vmul.f32 %v6319, %v6246
    %6323 = vrot.lane.b32.xlu0 %v6075, 104
    %v6324 = vpop.permute.xlu0 %6323
    %v6326 = vsel %vm554, %v6324, 0.0
    %6327 = vadd.xlane.f32.xlu0 %v6326
    %v6328 = vpop.xlane.xlu0 %6327
    %v6329 = vrcp.pop %v6328
    %6330 = vrot.lane.b32.xlu0 %v5058, 40
    %v6331 = vpop.permute.xlu0 %6330
    %v6333 = vsel %vm554, %v6324, 0
    %6335 = vmatprep.subr.mxu0 0.0
    %6336 = vmatpush1.msra.mxu0 %v6331
    %6337 = vmatprep.subr.mxu0 0.0
    %6338 = vmatpush1.msra.mxu0 0.0
    %6339 = vmatprep.subr.mxu0 0.0
    %6340 = vmatpush1.msra.mxu0 0.0
    %6341 = vmatprep.subr.mxu0 0.0
    %6342 = vmatpush1.msra.mxu0 0.0
    %6343 = vmatprep.subr.mxu0 0.0
    %6344 = vmatpush1.msra.mxu0 0.0
    %6345 = vmatprep.subr.mxu0 0.0
    %6346 = vmatpush1.msra.mxu0 0.0
    %6347 = vmatprep.subr.mxu0 0.0
    %6348 = vmatpush1.msra.mxu0 0.0
    %6349 = vmatprep.subr.mxu0 0.0
    %6350 = vmatpush1.msra.mxu0 0.0
    %6351 = vmatprep.subr.mxu0 0.0
    %6352 = vmatpush1.msra.mxu0 0.0
    %6353 = vmatprep.subr.mxu0 0.0
    %6354 = vmatpush1.msra.mxu0 0.0
    %6355 = vmatprep.subr.mxu0 0.0
    %6356 = vmatpush1.msra.mxu0 0.0
    %6357 = vmatprep.subr.mxu0 0.0
    %6358 = vmatpush1.msra.mxu0 0.0
    %6359 = vmatprep.subr.mxu0 0.0
    %6360 = vmatpush1.msra.mxu0 0.0
    %6361 = vmatprep.subr.mxu0 0.0
    %6362 = vmatpush1.msra.mxu0 0.0
    %6363 = vmatprep.subr.mxu0 0.0
    %6364 = vmatpush1.msra.mxu0 0.0
    %6365 = vmatprep.subr.mxu0 0.0
    %6366 = vmatpush1.msra.mxu0 0.0
    %6367 = vmatprep.subr.mxu0 0.0
    %6368 = vmatpush1.msra.mxu0 0.0
    %6369 = vmatprep.subr.mxu0 0.0
    %6370 = vmatpush1.msra.mxu0 0.0
    %6371 = vmatprep.subr.mxu0 0.0
    %6372 = vmatpush1.msra.mxu0 0.0
    %6373 = vmatprep.subr.mxu0 0.0
    %6374 = vmatpush1.msra.mxu0 0.0
    %6375 = vmatprep.subr.mxu0 0.0
    %6376 = vmatpush1.msra.mxu0 0.0
    %6377 = vmatprep.subr.mxu0 0.0
    %6378 = vmatpush1.msra.mxu0 0.0
    %6379 = vmatprep.subr.mxu0 0.0
    %6380 = vmatpush1.msra.mxu0 0.0
    %6381 = vmatprep.subr.mxu0 0.0
    %6382 = vmatpush1.msra.mxu0 0.0
    %6383 = vmatprep.subr.mxu0 0.0
    %6384 = vmatpush1.msra.mxu0 0.0
    %6385 = vmatprep.subr.mxu0 0.0
    %6386 = vmatpush1.msra.mxu0 0.0
    %6387 = vmatprep.subr.mxu0 0.0
    %6388 = vmatpush1.msra.mxu0 0.0
    %6389 = vmatprep.subr.mxu0 0.0
    %6390 = vmatpush1.msra.mxu0 0.0
    %6391 = vmatprep.subr.mxu0 0.0
    %6392 = vmatpush1.msra.mxu0 0.0
    %6393 = vmatprep.subr.mxu0 0.0
    %6394 = vmatpush1.msra.mxu0 0.0
    %6395 = vmatprep.subr.mxu0 0.0
    %6396 = vmatpush1.msra.mxu0 0.0
    %6397 = vmatprep.subr.mxu0 0.0
    %6398 = vmatpush1.msra.mxu0 0.0
    %6399 = vmatprep.mubr.f32.mxu0 0.0
    %6400 = vmatmul.mubr.f32.gmra.mrb[0].mxu0 %v6333
    %v6401 = vpop.f32.mrb[0].mxu0
    %v6402 = vadd.f32 0.0, %v6401
    %v6403 = vpop.f32.mrb[0].mxu0
    %6404 = vdwg.mxu0
    %v6405 = vmul.f32 %v6402, %v6329
    %6407 = vrot.lane.b32.xlu0 %v6239, 8
    %v6408 = vpop.permute.xlu0 %6407
    %6411 = vrot.lane.b32.xlu0 %v6322, 16
    %v6412 = vpop.permute.xlu0 %6411
    %6415 = vrot.lane.b32.xlu0 %v6405, 24
    %v6416 = vpop.permute.xlu0 %6415
    %v6418 = vsel %vm554, %v6156, %v6408
    %v6419 = vsel %vm937, %v6418, %v6412
    %v6420 = vsel %vm1388, %v6419, %v6416
    %v6422 = vlaneseq
    %v6423 = vshrl.u32 %v6422, 7
    %v6424 = vsub.s32 0, %v6423
    %v6425 = vrot.slane %v4973, %v6424
    %v6428 = vsel %vm446, %v5741, 0
    %v6431 = vsel %vm446, %v6420, 0
    %6433 = vmatprep.subr.mxu0 0.0
    %6434 = vmatpush1.msra.mxu0 %v4969
    %6435 = vmatprep.subr.mxu0 0.0
    %6436 = vmatpush1.msra.mxu0 %v4970
    %6437 = vmatprep.subr.mxu0 0.0
    %6438 = vmatpush1.msra.mxu0 %v4971
    %6439 = vmatprep.subr.mxu0 0.0
    %6440 = vmatpush1.msra.mxu0 %v4972
    %6441 = vmatprep.subr.mxu0 0.0
    %6442 = vmatpush1.msra.mxu0 0.0
    %6443 = vmatprep.subr.mxu0 0.0
    %6444 = vmatpush1.msra.mxu0 0.0
    %6445 = vmatprep.subr.mxu0 0.0
    %6446 = vmatpush1.msra.mxu0 0.0
    %6447 = vmatprep.subr.mxu0 0.0
    %6448 = vmatpush1.msra.mxu0 0.0
    %6449 = vmatprep.subr.mxu0 0.0
    %6450 = vmatpush1.msra.mxu0 0.0
    %6451 = vmatprep.subr.mxu0 0.0
    %6452 = vmatpush1.msra.mxu0 0.0
    %6453 = vmatprep.subr.mxu0 0.0
    %6454 = vmatpush1.msra.mxu0 0.0
    %6455 = vmatprep.subr.mxu0 0.0
    %6456 = vmatpush1.msra.mxu0 0.0
    %6457 = vmatprep.subr.mxu0 0.0
    %6458 = vmatpush1.msra.mxu0 0.0
    %6459 = vmatprep.subr.mxu0 0.0
    %6460 = vmatpush1.msra.mxu0 0.0
    %6461 = vmatprep.subr.mxu0 0.0
    %6462 = vmatpush1.msra.mxu0 0.0
    %6463 = vmatprep.subr.mxu0 0.0
    %6464 = vmatpush1.msra.mxu0 0.0
    %6465 = vmatprep.subr.mxu0 0.0
    %6466 = vmatpush1.msra.mxu0 0.0
    %6467 = vmatprep.subr.mxu0 0.0
    %6468 = vmatpush1.msra.mxu0 0.0
    %6469 = vmatprep.subr.mxu0 0.0
    %6470 = vmatpush1.msra.mxu0 0.0
    %6471 = vmatprep.subr.mxu0 0.0
    %6472 = vmatpush1.msra.mxu0 0.0
    %6473 = vmatprep.subr.mxu0 0.0
    %6474 = vmatpush1.msra.mxu0 0.0
    %6475 = vmatprep.subr.mxu0 0.0
    %6476 = vmatpush1.msra.mxu0 0.0
    %6477 = vmatprep.subr.mxu0 0.0
    %6478 = vmatpush1.msra.mxu0 0.0
    %6479 = vmatprep.subr.mxu0 0.0
    %6480 = vmatpush1.msra.mxu0 0.0
    %6481 = vmatprep.subr.mxu0 0.0
    %6482 = vmatpush1.msra.mxu0 0.0
    %6483 = vmatprep.subr.mxu0 0.0
    %6484 = vmatpush1.msra.mxu0 0.0
    %6485 = vmatprep.subr.mxu0 0.0
    %6486 = vmatpush1.msra.mxu0 0.0
    %6487 = vmatprep.subr.mxu0 0.0
    %6488 = vmatpush1.msra.mxu0 0.0
    %6489 = vmatprep.subr.mxu0 0.0
    %6490 = vmatpush1.msra.mxu0 0.0
    %6491 = vmatprep.subr.mxu0 0.0
    %6492 = vmatpush1.msra.mxu0 0.0
    %6493 = vmatprep.subr.mxu0 0.0
    %6494 = vmatpush1.msra.mxu0 0.0
    %6495 = vmatprep.subr.mxu0 0.0
    %6496 = vmatpush1.msra.mxu0 0.0
    %6497 = vmatprep.mubr.f32.mxu0 0.0
    %6498 = vmatmul.mubr.f32.gmra.mrb[0].mxu0 %v6428
    %v6499 = vpop.f32.mrb[0].mxu0
    %v6500 = vadd.f32 %v6425, %v6499
    %v6501 = vpop.f32.mrb[0].mxu0
    %6502 = vmatprep.mubr.f32.mxu0 0.0
    %6503 = vmatmul.mubr.f32.gmra.mrb[0].mxu0 %v6431
    %v6504 = vpop.f32.mrb[0].mxu0
    %v6505 = vadd.f32 %v6425, %v6504
    %v6506 = vpop.f32.mrb[0].mxu0
    %6507 = vdwg.mxu0
    %v6508 = vadd.f32 %v4946, %v6500
    %v6509 = vadd.f32 %v4947, %v6505
    %v6510 = vsel %vm446, %v6508, 0.0
    %6511 = vadd.xlane.f32.xlu0 %v6510
    %v6512 = vpop.xlane.xlu0 %6511
    %v6513 = vsel %vm446, %v6509, 0.0
    %6514 = vadd.xlane.f32.xlu0 %v6513
    %v6515 = vpop.xlane.xlu0 %6514
    %v6516 = vmul.f32 %v6512, %v2348
    %v6517 = vmul.f32 %v6515, %v2348
    %v6518 = vsub.f32 %v6508, %v6516
    %v6519 = vsub.f32 %v6509, %v6517
    %v6520 = vmul.f32 %v6518, %v6518
    %v6521 = vmul.f32 %v6519, %v6519
    %v6522 = vsel %vm446, %v6520, 0.0
    %6523 = vadd.xlane.f32.xlu0 %v6522
    %v6524 = vpop.xlane.xlu0 %6523
    %v6525 = vsel %vm446, %v6521, 0.0
    %6526 = vadd.xlane.f32.xlu0 %v6525
    %v6527 = vpop.xlane.xlu0 %6526
    %v6528 = vmul.f32 %v6524, %v2348
    %v6529 = vmul.f32 %v6527, %v2348
    %v6530 = vadd.f32 %v6528, 1e-05
    %v6531 = vadd.f32 %v6529, 1e-05
    %v6532 = vrsqrt.pop %v6530
    %v6533 = vrsqrt.pop %v6531
    %v6534 = vmul.f32 %v6518, %v6532
    %v6535 = vmul.f32 %v6519, %v6533
    %v6536 = vlaneseq
    %v6537 = vshrl.u32 %v6536, 7
    %v6538 = vsub.s32 0, %v6537
    %v6539 = vrot.slane %v4963, %v6538
    %v6540 = vmul.f32 %v6534, %v6539
    %v6541 = vmul.f32 %v6535, %v6539
    %v6542 = vlaneseq
    %v6543 = vshrl.u32 %v6542, 7
    %v6544 = vsub.s32 1, %v6543
    %v6545 = vrot.slane %v4963, %v6544
    %v6546 = vadd.f32 %v6540, %v6545
    %v6547 = vadd.f32 %v6541, %v6545
    %v6548 = vld [vmem:[%s19] sm:$0xff]
    %v6549 = vld [vmem:[%s19 + $0x8] sm:$0xff]
    %v6550 = vld [vmem:[%s19 + $0x10] sm:$0xff]
    %v6551 = vld [vmem:[%s19 + $0x18] sm:$0xff]
    %v6552 = vld [vmem:[#allocation20] sm:$0x1]
    %v6554 = vlaneseq
    %v6555 = vshrl.u32 %v6554, 7
    %v6556 = vsub.s32 0, %v6555
    %v6557 = vrot.slane %v6552, %v6556
    %v6560 = vsel %vm446, %v4945, 0
    %6562 = vmatprep.subr.mxu0 0.0
    %6563 = vmatpush1.msra.mxu0 %v6548
    %6564 = vmatprep.subr.mxu0 0.0
    %6565 = vmatpush1.msra.mxu0 %v6549
    %6566 = vmatprep.subr.mxu0 0.0
    %6567 = vmatpush1.msra.mxu0 %v6550
    %6568 = vmatprep.subr.mxu0 0.0
    %6569 = vmatpush1.msra.mxu0 %v6551
    %6570 = vmatprep.subr.mxu0 0.0
    %6571 = vmatpush1.msra.mxu0 0.0
    %6572 = vmatprep.subr.mxu0 0.0
    %6573 = vmatpush1.msra.mxu0 0.0
    %6574 = vmatprep.subr.mxu0 0.0
    %6575 = vmatpush1.msra.mxu0 0.0
    %6576 = vmatprep.subr.mxu0 0.0
    %6577 = vmatpush1.msra.mxu0 0.0
    %6578 = vmatprep.subr.mxu0 0.0
    %6579 = vmatpush1.msra.mxu0 0.0
    %6580 = vmatprep.subr.mxu0 0.0
    %6581 = vmatpush1.msra.mxu0 0.0
    %6582 = vmatprep.subr.mxu0 0.0
    %6583 = vmatpush1.msra.mxu0 0.0
    %6584 = vmatprep.subr.mxu0 0.0
    %6585 = vmatpush1.msra.mxu0 0.0
    %6586 = vmatprep.subr.mxu0 0.0
    %6587 = vmatpush1.msra.mxu0 0.0
    %6588 = vmatprep.subr.mxu0 0.0
    %6589 = vmatpush1.msra.mxu0 0.0
    %6590 = vmatprep.subr.mxu0 0.0
    %6591 = vmatpush1.msra.mxu0 0.0
    %6592 = vmatprep.subr.mxu0 0.0
    %6593 = vmatpush1.msra.mxu0 0.0
    %6594 = vmatprep.subr.mxu0 0.0
    %6595 = vmatpush1.msra.mxu0 0.0
    %6596 = vmatprep.subr.mxu0 0.0
    %6597 = vmatpush1.msra.mxu0 0.0
    %6598 = vmatprep.subr.mxu0 0.0
    %6599 = vmatpush1.msra.mxu0 0.0
    %6600 = vmatprep.subr.mxu0 0.0
    %6601 = vmatpush1.msra.mxu0 0.0
    %6602 = vmatprep.subr.mxu0 0.0
    %6603 = vmatpush1.msra.mxu0 0.0
    %6604 = vmatprep.subr.mxu0 0.0
    %6605 = vmatpush1.msra.mxu0 0.0
    %6606 = vmatprep.subr.mxu0 0.0
    %6607 = vmatpush1.msra.mxu0 0.0
    %6608 = vmatprep.subr.mxu0 0.0
    %6609 = vmatpush1.msra.mxu0 0.0
    %6610 = vmatprep.subr.mxu0 0.0
    %6611 = vmatpush1.msra.mxu0 0.0
    %6612 = vmatprep.subr.mxu0 0.0
    %6613 = vmatpush1.msra.mxu0 0.0
    %6614 = vmatprep.subr.mxu0 0.0
    %6615 = vmatpush1.msra.mxu0 0.0
    %6616 = vmatprep.subr.mxu0 0.0
    %6617 = vmatpush1.msra.mxu0 0.0
    %6618 = vmatprep.subr.mxu0 0.0
    %6619 = vmatpush1.msra.mxu0 0.0
    %6620 = vmatprep.subr.mxu0 0.0
    %6621 = vmatpush1.msra.mxu0 0.0
    %6622 = vmatprep.subr.mxu0 0.0
    %6623 = vmatpush1.msra.mxu0 0.0
    %6624 = vmatprep.subr.mxu0 0.0
    %6625 = vmatpush1.msra.mxu0 0.0
    %6626 = vmatprep.mubr.f32.mxu0 0.0
    %6627 = vmatmul.mubr.f32.gmra.mrb[0].mxu0 %v6560
    %v6628 = vpop.f32.mrb[0].mxu0
    %v6629 = vadd.f32 %v6557, %v6628
    %v6630 = vpop.f32.mrb[0].mxu0
    %6631 = vdwg.mxu0
    %v6632 = vlaneseq
    %v6633 = vshrl.u32 %v6632, 7
    %v6634 = vsub.s32 0, %v6633
    %v6635 = vrot.slane %v6629, %v6634
    %v6636 = vlaneseq
    %v6637 = vshrl.u32 %v6636, 7
    %v6638 = vsub.s32 1, %v6637
    %v6639 = vrot.slane %v6629, %v6638
    %v6640 = vadd.f32 %v6546, %v6635
    %v6641 = vadd.f32 %v6547, %v6639
    %v6642 = vsel %vm446, %v6640, 0.0
    %6643 = vadd.xlane.f32.xlu0 %v6642
    %v6644 = vpop.xlane.xlu0 %6643
    %v6645 = vsel %vm446, %v6641, 0.0
    %6646 = vadd.xlane.f32.xlu0 %v6645
    %v6647 = vpop.xlane.xlu0 %6646
    %v6648 = vmul.f32 %v6644, %v2348
    %v6649 = vmul.f32 %v6647, %v2348
    %v6650 = vsub.f32 %v6640, %v6648
    %v6651 = vsub.f32 %v6641, %v6649
    %v6652 = vmul.f32 %v6650, %v6650
    %v6653 = vmul.f32 %v6651, %v6651
    %v6654 = vsel %vm446, %v6652, 0.0
    %6655 = vadd.xlane.f32.xlu0 %v6654
    %v6656 = vpop.xlane.xlu0 %6655
    %v6657 = vsel %vm446, %v6653, 0.0
    %6658 = vadd.xlane.f32.xlu0 %v6657
    %v6659 = vpop.xlane.xlu0 %6658
    %v6660 = vmul.f32 %v6656, %v2348
    %v6661 = vmul.f32 %v6659, %v2348
    %v6662 = vadd.f32 %v6660, 1e-05
    %v6663 = vadd.f32 %v6661, 1e-05
    %v6664 = vrsqrt.pop %v6662
    %v6665 = vrsqrt.pop %v6663
    %v6666 = vmul.f32 %v6650, %v6664
    %v6667 = vmul.f32 %v6651, %v6665
    %v6668 = vlaneseq
    %v6669 = vshrl.u32 %v6668, 7
    %v6670 = vsub.s32 2, %v6669
    %v6671 = vrot.slane %v4963, %v6670
    %v6672 = vmul.f32 %v6666, %v6671
    %v6673 = vmul.f32 %v6667, %v6671
    %v6674 = vlaneseq
    %v6675 = vshrl.u32 %v6674, 7
    %v6676 = vsub.s32 3, %v6675
    %v6677 = vrot.slane %v4963, %v6676
    %v6678 = vadd.f32 %v6672, %v6677
    %v6679 = vadd.f32 %v6673, %v6677
    %v6680 = vld [vmem:[#allocation22] sm:$0xff]
    %v6681 = vld [vmem:[#allocation22 + $0x8] sm:$0xff]
    %v6682 = vld [vmem:[#allocation22 + $0x10] sm:$0xff]
    %v6683 = vld [vmem:[#allocation22 + $0x18] sm:$0xff]
    %v6684 = vld [vmem:[#allocation23] sm:$0x1]
    %v6685 = vld [vmem:[%s23] sm:$0xff]
    %v6686 = vld [vmem:[%s23 + $0x8] sm:$0xff]
    %v6687 = vld [vmem:[%s23 + $0x10] sm:$0xff]
    %v6688 = vld [vmem:[%s23 + $0x18] sm:$0xff]
    %v6689 = vld [vmem:[%s23 + $0x20] sm:$0xff]
    %v6690 = vld [vmem:[%s23 + $0x28] sm:$0xff]
    %v6691 = vld [vmem:[%s23 + $0x30] sm:$0xff]
    %v6692 = vld [vmem:[%s23 + $0x38] sm:$0xff]
    %v6693 = vld [vmem:[#allocation25] sm:$0x1]
    %v6695 = vlaneseq
    %v6696 = vshrl.u32 %v6695, 7
    %v6697 = vsub.s32 0, %v6696
    %v6698 = vrot.slane %v6684, %v6697
    %v6701 = vsel %vm446, %v6678, 0
    %v6704 = vsel %vm446, %v6679, 0
    %6706 = vmatprep.subr.mxu0 0.0
    %6707 = vmatpush1.msra.mxu0 %v6680
    %6708 = vmatprep.subr.mxu0 0.0
    %6709 = vmatpush1.msra.mxu0 %v6681
    %6710 = vmatprep.subr.mxu0 0.0
    %6711 = vmatpush1.msra.mxu0 %v6682
    %6712 = vmatprep.subr.mxu0 0.0
    %6713 = vmatpush1.msra.mxu0 %v6683
    %6714 = vmatprep.subr.mxu0 0.0
    %6715 = vmatpush1.msra.mxu0 0.0
    %6716 = vmatprep.subr.mxu0 0.0
    %6717 = vmatpush1.msra.mxu0 0.0
    %6718 = vmatprep.subr.mxu0 0.0
    %6719 = vmatpush1.msra.mxu0 0.0
    %6720 = vmatprep.subr.mxu0 0.0
    %6721 = vmatpush1.msra.mxu0 0.0
    %6722 = vmatprep.subr.mxu0 0.0
    %6723 = vmatpush1.msra.mxu0 0.0
    %6724 = vmatprep.subr.mxu0 0.0
    %6725 = vmatpush1.msra.mxu0 0.0
    %6726 = vmatprep.subr.mxu0 0.0
    %6727 = vmatpush1.msra.mxu0 0.0
    %6728 = vmatprep.subr.mxu0 0.0
    %6729 = vmatpush1.msra.mxu0 0.0
    %6730 = vmatprep.subr.mxu0 0.0
    %6731 = vmatpush1.msra.mxu0 0.0
    %6732 = vmatprep.subr.mxu0 0.0
    %6733 = vmatpush1.msra.mxu0 0.0
    %6734 = vmatprep.subr.mxu0 0.0
    %6735 = vmatpush1.msra.mxu0 0.0
    %6736 = vmatprep.subr.mxu0 0.0
    %6737 = vmatpush1.msra.mxu0 0.0
    %6738 = vmatprep.subr.mxu0 0.0
    %6739 = vmatpush1.msra.mxu0 0.0
    %6740 = vmatprep.subr.mxu0 0.0
    %6741 = vmatpush1.msra.mxu0 0.0
    %6742 = vmatprep.subr.mxu0 0.0
    %6743 = vmatpush1.msra.mxu0 0.0
    %6744 = vmatprep.subr.mxu0 0.0
    %6745 = vmatpush1.msra.mxu0 0.0
    %6746 = vmatprep.subr.mxu0 0.0
    %6747 = vmatpush1.msra.mxu0 0.0
    %6748 = vmatprep.subr.mxu0 0.0
    %6749 = vmatpush1.msra.mxu0 0.0
    %6750 = vmatprep.subr.mxu0 0.0
    %6751 = vmatpush1.msra.mxu0 0.0
    %6752 = vmatprep.subr.mxu0 0.0
    %6753 = vmatpush1.msra.mxu0 0.0
    %6754 = vmatprep.subr.mxu0 0.0
    %6755 = vmatpush1.msra.mxu0 0.0
    %6756 = vmatprep.subr.mxu0 0.0
    %6757 = vmatpush1.msra.mxu0 0.0
    %6758 = vmatprep.subr.mxu0 0.0
    %6759 = vmatpush1.msra.mxu0 0.0
    %6760 = vmatprep.subr.mxu0 0.0
    %6761 = vmatpush1.msra.mxu0 0.0
    %6762 = vmatprep.subr.mxu0 0.0
    %6763 = vmatpush1.msra.mxu0 0.0
    %6764 = vmatprep.subr.mxu0 0.0
    %6765 = vmatpush1.msra.mxu0 0.0
    %6766 = vmatprep.subr.mxu0 0.0
    %6767 = vmatpush1.msra.mxu0 0.0
    %6768 = vmatprep.subr.mxu0 0.0
    %6769 = vmatpush1.msra.mxu0 0.0
    %6770 = vmatprep.mubr.f32.mxu0 0.0
    %6771 = vmatmul.mubr.f32.gmra.mrb[0].mxu0 %v6701
    %v6772 = vpop.f32.mrb[0].mxu0
    %v6773 = vadd.f32 %v6698, %v6772
    %v6774 = vpop.f32.mrb[0].mxu0
    %6775 = vmatprep.mubr.f32.mxu0 0.0
    %6776 = vmatmul.mubr.f32.gmra.mrb[0].mxu0 %v6704
    %v6777 = vpop.f32.mrb[0].mxu0
    %v6778 = vadd.f32 %v6698, %v6777
    %v6779 = vpop.f32.mrb[0].mxu0
    %6780 = vdwg.mxu0
    %v6781 = vmax.f32 %v6773, 0.0
    %v6782 = vmax.f32 %v6778, 0.0
    %v6784 = vlaneseq
    %v6785 = vshrl.u32 %v6784, 7
    %v6786 = vsub.s32 0, %v6785
    %v6787 = vrot.slane %v6693, %v6786
    %v6790 = vsel %vm947, %v6781, 0
    %v6793 = vsel %vm947, %v6782, 0
    %6795 = vmatprep.subr.mxu0 0.0
    %6796 = vmatpush1.msra.mxu0 %v6685
    %6797 = vmatprep.subr.mxu0 0.0
    %6798 = vmatpush1.msra.mxu0 %v6686
    %6799 = vmatprep.subr.mxu0 0.0
    %6800 = vmatpush1.msra.mxu0 %v6687
    %6801 = vmatprep.subr.mxu0 0.0
    %6802 = vmatpush1.msra.mxu0 %v6688
    %6803 = vmatprep.subr.mxu0 0.0
    %6804 = vmatpush1.msra.mxu0 %v6689
    %6805 = vmatprep.subr.mxu0 0.0
    %6806 = vmatpush1.msra.mxu0 %v6690
    %6807 = vmatprep.subr.mxu0 0.0
    %6808 = vmatpush1.msra.mxu0 %v6691
    %6809 = vmatprep.subr.mxu0 0.0
    %6810 = vmatpush1.msra.mxu0 %v6692
    %6811 = vmatprep.subr.mxu0 0.0
    %6812 = vmatpush1.msra.mxu0 0.0
    %6813 = vmatprep.subr.mxu0 0.0
    %6814 = vmatpush1.msra.mxu0 0.0
    %6815 = vmatprep.subr.mxu0 0.0
    %6816 = vmatpush1.msra.mxu0 0.0
    %6817 = vmatprep.subr.mxu0 0.0
    %6818 = vmatpush1.msra.mxu0 0.0
    %6819 = vmatprep.subr.mxu0 0.0
    %6820 = vmatpush1.msra.mxu0 0.0
    %6821 = vmatprep.subr.mxu0 0.0
    %6822 = vmatpush1.msra.mxu0 0.0
    %6823 = vmatprep.subr.mxu0 0.0
    %6824 = vmatpush1.msra.mxu0 0.0
    %6825 = vmatprep.subr.mxu0 0.0
    %6826 = vmatpush1.msra.mxu0 0.0
    %6827 = vmatprep.subr.mxu0 0.0
    %6828 = vmatpush1.msra.mxu0 0.0
    %6829 = vmatprep.subr.mxu0 0.0
    %6830 = vmatpush1.msra.mxu0 0.0
    %6831 = vmatprep.subr.mxu0 0.0
    %6832 = vmatpush1.msra.mxu0 0.0
    %6833 = vmatprep.subr.mxu0 0.0
    %6834 = vmatpush1.msra.mxu0 0.0
    %6835 = vmatprep.subr.mxu0 0.0
    %6836 = vmatpush1.msra.mxu0 0.0
    %6837 = vmatprep.subr.mxu0 0.0
    %6838 = vmatpush1.msra.mxu0 0.0
    %6839 = vmatprep.subr.mxu0 0.0
    %6840 = vmatpush1.msra.mxu0 0.0
    %6841 = vmatprep.subr.mxu0 0.0
    %6842 = vmatpush1.msra.mxu0 0.0
    %6843 = vmatprep.subr.mxu0 0.0
    %6844 = vmatpush1.msra.mxu0 0.0
    %6845 = vmatprep.subr.mxu0 0.0
    %6846 = vmatpush1.msra.mxu0 0.0
    %6847 = vmatprep.subr.mxu0 0.0
    %6848 = vmatpush1.msra.mxu0 0.0
    %6849 = vmatprep.subr.mxu0 0.0
    %6850 = vmatpush1.msra.mxu0 0.0
    %6851 = vmatprep.subr.mxu0 0.0
    %6852 = vmatpush1.msra.mxu0 0.0
    %6853 = vmatprep.subr.mxu0 0.0
    %6854 = vmatpush1.msra.mxu0 0.0
    %6855 = vmatprep.subr.mxu0 0.0
    %6856 = vmatpush1.msra.mxu0 0.0
    %6857 = vmatprep.subr.mxu0 0.0
    %6858 = vmatpush1.msra.mxu0 0.0
    %6859 = vmatprep.mubr.f32.mxu0 0.0
    %6860 = vmatmul.mubr.f32.gmra.mrb[0].mxu0 %v6790
    %v6861 = vpop.f32.mrb[0].mxu0
    %v6862 = vadd.f32 %v6787, %v6861
    %v6863 = vpop.f32.mrb[0].mxu0
    %6864 = vmatprep.mubr.f32.mxu0 0.0
    %6865 = vmatmul.mubr.f32.gmra.mrb[0].mxu0 %v6793
    %v6866 = vpop.f32.mrb[0].mxu0
    %v6867 = vadd.f32 %v6787, %v6866
    %v6868 = vpop.f32.mrb[0].mxu0
    %6869 = vdwg.mxu0
    %v6870 = vadd.f32 %v6678, %v6862
    %v6871 = vadd.f32 %v6679, %v6867
    %v6872 = vsel %vm446, %v6870, 0.0
    %6873 = vadd.xlane.f32.xlu0 %v6872
    %v6874 = vpop.xlane.xlu0 %6873
    %v6875 = vsel %vm446, %v6871, 0.0
    %6876 = vadd.xlane.f32.xlu0 %v6875
    %v6877 = vpop.xlane.xlu0 %6876
    %v6878 = vmul.f32 %v6874, %v2348
    %v6879 = vmul.f32 %v6877, %v2348
    %v6880 = vsub.f32 %v6870, %v6878
    %v6881 = vsub.f32 %v6871, %v6879
    %v6882 = vmul.f32 %v6880, %v6880
    %v6883 = vmul.f32 %v6881, %v6881
    %v6884 = vsel %vm446, %v6882, 0.0
    %6885 = vadd.xlane.f32.xlu0 %v6884
    %v6886 = vpop.xlane.xlu0 %6885
    %v6887 = vsel %vm446, %v6883, 0.0
    %6888 = vadd.xlane.f32.xlu0 %v6887
    %v6889 = vpop.xlane.xlu0 %6888
    %v6890 = vmul.f32 %v6886, %v2348
    %v6891 = vmul.f32 %v6889, %v2348
    %v6892 = vadd.f32 %v6890, 1e-05
    %v6893 = vadd.f32 %v6891, 1e-05
    %v6894 = vrsqrt.pop %v6892
    %v6895 = vrsqrt.pop %v6893
    %v6896 = vmul.f32 %v6880, %v6894
    %v6897 = vmul.f32 %v6881, %v6895
    %v6898 = vlaneseq
    %v6899 = vshrl.u32 %v6898, 7
    %v6900 = vsub.s32 4, %v6899
    %v6901 = vrot.slane %v4963, %v6900
    %v6902 = vmul.f32 %v6896, %v6901
    %v6903 = vmul.f32 %v6897, %v6901
    %v6904 = vlaneseq
    %v6905 = vshrl.u32 %v6904, 7
    %v6906 = vsub.s32 5, %v6905
    %v6907 = vrot.slane %v4963, %v6906
    %v6908 = vadd.f32 %v6902, %v6907
    %v6909 = vadd.f32 %v6903, %v6907
    %s6910 = scalar_lea.vmem %s25, 8
    %v6911 = vld [vmem:[%s6910] sm:$0x3f]
    %s6912 = scalar_lea.vmem %s15, 32
    %v6913 = vld [vmem:[%s6912] sm:$0xff]
    %v6914 = vld [vmem:[%s6912 + $0x8] sm:$0xff]
    %v6915 = vld [vmem:[%s6912 + $0x10] sm:$0xff]
    %v6916 = vld [vmem:[%s6912 + $0x18] sm:$0xff]
    %s6917 = scalar_lea.vmem [#allocation17], 1
    %v6918 = vld [vmem:[%s6917] sm:$0x1]
    %s6919 = scalar_lea.vmem %s17, 32
    %v6920 = vld [vmem:[%s6919] sm:$0xff]
    %v6921 = vld [vmem:[%s6919 + $0x8] sm:$0xff]
    %v6922 = vld [vmem:[%s6919 + $0x10] sm:$0xff]
    %v6923 = vld [vmem:[%s6919 + $0x18] sm:$0xff]
    %s6924 = scalar_lea.vmem [#allocation19], 1
    %v6925 = vld [vmem:[%s6924] sm:$0x1]
    %v6927 = vlaneseq
    %v6928 = vshrl.u32 %v6927, 7
    %v6929 = vsub.s32 0, %v6928
    %v6930 = vrot.slane %v6918, %v6929
    %v6933 = vsel %vm446, %v6908, 0
    %v6936 = vsel %vm446, %v6909, 0
    %6938 = vmatprep.subr.mxu0 0.0
    %6939 = vmatpush1.msra.mxu0 %v6913
    %6940 = vmatprep.subr.mxu0 0.0
    %6941 = vmatpush1.msra.mxu0 %v6914
    %6942 = vmatprep.subr.mxu0 0.0
    %6943 = vmatpush1.msra.mxu0 %v6915
    %6944 = vmatprep.subr.mxu0 0.0
    %6945 = vmatpush1.msra.mxu0 %v6916
    %6946 = vmatprep.subr.mxu0 0.0
    %6947 = vmatpush1.msra.mxu0 0.0
    %6948 = vmatprep.subr.mxu0 0.0
    %6949 = vmatpush1.msra.mxu0 0.0
    %6950 = vmatprep.subr.mxu0 0.0
    %6951 = vmatpush1.msra.mxu0 0.0
    %6952 = vmatprep.subr.mxu0 0.0
    %6953 = vmatpush1.msra.mxu0 0.0
    %6954 = vmatprep.subr.mxu0 0.0
    %6955 = vmatpush1.msra.mxu0 0.0
    %6956 = vmatprep.subr.mxu0 0.0
    %6957 = vmatpush1.msra.mxu0 0.0
    %6958 = vmatprep.subr.mxu0 0.0
    %6959 = vmatpush1.msra.mxu0 0.0
    %6960 = vmatprep.subr.mxu0 0.0
    %6961 = vmatpush1.msra.mxu0 0.0
    %6962 = vmatprep.subr.mxu0 0.0
    %6963 = vmatpush1.msra.mxu0 0.0
    %6964 = vmatprep.subr.mxu0 0.0
    %6965 = vmatpush1.msra.mxu0 0.0
    %6966 = vmatprep.subr.mxu0 0.0
    %6967 = vmatpush1.msra.mxu0 0.0
    %6968 = vmatprep.subr.mxu0 0.0
    %6969 = vmatpush1.msra.mxu0 0.0
    %6970 = vmatprep.subr.mxu0 0.0
    %6971 = vmatpush1.msra.mxu0 0.0
    %6972 = vmatprep.subr.mxu0 0.0
    %6973 = vmatpush1.msra.mxu0 0.0
    %6974 = vmatprep.subr.mxu0 0.0
    %6975 = vmatpush1.msra.mxu0 0.0
    %6976 = vmatprep.subr.mxu0 0.0
    %6977 = vmatpush1.msra.mxu0 0.0
    %6978 = vmatprep.subr.mxu0 0.0
    %6979 = vmatpush1.msra.mxu0 0.0
    %6980 = vmatprep.subr.mxu0 0.0
    %6981 = vmatpush1.msra.mxu0 0.0
    %6982 = vmatprep.subr.mxu0 0.0
    %6983 = vmatpush1.msra.mxu0 0.0
    %6984 = vmatprep.subr.mxu0 0.0
    %6985 = vmatpush1.msra.mxu0 0.0
    %6986 = vmatprep.subr.mxu0 0.0
    %6987 = vmatpush1.msra.mxu0 0.0
    %6988 = vmatprep.subr.mxu0 0.0
    %6989 = vmatpush1.msra.mxu0 0.0
    %6990 = vmatprep.subr.mxu0 0.0
    %6991 = vmatpush1.msra.mxu0 0.0
    %6992 = vmatprep.subr.mxu0 0.0
    %6993 = vmatpush1.msra.mxu0 0.0
    %6994 = vmatprep.subr.mxu0 0.0
    %6995 = vmatpush1.msra.mxu0 0.0
    %6996 = vmatprep.subr.mxu0 0.0
    %6997 = vmatpush1.msra.mxu0 0.0
    %6998 = vmatprep.subr.mxu0 0.0
    %6999 = vmatpush1.msra.mxu0 0.0
    %7000 = vmatprep.subr.mxu0 0.0
    %7001 = vmatpush1.msra.mxu0 0.0
    %7002 = vmatprep.mubr.f32.mxu0 0.0
    %7003 = vmatmul.mubr.f32.gmra.mrb[0].mxu0 %v6933
    %v7004 = vpop.f32.mrb[0].mxu0
    %v7005 = vadd.f32 %v6930, %v7004
    %v7006 = vpop.f32.mrb[0].mxu0
    %7007 = vmatprep.mubr.f32.mxu0 0.0
    %7008 = vmatmul.mubr.f32.gmra.mrb[0].mxu0 %v6936
    %v7009 = vpop.f32.mrb[0].mxu0
    %v7010 = vadd.f32 %v6930, %v7009
    %v7011 = vpop.f32.mrb[0].mxu0
    %7012 = vdwg.mxu0
    %v7013 = vmul.f32 %v7005, 0.35355338
    %v7014 = vmul.f32 %v7010, 0.35355338
    %7016 = vrot.lane.b32.xlu0 %v7005, 96
    %v7017 = vpop.permute.xlu0 %7016
    %v7019 = vsel %vm554, %v7013, 0
    %v7021 = vsel %vm554, %v7017, 0
    %7023 = vmatprep.subr.mxu0 0.0
    %7024 = vmatpush1.xpose.msra.mxu0 %v7021
    %7025 = vmatprep.subr.mxu0 0.0
    %7026 = vmatpush1.xpose.msra.mxu0 0.0
    %7027 = vmatprep.subr.mxu0 0.0
    %7028 = vmatpush1.xpose.msra.mxu0 0.0
    %7029 = vmatprep.subr.mxu0 0.0
    %7030 = vmatpush1.xpose.msra.mxu0 0.0
    %7031 = vmatprep.subr.mxu0 0.0
    %7032 = vmatpush1.xpose.msra.mxu0 0.0
    %7033 = vmatprep.subr.mxu0 0.0
    %7034 = vmatpush1.xpose.msra.mxu0 0.0
    %7035 = vmatprep.subr.mxu0 0.0
    %7036 = vmatpush1.xpose.msra.mxu0 0.0
    %7037 = vmatprep.subr.mxu0 0.0
    %7038 = vmatpush1.xpose.msra.mxu0 0.0
    %7039 = vmatprep.subr.mxu0 0.0
    %7040 = vmatpush1.xpose.msra.mxu0 0.0
    %7041 = vmatprep.subr.mxu0 0.0
    %7042 = vmatpush1.xpose.msra.mxu0 0.0
    %7043 = vmatprep.subr.mxu0 0.0
    %7044 = vmatpush1.xpose.msra.mxu0 0.0
    %7045 = vmatprep.subr.mxu0 0.0
    %7046 = vmatpush1.xpose.msra.mxu0 0.0
    %7047 = vmatprep.subr.mxu0 0.0
    %7048 = vmatpush1.xpose.msra.mxu0 0.0
    %7049 = vmatprep.subr.mxu0 0.0
    %7050 = vmatpush1.xpose.msra.mxu0 0.0
    %7051 = vmatprep.subr.mxu0 0.0
    %7052 = vmatpush1.xpose.msra.mxu0 0.0
    %7053 = vmatprep.subr.mxu0 0.0
    %7054 = vmatpush1.xpose.msra.mxu0 0.0
    %7055 = vmatprep.subr.mxu0 0.0
    %7056 = vmatpush1.xpose.msra.mxu0 0.0
    %7057 = vmatprep.subr.mxu0 0.0
    %7058 = vmatpush1.xpose.msra.mxu0 0.0
    %7059 = vmatprep.subr.mxu0 0.0
    %7060 = vmatpush1.xpose.msra.mxu0 0.0
    %7061 = vmatprep.subr.mxu0 0.0
    %7062 = vmatpush1.xpose.msra.mxu0 0.0
    %7063 = vmatprep.subr.mxu0 0.0
    %7064 = vmatpush1.xpose.msra.mxu0 0.0
    %7065 = vmatprep.subr.mxu0 0.0
    %7066 = vmatpush1.xpose.msra.mxu0 0.0
    %7067 = vmatprep.subr.mxu0 0.0
    %7068 = vmatpush1.xpose.msra.mxu0 0.0
    %7069 = vmatprep.subr.mxu0 0.0
    %7070 = vmatpush1.xpose.msra.mxu0 0.0
    %7071 = vmatprep.subr.mxu0 0.0
    %7072 = vmatpush1.xpose.msra.mxu0 0.0
    %7073 = vmatprep.subr.mxu0 0.0
    %7074 = vmatpush1.xpose.msra.mxu0 0.0
    %7075 = vmatprep.subr.mxu0 0.0
    %7076 = vmatpush1.xpose.msra.mxu0 0.0
    %7077 = vmatprep.subr.mxu0 0.0
    %7078 = vmatpush1.xpose.msra.mxu0 0.0
    %7079 = vmatprep.subr.mxu0 0.0
    %7080 = vmatpush1.xpose.msra.mxu0 0.0
    %7081 = vmatprep.subr.mxu0 0.0
    %7082 = vmatpush1.xpose.msra.mxu0 0.0
    %7083 = vmatprep.subr.mxu0 0.0
    %7084 = vmatpush1.xpose.msra.mxu0 0.0
    %7085 = vmatprep.subr.mxu0 0.0
    %7086 = vmatpush1.xpose.msra.mxu0 0.0
    %7087 = vmatprep.mubr.f32.mxu0 0.0
    %7088 = vmatmul.mubr.f32.gmra.mrb[0].mxu0 %v7019
    %v7089 = vpop.f32.mrb[0].mxu0
    %v7090 = vadd.f32 0.0, %v7089
    %v7091 = vpop.f32.mrb[0].mxu0
    %7092 = vdwg.mxu0
    %7093 = vrot.lane.b32.xlu0 %v7013, 120
    %v7094 = vpop.permute.xlu0 %7093
    %7095 = vrot.lane.b32.xlu0 %v7005, 88
    %v7096 = vpop.permute.xlu0 %7095
    %v7097 = vsel %vm554, %v7094, 0
    %v7099 = vsel %vm554, %v7096, 0
    %7101 = vmatprep.subr.mxu0 0.0
    %7102 = vmatpush1.xpose.msra.mxu0 %v7099
    %7103 = vmatprep.subr.mxu0 0.0
    %7104 = vmatpush1.xpose.msra.mxu0 0.0
    %7105 = vmatprep.subr.mxu0 0.0
    %7106 = vmatpush1.xpose.msra.mxu0 0.0
    %7107 = vmatprep.subr.mxu0 0.0
    %7108 = vmatpush1.xpose.msra.mxu0 0.0
    %7109 = vmatprep.subr.mxu0 0.0
    %7110 = vmatpush1.xpose.msra.mxu0 0.0
    %7111 = vmatprep.subr.mxu0 0.0
    %7112 = vmatpush1.xpose.msra.mxu0 0.0
    %7113 = vmatprep.subr.mxu0 0.0
    %7114 = vmatpush1.xpose.msra.mxu0 0.0
    %7115 = vmatprep.subr.mxu0 0.0
    %7116 = vmatpush1.xpose.msra.mxu0 0.0
    %7117 = vmatprep.subr.mxu0 0.0
    %7118 = vmatpush1.xpose.msra.mxu0 0.0
    %7119 = vmatprep.subr.mxu0 0.0
    %7120 = vmatpush1.xpose.msra.mxu0 0.0
    %7121 = vmatprep.subr.mxu0 0.0
    %7122 = vmatpush1.xpose.msra.mxu0 0.0
    %7123 = vmatprep.subr.mxu0 0.0
    %7124 = vmatpush1.xpose.msra.mxu0 0.0
    %7125 = vmatprep.subr.mxu0 0.0
    %7126 = vmatpush1.xpose.msra.mxu0 0.0
    %7127 = vmatprep.subr.mxu0 0.0
    %7128 = vmatpush1.xpose.msra.mxu0 0.0
    %7129 = vmatprep.subr.mxu0 0.0
    %7130 = vmatpush1.xpose.msra.mxu0 0.0
    %7131 = vmatprep.subr.mxu0 0.0
    %7132 = vmatpush1.xpose.msra.mxu0 0.0
    %7133 = vmatprep.subr.mxu0 0.0
    %7134 = vmatpush1.xpose.msra.mxu0 0.0
    %7135 = vmatprep.subr.mxu0 0.0
    %7136 = vmatpush1.xpose.msra.mxu0 0.0
    %7137 = vmatprep.subr.mxu0 0.0
    %7138 = vmatpush1.xpose.msra.mxu0 0.0
    %7139 = vmatprep.subr.mxu0 0.0
    %7140 = vmatpush1.xpose.msra.mxu0 0.0
    %7141 = vmatprep.subr.mxu0 0.0
    %7142 = vmatpush1.xpose.msra.mxu0 0.0
    %7143 = vmatprep.subr.mxu0 0.0
    %7144 = vmatpush1.xpose.msra.mxu0 0.0
    %7145 = vmatprep.subr.mxu0 0.0
    %7146 = vmatpush1.xpose.msra.mxu0 0.0
    %7147 = vmatprep.subr.mxu0 0.0
    %7148 = vmatpush1.xpose.msra.mxu0 0.0
    %7149 = vmatprep.subr.mxu0 0.0
    %7150 = vmatpush1.xpose.msra.mxu0 0.0
    %7151 = vmatprep.subr.mxu0 0.0
    %7152 = vmatpush1.xpose.msra.mxu0 0.0
    %7153 = vmatprep.subr.mxu0 0.0
    %7154 = vmatpush1.xpose.msra.mxu0 0.0
    %7155 = vmatprep.subr.mxu0 0.0
    %7156 = vmatpush1.xpose.msra.mxu0 0.0
    %7157 = vmatprep.subr.mxu0 0.0
    %7158 = vmatpush1.xpose.msra.mxu0 0.0
    %7159 = vmatprep.subr.mxu0 0.0
    %7160 = vmatpush1.xpose.msra.mxu0 0.0
    %7161 = vmatprep.subr.mxu0 0.0
    %7162 = vmatpush1.xpose.msra.mxu0 0.0
    %7163 = vmatprep.subr.mxu0 0.0
    %7164 = vmatpush1.xpose.msra.mxu0 0.0
    %7165 = vmatprep.mubr.f32.mxu0 0.0
    %7166 = vmatmul.mubr.f32.gmra.mrb[0].mxu0 %v7097
    %v7167 = vpop.f32.mrb[0].mxu0
    %v7168 = vadd.f32 0.0, %v7167
    %v7169 = vpop.f32.mrb[0].mxu0
    %7170 = vdwg.mxu0
    %7171 = vrot.lane.b32.xlu0 %v7013, 112
    %v7172 = vpop.permute.xlu0 %7171
    %7173 = vrot.lane.b32.xlu0 %v7005, 80
    %v7174 = vpop.permute.xlu0 %7173
    %v7175 = vsel %vm554, %v7172, 0
    %v7177 = vsel %vm554, %v7174, 0
    %7179 = vmatprep.subr.mxu0 0.0
    %7180 = vmatpush1.xpose.msra.mxu0 %v7177
    %7181 = vmatprep.subr.mxu0 0.0
    %7182 = vmatpush1.xpose.msra.mxu0 0.0
    %7183 = vmatprep.subr.mxu0 0.0
    %7184 = vmatpush1.xpose.msra.mxu0 0.0
    %7185 = vmatprep.subr.mxu0 0.0
    %7186 = vmatpush1.xpose.msra.mxu0 0.0
    %7187 = vmatprep.subr.mxu0 0.0
    %7188 = vmatpush1.xpose.msra.mxu0 0.0
    %7189 = vmatprep.subr.mxu0 0.0
    %7190 = vmatpush1.xpose.msra.mxu0 0.0
    %7191 = vmatprep.subr.mxu0 0.0
    %7192 = vmatpush1.xpose.msra.mxu0 0.0
    %7193 = vmatprep.subr.mxu0 0.0
    %7194 = vmatpush1.xpose.msra.mxu0 0.0
    %7195 = vmatprep.subr.mxu0 0.0
    %7196 = vmatpush1.xpose.msra.mxu0 0.0
    %7197 = vmatprep.subr.mxu0 0.0
    %7198 = vmatpush1.xpose.msra.mxu0 0.0
    %7199 = vmatprep.subr.mxu0 0.0
    %7200 = vmatpush1.xpose.msra.mxu0 0.0
    %7201 = vmatprep.subr.mxu0 0.0
    %7202 = vmatpush1.xpose.msra.mxu0 0.0
    %7203 = vmatprep.subr.mxu0 0.0
    %7204 = vmatpush1.xpose.msra.mxu0 0.0
    %7205 = vmatprep.subr.mxu0 0.0
    %7206 = vmatpush1.xpose.msra.mxu0 0.0
    %7207 = vmatprep.subr.mxu0 0.0
    %7208 = vmatpush1.xpose.msra.mxu0 0.0
    %7209 = vmatprep.subr.mxu0 0.0
    %7210 = vmatpush1.xpose.msra.mxu0 0.0
    %7211 = vmatprep.subr.mxu0 0.0
    %7212 = vmatpush1.xpose.msra.mxu0 0.0
    %7213 = vmatprep.subr.mxu0 0.0
    %7214 = vmatpush1.xpose.msra.mxu0 0.0
    %7215 = vmatprep.subr.mxu0 0.0
    %7216 = vmatpush1.xpose.msra.mxu0 0.0
    %7217 = vmatprep.subr.mxu0 0.0
    %7218 = vmatpush1.xpose.msra.mxu0 0.0
    %7219 = vmatprep.subr.mxu0 0.0
    %7220 = vmatpush1.xpose.msra.mxu0 0.0
    %7221 = vmatprep.subr.mxu0 0.0
    %7222 = vmatpush1.xpose.msra.mxu0 0.0
    %7223 = vmatprep.subr.mxu0 0.0
    %7224 = vmatpush1.xpose.msra.mxu0 0.0
    %7225 = vmatprep.subr.mxu0 0.0
    %7226 = vmatpush1.xpose.msra.mxu0 0.0
    %7227 = vmatprep.subr.mxu0 0.0
    %7228 = vmatpush1.xpose.msra.mxu0 0.0
    %7229 = vmatprep.subr.mxu0 0.0
    %7230 = vmatpush1.xpose.msra.mxu0 0.0
    %7231 = vmatprep.subr.mxu0 0.0
    %7232 = vmatpush1.xpose.msra.mxu0 0.0
    %7233 = vmatprep.subr.mxu0 0.0
    %7234 = vmatpush1.xpose.msra.mxu0 0.0
    %7235 = vmatprep.subr.mxu0 0.0
    %7236 = vmatpush1.xpose.msra.mxu0 0.0
    %7237 = vmatprep.subr.mxu0 0.0
    %7238 = vmatpush1.xpose.msra.mxu0 0.0
    %7239 = vmatprep.subr.mxu0 0.0
    %7240 = vmatpush1.xpose.msra.mxu0 0.0
    %7241 = vmatprep.subr.mxu0 0.0
    %7242 = vmatpush1.xpose.msra.mxu0 0.0
    %7243 = vmatprep.mubr.f32.mxu0 0.0
    %7244 = vmatmul.mubr.f32.gmra.mrb[0].mxu0 %v7175
    %v7245 = vpop.f32.mrb[0].mxu0
    %v7246 = vadd.f32 0.0, %v7245
    %v7247 = vpop.f32.mrb[0].mxu0
    %7248 = vdwg.mxu0
    %7249 = vrot.lane.b32.xlu0 %v7013, 104
    %v7250 = vpop.permute.xlu0 %7249
    %7251 = vrot.lane.b32.xlu0 %v7005, 72
    %v7252 = vpop.permute.xlu0 %7251
    %v7253 = vsel %vm554, %v7250, 0
    %v7255 = vsel %vm554, %v7252, 0
    %7257 = vmatprep.subr.mxu0 0.0
    %7258 = vmatpush1.xpose.msra.mxu0 %v7255
    %7259 = vmatprep.subr.mxu0 0.0
    %7260 = vmatpush1.xpose.msra.mxu0 0.0
    %7261 = vmatprep.subr.mxu0 0.0
    %7262 = vmatpush1.xpose.msra.mxu0 0.0
    %7263 = vmatprep.subr.mxu0 0.0
    %7264 = vmatpush1.xpose.msra.mxu0 0.0
    %7265 = vmatprep.subr.mxu0 0.0
    %7266 = vmatpush1.xpose.msra.mxu0 0.0
    %7267 = vmatprep.subr.mxu0 0.0
    %7268 = vmatpush1.xpose.msra.mxu0 0.0
    %7269 = vmatprep.subr.mxu0 0.0
    %7270 = vmatpush1.xpose.msra.mxu0 0.0
    %7271 = vmatprep.subr.mxu0 0.0
    %7272 = vmatpush1.xpose.msra.mxu0 0.0
    %7273 = vmatprep.subr.mxu0 0.0
    %7274 = vmatpush1.xpose.msra.mxu0 0.0
    %7275 = vmatprep.subr.mxu0 0.0
    %7276 = vmatpush1.xpose.msra.mxu0 0.0
    %7277 = vmatprep.subr.mxu0 0.0
    %7278 = vmatpush1.xpose.msra.mxu0 0.0
    %7279 = vmatprep.subr.mxu0 0.0
    %7280 = vmatpush1.xpose.msra.mxu0 0.0
    %7281 = vmatprep.subr.mxu0 0.0
    %7282 = vmatpush1.xpose.msra.mxu0 0.0
    %7283 = vmatprep.subr.mxu0 0.0
    %7284 = vmatpush1.xpose.msra.mxu0 0.0
    %7285 = vmatprep.subr.mxu0 0.0
    %7286 = vmatpush1.xpose.msra.mxu0 0.0
    %7287 = vmatprep.subr.mxu0 0.0
    %7288 = vmatpush1.xpose.msra.mxu0 0.0
    %7289 = vmatprep.subr.mxu0 0.0
    %7290 = vmatpush1.xpose.msra.mxu0 0.0
    %7291 = vmatprep.subr.mxu0 0.0
    %7292 = vmatpush1.xpose.msra.mxu0 0.0
    %7293 = vmatprep.subr.mxu0 0.0
    %7294 = vmatpush1.xpose.msra.mxu0 0.0
    %7295 = vmatprep.subr.mxu0 0.0
    %7296 = vmatpush1.xpose.msra.mxu0 0.0
    %7297 = vmatprep.subr.mxu0 0.0
    %7298 = vmatpush1.xpose.msra.mxu0 0.0
    %7299 = vmatprep.subr.mxu0 0.0
    %7300 = vmatpush1.xpose.msra.mxu0 0.0
    %7301 = vmatprep.subr.mxu0 0.0
    %7302 = vmatpush1.xpose.msra.mxu0 0.0
    %7303 = vmatprep.subr.mxu0 0.0
    %7304 = vmatpush1.xpose.msra.mxu0 0.0
    %7305 = vmatprep.subr.mxu0 0.0
    %7306 = vmatpush1.xpose.msra.mxu0 0.0
    %7307 = vmatprep.subr.mxu0 0.0
    %7308 = vmatpush1.xpose.msra.mxu0 0.0
    %7309 = vmatprep.subr.mxu0 0.0
    %7310 = vmatpush1.xpose.msra.mxu0 0.0
    %7311 = vmatprep.subr.mxu0 0.0
    %7312 = vmatpush1.xpose.msra.mxu0 0.0
    %7313 = vmatprep.subr.mxu0 0.0
    %7314 = vmatpush1.xpose.msra.mxu0 0.0
    %7315 = vmatprep.subr.mxu0 0.0
    %7316 = vmatpush1.xpose.msra.mxu0 0.0
    %7317 = vmatprep.subr.mxu0 0.0
    %7318 = vmatpush1.xpose.msra.mxu0 0.0
    %7319 = vmatprep.subr.mxu0 0.0
    %7320 = vmatpush1.xpose.msra.mxu0 0.0
    %7321 = vmatprep.mubr.f32.mxu0 0.0
    %7322 = vmatmul.mubr.f32.gmra.mrb[0].mxu0 %v7253
    %v7323 = vpop.f32.mrb[0].mxu0
    %v7324 = vadd.f32 0.0, %v7323
    %v7325 = vpop.f32.mrb[0].mxu0
    %7326 = vdwg.mxu0
    %7328 = vrot.lane.b32.xlu0 %v7168, 8
    %v7329 = vpop.permute.xlu0 %7328
    %7332 = vrot.lane.b32.xlu0 %v7246, 16
    %v7333 = vpop.permute.xlu0 %7332
    %7336 = vrot.lane.b32.xlu0 %v7324, 24
    %v7337 = vpop.permute.xlu0 %7336
    %v7339 = vsel %vm554, %v7090, %v7329
    %v7340 = vsel %vm937, %v7339, %v7333
    %v7341 = vsel %vm1388, %v7340, %v7337
    %v7342 = vadd.f32 %v7341, %v4953
    %v7343 = vsel %vm446, %v7342, -inf
    %7344 = vmax.xlane.f32.xlu0 %v7343
    %v7345 = vpop.xlane.xlu0 %7344
    %v7346 = vsub.f32 %v7342, %v7345
    %v7347 = vmul.f32 %v7346, 1.442695
    %v7348 = vpow.pop %v7347
    %v7349 = vsel %vm554, %v7348, 0.0
    %7350 = vadd.xlane.f32.xlu0 %v7349
    %v7351 = vpop.xlane.xlu0 %7350
    %v7352 = vrcp.pop %v7351
    %7353 = vrot.lane.b32.xlu0 %v7005, 64
    %v7354 = vpop.permute.xlu0 %7353
    %v7357 = vsel %vm554, %v7348, 0
    %7359 = vmatprep.subr.mxu0 0.0
    %7360 = vmatpush1.msra.mxu0 %v7354
    %7361 = vmatprep.subr.mxu0 0.0
    %7362 = vmatpush1.msra.mxu0 0.0
    %7363 = vmatprep.subr.mxu0 0.0
    %7364 = vmatpush1.msra.mxu0 0.0
    %7365 = vmatprep.subr.mxu0 0.0
    %7366 = vmatpush1.msra.mxu0 0.0
    %7367 = vmatprep.subr.mxu0 0.0
    %7368 = vmatpush1.msra.mxu0 0.0
    %7369 = vmatprep.subr.mxu0 0.0
    %7370 = vmatpush1.msra.mxu0 0.0
    %7371 = vmatprep.subr.mxu0 0.0
    %7372 = vmatpush1.msra.mxu0 0.0
    %7373 = vmatprep.subr.mxu0 0.0
    %7374 = vmatpush1.msra.mxu0 0.0
    %7375 = vmatprep.subr.mxu0 0.0
    %7376 = vmatpush1.msra.mxu0 0.0
    %7377 = vmatprep.subr.mxu0 0.0
    %7378 = vmatpush1.msra.mxu0 0.0
    %7379 = vmatprep.subr.mxu0 0.0
    %7380 = vmatpush1.msra.mxu0 0.0
    %7381 = vmatprep.subr.mxu0 0.0
    %7382 = vmatpush1.msra.mxu0 0.0
    %7383 = vmatprep.subr.mxu0 0.0
    %7384 = vmatpush1.msra.mxu0 0.0
    %7385 = vmatprep.subr.mxu0 0.0
    %7386 = vmatpush1.msra.mxu0 0.0
    %7387 = vmatprep.subr.mxu0 0.0
    %7388 = vmatpush1.msra.mxu0 0.0
    %7389 = vmatprep.subr.mxu0 0.0
    %7390 = vmatpush1.msra.mxu0 0.0
    %7391 = vmatprep.subr.mxu0 0.0
    %7392 = vmatpush1.msra.mxu0 0.0
    %7393 = vmatprep.subr.mxu0 0.0
    %7394 = vmatpush1.msra.mxu0 0.0
    %7395 = vmatprep.subr.mxu0 0.0
    %7396 = vmatpush1.msra.mxu0 0.0
    %7397 = vmatprep.subr.mxu0 0.0
    %7398 = vmatpush1.msra.mxu0 0.0
    %7399 = vmatprep.subr.mxu0 0.0
    %7400 = vmatpush1.msra.mxu0 0.0
    %7401 = vmatprep.subr.mxu0 0.0
    %7402 = vmatpush1.msra.mxu0 0.0
    %7403 = vmatprep.subr.mxu0 0.0
    %7404 = vmatpush1.msra.mxu0 0.0
    %7405 = vmatprep.subr.mxu0 0.0
    %7406 = vmatpush1.msra.mxu0 0.0
    %7407 = vmatprep.subr.mxu0 0.0
    %7408 = vmatpush1.msra.mxu0 0.0
    %7409 = vmatprep.subr.mxu0 0.0
    %7410 = vmatpush1.msra.mxu0 0.0
    %7411 = vmatprep.subr.mxu0 0.0
    %7412 = vmatpush1.msra.mxu0 0.0
    %7413 = vmatprep.subr.mxu0 0.0
    %7414 = vmatpush1.msra.mxu0 0.0
    %7415 = vmatprep.subr.mxu0 0.0
    %7416 = vmatpush1.msra.mxu0 0.0
    %7417 = vmatprep.subr.mxu0 0.0
    %7418 = vmatpush1.msra.mxu0 0.0
    %7419 = vmatprep.subr.mxu0 0.0
    %7420 = vmatpush1.msra.mxu0 0.0
    %7421 = vmatprep.subr.mxu0 0.0
    %7422 = vmatpush1.msra.mxu0 0.0
    %7423 = vmatprep.mubr.f32.mxu0 0.0
    %7424 = vmatmul.mubr.f32.gmra.mrb[0].mxu0 %v7357
    %v7425 = vpop.f32.mrb[0].mxu0
    %v7426 = vadd.f32 0.0, %v7425
    %v7427 = vpop.f32.mrb[0].mxu0
    %7428 = vdwg.mxu0
    %v7429 = vmul.f32 %v7426, %v7352
    %7430 = vrot.lane.b32.xlu0 %v7348, 120
    %v7431 = vpop.permute.xlu0 %7430
    %v7433 = vsel %vm554, %v7431, 0.0
    %7434 = vadd.xlane.f32.xlu0 %v7433
    %v7435 = vpop.xlane.xlu0 %7434
    %v7436 = vrcp.pop %v7435
    %7437 = vrot.lane.b32.xlu0 %v7005, 56
    %v7438 = vpop.permute.xlu0 %7437
    %v7440 = vsel %vm554, %v7431, 0
    %7442 = vmatprep.subr.mxu0 0.0
    %7443 = vmatpush1.msra.mxu0 %v7438
    %7444 = vmatprep.subr.mxu0 0.0
    %7445 = vmatpush1.msra.mxu0 0.0
    %7446 = vmatprep.subr.mxu0 0.0
    %7447 = vmatpush1.msra.mxu0 0.0
    %7448 = vmatprep.subr.mxu0 0.0
    %7449 = vmatpush1.msra.mxu0 0.0
    %7450 = vmatprep.subr.mxu0 0.0
    %7451 = vmatpush1.msra.mxu0 0.0
    %7452 = vmatprep.subr.mxu0 0.0
    %7453 = vmatpush1.msra.mxu0 0.0
    %7454 = vmatprep.subr.mxu0 0.0
    %7455 = vmatpush1.msra.mxu0 0.0
    %7456 = vmatprep.subr.mxu0 0.0
    %7457 = vmatpush1.msra.mxu0 0.0
    %7458 = vmatprep.subr.mxu0 0.0
    %7459 = vmatpush1.msra.mxu0 0.0
    %7460 = vmatprep.subr.mxu0 0.0
    %7461 = vmatpush1.msra.mxu0 0.0
    %7462 = vmatprep.subr.mxu0 0.0
    %7463 = vmatpush1.msra.mxu0 0.0
    %7464 = vmatprep.subr.mxu0 0.0
    %7465 = vmatpush1.msra.mxu0 0.0
    %7466 = vmatprep.subr.mxu0 0.0
    %7467 = vmatpush1.msra.mxu0 0.0
    %7468 = vmatprep.subr.mxu0 0.0
    %7469 = vmatpush1.msra.mxu0 0.0
    %7470 = vmatprep.subr.mxu0 0.0
    %7471 = vmatpush1.msra.mxu0 0.0
    %7472 = vmatprep.subr.mxu0 0.0
    %7473 = vmatpush1.msra.mxu0 0.0
    %7474 = vmatprep.subr.mxu0 0.0
    %7475 = vmatpush1.msra.mxu0 0.0
    %7476 = vmatprep.subr.mxu0 0.0
    %7477 = vmatpush1.msra.mxu0 0.0
    %7478 = vmatprep.subr.mxu0 0.0
    %7479 = vmatpush1.msra.mxu0 0.0
    %7480 = vmatprep.subr.mxu0 0.0
    %7481 = vmatpush1.msra.mxu0 0.0
    %7482 = vmatprep.subr.mxu0 0.0
    %7483 = vmatpush1.msra.mxu0 0.0
    %7484 = vmatprep.subr.mxu0 0.0
    %7485 = vmatpush1.msra.mxu0 0.0
    %7486 = vmatprep.subr.mxu0 0.0
    %7487 = vmatpush1.msra.mxu0 0.0
    %7488 = vmatprep.subr.mxu0 0.0
    %7489 = vmatpush1.msra.mxu0 0.0
    %7490 = vmatprep.subr.mxu0 0.0
    %7491 = vmatpush1.msra.mxu0 0.0
    %7492 = vmatprep.subr.mxu0 0.0
    %7493 = vmatpush1.msra.mxu0 0.0
    %7494 = vmatprep.subr.mxu0 0.0
    %7495 = vmatpush1.msra.mxu0 0.0
    %7496 = vmatprep.subr.mxu0 0.0
    %7497 = vmatpush1.msra.mxu0 0.0
    %7498 = vmatprep.subr.mxu0 0.0
    %7499 = vmatpush1.msra.mxu0 0.0
    %7500 = vmatprep.subr.mxu0 0.0
    %7501 = vmatpush1.msra.mxu0 0.0
    %7502 = vmatprep.subr.mxu0 0.0
    %7503 = vmatpush1.msra.mxu0 0.0
    %7504 = vmatprep.subr.mxu0 0.0
    %7505 = vmatpush1.msra.mxu0 0.0
    %7506 = vmatprep.mubr.f32.mxu0 0.0
    %7507 = vmatmul.mubr.f32.gmra.mrb[0].mxu0 %v7440
    %v7508 = vpop.f32.mrb[0].mxu0
    %v7509 = vadd.f32 0.0, %v7508
    %v7510 = vpop.f32.mrb[0].mxu0
    %7511 = vdwg.mxu0
    %v7512 = vmul.f32 %v7509, %v7436
    %7513 = vrot.lane.b32.xlu0 %v7348, 112
    %v7514 = vpop.permute.xlu0 %7513
    %v7516 = vsel %vm554, %v7514, 0.0
    %7517 = vadd.xlane.f32.xlu0 %v7516
    %v7518 = vpop.xlane.xlu0 %7517
    %v7519 = vrcp.pop %v7518
    %7520 = vrot.lane.b32.xlu0 %v7005, 48
    %v7521 = vpop.permute.xlu0 %7520
    %v7523 = vsel %vm554, %v7514, 0
    %7525 = vmatprep.subr.mxu0 0.0
    %7526 = vmatpush1.msra.mxu0 %v7521
    %7527 = vmatprep.subr.mxu0 0.0
    %7528 = vmatpush1.msra.mxu0 0.0
    %7529 = vmatprep.subr.mxu0 0.0
    %7530 = vmatpush1.msra.mxu0 0.0
    %7531 = vmatprep.subr.mxu0 0.0
    %7532 = vmatpush1.msra.mxu0 0.0
    %7533 = vmatprep.subr.mxu0 0.0
    %7534 = vmatpush1.msra.mxu0 0.0
    %7535 = vmatprep.subr.mxu0 0.0
    %7536 = vmatpush1.msra.mxu0 0.0
    %7537 = vmatprep.subr.mxu0 0.0
    %7538 = vmatpush1.msra.mxu0 0.0
    %7539 = vmatprep.subr.mxu0 0.0
    %7540 = vmatpush1.msra.mxu0 0.0
    %7541 = vmatprep.subr.mxu0 0.0
    %7542 = vmatpush1.msra.mxu0 0.0
    %7543 = vmatprep.subr.mxu0 0.0
    %7544 = vmatpush1.msra.mxu0 0.0
    %7545 = vmatprep.subr.mxu0 0.0
    %7546 = vmatpush1.msra.mxu0 0.0
    %7547 = vmatprep.subr.mxu0 0.0
    %7548 = vmatpush1.msra.mxu0 0.0
    %7549 = vmatprep.subr.mxu0 0.0
    %7550 = vmatpush1.msra.mxu0 0.0
    %7551 = vmatprep.subr.mxu0 0.0
    %7552 = vmatpush1.msra.mxu0 0.0
    %7553 = vmatprep.subr.mxu0 0.0
    %7554 = vmatpush1.msra.mxu0 0.0
    %7555 = vmatprep.subr.mxu0 0.0
    %7556 = vmatpush1.msra.mxu0 0.0
    %7557 = vmatprep.subr.mxu0 0.0
    %7558 = vmatpush1.msra.mxu0 0.0
    %7559 = vmatprep.subr.mxu0 0.0
    %7560 = vmatpush1.msra.mxu0 0.0
    %7561 = vmatprep.subr.mxu0 0.0
    %7562 = vmatpush1.msra.mxu0 0.0
    %7563 = vmatprep.subr.mxu0 0.0
    %7564 = vmatpush1.msra.mxu0 0.0
    %7565 = vmatprep.subr.mxu0 0.0
    %7566 = vmatpush1.msra.mxu0 0.0
    %7567 = vmatprep.subr.mxu0 0.0
    %7568 = vmatpush1.msra.mxu0 0.0
    %7569 = vmatprep.subr.mxu0 0.0
    %7570 = vmatpush1.msra.mxu0 0.0
    %7571 = vmatprep.subr.mxu0 0.0
    %7572 = vmatpush1.msra.mxu0 0.0
    %7573 = vmatprep.subr.mxu0 0.0
    %7574 = vmatpush1.msra.mxu0 0.0
    %7575 = vmatprep.subr.mxu0 0.0
    %7576 = vmatpush1.msra.mxu0 0.0
    %7577 = vmatprep.subr.mxu0 0.0
    %7578 = vmatpush1.msra.mxu0 0.0
    %7579 = vmatprep.subr.mxu0 0.0
    %7580 = vmatpush1.msra.mxu0 0.0
    %7581 = vmatprep.subr.mxu0 0.0
    %7582 = vmatpush1.msra.mxu0 0.0
    %7583 = vmatprep.subr.mxu0 0.0
    %7584 = vmatpush1.msra.mxu0 0.0
    %7585 = vmatprep.subr.mxu0 0.0
    %7586 = vmatpush1.msra.mxu0 0.0
    %7587 = vmatprep.subr.mxu0 0.0
    %7588 = vmatpush1.msra.mxu0 0.0
    %7589 = vmatprep.mubr.f32.mxu0 0.0
    %7590 = vmatmul.mubr.f32.gmra.mrb[0].mxu0 %v7523
    %v7591 = vpop.f32.mrb[0].mxu0
    %v7592 = vadd.f32 0.0, %v7591
    %v7593 = vpop.f32.mrb[0].mxu0
    %7594 = vdwg.mxu0
    %v7595 = vmul.f32 %v7592, %v7519
    %7596 = vrot.lane.b32.xlu0 %v7348, 104
    %v7597 = vpop.permute.xlu0 %7596
    %v7599 = vsel %vm554, %v7597, 0.0
    %7600 = vadd.xlane.f32.xlu0 %v7599
    %v7601 = vpop.xlane.xlu0 %7600
    %v7602 = vrcp.pop %v7601
    %7603 = vrot.lane.b32.xlu0 %v7005, 40
    %v7604 = vpop.permute.xlu0 %7603
    %v7606 = vsel %vm554, %v7597, 0
    %7608 = vmatprep.subr.mxu0 0.0
    %7609 = vmatpush1.msra.mxu0 %v7604
    %7610 = vmatprep.subr.mxu0 0.0
    %7611 = vmatpush1.msra.mxu0 0.0
    %7612 = vmatprep.subr.mxu0 0.0
    %7613 = vmatpush1.msra.mxu0 0.0
    %7614 = vmatprep.subr.mxu0 0.0
    %7615 = vmatpush1.msra.mxu0 0.0
    %7616 = vmatprep.subr.mxu0 0.0
    %7617 = vmatpush1.msra.mxu0 0.0
    %7618 = vmatprep.subr.mxu0 0.0
    %7619 = vmatpush1.msra.mxu0 0.0
    %7620 = vmatprep.subr.mxu0 0.0
    %7621 = vmatpush1.msra.mxu0 0.0
    %7622 = vmatprep.subr.mxu0 0.0
    %7623 = vmatpush1.msra.mxu0 0.0
    %7624 = vmatprep.subr.mxu0 0.0
    %7625 = vmatpush1.msra.mxu0 0.0
    %7626 = vmatprep.subr.mxu0 0.0
    %7627 = vmatpush1.msra.mxu0 0.0
    %7628 = vmatprep.subr.mxu0 0.0
    %7629 = vmatpush1.msra.mxu0 0.0
    %7630 = vmatprep.subr.mxu0 0.0
    %7631 = vmatpush1.msra.mxu0 0.0
    %7632 = vmatprep.subr.mxu0 0.0
    %7633 = vmatpush1.msra.mxu0 0.0
    %7634 = vmatprep.subr.mxu0 0.0
    %7635 = vmatpush1.msra.mxu0 0.0
    %7636 = vmatprep.subr.mxu0 0.0
    %7637 = vmatpush1.msra.mxu0 0.0
    %7638 = vmatprep.subr.mxu0 0.0
    %7639 = vmatpush1.msra.mxu0 0.0
    %7640 = vmatprep.subr.mxu0 0.0
    %7641 = vmatpush1.msra.mxu0 0.0
    %7642 = vmatprep.subr.mxu0 0.0
    %7643 = vmatpush1.msra.mxu0 0.0
    %7644 = vmatprep.subr.mxu0 0.0
    %7645 = vmatpush1.msra.mxu0 0.0
    %7646 = vmatprep.subr.mxu0 0.0
    %7647 = vmatpush1.msra.mxu0 0.0
    %7648 = vmatprep.subr.mxu0 0.0
    %7649 = vmatpush1.msra.mxu0 0.0
    %7650 = vmatprep.subr.mxu0 0.0
    %7651 = vmatpush1.msra.mxu0 0.0
    %7652 = vmatprep.subr.mxu0 0.0
    %7653 = vmatpush1.msra.mxu0 0.0
    %7654 = vmatprep.subr.mxu0 0.0
    %7655 = vmatpush1.msra.mxu0 0.0
    %7656 = vmatprep.subr.mxu0 0.0
    %7657 = vmatpush1.msra.mxu0 0.0
    %7658 = vmatprep.subr.mxu0 0.0
    %7659 = vmatpush1.msra.mxu0 0.0
    %7660 = vmatprep.subr.mxu0 0.0
    %7661 = vmatpush1.msra.mxu0 0.0
    %7662 = vmatprep.subr.mxu0 0.0
    %7663 = vmatpush1.msra.mxu0 0.0
    %7664 = vmatprep.subr.mxu0 0.0
    %7665 = vmatpush1.msra.mxu0 0.0
    %7666 = vmatprep.subr.mxu0 0.0
    %7667 = vmatpush1.msra.mxu0 0.0
    %7668 = vmatprep.subr.mxu0 0.0
    %7669 = vmatpush1.msra.mxu0 0.0
    %7670 = vmatprep.subr.mxu0 0.0
    %7671 = vmatpush1.msra.mxu0 0.0
    %7672 = vmatprep.mubr.f32.mxu0 0.0
    %7673 = vmatmul.mubr.f32.gmra.mrb[0].mxu0 %v7606
    %v7674 = vpop.f32.mrb[0].mxu0
    %v7675 = vadd.f32 0.0, %v7674
    %v7676 = vpop.f32.mrb[0].mxu0
    %7677 = vdwg.mxu0
    %v7678 = vmul.f32 %v7675, %v7602
    %7680 = vrot.lane.b32.xlu0 %v7512, 8
    %v7681 = vpop.permute.xlu0 %7680
    %7684 = vrot.lane.b32.xlu0 %v7595, 16
    %v7685 = vpop.permute.xlu0 %7684
    %7688 = vrot.lane.b32.xlu0 %v7678, 24
    %v7689 = vpop.permute.xlu0 %7688
    %v7691 = vsel %vm554, %v7429, %v7681
    %v7692 = vsel %vm937, %v7691, %v7685
    %v7693 = vsel %vm1388, %v7692, %v7689
    %7695 = vrot.lane.b32.xlu0 %v7010, 96
    %v7696 = vpop.permute.xlu0 %7695
    %v7698 = vsel %vm554, %v7014, 0
    %v7700 = vsel %vm554, %v7696, 0
    %7702 = vmatprep.subr.mxu0 0.0
    %7703 = vmatpush1.xpose.msra.mxu0 %v7700
    %7704 = vmatprep.subr.mxu0 0.0
    %7705 = vmatpush1.xpose.msra.mxu0 0.0
    %7706 = vmatprep.subr.mxu0 0.0
    %7707 = vmatpush1.xpose.msra.mxu0 0.0
    %7708 = vmatprep.subr.mxu0 0.0
    %7709 = vmatpush1.xpose.msra.mxu0 0.0
    %7710 = vmatprep.subr.mxu0 0.0
    %7711 = vmatpush1.xpose.msra.mxu0 0.0
    %7712 = vmatprep.subr.mxu0 0.0
    %7713 = vmatpush1.xpose.msra.mxu0 0.0
    %7714 = vmatprep.subr.mxu0 0.0
    %7715 = vmatpush1.xpose.msra.mxu0 0.0
    %7716 = vmatprep.subr.mxu0 0.0
    %7717 = vmatpush1.xpose.msra.mxu0 0.0
    %7718 = vmatprep.subr.mxu0 0.0
    %7719 = vmatpush1.xpose.msra.mxu0 0.0
    %7720 = vmatprep.subr.mxu0 0.0
    %7721 = vmatpush1.xpose.msra.mxu0 0.0
    %7722 = vmatprep.subr.mxu0 0.0
    %7723 = vmatpush1.xpose.msra.mxu0 0.0
    %7724 = vmatprep.subr.mxu0 0.0
    %7725 = vmatpush1.xpose.msra.mxu0 0.0
    %7726 = vmatprep.subr.mxu0 0.0
    %7727 = vmatpush1.xpose.msra.mxu0 0.0
    %7728 = vmatprep.subr.mxu0 0.0
    %7729 = vmatpush1.xpose.msra.mxu0 0.0
    %7730 = vmatprep.subr.mxu0 0.0
    %7731 = vmatpush1.xpose.msra.mxu0 0.0
    %7732 = vmatprep.subr.mxu0 0.0
    %7733 = vmatpush1.xpose.msra.mxu0 0.0
    %7734 = vmatprep.subr.mxu0 0.0
    %7735 = vmatpush1.xpose.msra.mxu0 0.0
    %7736 = vmatprep.subr.mxu0 0.0
    %7737 = vmatpush1.xpose.msra.mxu0 0.0
    %7738 = vmatprep.subr.mxu0 0.0
    %7739 = vmatpush1.xpose.msra.mxu0 0.0
    %7740 = vmatprep.subr.mxu0 0.0
    %7741 = vmatpush1.xpose.msra.mxu0 0.0
    %7742 = vmatprep.subr.mxu0 0.0
    %7743 = vmatpush1.xpose.msra.mxu0 0.0
    %7744 = vmatprep.subr.mxu0 0.0
    %7745 = vmatpush1.xpose.msra.mxu0 0.0
    %7746 = vmatprep.subr.mxu0 0.0
    %7747 = vmatpush1.xpose.msra.mxu0 0.0
    %7748 = vmatprep.subr.mxu0 0.0
    %7749 = vmatpush1.xpose.msra.mxu0 0.0
    %7750 = vmatprep.subr.mxu0 0.0
    %7751 = vmatpush1.xpose.msra.mxu0 0.0
    %7752 = vmatprep.subr.mxu0 0.0
    %7753 = vmatpush1.xpose.msra.mxu0 0.0
    %7754 = vmatprep.subr.mxu0 0.0
    %7755 = vmatpush1.xpose.msra.mxu0 0.0
    %7756 = vmatprep.subr.mxu0 0.0
    %7757 = vmatpush1.xpose.msra.mxu0 0.0
    %7758 = vmatprep.subr.mxu0 0.0
    %7759 = vmatpush1.xpose.msra.mxu0 0.0
    %7760 = vmatprep.subr.mxu0 0.0
    %7761 = vmatpush1.xpose.msra.mxu0 0.0
    %7762 = vmatprep.subr.mxu0 0.0
    %7763 = vmatpush1.xpose.msra.mxu0 0.0
    %7764 = vmatprep.subr.mxu0 0.0
    %7765 = vmatpush1.xpose.msra.mxu0 0.0
    %7766 = vmatprep.mubr.f32.mxu0 0.0
    %7767 = vmatmul.mubr.f32.gmra.mrb[0].mxu0 %v7698
    %v7768 = vpop.f32.mrb[0].mxu0
    %v7769 = vadd.f32 0.0, %v7768
    %v7770 = vpop.f32.mrb[0].mxu0
    %7771 = vdwg.mxu0
    %7772 = vrot.lane.b32.xlu0 %v7014, 120
    %v7773 = vpop.permute.xlu0 %7772
    %7774 = vrot.lane.b32.xlu0 %v7010, 88
    %v7775 = vpop.permute.xlu0 %7774
    %v7776 = vsel %vm554, %v7773, 0
    %v7778 = vsel %vm554, %v7775, 0
    %7780 = vmatprep.subr.mxu0 0.0
    %7781 = vmatpush1.xpose.msra.mxu0 %v7778
    %7782 = vmatprep.subr.mxu0 0.0
    %7783 = vmatpush1.xpose.msra.mxu0 0.0
    %7784 = vmatprep.subr.mxu0 0.0
    %7785 = vmatpush1.xpose.msra.mxu0 0.0
    %7786 = vmatprep.subr.mxu0 0.0
    %7787 = vmatpush1.xpose.msra.mxu0 0.0
    %7788 = vmatprep.subr.mxu0 0.0
    %7789 = vmatpush1.xpose.msra.mxu0 0.0
    %7790 = vmatprep.subr.mxu0 0.0
    %7791 = vmatpush1.xpose.msra.mxu0 0.0
    %7792 = vmatprep.subr.mxu0 0.0
    %7793 = vmatpush1.xpose.msra.mxu0 0.0
    %7794 = vmatprep.subr.mxu0 0.0
    %7795 = vmatpush1.xpose.msra.mxu0 0.0
    %7796 = vmatprep.subr.mxu0 0.0
    %7797 = vmatpush1.xpose.msra.mxu0 0.0
    %7798 = vmatprep.subr.mxu0 0.0
    %7799 = vmatpush1.xpose.msra.mxu0 0.0
    %7800 = vmatprep.subr.mxu0 0.0
    %7801 = vmatpush1.xpose.msra.mxu0 0.0
    %7802 = vmatprep.subr.mxu0 0.0
    %7803 = vmatpush1.xpose.msra.mxu0 0.0
    %7804 = vmatprep.subr.mxu0 0.0
    %7805 = vmatpush1.xpose.msra.mxu0 0.0
    %7806 = vmatprep.subr.mxu0 0.0
    %7807 = vmatpush1.xpose.msra.mxu0 0.0
    %7808 = vmatprep.subr.mxu0 0.0
    %7809 = vmatpush1.xpose.msra.mxu0 0.0
    %7810 = vmatprep.subr.mxu0 0.0
    %7811 = vmatpush1.xpose.msra.mxu0 0.0
    %7812 = vmatprep.subr.mxu0 0.0
    %7813 = vmatpush1.xpose.msra.mxu0 0.0
    %7814 = vmatprep.subr.mxu0 0.0
    %7815 = vmatpush1.xpose.msra.mxu0 0.0
    %7816 = vmatprep.subr.mxu0 0.0
    %7817 = vmatpush1.xpose.msra.mxu0 0.0
    %7818 = vmatprep.subr.mxu0 0.0
    %7819 = vmatpush1.xpose.msra.mxu0 0.0
    %7820 = vmatprep.subr.mxu0 0.0
    %7821 = vmatpush1.xpose.msra.mxu0 0.0
    %7822 = vmatprep.subr.mxu0 0.0
    %7823 = vmatpush1.xpose.msra.mxu0 0.0
    %7824 = vmatprep.subr.mxu0 0.0
    %7825 = vmatpush1.xpose.msra.mxu0 0.0
    %7826 = vmatprep.subr.mxu0 0.0
    %7827 = vmatpush1.xpose.msra.mxu0 0.0
    %7828 = vmatprep.subr.mxu0 0.0
    %7829 = vmatpush1.xpose.msra.mxu0 0.0
    %7830 = vmatprep.subr.mxu0 0.0
    %7831 = vmatpush1.xpose.msra.mxu0 0.0
    %7832 = vmatprep.subr.mxu0 0.0
    %7833 = vmatpush1.xpose.msra.mxu0 0.0
    %7834 = vmatprep.subr.mxu0 0.0
    %7835 = vmatpush1.xpose.msra.mxu0 0.0
    %7836 = vmatprep.subr.mxu0 0.0
    %7837 = vmatpush1.xpose.msra.mxu0 0.0
    %7838 = vmatprep.subr.mxu0 0.0
    %7839 = vmatpush1.xpose.msra.mxu0 0.0
    %7840 = vmatprep.subr.mxu0 0.0
    %7841 = vmatpush1.xpose.msra.mxu0 0.0
    %7842 = vmatprep.subr.mxu0 0.0
    %7843 = vmatpush1.xpose.msra.mxu0 0.0
    %7844 = vmatprep.mubr.f32.mxu0 0.0
    %7845 = vmatmul.mubr.f32.gmra.mrb[0].mxu0 %v7776
    %v7846 = vpop.f32.mrb[0].mxu0
    %v7847 = vadd.f32 0.0, %v7846
    %v7848 = vpop.f32.mrb[0].mxu0
    %7849 = vdwg.mxu0
    %7850 = vrot.lane.b32.xlu0 %v7014, 112
    %v7851 = vpop.permute.xlu0 %7850
    %7852 = vrot.lane.b32.xlu0 %v7010, 80
    %v7853 = vpop.permute.xlu0 %7852
    %v7854 = vsel %vm554, %v7851, 0
    %v7856 = vsel %vm554, %v7853, 0
    %7858 = vmatprep.subr.mxu0 0.0
    %7859 = vmatpush1.xpose.msra.mxu0 %v7856
    %7860 = vmatprep.subr.mxu0 0.0
    %7861 = vmatpush1.xpose.msra.mxu0 0.0
    %7862 = vmatprep.subr.mxu0 0.0
    %7863 = vmatpush1.xpose.msra.mxu0 0.0
    %7864 = vmatprep.subr.mxu0 0.0
    %7865 = vmatpush1.xpose.msra.mxu0 0.0
    %7866 = vmatprep.subr.mxu0 0.0
    %7867 = vmatpush1.xpose.msra.mxu0 0.0
    %7868 = vmatprep.subr.mxu0 0.0
    %7869 = vmatpush1.xpose.msra.mxu0 0.0
    %7870 = vmatprep.subr.mxu0 0.0
    %7871 = vmatpush1.xpose.msra.mxu0 0.0
    %7872 = vmatprep.subr.mxu0 0.0
    %7873 = vmatpush1.xpose.msra.mxu0 0.0
    %7874 = vmatprep.subr.mxu0 0.0
    %7875 = vmatpush1.xpose.msra.mxu0 0.0
    %7876 = vmatprep.subr.mxu0 0.0
    %7877 = vmatpush1.xpose.msra.mxu0 0.0
    %7878 = vmatprep.subr.mxu0 0.0
    %7879 = vmatpush1.xpose.msra.mxu0 0.0
    %7880 = vmatprep.subr.mxu0 0.0
    %7881 = vmatpush1.xpose.msra.mxu0 0.0
    %7882 = vmatprep.subr.mxu0 0.0
    %7883 = vmatpush1.xpose.msra.mxu0 0.0
    %7884 = vmatprep.subr.mxu0 0.0
    %7885 = vmatpush1.xpose.msra.mxu0 0.0
    %7886 = vmatprep.subr.mxu0 0.0
    %7887 = vmatpush1.xpose.msra.mxu0 0.0
    %7888 = vmatprep.subr.mxu0 0.0
    %7889 = vmatpush1.xpose.msra.mxu0 0.0
    %7890 = vmatprep.subr.mxu0 0.0
    %7891 = vmatpush1.xpose.msra.mxu0 0.0
    %7892 = vmatprep.subr.mxu0 0.0
    %7893 = vmatpush1.xpose.msra.mxu0 0.0
    %7894 = vmatprep.subr.mxu0 0.0
    %7895 = vmatpush1.xpose.msra.mxu0 0.0
    %7896 = vmatprep.subr.mxu0 0.0
    %7897 = vmatpush1.xpose.msra.mxu0 0.0
    %7898 = vmatprep.subr.mxu0 0.0
    %7899 = vmatpush1.xpose.msra.mxu0 0.0
    %7900 = vmatprep.subr.mxu0 0.0
    %7901 = vmatpush1.xpose.msra.mxu0 0.0
    %7902 = vmatprep.subr.mxu0 0.0
    %7903 = vmatpush1.xpose.msra.mxu0 0.0
    %7904 = vmatprep.subr.mxu0 0.0
    %7905 = vmatpush1.xpose.msra.mxu0 0.0
    %7906 = vmatprep.subr.mxu0 0.0
    %7907 = vmatpush1.xpose.msra.mxu0 0.0
    %7908 = vmatprep.subr.mxu0 0.0
    %7909 = vmatpush1.xpose.msra.mxu0 0.0
    %7910 = vmatprep.subr.mxu0 0.0
    %7911 = vmatpush1.xpose.msra.mxu0 0.0
    %7912 = vmatprep.subr.mxu0 0.0
    %7913 = vmatpush1.xpose.msra.mxu0 0.0
    %7914 = vmatprep.subr.mxu0 0.0
    %7915 = vmatpush1.xpose.msra.mxu0 0.0
    %7916 = vmatprep.subr.mxu0 0.0
    %7917 = vmatpush1.xpose.msra.mxu0 0.0
    %7918 = vmatprep.subr.mxu0 0.0
    %7919 = vmatpush1.xpose.msra.mxu0 0.0
    %7920 = vmatprep.subr.mxu0 0.0
    %7921 = vmatpush1.xpose.msra.mxu0 0.0
    %7922 = vmatprep.mubr.f32.mxu0 0.0
    %7923 = vmatmul.mubr.f32.gmra.mrb[0].mxu0 %v7854
    %v7924 = vpop.f32.mrb[0].mxu0
    %v7925 = vadd.f32 0.0, %v7924
    %v7926 = vpop.f32.mrb[0].mxu0
    %7927 = vdwg.mxu0
    %7928 = vrot.lane.b32.xlu0 %v7014, 104
    %v7929 = vpop.permute.xlu0 %7928
    %7930 = vrot.lane.b32.xlu0 %v7010, 72
    %v7931 = vpop.permute.xlu0 %7930
    %v7932 = vsel %vm554, %v7929, 0
    %v7934 = vsel %vm554, %v7931, 0
    %7936 = vmatprep.subr.mxu0 0.0
    %7937 = vmatpush1.xpose.msra.mxu0 %v7934
    %7938 = vmatprep.subr.mxu0 0.0
    %7939 = vmatpush1.xpose.msra.mxu0 0.0
    %7940 = vmatprep.subr.mxu0 0.0
    %7941 = vmatpush1.xpose.msra.mxu0 0.0
    %7942 = vmatprep.subr.mxu0 0.0
    %7943 = vmatpush1.xpose.msra.mxu0 0.0
    %7944 = vmatprep.subr.mxu0 0.0
    %7945 = vmatpush1.xpose.msra.mxu0 0.0
    %7946 = vmatprep.subr.mxu0 0.0
    %7947 = vmatpush1.xpose.msra.mxu0 0.0
    %7948 = vmatprep.subr.mxu0 0.0
    %7949 = vmatpush1.xpose.msra.mxu0 0.0
    %7950 = vmatprep.subr.mxu0 0.0
    %7951 = vmatpush1.xpose.msra.mxu0 0.0
    %7952 = vmatprep.subr.mxu0 0.0
    %7953 = vmatpush1.xpose.msra.mxu0 0.0
    %7954 = vmatprep.subr.mxu0 0.0
    %7955 = vmatpush1.xpose.msra.mxu0 0.0
    %7956 = vmatprep.subr.mxu0 0.0
    %7957 = vmatpush1.xpose.msra.mxu0 0.0
    %7958 = vmatprep.subr.mxu0 0.0
    %7959 = vmatpush1.xpose.msra.mxu0 0.0
    %7960 = vmatprep.subr.mxu0 0.0
    %7961 = vmatpush1.xpose.msra.mxu0 0.0
    %7962 = vmatprep.subr.mxu0 0.0
    %7963 = vmatpush1.xpose.msra.mxu0 0.0
    %7964 = vmatprep.subr.mxu0 0.0
    %7965 = vmatpush1.xpose.msra.mxu0 0.0
    %7966 = vmatprep.subr.mxu0 0.0
    %7967 = vmatpush1.xpose.msra.mxu0 0.0
    %7968 = vmatprep.subr.mxu0 0.0
    %7969 = vmatpush1.xpose.msra.mxu0 0.0
    %7970 = vmatprep.subr.mxu0 0.0
    %7971 = vmatpush1.xpose.msra.mxu0 0.0
    %7972 = vmatprep.subr.mxu0 0.0
    %7973 = vmatpush1.xpose.msra.mxu0 0.0
    %7974 = vmatprep.subr.mxu0 0.0
    %7975 = vmatpush1.xpose.msra.mxu0 0.0
    %7976 = vmatprep.subr.mxu0 0.0
    %7977 = vmatpush1.xpose.msra.mxu0 0.0
    %7978 = vmatprep.subr.mxu0 0.0
    %7979 = vmatpush1.xpose.msra.mxu0 0.0
    %7980 = vmatprep.subr.mxu0 0.0
    %7981 = vmatpush1.xpose.msra.mxu0 0.0
    %7982 = vmatprep.subr.mxu0 0.0
    %7983 = vmatpush1.xpose.msra.mxu0 0.0
    %7984 = vmatprep.subr.mxu0 0.0
    %7985 = vmatpush1.xpose.msra.mxu0 0.0
    %7986 = vmatprep.subr.mxu0 0.0
    %7987 = vmatpush1.xpose.msra.mxu0 0.0
    %7988 = vmatprep.subr.mxu0 0.0
    %7989 = vmatpush1.xpose.msra.mxu0 0.0
    %7990 = vmatprep.subr.mxu0 0.0
    %7991 = vmatpush1.xpose.msra.mxu0 0.0
    %7992 = vmatprep.subr.mxu0 0.0
    %7993 = vmatpush1.xpose.msra.mxu0 0.0
    %7994 = vmatprep.subr.mxu0 0.0
    %7995 = vmatpush1.xpose.msra.mxu0 0.0
    %7996 = vmatprep.subr.mxu0 0.0
    %7997 = vmatpush1.xpose.msra.mxu0 0.0
    %7998 = vmatprep.subr.mxu0 0.0
    %7999 = vmatpush1.xpose.msra.mxu0 0.0
    %8000 = vmatprep.mubr.f32.mxu0 0.0
    %8001 = vmatmul.mubr.f32.gmra.mrb[0].mxu0 %v7932
    %v8002 = vpop.f32.mrb[0].mxu0
    %v8003 = vadd.f32 0.0, %v8002
    %v8004 = vpop.f32.mrb[0].mxu0
    %8005 = vdwg.mxu0
    %8007 = vrot.lane.b32.xlu0 %v7847, 8
    %v8008 = vpop.permute.xlu0 %8007
    %8011 = vrot.lane.b32.xlu0 %v7925, 16
    %v8012 = vpop.permute.xlu0 %8011
    %8015 = vrot.lane.b32.xlu0 %v8003, 24
    %v8016 = vpop.permute.xlu0 %8015
    %v8018 = vsel %vm554, %v7769, %v8008
    %v8019 = vsel %vm937, %v8018, %v8012
    %v8020 = vsel %vm1388, %v8019, %v8016
    %v8021 = vadd.f32 %v8020, %v4961
    %v8022 = vsel %vm446, %v8021, -inf
    %8023 = vmax.xlane.f32.xlu0 %v8022
    %v8024 = vpop.xlane.xlu0 %8023
    %v8025 = vsub.f32 %v8021, %v8024
    %v8026 = vmul.f32 %v8025, 1.442695
    %v8027 = vpow.pop %v8026
    %v8028 = vsel %vm554, %v8027, 0.0
    %8029 = vadd.xlane.f32.xlu0 %v8028
    %v8030 = vpop.xlane.xlu0 %8029
    %v8031 = vrcp.pop %v8030
    %8032 = vrot.lane.b32.xlu0 %v7010, 64
    %v8033 = vpop.permute.xlu0 %8032
    %v8036 = vsel %vm554, %v8027, 0
    %8038 = vmatprep.subr.mxu0 0.0
    %8039 = vmatpush1.msra.mxu0 %v8033
    %8040 = vmatprep.subr.mxu0 0.0
    %8041 = vmatpush1.msra.mxu0 0.0
    %8042 = vmatprep.subr.mxu0 0.0
    %8043 = vmatpush1.msra.mxu0 0.0
    %8044 = vmatprep.subr.mxu0 0.0
    %8045 = vmatpush1.msra.mxu0 0.0
    %8046 = vmatprep.subr.mxu0 0.0
    %8047 = vmatpush1.msra.mxu0 0.0
    %8048 = vmatprep.subr.mxu0 0.0
    %8049 = vmatpush1.msra.mxu0 0.0
    %8050 = vmatprep.subr.mxu0 0.0
    %8051 = vmatpush1.msra.mxu0 0.0
    %8052 = vmatprep.subr.mxu0 0.0
    %8053 = vmatpush1.msra.mxu0 0.0
    %8054 = vmatprep.subr.mxu0 0.0
    %8055 = vmatpush1.msra.mxu0 0.0
    %8056 = vmatprep.subr.mxu0 0.0
    %8057 = vmatpush1.msra.mxu0 0.0
    %8058 = vmatprep.subr.mxu0 0.0
    %8059 = vmatpush1.msra.mxu0 0.0
    %8060 = vmatprep.subr.mxu0 0.0
    %8061 = vmatpush1.msra.mxu0 0.0
    %8062 = vmatprep.subr.mxu0 0.0
    %8063 = vmatpush1.msra.mxu0 0.0
    %8064 = vmatprep.subr.mxu0 0.0
    %8065 = vmatpush1.msra.mxu0 0.0
    %8066 = vmatprep.subr.mxu0 0.0
    %8067 = vmatpush1.msra.mxu0 0.0
    %8068 = vmatprep.subr.mxu0 0.0
    %8069 = vmatpush1.msra.mxu0 0.0
    %8070 = vmatprep.subr.mxu0 0.0
    %8071 = vmatpush1.msra.mxu0 0.0
    %8072 = vmatprep.subr.mxu0 0.0
    %8073 = vmatpush1.msra.mxu0 0.0
    %8074 = vmatprep.subr.mxu0 0.0
    %8075 = vmatpush1.msra.mxu0 0.0
    %8076 = vmatprep.subr.mxu0 0.0
    %8077 = vmatpush1.msra.mxu0 0.0
    %8078 = vmatprep.subr.mxu0 0.0
    %8079 = vmatpush1.msra.mxu0 0.0
    %8080 = vmatprep.subr.mxu0 0.0
    %8081 = vmatpush1.msra.mxu0 0.0
    %8082 = vmatprep.subr.mxu0 0.0
    %8083 = vmatpush1.msra.mxu0 0.0
    %8084 = vmatprep.subr.mxu0 0.0
    %8085 = vmatpush1.msra.mxu0 0.0
    %8086 = vmatprep.subr.mxu0 0.0
    %8087 = vmatpush1.msra.mxu0 0.0
    %8088 = vmatprep.subr.mxu0 0.0
    %8089 = vmatpush1.msra.mxu0 0.0
    %8090 = vmatprep.subr.mxu0 0.0
    %8091 = vmatpush1.msra.mxu0 0.0
    %8092 = vmatprep.subr.mxu0 0.0
    %8093 = vmatpush1.msra.mxu0 0.0
    %8094 = vmatprep.subr.mxu0 0.0
    %8095 = vmatpush1.msra.mxu0 0.0
    %8096 = vmatprep.subr.mxu0 0.0
    %8097 = vmatpush1.msra.mxu0 0.0
    %8098 = vmatprep.subr.mxu0 0.0
    %8099 = vmatpush1.msra.mxu0 0.0
    %8100 = vmatprep.subr.mxu0 0.0
    %8101 = vmatpush1.msra.mxu0 0.0
    %8102 = vmatprep.mubr.f32.mxu0 0.0
    %8103 = vmatmul.mubr.f32.gmra.mrb[0].mxu0 %v8036
    %v8104 = vpop.f32.mrb[0].mxu0
    %v8105 = vadd.f32 0.0, %v8104
    %v8106 = vpop.f32.mrb[0].mxu0
    %8107 = vdwg.mxu0
    %v8108 = vmul.f32 %v8105, %v8031
    %8109 = vrot.lane.b32.xlu0 %v8027, 120
    %v8110 = vpop.permute.xlu0 %8109
    %v8112 = vsel %vm554, %v8110, 0.0
    %8113 = vadd.xlane.f32.xlu0 %v8112
    %v8114 = vpop.xlane.xlu0 %8113
    %v8115 = vrcp.pop %v8114
    %8116 = vrot.lane.b32.xlu0 %v7010, 56
    %v8117 = vpop.permute.xlu0 %8116
    %v8119 = vsel %vm554, %v8110, 0
    %8121 = vmatprep.subr.mxu0 0.0
    %8122 = vmatpush1.msra.mxu0 %v8117
    %8123 = vmatprep.subr.mxu0 0.0
    %8124 = vmatpush1.msra.mxu0 0.0
    %8125 = vmatprep.subr.mxu0 0.0
    %8126 = vmatpush1.msra.mxu0 0.0
    %8127 = vmatprep.subr.mxu0 0.0
    %8128 = vmatpush1.msra.mxu0 0.0
    %8129 = vmatprep.subr.mxu0 0.0
    %8130 = vmatpush1.msra.mxu0 0.0
    %8131 = vmatprep.subr.mxu0 0.0
    %8132 = vmatpush1.msra.mxu0 0.0
    %8133 = vmatprep.subr.mxu0 0.0
    %8134 = vmatpush1.msra.mxu0 0.0
    %8135 = vmatprep.subr.mxu0 0.0
    %8136 = vmatpush1.msra.mxu0 0.0
    %8137 = vmatprep.subr.mxu0 0.0
    %8138 = vmatpush1.msra.mxu0 0.0
    %8139 = vmatprep.subr.mxu0 0.0
    %8140 = vmatpush1.msra.mxu0 0.0
    %8141 = vmatprep.subr.mxu0 0.0
    %8142 = vmatpush1.msra.mxu0 0.0
    %8143 = vmatprep.subr.mxu0 0.0
    %8144 = vmatpush1.msra.mxu0 0.0
    %8145 = vmatprep.subr.mxu0 0.0
    %8146 = vmatpush1.msra.mxu0 0.0
    %8147 = vmatprep.subr.mxu0 0.0
    %8148 = vmatpush1.msra.mxu0 0.0
    %8149 = vmatprep.subr.mxu0 0.0
    %8150 = vmatpush1.msra.mxu0 0.0
    %8151 = vmatprep.subr.mxu0 0.0
    %8152 = vmatpush1.msra.mxu0 0.0
    %8153 = vmatprep.subr.mxu0 0.0
    %8154 = vmatpush1.msra.mxu0 0.0
    %8155 = vmatprep.subr.mxu0 0.0
    %8156 = vmatpush1.msra.mxu0 0.0
    %8157 = vmatprep.subr.mxu0 0.0
    %8158 = vmatpush1.msra.mxu0 0.0
    %8159 = vmatprep.subr.mxu0 0.0
    %8160 = vmatpush1.msra.mxu0 0.0
    %8161 = vmatprep.subr.mxu0 0.0
    %8162 = vmatpush1.msra.mxu0 0.0
    %8163 = vmatprep.subr.mxu0 0.0
    %8164 = vmatpush1.msra.mxu0 0.0
    %8165 = vmatprep.subr.mxu0 0.0
    %8166 = vmatpush1.msra.mxu0 0.0
    %8167 = vmatprep.subr.mxu0 0.0
    %8168 = vmatpush1.msra.mxu0 0.0
    %8169 = vmatprep.subr.mxu0 0.0
    %8170 = vmatpush1.msra.mxu0 0.0
    %8171 = vmatprep.subr.mxu0 0.0
    %8172 = vmatpush1.msra.mxu0 0.0
    %8173 = vmatprep.subr.mxu0 0.0
    %8174 = vmatpush1.msra.mxu0 0.0
    %8175 = vmatprep.subr.mxu0 0.0
    %8176 = vmatpush1.msra.mxu0 0.0
    %8177 = vmatprep.subr.mxu0 0.0
    %8178 = vmatpush1.msra.mxu0 0.0
    %8179 = vmatprep.subr.mxu0 0.0
    %8180 = vmatpush1.msra.mxu0 0.0
    %8181 = vmatprep.subr.mxu0 0.0
    %8182 = vmatpush1.msra.mxu0 0.0
    %8183 = vmatprep.subr.mxu0 0.0
    %8184 = vmatpush1.msra.mxu0 0.0
    %8185 = vmatprep.mubr.f32.mxu0 0.0
    %8186 = vmatmul.mubr.f32.gmra.mrb[0].mxu0 %v8119
    %v8187 = vpop.f32.mrb[0].mxu0
    %v8188 = vadd.f32 0.0, %v8187
    %v8189 = vpop.f32.mrb[0].mxu0
    %8190 = vdwg.mxu0
    %v8191 = vmul.f32 %v8188, %v8115
    %8192 = vrot.lane.b32.xlu0 %v8027, 112
    %v8193 = vpop.permute.xlu0 %8192
    %v8195 = vsel %vm554, %v8193, 0.0
    %8196 = vadd.xlane.f32.xlu0 %v8195
    %v8197 = vpop.xlane.xlu0 %8196
    %v8198 = vrcp.pop %v8197
    %8199 = vrot.lane.b32.xlu0 %v7010, 48
    %v8200 = vpop.permute.xlu0 %8199
    %v8202 = vsel %vm554, %v8193, 0
    %8204 = vmatprep.subr.mxu0 0.0
    %8205 = vmatpush1.msra.mxu0 %v8200
    %8206 = vmatprep.subr.mxu0 0.0
    %8207 = vmatpush1.msra.mxu0 0.0
    %8208 = vmatprep.subr.mxu0 0.0
    %8209 = vmatpush1.msra.mxu0 0.0
    %8210 = vmatprep.subr.mxu0 0.0
    %8211 = vmatpush1.msra.mxu0 0.0
    %8212 = vmatprep.subr.mxu0 0.0
    %8213 = vmatpush1.msra.mxu0 0.0
    %8214 = vmatprep.subr.mxu0 0.0
    %8215 = vmatpush1.msra.mxu0 0.0
    %8216 = vmatprep.subr.mxu0 0.0
    %8217 = vmatpush1.msra.mxu0 0.0
    %8218 = vmatprep.subr.mxu0 0.0
    %8219 = vmatpush1.msra.mxu0 0.0
    %8220 = vmatprep.subr.mxu0 0.0
    %8221 = vmatpush1.msra.mxu0 0.0
    %8222 = vmatprep.subr.mxu0 0.0
    %8223 = vmatpush1.msra.mxu0 0.0
    %8224 = vmatprep.subr.mxu0 0.0
    %8225 = vmatpush1.msra.mxu0 0.0
    %8226 = vmatprep.subr.mxu0 0.0
    %8227 = vmatpush1.msra.mxu0 0.0
    %8228 = vmatprep.subr.mxu0 0.0
    %8229 = vmatpush1.msra.mxu0 0.0
    %8230 = vmatprep.subr.mxu0 0.0
    %8231 = vmatpush1.msra.mxu0 0.0
    %8232 = vmatprep.subr.mxu0 0.0
    %8233 = vmatpush1.msra.mxu0 0.0
    %8234 = vmatprep.subr.mxu0 0.0
    %8235 = vmatpush1.msra.mxu0 0.0
    %8236 = vmatprep.subr.mxu0 0.0
    %8237 = vmatpush1.msra.mxu0 0.0
    %8238 = vmatprep.subr.mxu0 0.0
    %8239 = vmatpush1.msra.mxu0 0.0
    %8240 = vmatprep.subr.mxu0 0.0
    %8241 = vmatpush1.msra.mxu0 0.0
    %8242 = vmatprep.subr.mxu0 0.0
    %8243 = vmatpush1.msra.mxu0 0.0
    %8244 = vmatprep.subr.mxu0 0.0
    %8245 = vmatpush1.msra.mxu0 0.0
    %8246 = vmatprep.subr.mxu0 0.0
    %8247 = vmatpush1.msra.mxu0 0.0
    %8248 = vmatprep.subr.mxu0 0.0
    %8249 = vmatpush1.msra.mxu0 0.0
    %8250 = vmatprep.subr.mxu0 0.0
    %8251 = vmatpush1.msra.mxu0 0.0
    %8252 = vmatprep.subr.mxu0 0.0
    %8253 = vmatpush1.msra.mxu0 0.0
    %8254 = vmatprep.subr.mxu0 0.0
    %8255 = vmatpush1.msra.mxu0 0.0
    %8256 = vmatprep.subr.mxu0 0.0
    %8257 = vmatpush1.msra.mxu0 0.0
    %8258 = vmatprep.subr.mxu0 0.0
    %8259 = vmatpush1.msra.mxu0 0.0
    %8260 = vmatprep.subr.mxu0 0.0
    %8261 = vmatpush1.msra.mxu0 0.0
    %8262 = vmatprep.subr.mxu0 0.0
    %8263 = vmatpush1.msra.mxu0 0.0
    %8264 = vmatprep.subr.mxu0 0.0
    %8265 = vmatpush1.msra.mxu0 0.0
    %8266 = vmatprep.subr.mxu0 0.0
    %8267 = vmatpush1.msra.mxu0 0.0
    %8268 = vmatprep.mubr.f32.mxu0 0.0
    %8269 = vmatmul.mubr.f32.gmra.mrb[0].mxu0 %v8202
    %v8270 = vpop.f32.mrb[0].mxu0
    %v8271 = vadd.f32 0.0, %v8270
    %v8272 = vpop.f32.mrb[0].mxu0
    %8273 = vdwg.mxu0
    %v8274 = vmul.f32 %v8271, %v8198
    %8275 = vrot.lane.b32.xlu0 %v8027, 104
    %v8276 = vpop.permute.xlu0 %8275
    %v8278 = vsel %vm554, %v8276, 0.0
    %8279 = vadd.xlane.f32.xlu0 %v8278
    %v8280 = vpop.xlane.xlu0 %8279
    %v8281 = vrcp.pop %v8280
    %8282 = vrot.lane.b32.xlu0 %v7010, 40
    %v8283 = vpop.permute.xlu0 %8282
    %v8285 = vsel %vm554, %v8276, 0
    %8287 = vmatprep.subr.mxu0 0.0
    %8288 = vmatpush1.msra.mxu0 %v8283
    %8289 = vmatprep.subr.mxu0 0.0
    %8290 = vmatpush1.msra.mxu0 0.0
    %8291 = vmatprep.subr.mxu0 0.0
    %8292 = vmatpush1.msra.mxu0 0.0
    %8293 = vmatprep.subr.mxu0 0.0
    %8294 = vmatpush1.msra.mxu0 0.0
    %8295 = vmatprep.subr.mxu0 0.0
    %8296 = vmatpush1.msra.mxu0 0.0
    %8297 = vmatprep.subr.mxu0 0.0
    %8298 = vmatpush1.msra.mxu0 0.0
    %8299 = vmatprep.subr.mxu0 0.0
    %8300 = vmatpush1.msra.mxu0 0.0
    %8301 = vmatprep.subr.mxu0 0.0
    %8302 = vmatpush1.msra.mxu0 0.0
    %8303 = vmatprep.subr.mxu0 0.0
    %8304 = vmatpush1.msra.mxu0 0.0
    %8305 = vmatprep.subr.mxu0 0.0
    %8306 = vmatpush1.msra.mxu0 0.0
    %8307 = vmatprep.subr.mxu0 0.0
    %8308 = vmatpush1.msra.mxu0 0.0
    %8309 = vmatprep.subr.mxu0 0.0
    %8310 = vmatpush1.msra.mxu0 0.0
    %8311 = vmatprep.subr.mxu0 0.0
    %8312 = vmatpush1.msra.mxu0 0.0
    %8313 = vmatprep.subr.mxu0 0.0
    %8314 = vmatpush1.msra.mxu0 0.0
    %8315 = vmatprep.subr.mxu0 0.0
    %8316 = vmatpush1.msra.mxu0 0.0
    %8317 = vmatprep.subr.mxu0 0.0
    %8318 = vmatpush1.msra.mxu0 0.0
    %8319 = vmatprep.subr.mxu0 0.0
    %8320 = vmatpush1.msra.mxu0 0.0
    %8321 = vmatprep.subr.mxu0 0.0
    %8322 = vmatpush1.msra.mxu0 0.0
    %8323 = vmatprep.subr.mxu0 0.0
    %8324 = vmatpush1.msra.mxu0 0.0
    %8325 = vmatprep.subr.mxu0 0.0
    %8326 = vmatpush1.msra.mxu0 0.0
    %8327 = vmatprep.subr.mxu0 0.0
    %8328 = vmatpush1.msra.mxu0 0.0
    %8329 = vmatprep.subr.mxu0 0.0
    %8330 = vmatpush1.msra.mxu0 0.0
    %8331 = vmatprep.subr.mxu0 0.0
    %8332 = vmatpush1.msra.mxu0 0.0
    %8333 = vmatprep.subr.mxu0 0.0
    %8334 = vmatpush1.msra.mxu0 0.0
    %8335 = vmatprep.subr.mxu0 0.0
    %8336 = vmatpush1.msra.mxu0 0.0
    %8337 = vmatprep.subr.mxu0 0.0
    %8338 = vmatpush1.msra.mxu0 0.0
    %8339 = vmatprep.subr.mxu0 0.0
    %8340 = vmatpush1.msra.mxu0 0.0
    %8341 = vmatprep.subr.mxu0 0.0
    %8342 = vmatpush1.msra.mxu0 0.0
    %8343 = vmatprep.subr.mxu0 0.0
    %8344 = vmatpush1.msra.mxu0 0.0
    %8345 = vmatprep.subr.mxu0 0.0
    %8346 = vmatpush1.msra.mxu0 0.0
    %8347 = vmatprep.subr.mxu0 0.0
    %8348 = vmatpush1.msra.mxu0 0.0
    %8349 = vmatprep.subr.mxu0 0.0
    %8350 = vmatpush1.msra.mxu0 0.0
    %8351 = vmatprep.mubr.f32.mxu0 0.0
    %8352 = vmatmul.mubr.f32.gmra.mrb[0].mxu0 %v8285
    %v8353 = vpop.f32.mrb[0].mxu0
    %v8354 = vadd.f32 0.0, %v8353
    %v8355 = vpop.f32.mrb[0].mxu0
    %8356 = vdwg.mxu0
    %v8357 = vmul.f32 %v8354, %v8281
    %8359 = vrot.lane.b32.xlu0 %v8191, 8
    %v8360 = vpop.permute.xlu0 %8359
    %8363 = vrot.lane.b32.xlu0 %v8274, 16
    %v8364 = vpop.permute.xlu0 %8363
    %8367 = vrot.lane.b32.xlu0 %v8357, 24
    %v8368 = vpop.permute.xlu0 %8367
    %v8370 = vsel %vm554, %v8108, %v8360
    %v8371 = vsel %vm937, %v8370, %v8364
    %v8372 = vsel %vm1388, %v8371, %v8368
    %v8374 = vlaneseq
    %v8375 = vshrl.u32 %v8374, 7
    %v8376 = vsub.s32 0, %v8375
    %v8377 = vrot.slane %v6925, %v8376
    %v8380 = vsel %vm446, %v7693, 0
    %v8383 = vsel %vm446, %v8372, 0
    %8385 = vmatprep.subr.mxu0 0.0
    %8386 = vmatpush1.msra.mxu0 %v6920
    %8387 = vmatprep.subr.mxu0 0.0
    %8388 = vmatpush1.msra.mxu0 %v6921
    %8389 = vmatprep.subr.mxu0 0.0
    %8390 = vmatpush1.msra.mxu0 %v6922
    %8391 = vmatprep.subr.mxu0 0.0
    %8392 = vmatpush1.msra.mxu0 %v6923
    %8393 = vmatprep.subr.mxu0 0.0
    %8394 = vmatpush1.msra.mxu0 0.0
    %8395 = vmatprep.subr.mxu0 0.0
    %8396 = vmatpush1.msra.mxu0 0.0
    %8397 = vmatprep.subr.mxu0 0.0
    %8398 = vmatpush1.msra.mxu0 0.0
    %8399 = vmatprep.subr.mxu0 0.0
    %8400 = vmatpush1.msra.mxu0 0.0
    %8401 = vmatprep.subr.mxu0 0.0
    %8402 = vmatpush1.msra.mxu0 0.0
    %8403 = vmatprep.subr.mxu0 0.0
    %8404 = vmatpush1.msra.mxu0 0.0
    %8405 = vmatprep.subr.mxu0 0.0
    %8406 = vmatpush1.msra.mxu0 0.0
    %8407 = vmatprep.subr.mxu0 0.0
    %8408 = vmatpush1.msra.mxu0 0.0
    %8409 = vmatprep.subr.mxu0 0.0
    %8410 = vmatpush1.msra.mxu0 0.0
    %8411 = vmatprep.subr.mxu0 0.0
    %8412 = vmatpush1.msra.mxu0 0.0
    %8413 = vmatprep.subr.mxu0 0.0
    %8414 = vmatpush1.msra.mxu0 0.0
    %8415 = vmatprep.subr.mxu0 0.0
    %8416 = vmatpush1.msra.mxu0 0.0
    %8417 = vmatprep.subr.mxu0 0.0
    %8418 = vmatpush1.msra.mxu0 0.0
    %8419 = vmatprep.subr.mxu0 0.0
    %8420 = vmatpush1.msra.mxu0 0.0
    %8421 = vmatprep.subr.mxu0 0.0
    %8422 = vmatpush1.msra.mxu0 0.0
    %8423 = vmatprep.subr.mxu0 0.0
    %8424 = vmatpush1.msra.mxu0 0.0
    %8425 = vmatprep.subr.mxu0 0.0
    %8426 = vmatpush1.msra.mxu0 0.0
    %8427 = vmatprep.subr.mxu0 0.0
    %8428 = vmatpush1.msra.mxu0 0.0
    %8429 = vmatprep.subr.mxu0 0.0
    %8430 = vmatpush1.msra.mxu0 0.0
    %8431 = vmatprep.subr.mxu0 0.0
    %8432 = vmatpush1.msra.mxu0 0.0
    %8433 = vmatprep.subr.mxu0 0.0
    %8434 = vmatpush1.msra.mxu0 0.0
    %8435 = vmatprep.subr.mxu0 0.0
    %8436 = vmatpush1.msra.mxu0 0.0
    %8437 = vmatprep.subr.mxu0 0.0
    %8438 = vmatpush1.msra.mxu0 0.0
    %8439 = vmatprep.subr.mxu0 0.0
    %8440 = vmatpush1.msra.mxu0 0.0
    %8441 = vmatprep.subr.mxu0 0.0
    %8442 = vmatpush1.msra.mxu0 0.0
    %8443 = vmatprep.subr.mxu0 0.0
    %8444 = vmatpush1.msra.mxu0 0.0
    %8445 = vmatprep.subr.mxu0 0.0
    %8446 = vmatpush1.msra.mxu0 0.0
    %8447 = vmatprep.subr.mxu0 0.0
    %8448 = vmatpush1.msra.mxu0 0.0
    %8449 = vmatprep.mubr.f32.mxu0 0.0
    %8450 = vmatmul.mubr.f32.gmra.mrb[0].mxu0 %v8380
    %v8451 = vpop.f32.mrb[0].mxu0
    %v8452 = vadd.f32 %v8377, %v8451
    %v8453 = vpop.f32.mrb[0].mxu0
    %8454 = vmatprep.mubr.f32.mxu0 0.0
    %8455 = vmatmul.mubr.f32.gmra.mrb[0].mxu0 %v8383
    %v8456 = vpop.f32.mrb[0].mxu0
    %v8457 = vadd.f32 %v8377, %v8456
    %v8458 = vpop.f32.mrb[0].mxu0
    %8459 = vdwg.mxu0
    %v8460 = vadd.f32 %v6908, %v8452
    %v8461 = vadd.f32 %v6909, %v8457
    %v8462 = vsel %vm446, %v8460, 0.0
    %8463 = vadd.xlane.f32.xlu0 %v8462
    %v8464 = vpop.xlane.xlu0 %8463
    %v8465 = vsel %vm446, %v8461, 0.0
    %8466 = vadd.xlane.f32.xlu0 %v8465
    %v8467 = vpop.xlane.xlu0 %8466
    %v8468 = vmul.f32 %v8464, %v2348
    %v8469 = vmul.f32 %v8467, %v2348
    %v8470 = vsub.f32 %v8460, %v8468
    %v8471 = vsub.f32 %v8461, %v8469
    %v8472 = vmul.f32 %v8470, %v8470
    %v8473 = vmul.f32 %v8471, %v8471
    %v8474 = vsel %vm446, %v8472, 0.0
    %8475 = vadd.xlane.f32.xlu0 %v8474
    %v8476 = vpop.xlane.xlu0 %8475
    %v8477 = vsel %vm446, %v8473, 0.0
    %8478 = vadd.xlane.f32.xlu0 %v8477
    %v8479 = vpop.xlane.xlu0 %8478
    %v8480 = vmul.f32 %v8476, %v2348
    %v8481 = vmul.f32 %v8479, %v2348
    %v8482 = vadd.f32 %v8480, 1e-05
    %v8483 = vadd.f32 %v8481, 1e-05
    %v8484 = vrsqrt.pop %v8482
    %v8485 = vrsqrt.pop %v8483
    %v8486 = vmul.f32 %v8470, %v8484
    %v8487 = vmul.f32 %v8471, %v8485
    %v8488 = vlaneseq
    %v8489 = vshrl.u32 %v8488, 7
    %v8490 = vsub.s32 0, %v8489
    %v8491 = vrot.slane %v6911, %v8490
    %v8492 = vmul.f32 %v8486, %v8491
    %v8493 = vmul.f32 %v8487, %v8491
    %v8494 = vlaneseq
    %v8495 = vshrl.u32 %v8494, 7
    %v8496 = vsub.s32 1, %v8495
    %v8497 = vrot.slane %v6911, %v8496
    %v8498 = vadd.f32 %v8492, %v8497
    %v8499 = vadd.f32 %v8493, %v8497
    %s8500 = scalar_lea.vmem %s19, 32
    %v8501 = vld [vmem:[%s8500] sm:$0xff]
    %v8502 = vld [vmem:[%s8500 + $0x8] sm:$0xff]
    %v8503 = vld [vmem:[%s8500 + $0x10] sm:$0xff]
    %v8504 = vld [vmem:[%s8500 + $0x18] sm:$0xff]
    %s8505 = scalar_lea.vmem [#allocation20], 1
    %v8506 = vld [vmem:[%s8505] sm:$0x1]
    %v8508 = vlaneseq
    %v8509 = vshrl.u32 %v8508, 7
    %v8510 = vsub.s32 0, %v8509
    %v8511 = vrot.slane %v8506, %v8510
    %8513 = vmatprep.subr.mxu0 0.0
    %8514 = vmatpush1.msra.mxu0 %v8501
    %8515 = vmatprep.subr.mxu0 0.0
    %8516 = vmatpush1.msra.mxu0 %v8502
    %8517 = vmatprep.subr.mxu0 0.0
    %8518 = vmatpush1.msra.mxu0 %v8503
    %8519 = vmatprep.subr.mxu0 0.0
    %8520 = vmatpush1.msra.mxu0 %v8504
    %8521 = vmatprep.subr.mxu0 0.0
    %8522 = vmatpush1.msra.mxu0 0.0
    %8523 = vmatprep.subr.mxu0 0.0
    %8524 = vmatpush1.msra.mxu0 0.0
    %8525 = vmatprep.subr.mxu0 0.0
    %8526 = vmatpush1.msra.mxu0 0.0
    %8527 = vmatprep.subr.mxu0 0.0
    %8528 = vmatpush1.msra.mxu0 0.0
    %8529 = vmatprep.subr.mxu0 0.0
    %8530 = vmatpush1.msra.mxu0 0.0
    %8531 = vmatprep.subr.mxu0 0.0
    %8532 = vmatpush1.msra.mxu0 0.0
    %8533 = vmatprep.subr.mxu0 0.0
    %8534 = vmatpush1.msra.mxu0 0.0
    %8535 = vmatprep.subr.mxu0 0.0
    %8536 = vmatpush1.msra.mxu0 0.0
    %8537 = vmatprep.subr.mxu0 0.0
    %8538 = vmatpush1.msra.mxu0 0.0
    %8539 = vmatprep.subr.mxu0 0.0
    %8540 = vmatpush1.msra.mxu0 0.0
    %8541 = vmatprep.subr.mxu0 0.0
    %8542 = vmatpush1.msra.mxu0 0.0
    %8543 = vmatprep.subr.mxu0 0.0
    %8544 = vmatpush1.msra.mxu0 0.0
    %8545 = vmatprep.subr.mxu0 0.0
    %8546 = vmatpush1.msra.mxu0 0.0
    %8547 = vmatprep.subr.mxu0 0.0
    %8548 = vmatpush1.msra.mxu0 0.0
    %8549 = vmatprep.subr.mxu0 0.0
    %8550 = vmatpush1.msra.mxu0 0.0
    %8551 = vmatprep.subr.mxu0 0.0
    %8552 = vmatpush1.msra.mxu0 0.0
    %8553 = vmatprep.subr.mxu0 0.0
    %8554 = vmatpush1.msra.mxu0 0.0
    %8555 = vmatprep.subr.mxu0 0.0
    %8556 = vmatpush1.msra.mxu0 0.0
    %8557 = vmatprep.subr.mxu0 0.0
    %8558 = vmatpush1.msra.mxu0 0.0
    %8559 = vmatprep.subr.mxu0 0.0
    %8560 = vmatpush1.msra.mxu0 0.0
    %8561 = vmatprep.subr.mxu0 0.0
    %8562 = vmatpush1.msra.mxu0 0.0
    %8563 = vmatprep.subr.mxu0 0.0
    %8564 = vmatpush1.msra.mxu0 0.0
    %8565 = vmatprep.subr.mxu0 0.0
    %8566 = vmatpush1.msra.mxu0 0.0
    %8567 = vmatprep.subr.mxu0 0.0
    %8568 = vmatpush1.msra.mxu0 0.0
    %8569 = vmatprep.subr.mxu0 0.0
    %8570 = vmatpush1.msra.mxu0 0.0
    %8571 = vmatprep.subr.mxu0 0.0
    %8572 = vmatpush1.msra.mxu0 0.0
    %8573 = vmatprep.subr.mxu0 0.0
    %8574 = vmatpush1.msra.mxu0 0.0
    %8575 = vmatprep.subr.mxu0 0.0
    %8576 = vmatpush1.msra.mxu0 0.0
    %8577 = vmatprep.mubr.f32.mxu0 0.0
    %8578 = vmatmul.mubr.f32.gmra.mrb[0].mxu0 %v6560
    %v8579 = vpop.f32.mrb[0].mxu0
    %v8580 = vadd.f32 %v8511, %v8579
    %v8581 = vpop.f32.mrb[0].mxu0
    %8582 = vdwg.mxu0
    %v8583 = vlaneseq
    %v8584 = vshrl.u32 %v8583, 7
    %v8585 = vsub.s32 0, %v8584
    %v8586 = vrot.slane %v8580, %v8585
    %v8587 = vlaneseq
    %v8588 = vshrl.u32 %v8587, 7
    %v8589 = vsub.s32 1, %v8588
    %v8590 = vrot.slane %v8580, %v8589
    %v8591 = vadd.f32 %v8498, %v8586
    %v8592 = vadd.f32 %v8499, %v8590
    %v8593 = vsel %vm446, %v8591, 0.0
    %8594 = vadd.xlane.f32.xlu0 %v8593
    %v8595 = vpop.xlane.xlu0 %8594
    %v8596 = vsel %vm446, %v8592, 0.0
    %8597 = vadd.xlane.f32.xlu0 %v8596
    %v8598 = vpop.xlane.xlu0 %8597
    %v8599 = vmul.f32 %v8595, %v2348
    %v8600 = vmul.f32 %v8598, %v2348
    %v8601 = vsub.f32 %v8591, %v8599
    %v8602 = vsub.f32 %v8592, %v8600
    %v8603 = vmul.f32 %v8601, %v8601
    %v8604 = vmul.f32 %v8602, %v8602
    %v8605 = vsel %vm446, %v8603, 0.0
    %8606 = vadd.xlane.f32.xlu0 %v8605
    %v8607 = vpop.xlane.xlu0 %8606
    %v8608 = vsel %vm446, %v8604, 0.0
    %8609 = vadd.xlane.f32.xlu0 %v8608
    %v8610 = vpop.xlane.xlu0 %8609
    %v8611 = vmul.f32 %v8607, %v2348
    %v8612 = vmul.f32 %v8610, %v2348
    %v8613 = vadd.f32 %v8611, 1e-05
    %v8614 = vadd.f32 %v8612, 1e-05
    %v8615 = vrsqrt.pop %v8613
    %v8616 = vrsqrt.pop %v8614
    %v8617 = vmul.f32 %v8601, %v8615
    %v8618 = vmul.f32 %v8602, %v8616
    %v8619 = vlaneseq
    %v8620 = vshrl.u32 %v8619, 7
    %v8621 = vsub.s32 2, %v8620
    %v8622 = vrot.slane %v6911, %v8621
    %v8623 = vmul.f32 %v8617, %v8622
    %v8624 = vmul.f32 %v8618, %v8622
    %v8625 = vlaneseq
    %v8626 = vshrl.u32 %v8625, 7
    %v8627 = vsub.s32 3, %v8626
    %v8628 = vrot.slane %v6911, %v8627
    %v8629 = vadd.f32 %v8623, %v8628
    %v8630 = vadd.f32 %v8624, %v8628
    %s8631 = scalar_lea.vmem [#allocation22], 32
    %v8632 = vld [vmem:[%s8631] sm:$0xff]
    %v8633 = vld [vmem:[%s8631 + $0x8] sm:$0xff]
    %v8634 = vld [vmem:[%s8631 + $0x10] sm:$0xff]
    %v8635 = vld [vmem:[%s8631 + $0x18] sm:$0xff]
    %s8636 = scalar_lea.vmem [#allocation23], 1
    %v8637 = vld [vmem:[%s8636] sm:$0x1]
    %s8638 = scalar_lea.vmem %s23, 64
    %v8639 = vld [vmem:[%s8638] sm:$0xff]
    %v8640 = vld [vmem:[%s8638 + $0x8] sm:$0xff]
    %v8641 = vld [vmem:[%s8638 + $0x10] sm:$0xff]
    %v8642 = vld [vmem:[%s8638 + $0x18] sm:$0xff]
    %v8643 = vld [vmem:[%s8638 + $0x20] sm:$0xff]
    %v8644 = vld [vmem:[%s8638 + $0x28] sm:$0xff]
    %v8645 = vld [vmem:[%s8638 + $0x30] sm:$0xff]
    %v8646 = vld [vmem:[%s8638 + $0x38] sm:$0xff]
    %s8647 = scalar_lea.vmem [#allocation25], 1
    %v8648 = vld [vmem:[%s8647] sm:$0x1]
    %v8650 = vlaneseq
    %v8651 = vshrl.u32 %v8650, 7
    %v8652 = vsub.s32 0, %v8651
    %v8653 = vrot.slane %v8637, %v8652
    %v8656 = vsel %vm446, %v8629, 0
    %v8659 = vsel %vm446, %v8630, 0
    %8661 = vmatprep.subr.mxu0 0.0
    %8662 = vmatpush1.msra.mxu0 %v8632
    %8663 = vmatprep.subr.mxu0 0.0
    %8664 = vmatpush1.msra.mxu0 %v8633
    %8665 = vmatprep.subr.mxu0 0.0
    %8666 = vmatpush1.msra.mxu0 %v8634
    %8667 = vmatprep.subr.mxu0 0.0
    %8668 = vmatpush1.msra.mxu0 %v8635
    %8669 = vmatprep.subr.mxu0 0.0
    %8670 = vmatpush1.msra.mxu0 0.0
    %8671 = vmatprep.subr.mxu0 0.0
    %8672 = vmatpush1.msra.mxu0 0.0
    %8673 = vmatprep.subr.mxu0 0.0
    %8674 = vmatpush1.msra.mxu0 0.0
    %8675 = vmatprep.subr.mxu0 0.0
    %8676 = vmatpush1.msra.mxu0 0.0
    %8677 = vmatprep.subr.mxu0 0.0
    %8678 = vmatpush1.msra.mxu0 0.0
    %8679 = vmatprep.subr.mxu0 0.0
    %8680 = vmatpush1.msra.mxu0 0.0
    %8681 = vmatprep.subr.mxu0 0.0
    %8682 = vmatpush1.msra.mxu0 0.0
    %8683 = vmatprep.subr.mxu0 0.0
    %8684 = vmatpush1.msra.mxu0 0.0
    %8685 = vmatprep.subr.mxu0 0.0
    %8686 = vmatpush1.msra.mxu0 0.0
    %8687 = vmatprep.subr.mxu0 0.0
    %8688 = vmatpush1.msra.mxu0 0.0
    %8689 = vmatprep.subr.mxu0 0.0
    %8690 = vmatpush1.msra.mxu0 0.0
    %8691 = vmatprep.subr.mxu0 0.0
    %8692 = vmatpush1.msra.mxu0 0.0
    %8693 = vmatprep.subr.mxu0 0.0
    %8694 = vmatpush1.msra.mxu0 0.0
    %8695 = vmatprep.subr.mxu0 0.0
    %8696 = vmatpush1.msra.mxu0 0.0
    %8697 = vmatprep.subr.mxu0 0.0
    %8698 = vmatpush1.msra.mxu0 0.0
    %8699 = vmatprep.subr.mxu0 0.0
    %8700 = vmatpush1.msra.mxu0 0.0
    %8701 = vmatprep.subr.mxu0 0.0
    %8702 = vmatpush1.msra.mxu0 0.0
    %8703 = vmatprep.subr.mxu0 0.0
    %8704 = vmatpush1.msra.mxu0 0.0
    %8705 = vmatprep.subr.mxu0 0.0
    %8706 = vmatpush1.msra.mxu0 0.0
    %8707 = vmatprep.subr.mxu0 0.0
    %8708 = vmatpush1.msra.mxu0 0.0
    %8709 = vmatprep.subr.mxu0 0.0
    %8710 = vmatpush1.msra.mxu0 0.0
    %8711 = vmatprep.subr.mxu0 0.0
    %8712 = vmatpush1.msra.mxu0 0.0
    %8713 = vmatprep.subr.mxu0 0.0
    %8714 = vmatpush1.msra.mxu0 0.0
    %8715 = vmatprep.subr.mxu0 0.0
    %8716 = vmatpush1.msra.mxu0 0.0
    %8717 = vmatprep.subr.mxu0 0.0
    %8718 = vmatpush1.msra.mxu0 0.0
    %8719 = vmatprep.subr.mxu0 0.0
    %8720 = vmatpush1.msra.mxu0 0.0
    %8721 = vmatprep.subr.mxu0 0.0
    %8722 = vmatpush1.msra.mxu0 0.0
    %8723 = vmatprep.subr.mxu0 0.0
    %8724 = vmatpush1.msra.mxu0 0.0
    %8725 = vmatprep.mubr.f32.mxu0 0.0
    %8726 = vmatmul.mubr.f32.gmra.mrb[0].mxu0 %v8656
    %v8727 = vpop.f32.mrb[0].mxu0
    %v8728 = vadd.f32 %v8653, %v8727
    %v8729 = vpop.f32.mrb[0].mxu0
    %8730 = vmatprep.mubr.f32.mxu0 0.0
    %8731 = vmatmul.mubr.f32.gmra.mrb[0].mxu0 %v8659
    %v8732 = vpop.f32.mrb[0].mxu0
    %v8733 = vadd.f32 %v8653, %v8732
    %v8734 = vpop.f32.mrb[0].mxu0
    %8735 = vdwg.mxu0
    %v8736 = vmax.f32 %v8728, 0.0
    %v8737 = vmax.f32 %v8733, 0.0
    %v8739 = vlaneseq
    %v8740 = vshrl.u32 %v8739, 7
    %v8741 = vsub.s32 0, %v8740
    %v8742 = vrot.slane %v8648, %v8741
    %v8745 = vsel %vm947, %v8736, 0
    %v8748 = vsel %vm947, %v8737, 0
    %8750 = vmatprep.subr.mxu0 0.0
    %8751 = vmatpush1.msra.mxu0 %v8639
    %8752 = vmatprep.subr.mxu0 0.0
    %8753 = vmatpush1.msra.mxu0 %v8640
    %8754 = vmatprep.subr.mxu0 0.0
    %8755 = vmatpush1.msra.mxu0 %v8641
    %8756 = vmatprep.subr.mxu0 0.0
    %8757 = vmatpush1.msra.mxu0 %v8642
    %8758 = vmatprep.subr.mxu0 0.0
    %8759 = vmatpush1.msra.mxu0 %v8643
    %8760 = vmatprep.subr.mxu0 0.0
    %8761 = vmatpush1.msra.mxu0 %v8644
    %8762 = vmatprep.subr.mxu0 0.0
    %8763 = vmatpush1.msra.mxu0 %v8645
    %8764 = vmatprep.subr.mxu0 0.0
    %8765 = vmatpush1.msra.mxu0 %v8646
    %8766 = vmatprep.subr.mxu0 0.0
    %8767 = vmatpush1.msra.mxu0 0.0
    %8768 = vmatprep.subr.mxu0 0.0
    %8769 = vmatpush1.msra.mxu0 0.0
    %8770 = vmatprep.subr.mxu0 0.0
    %8771 = vmatpush1.msra.mxu0 0.0
    %8772 = vmatprep.subr.mxu0 0.0
    %8773 = vmatpush1.msra.mxu0 0.0
    %8774 = vmatprep.subr.mxu0 0.0
    %8775 = vmatpush1.msra.mxu0 0.0
    %8776 = vmatprep.subr.mxu0 0.0
    %8777 = vmatpush1.msra.mxu0 0.0
    %8778 = vmatprep.subr.mxu0 0.0
    %8779 = vmatpush1.msra.mxu0 0.0
    %8780 = vmatprep.subr.mxu0 0.0
    %8781 = vmatpush1.msra.mxu0 0.0
    %8782 = vmatprep.subr.mxu0 0.0
    %8783 = vmatpush1.msra.mxu0 0.0
    %8784 = vmatprep.subr.mxu0 0.0
    %8785 = vmatpush1.msra.mxu0 0.0
    %8786 = vmatprep.subr.mxu0 0.0
    %8787 = vmatpush1.msra.mxu0 0.0
    %8788 = vmatprep.subr.mxu0 0.0
    %8789 = vmatpush1.msra.mxu0 0.0
    %8790 = vmatprep.subr.mxu0 0.0
    %8791 = vmatpush1.msra.mxu0 0.0
    %8792 = vmatprep.subr.mxu0 0.0
    %8793 = vmatpush1.msra.mxu0 0.0
    %8794 = vmatprep.subr.mxu0 0.0
    %8795 = vmatpush1.msra.mxu0 0.0
    %8796 = vmatprep.subr.mxu0 0.0
    %8797 = vmatpush1.msra.mxu0 0.0
    %8798 = vmatprep.subr.mxu0 0.0
    %8799 = vmatpush1.msra.mxu0 0.0
    %8800 = vmatprep.subr.mxu0 0.0
    %8801 = vmatpush1.msra.mxu0 0.0
    %8802 = vmatprep.subr.mxu0 0.0
    %8803 = vmatpush1.msra.mxu0 0.0
    %8804 = vmatprep.subr.mxu0 0.0
    %8805 = vmatpush1.msra.mxu0 0.0
    %8806 = vmatprep.subr.mxu0 0.0
    %8807 = vmatpush1.msra.mxu0 0.0
    %8808 = vmatprep.subr.mxu0 0.0
    %8809 = vmatpush1.msra.mxu0 0.0
    %8810 = vmatprep.subr.mxu0 0.0
    %8811 = vmatpush1.msra.mxu0 0.0
    %8812 = vmatprep.subr.mxu0 0.0
    %8813 = vmatpush1.msra.mxu0 0.0
    %8814 = vmatprep.mubr.f32.mxu0 0.0
    %8815 = vmatmul.mubr.f32.gmra.mrb[0].mxu0 %v8745
    %v8816 = vpop.f32.mrb[0].mxu0
    %v8817 = vadd.f32 %v8742, %v8816
    %v8818 = vpop.f32.mrb[0].mxu0
    %8819 = vmatprep.mubr.f32.mxu0 0.0
    %8820 = vmatmul.mubr.f32.gmra.mrb[0].mxu0 %v8748
    %v8821 = vpop.f32.mrb[0].mxu0
    %v8822 = vadd.f32 %v8742, %v8821
    %v8823 = vpop.f32.mrb[0].mxu0
    %8824 = vdwg.mxu0
    %v8825 = vadd.f32 %v8629, %v8817
    %v8826 = vadd.f32 %v8630, %v8822
    %v8827 = vsel %vm446, %v8825, 0.0
    %8828 = vadd.xlane.f32.xlu0 %v8827
    %v8829 = vpop.xlane.xlu0 %8828
    %v8830 = vsel %vm446, %v8826, 0.0
    %8831 = vadd.xlane.f32.xlu0 %v8830
    %v8832 = vpop.xlane.xlu0 %8831
    %v8833 = vmul.f32 %v8829, %v2348
    %v8834 = vmul.f32 %v8832, %v2348
    %v8835 = vsub.f32 %v8825, %v8833
    %v8836 = vsub.f32 %v8826, %v8834
    %v8837 = vmul.f32 %v8835, %v8835
    %v8838 = vmul.f32 %v8836, %v8836
    %v8839 = vsel %vm446, %v8837, 0.0
    %8840 = vadd.xlane.f32.xlu0 %v8839
    %v8841 = vpop.xlane.xlu0 %8840
    %v8842 = vsel %vm446, %v8838, 0.0
    %8843 = vadd.xlane.f32.xlu0 %v8842
    %v8844 = vpop.xlane.xlu0 %8843
    %v8845 = vmul.f32 %v8841, %v2348
    %v8846 = vmul.f32 %v8844, %v2348
    %v8847 = vadd.f32 %v8845, 1e-05
    %v8848 = vadd.f32 %v8846, 1e-05
    %v8849 = vrsqrt.pop %v8847
    %v8850 = vrsqrt.pop %v8848
    %v8851 = vmul.f32 %v8835, %v8849
    %v8852 = vmul.f32 %v8836, %v8850
    %v8853 = vlaneseq
    %v8854 = vshrl.u32 %v8853, 7
    %v8855 = vsub.s32 4, %v8854
    %v8856 = vrot.slane %v6911, %v8855
    %v8857 = vmul.f32 %v8851, %v8856
    %v8858 = vmul.f32 %v8852, %v8856
    %v8859 = vlaneseq
    %v8860 = vshrl.u32 %v8859, 7
    %v8861 = vsub.s32 5, %v8860
    %v8862 = vrot.slane %v6911, %v8861
    %v8863 = vadd.f32 %v8857, %v8862
    %v8864 = vadd.f32 %v8858, %v8862
    %v8865 = vld [vmem:[%s26] sm:$0xff]
    %v8866 = vld [vmem:[%s26 + $0x8] sm:$0xff]
    %v8867 = vld [vmem:[%s26 + $0x10] sm:$0xff]
    %v8868 = vld [vmem:[%s26 + $0x18] sm:$0xff]
    %v8869 = vld [vmem:[#allocation26] sm:$0x1]
    %v8871 = vlaneseq
    %v8872 = vshrl.u32 %v8871, 7
    %v8873 = vsub.s32 0, %v8872
    %v8874 = vrot.slane %v8869, %v8873
    %v8877 = vsel %vm446, %v8863, 0
    %v8880 = vsel %vm446, %v8864, 0
    %8882 = vmatprep.subr.mxu0 0.0
    %8883 = vmatpush1.msra.mxu0 %v8865
    %8884 = vmatprep.subr.mxu0 0.0
    %8885 = vmatpush1.msra.mxu0 %v8866
    %8886 = vmatprep.subr.mxu0 0.0
    %8887 = vmatpush1.msra.mxu0 %v8867
    %8888 = vmatprep.subr.mxu0 0.0
    %8889 = vmatpush1.msra.mxu0 %v8868
    %8890 = vmatprep.subr.mxu0 0.0
    %8891 = vmatpush1.msra.mxu0 0.0
    %8892 = vmatprep.subr.mxu0 0.0
    %8893 = vmatpush1.msra.mxu0 0.0
    %8894 = vmatprep.subr.mxu0 0.0
    %8895 = vmatpush1.msra.mxu0 0.0
    %8896 = vmatprep.subr.mxu0 0.0
    %8897 = vmatpush1.msra.mxu0 0.0
    %8898 = vmatprep.subr.mxu0 0.0
    %8899 = vmatpush1.msra.mxu0 0.0
    %8900 = vmatprep.subr.mxu0 0.0
    %8901 = vmatpush1.msra.mxu0 0.0
    %8902 = vmatprep.subr.mxu0 0.0
    %8903 = vmatpush1.msra.mxu0 0.0
    %8904 = vmatprep.subr.mxu0 0.0
    %8905 = vmatpush1.msra.mxu0 0.0
    %8906 = vmatprep.subr.mxu0 0.0
    %8907 = vmatpush1.msra.mxu0 0.0
    %8908 = vmatprep.subr.mxu0 0.0
    %8909 = vmatpush1.msra.mxu0 0.0
    %8910 = vmatprep.subr.mxu0 0.0
    %8911 = vmatpush1.msra.mxu0 0.0
    %8912 = vmatprep.subr.mxu0 0.0
    %8913 = vmatpush1.msra.mxu0 0.0
    %8914 = vmatprep.subr.mxu0 0.0
    %8915 = vmatpush1.msra.mxu0 0.0
    %8916 = vmatprep.subr.mxu0 0.0
    %8917 = vmatpush1.msra.mxu0 0.0
    %8918 = vmatprep.subr.mxu0 0.0
    %8919 = vmatpush1.msra.mxu0 0.0
    %8920 = vmatprep.subr.mxu0 0.0
    %8921 = vmatpush1.msra.mxu0 0.0
    %8922 = vmatprep.subr.mxu0 0.0
    %8923 = vmatpush1.msra.mxu0 0.0
    %8924 = vmatprep.subr.mxu0 0.0
    %8925 = vmatpush1.msra.mxu0 0.0
    %8926 = vmatprep.subr.mxu0 0.0
    %8927 = vmatpush1.msra.mxu0 0.0
    %8928 = vmatprep.subr.mxu0 0.0
    %8929 = vmatpush1.msra.mxu0 0.0
    %8930 = vmatprep.subr.mxu0 0.0
    %8931 = vmatpush1.msra.mxu0 0.0
    %8932 = vmatprep.subr.mxu0 0.0
    %8933 = vmatpush1.msra.mxu0 0.0
    %8934 = vmatprep.subr.mxu0 0.0
    %8935 = vmatpush1.msra.mxu0 0.0
    %8936 = vmatprep.subr.mxu0 0.0
    %8937 = vmatpush1.msra.mxu0 0.0
    %8938 = vmatprep.subr.mxu0 0.0
    %8939 = vmatpush1.msra.mxu0 0.0
    %8940 = vmatprep.subr.mxu0 0.0
    %8941 = vmatpush1.msra.mxu0 0.0
    %8942 = vmatprep.subr.mxu0 0.0
    %8943 = vmatpush1.msra.mxu0 0.0
    %8944 = vmatprep.subr.mxu0 0.0
    %8945 = vmatpush1.msra.mxu0 0.0
    %8946 = vmatprep.mubr.f32.mxu0 0.0
    %8947 = vmatmul.mubr.f32.gmra.mrb[0].mxu0 %v8877
    %v8948 = vpop.f32.mrb[0].mxu0
    %v8949 = vadd.f32 %v8874, %v8948
    %v8950 = vpop.f32.mrb[0].mxu0
    %8951 = vmatprep.mubr.f32.mxu0 0.0
    %8952 = vmatmul.mubr.f32.gmra.mrb[0].mxu0 %v8880
    %v8953 = vpop.f32.mrb[0].mxu0
    %v8954 = vadd.f32 %v8874, %v8953
    %v8955 = vpop.f32.mrb[0].mxu0
    %8956 = vdwg.mxu0
    %8957 = vst [vmem:[#allocation28] sm:$0xff] %v8949
    %8958 = vst [vmem:[#allocation28 + $0x8] sm:$0xff] %v8954
    // Predicated region
    $region178: #{tpu_custom_call.1} parent=1 // pred_check
      _
    $region179: #{tpu_custom_call.1} parent=1 // pred_check_branch
      %8960 = sbr.rel (0) target = $region181
    $region180: #{tpu_custom_call.1} parent=1 // pred_region
      %s8962 = ssub.s32 256, 256
      %8963 = vsyncadd [#allocation4], %s8962
      %s8964 = sshll.u32 [#allocation28], 4
      %s8965 = int_to_ptr.vmem [resolvable:$true] %s8964
      %8970 = dma.vmem_to_hbm [thread:$0]  %s8965, 256, %s28, [#allocation4], 128, 128, 8
    $region181: #{tpu_custom_call.1} parent=1 // pred_fallthru
      _
    // Predicated region
    $region182: #{tpu_custom_call.1} parent=1 // pred_check
      _
    $region183: #{tpu_custom_call.1} parent=1 // pred_check_branch
      %8972 = sbr.rel (0) target = $region185
    $region184: #{tpu_custom_call.1} parent=1 // pred_region
      %8973 = dma.done [#allocation4], 256
    $region185: #{tpu_custom_call.1} parent=1 // pred_fallthru
      _
    %8974 = vsyncpa [#allocation3], 1
    %8975 = vsyncpa [#allocation6], 1
    %8976 = vsyncpa [#allocation9], 1
    %8977 = vsyncpa [#allocation12], 1
    %8978 = vsyncpa [#allocation15], 1
    %8979 = vsyncpa [#allocation18], 1
    %8980 = vsyncpa [#allocation21], 1
    %8981 = vsyncpa [#allocation24], 1
    %8982 = vsyncpa [#allocation27], 1
    %8983 = vsyncpa [#allocation4], 1

</llo_original>
